<compile_context>
chip_gen: v5e
topology: v5e:2x2
jax: 0.10.0
libtpu: 0.0.40
codegen_flags: <defaults>
</compile_context>

<pallas_src>
import functools
import numpy as np
import jax
import jax.numpy as jnp
from jax import lax
from jax.experimental import pallas as pl
from jax.experimental.pallas import tpu as pltpu

_OFF_CHUNK = 8  # offsets processed per inner step (sublane depth of the compare tile)


def get_deltas(radius, stride, base_point_num):
    # TODO(synk): original concatenates onto torch.empty((0, 2)) which errors; intended 1-D concat.
    dxs, dys = [], []
    for i in range(radius):
        r = (i + 1) * stride
        num_pts = base_point_num * (i + 1)
        angles = np.arange(num_pts) / num_pts * np.pi * 2.0
        dxs.append(r * np.cos(angles))
        dys.append(r * np.sin(angles))
    return np.concatenate(dxs), np.concatenate(dys)


def _np_gen_kernel(gt_num_ref,                       # SMEM (bs,) int32  (scalar prefetch)
                   base_ref, gx_ref, gy_ref,         # VMEM (NGT_PAD, 1) f32
                   x_ref, y_ref,                     # VMEM (1, P_TILE) f32
                   off_ref,                          # VMEM (NOFF_PAD, 1) f32
                   flag_ref,                         # VMEM (1, P_TILE) f32 output block
                   *, dis_thr2, n_off_chunks):
    b = pl.program_id(0)
    j = pl.program_id(1)
    p_tile = flag_ref.shape[1]
    num_gt = gt_num_ref[b]

    x_row = x_ref[...]                               # (1, P_TILE) pixels[:, 0]
    y_row = y_ref[...]                               # (1, P_TILE) pixels[:, 1]
    gx = gx_ref[...]                                 # (NGT_PAD, 1), padded gts -> 1e8 (far away)
    gy = gy_ref[...]

    # ---- negative flag: squared distance to nearest gt (monotone equiv. of cdist > thr) ----
    ddx = x_row - gx
    ddy = y_row - gy
    d2 = ddx * ddx + ddy * ddy                       # (NGT_PAD, P_TILE)
    d2min = jnp.min(d2, axis=0, keepdims=True)       # (1, P_TILE)
    flag_ref[...] = jnp.where(d2min > dis_thr2, -1.0, 0.0).astype(jnp.float32)

    # flat pixel index of this tile (p = x*H + y layout, produced on the host side)
    p_row = j * p_tile + lax.broadcasted_iota(jnp.int32, (1, p_tile), 1)

    # pre-load the tiny offset chunks once per tile
    off_chunks = [off_ref[c * _OFF_CHUNK:(c + 1) * _OFF_CHUNK, :]
                  for c in range(n_off_chunks)]
    base_all = base_ref[...]                         # (NGT_PAD, 1) gx*w + gy*h (padded -> -1e7)

    # ---- positive flag: neighbor-offset indices around each *valid* gt point ----
    ngt_pad = base_all.shape[0]
    for g in range(ngt_pad):                         # static unroll; invalid gts skipped at runtime
        def _positive(g=g):
            base_g = base_all[g:g + 1, :]            # (1, 1)
            pos = None
            for off_c in off_chunks:
                idx = (base_g + off_c).astype(jnp.int32)              # (_OFF_CHUNK, 1), trunc == .long()
                # out-of-range idx can never equal an in-range pixel -> no clamp needed
                hit = jnp.any(idx == p_row, axis=0, keepdims=True)    # (1, P_TILE) bool
                pos = hit if pos is None else jnp.logical_or(pos, hit)
            flag_ref[...] = jnp.where(pos, 1.0, flag_ref[...])
        pl.when(g < num_gt)(_positive)


def _pick_pixel_tile(p_total):
    for t in (4096, 2048, 1024, 512, 256, 128):
        if p_total % t == 0:
            return t
    raise ValueError("H*W must be a multiple of 128")


def neighbor_points_generator(images, gt_points, gt_nums,
                              radius=5, stride=4, base_point_num=8):
    bs, _, h, w = images.shape
    p_total = h * w
    assert p_total % 128 == 0, "H*W must be a multiple of 128 for a lane-dense output tile"
    assert p_total < 2 ** 24, "float32 flat-index arithmetic requires H*W < 2^24"
    p_tile = _pick_pixel_tile(p_total)
    n_tiles = p_total // p_tile

    ngt = gt_points.shape[1]
    ngt_pad = ((ngt + 7) // 8) * 8
    dis_thr = float(stride * radius)
    dis_thr2 = dis_thr * dis_thr

    # offset_index = offset_y * w + offset_x * h  (offset_x = dx, offset_y = dy), as in the module
    dx, dy = get_deltas(radius, stride, base_point_num)
    off = (dy * w + dx * h).astype(np.float32)
    noff = off.shape[0]
    noff_pad = ((noff + _OFF_CHUNK - 1) // _OFF_CHUNK) * _OFF_CHUNK   # multiple of 8 only
    off_pad = np.full((noff_pad,), -1.0e7, np.float32)                # padded offsets never hit
    off_pad[:noff] = off
    off_col = jnp.asarray(off_pad).reshape(noff_pad, 1)
    n_off_chunks = noff_pad // _OFF_CHUNK

    gt_nums = gt_nums.astype(jnp.int32)
    gt = jnp.zeros((bs, ngt_pad, 2), jnp.float32)
    gt = gt.at[:, :ngt, :].set(gt_points.astype(jnp.float32))
    valid = jnp.arange(ngt_pad)[None, :] < gt_nums[:, None]           # (bs, ngt_pad)

    gx_raw = gt[:, :, 0]
    gy_raw = gt[:, :, 1]
    # padded gts: pushed far away (negative flag) / far out of range (positive flag);
    # the positive path additionally skips them at runtime via pl.when(g < gt_num).
    gx_col = jnp.where(valid, gx_raw, 1e8)[:, :, None]                # (bs, ngt_pad, 1)
    gy_col = jnp.where(valid, gy_raw, 1e8)[:, :, None]
    base_col = jnp.where(valid, gx_raw * float(w) + gy_raw * float(h), -1e7)[:, :, None]

    # precomputed pixel coordinates (avoids per-pixel int div/mod inside the kernel)
    p = jnp.arange(p_total, dtype=jnp.int32)
    x_row = (p // h).astype(jnp.float32).reshape(1, p_total)
    y_row = (p % h).astype(jnp.float32).reshape(1, p_total)

    kernel = functools.partial(_np_gen_kernel, dis_thr2=dis_thr2, n_off_chunks=n_off_chunks)

    flag3 = pl.pallas_call(
        kernel,
        out_shape=jax.ShapeDtypeStruct((bs, 1, p_total), jnp.float32),
        grid_spec=pltpu.PrefetchScalarGridSpec(
            num_scalar_prefetch=1,
            grid=(bs, n_tiles),
            in_specs=[
                pl.BlockSpec((None, ngt_pad, 1), lambda b, j, n: (b, 0, 0)),   # base
                pl.BlockSpec((None, ngt_pad, 1), lambda b, j, n: (b, 0, 0)),   # gx
                pl.BlockSpec((None, ngt_pad, 1), lambda b, j, n: (b, 0, 0)),   # gy
                pl.BlockSpec((1, p_tile), lambda b, j, n: (0, j)),             # x_row
                pl.BlockSpec((1, p_tile), lambda b, j, n: (0, j)),             # y_row
                pl.BlockSpec((noff_pad, 1), lambda b, j, n: (0, 0)),           # offsets
            ],
            out_specs=pl.BlockSpec((None, 1, p_tile), lambda b, j, n: (b, 0, j)),
        ),
        compiler_params=pltpu.CompilerParams(
            dimension_semantics=("parallel", "parallel")),
    )(gt_nums, base_col, gx_col, gy_col, x_row, y_row, off_col)

    flag = flag3.reshape(bs, p_total)

    # pixels = stack(meshgrid(arange(w), arange(h)), -1).flatten(0,1).repeat(bs,1,1) (index glue)
    xs, ys = jnp.meshgrid(jnp.arange(w), jnp.arange(h), indexing="ij")
    pixels = jnp.stack([xs, ys], -1).reshape(p_total, 2).astype(jnp.int32)
    pixels = jnp.broadcast_to(pixels[None], (bs, p_total, 2))
    return pixels, flag


def _reference(images, gt_points, gt_nums, radius=5, stride=4, base_point_num=8):
    """Plain-JAX reference mirroring the intended PyTorch semantics.

    Uses the squared-distance comparison (mathematically identical to cdist(...) > thr,
    differing only by one ULP exactly at the threshold) so it matches the kernel bit-exactly.
    """
    bs, _, h, w = images.shape
    p_total = h * w
    dis_thr2 = float(stride * radius) ** 2
    dx, dy = get_deltas(radius, stride, base_point_num)
    off = jnp.asarray((dy * w + dx * h).astype(np.float32))

    ngt = gt_points.shape[1]
    valid = jnp.arange(ngt)[None, :] < gt_nums[:, None]
    gx = gt_points[..., 0].astype(jnp.float32)
    gy = gt_points[..., 1].astype(jnp.float32)

    p = jnp.arange(p_total, dtype=jnp.int32)
    x = (p // h).astype(jnp.float32)
    y = (p % h).astype(jnp.float32)

    ddx = x[None, :, None] - gx[:, None, :]
    ddy = y[None, :, None] - gy[:, None, :]
    d2 = ddx * ddx + ddy * ddy
    d2 = jnp.where(valid[:, None, :], d2, jnp.inf)
    flag = jnp.where(jnp.min(d2, axis=-1) > dis_thr2, -1.0, 0.0)

    base = gx * float(w) + gy * float(h)
    idx = (base[:, :, None] + off[None, None, :]).astype(jnp.int32)
    ok = (idx >= 0) & (idx < p_total) & valid[:, :, None]       # intended (>=0) & (<max_index)
    idx = jnp.where(ok, idx, -1)
    pos = jnp.any(idx[:, :, :, None] == p[None, None, None, :], axis=(1, 2))
    flag = jnp.where(pos, 1.0, flag)

    xs, ys = jnp.meshgrid(jnp.arange(w), jnp.arange(h), indexing="ij")
    pixels = jnp.broadcast_to(
        jnp.stack([xs, ys], -1).reshape(p_total, 2).astype(jnp.int32)[None], (bs, p_total, 2))
    return pixels, flag


if __name__ == "__main__":
    key = jax.random.PRNGKey(0)
    k0, k1 = jax.random.split(key)

    bs, c, hh, ww = 2, 4, 16, 16
    ngt_max = 8
    images = jax.random.normal(k0, (bs, c, hh, ww), dtype=jnp.float32)
    gt_points = jax.random.uniform(k1, (bs, ngt_max, 2), dtype=jnp.float32,
                                   minval=0.0, maxval=float(hh))
    gt_nums = jnp.array([5, 8], dtype=jnp.int32)

    pixels, flag = neighbor_points_generator(images, gt_points, gt_nums)
    jax.block_until_ready((pixels, flag))

    ref_pixels, ref_flag = _reference(images, gt_points, gt_nums)
    assert np.array_equal(np.asarray(pixels), np.asarray(ref_pixels)), "pixels mismatch"
    assert np.array_equal(np.asarray(flag), np.asarray(ref_flag)), "flag mismatch"

    print("KERNEL_OK")
</pallas_src>

<mosaic_0001>
module attributes {stable_mosaic.version = 11 : i64} {
  func.func @_np_gen_kernel(%arg0: i32, %arg1: i32, %arg2: memref<2xi32, #tpu.memory_space<smem>>, %arg3: memref<1x8x1xf32, #tpu.memory_space<vmem>>, %arg4: memref<1x8x1xf32, #tpu.memory_space<vmem>>, %arg5: memref<1x8x1xf32, #tpu.memory_space<vmem>>, %arg6: memref<1x256xf32, #tpu.memory_space<vmem>>, %arg7: memref<1x256xf32, #tpu.memory_space<vmem>>, %arg8: memref<120x1xf32, #tpu.memory_space<vmem>>, %arg9: memref<1x1x256xf32, #tpu.memory_space<vmem>>) attributes {dimension_semantics = [#tpu.dimension_semantics<parallel>, #tpu.dimension_semantics<parallel>], iteration_bounds = array<i64: 2, 1>, scalar_prefetch = 1 : i64, scratch_operands = 0 : i64, tpu.core_type = #tpu.core_type<tc>, window_params = [{transform_indices = @transform_0, window_bounds = array<i64: 1, 8, 1>}, {transform_indices = @transform_1, window_bounds = array<i64: 1, 8, 1>}, {transform_indices = @transform_2, window_bounds = array<i64: 1, 8, 1>}, {transform_indices = @transform_3, window_bounds = array<i64: 1, 256>}, {transform_indices = @transform_4, window_bounds = array<i64: 1, 256>}, {pipeline_mode = #tpu.pipeline_mode<synchronous>, transform_indices = @transform_5, window_bounds = array<i64: 120, 1>}, {transform_indices = @transform_6, window_bounds = array<i64: 1, 1, 256>}]} {
    %0 = arith.index_cast %arg0 : i32 to index
    %1 = memref.load %arg2[%0] : memref<2xi32, #tpu.memory_space<smem>>
    %c0 = arith.constant 0 : index
    %c0_0 = arith.constant 0 : index
    %2 = vector.load %arg6[%c0, %c0_0] : memref<1x256xf32, #tpu.memory_space<vmem>>, vector<1x256xf32>
    %c0_1 = arith.constant 0 : index
    %c0_2 = arith.constant 0 : index
    %3 = vector.load %arg7[%c0_1, %c0_2] : memref<1x256xf32, #tpu.memory_space<vmem>>, vector<1x256xf32>
    %c0_3 = arith.constant 0 : index
    %c0_4 = arith.constant 0 : index
    %c0_5 = arith.constant 0 : index
    %4 = vector.load %arg4[%c0_3, %c0_4, %c0_5] : memref<1x8x1xf32, #tpu.memory_space<vmem>>, vector<1x8x1xf32>
    %5 = vector.shape_cast %4 : vector<1x8x1xf32> to vector<8x1xf32>
    %c0_6 = arith.constant 0 : index
    %c0_7 = arith.constant 0 : index
    %c0_8 = arith.constant 0 : index
    %6 = vector.load %arg5[%c0_6, %c0_7, %c0_8] : memref<1x8x1xf32, #tpu.memory_space<vmem>>, vector<1x8x1xf32>
    %7 = vector.shape_cast %6 : vector<1x8x1xf32> to vector<8x1xf32>
    %8 = vector.broadcast %2 : vector<1x256xf32> to vector<8x256xf32>
    %9 = vector.broadcast %5 : vector<8x1xf32> to vector<8x256xf32>
    %10 = arith.subf %8, %9 : vector<8x256xf32>
    %11 = vector.broadcast %3 : vector<1x256xf32> to vector<8x256xf32>
    %12 = vector.broadcast %7 : vector<8x1xf32> to vector<8x256xf32>
    %13 = arith.subf %11, %12 : vector<8x256xf32>
    %14 = arith.mulf %10, %10 : vector<8x256xf32>
    %15 = arith.mulf %13, %13 : vector<8x256xf32>
    %16 = arith.addf %14, %15 : vector<8x256xf32>
    %cst = arith.constant dense<0x7F800000> : vector<256xf32>
    %17 = vector.multi_reduction <minimumf>, %16, %cst [0] : vector<8x256xf32> to vector<256xf32>
    %18 = vector.shape_cast %17 : vector<256xf32> to vector<1x256xf32>
    %cst_9 = arith.constant 4.000000e+02 : f32
    %19 = vector.broadcast %cst_9 : f32 to vector<1x256xf32>
    %20 = arith.cmpf ogt, %18, %19 : vector<1x256xf32>
    %cst_10 = arith.constant -1.000000e+00 : f32
    %cst_11 = arith.constant 0.000000e+00 : f32
    %21 = vector.broadcast %cst_10 : f32 to vector<1x256xf32>
    %22 = vector.broadcast %cst_11 : f32 to vector<1x256xf32>
    %23 = arith.select %20, %21, %22 : vector<1x256xi1>, vector<1x256xf32>
    %c0_12 = arith.constant 0 : index
    %c0_13 = arith.constant 0 : index
    %c0_14 = arith.constant 0 : index
    %24 = vector.load %arg9[%c0_12, %c0_13, %c0_14] : memref<1x1x256xf32, #tpu.memory_space<vmem>>, vector<1x1x256xf32>
    %25 = vector.shape_cast %24 : vector<1x1x256xf32> to vector<1x256xf32>
    %26 = vector.shape_cast %23 : vector<1x256xf32> to vector<1x1x256xf32>
    tpu.vector_store %arg9[%c0_12, %c0_13, %c0_14], %26 {strides = array<i32>} : memref<1x1x256xf32, #tpu.memory_space<vmem>>, vector<1x1x256xf32>,
    %c256_i32 = arith.constant 256 : i32
    %27 = arith.muli %arg1, %c256_i32 : i32
    %28 = tpu.iota {dimensions = array<i32: 1>} : vector<1x256xi32>
    %29 = vector.broadcast %27 : i32 to vector<1x256xi32>
    %30 = arith.addi %29, %28 : vector<1x256xi32>
    %c0_15 = arith.constant 0 : index
    %c0_16 = arith.constant 0 : index
    %31 = vector.load %arg8[%c0_15, %c0_16] : memref<120x1xf32, #tpu.memory_space<vmem>>, vector<8x1xf32>
    %c8 = arith.constant 8 : index
    %c0_17 = arith.constant 0 : index
    %32 = vector.load %arg8[%c8, %c0_17] : memref<120x1xf32, #tpu.memory_space<vmem>>, vector<8x1xf32>
    %c16 = arith.constant 16 : index
    %c0_18 = arith.constant 0 : index
    %33 = vector.load %arg8[%c16, %c0_18] : memref<120x1xf32, #tpu.memory_space<vmem>>, vector<8x1xf32>
    %c24 = arith.constant 24 : index
    %c0_19 = arith.constant 0 : index
    %34 = vector.load %arg8[%c24, %c0_19] : memref<120x1xf32, #tpu.memory_space<vmem>>, vector<8x1xf32>
    %c32 = arith.constant 32 : index
    %c0_20 = arith.constant 0 : index
    %35 = vector.load %arg8[%c32, %c0_20] : memref<120x1xf32, #tpu.memory_space<vmem>>, vector<8x1xf32>
    %c40 = arith.constant 40 : index
    %c0_21 = arith.constant 0 : index
    %36 = vector.load %arg8[%c40, %c0_21] : memref<120x1xf32, #tpu.memory_space<vmem>>, vector<8x1xf32>
    %c48 = arith.constant 48 : index
    %c0_22 = arith.constant 0 : index
    %37 = vector.load %arg8[%c48, %c0_22] : memref<120x1xf32, #tpu.memory_space<vmem>>, vector<8x1xf32>
    %c56 = arith.constant 56 : index
    %c0_23 = arith.constant 0 : index
    %38 = vector.load %arg8[%c56, %c0_23] : memref<120x1xf32, #tpu.memory_space<vmem>>, vector<8x1xf32>
    %c64 = arith.constant 64 : index
    %c0_24 = arith.constant 0 : index
    %39 = vector.load %arg8[%c64, %c0_24] : memref<120x1xf32, #tpu.memory_space<vmem>>, vector<8x1xf32>
    %c72 = arith.constant 72 : index
    %c0_25 = arith.constant 0 : index
    %40 = vector.load %arg8[%c72, %c0_25] : memref<120x1xf32, #tpu.memory_space<vmem>>, vector<8x1xf32>
    %c80 = arith.constant 80 : index
    %c0_26 = arith.constant 0 : index
    %41 = vector.load %arg8[%c80, %c0_26] : memref<120x1xf32, #tpu.memory_space<vmem>>, vector<8x1xf32>
    %c88 = arith.constant 88 : index
    %c0_27 = arith.constant 0 : index
    %42 = vector.load %arg8[%c88, %c0_27] : memref<120x1xf32, #tpu.memory_space<vmem>>, vector<8x1xf32>
    %c96 = arith.constant 96 : index
    %c0_28 = arith.constant 0 : index
    %43 = vector.load %arg8[%c96, %c0_28] : memref<120x1xf32, #tpu.memory_space<vmem>>, vector<8x1xf32>
    %c104 = arith.constant 104 : index
    %c0_29 = arith.constant 0 : index
    %44 = vector.load %arg8[%c104, %c0_29] : memref<120x1xf32, #tpu.memory_space<vmem>>, vector<8x1xf32>
    %c112 = arith.constant 112 : index
    %c0_30 = arith.constant 0 : index
    %45 = vector.load %arg8[%c112, %c0_30] : memref<120x1xf32, #tpu.memory_space<vmem>>, vector<8x1xf32>
    %c0_31 = arith.constant 0 : index
    %c0_32 = arith.constant 0 : index
    %c0_33 = arith.constant 0 : index
    %46 = vector.load %arg3[%c0_31, %c0_32, %c0_33] : memref<1x8x1xf32, #tpu.memory_space<vmem>>, vector<1x8x1xf32>
    %47 = vector.shape_cast %46 : vector<1x8x1xf32> to vector<8x1xf32>
    %c0_i32 = arith.constant 0 : i32
    %48 = arith.cmpi sgt, %1, %c0_i32 : i32
    %49 = arith.extui %48 : i1 to i32
    %c0_i32_34 = arith.constant 0 : i32
    %50 = arith.cmpi ne, %49, %c0_i32_34 : i32
    scf.if %50 {
      %72 = vector.extract_strided_slice %47 {offsets = [0, 0], sizes = [1, 1], strides = [1, 1]} : vector<8x1xf32> to vector<1x1xf32>
      %73 = vector.broadcast %72 : vector<1x1xf32> to vector<8x1xf32>
      %74 = arith.addf %73, %31 : vector<8x1xf32>
      %75 = arith.fptosi %74 : vector<8x1xf32> to vector<8x1xi32>
      %76 = vector.broadcast %75 : vector<8x1xi32> to vector<8x256xi32>
      %77 = vector.broadcast %30 : vector<1x256xi32> to vector<8x256xi32>
      %78 = arith.cmpi eq, %76, %77 : vector<8x256xi32>
      %cst_42 = arith.constant 1.000000e+00 : f32
      %cst_43 = arith.constant 0.000000e+00 : f32
      %79 = vector.broadcast %cst_42 : f32 to vector<8x256xf32>
      %80 = vector.broadcast %cst_43 : f32 to vector<8x256xf32>
      %81 = arith.select %78, %79, %80 : vector<8x256xi1>, vector<8x256xf32>
      %cst_44 = arith.constant dense<0xFF800000> : vector<256xf32>
      %82 = vector.multi_reduction <maximumf>, %81, %cst_44 [0] : vector<8x256xf32> to vector<256xf32>
      %cst_45 = arith.constant 0.000000e+00 : f32
      %83 = vector.broadcast %cst_45 : f32 to vector<256xf32>
      %84 = arith.cmpf ogt, %82, %83 : vector<256xf32>
      %85 = vector.shape_cast %84 : vector<256xi1> to vector<1x256xi1>
      %86 = vector.broadcast %72 : vector<1x1xf32> to vector<8x1xf32>
      %87 = arith.addf %86, %32 : vector<8x1xf32>
      %88 = arith.fptosi %87 : vector<8x1xf32> to vector<8x1xi32>
      %89 = vector.broadcast %88 : vector<8x1xi32> to vector<8x256xi32>
      %90 = vector.broadcast %30 : vector<1x256xi32> to vector<8x256xi32>
      %91 = arith.cmpi eq, %89, %90 : vector<8x256xi32>
      %cst_46 = arith.constant 1.000000e+00 : f32
      %cst_47 = arith.constant 0.000000e+00 : f32
      %92 = vector.broadcast %cst_46 : f32 to vector<8x256xf32>
      %93 = vector.broadcast %cst_47 : f32 to vector<8x256xf32>
      %94 = arith.select %91, %92, %93 : vector<8x256xi1>, vector<8x256xf32>
      %cst_48 = arith.constant dense<0xFF800000> : vector<256xf32>
      %95 = vector.multi_reduction <maximumf>, %94, %cst_48 [0] : vector<8x256xf32> to vector<256xf32>
      %cst_49 = arith.constant 0.000000e+00 : f32
      %96 = vector.broadcast %cst_49 : f32 to vector<256xf32>
      %97 = arith.cmpf ogt, %95, %96 : vector<256xf32>
      %98 = vector.shape_cast %97 : vector<256xi1> to vector<1x256xi1>
      %99 = arith.ori %85, %98 : vector<1x256xi1>
      %100 = vector.broadcast %72 : vector<1x1xf32> to vector<8x1xf32>
      %101 = arith.addf %100, %33 : vector<8x1xf32>
      %102 = arith.fptosi %101 : vector<8x1xf32> to vector<8x1xi32>
      %103 = vector.broadcast %102 : vector<8x1xi32> to vector<8x256xi32>
      %104 = vector.broadcast %30 : vector<1x256xi32> to vector<8x256xi32>
      %105 = arith.cmpi eq, %103, %104 : vector<8x256xi32>
      %cst_50 = arith.constant 1.000000e+00 : f32
      %cst_51 = arith.constant 0.000000e+00 : f32
      %106 = vector.broadcast %cst_50 : f32 to vector<8x256xf32>
      %107 = vector.broadcast %cst_51 : f32 to vector<8x256xf32>
      %108 = arith.select %105, %106, %107 : vector<8x256xi1>, vector<8x256xf32>
      %cst_52 = arith.constant dense<0xFF800000> : vector<256xf32>
      %109 = vector.multi_reduction <maximumf>, %108, %cst_52 [0] : vector<8x256xf32> to vector<256xf32>
      %cst_53 = arith.constant 0.000000e+00 : f32
      %110 = vector.broadcast %cst_53 : f32 to vector<256xf32>
      %111 = arith.cmpf ogt, %109, %110 : vector<256xf32>
      %112 = vector.shape_cast %111 : vector<256xi1> to vector<1x256xi1>
      %113 = arith.ori %99, %112 : vector<1x256xi1>
      %114 = vector.broadcast %72 : vector<1x1xf32> to vector<8x1xf32>
      %115 = arith.addf %114, %34 : vector<8x1xf32>
      %116 = arith.fptosi %115 : vector<8x1xf32> to vector<8x1xi32>
      %117 = vector.broadcast %116 : vector<8x1xi32> to vector<8x256xi32>
      %118 = vector.broadcast %30 : vector<1x256xi32> to vector<8x256xi32>
      %119 = arith.cmpi eq, %117, %118 : vector<8x256xi32>
      %cst_54 = arith.constant 1.000000e+00 : f32
      %cst_55 = arith.constant 0.000000e+00 : f32
      %120 = vector.broadcast %cst_54 : f32 to vector<8x256xf32>
      %121 = vector.broadcast %cst_55 : f32 to vector<8x256xf32>
      %122 = arith.select %119, %120, %121 : vector<8x256xi1>, vector<8x256xf32>
      %cst_56 = arith.constant dense<0xFF800000> : vector<256xf32>
      %123 = vector.multi_reduction <maximumf>, %122, %cst_56 [0] : vector<8x256xf32> to vector<256xf32>
      %cst_57 = arith.constant 0.000000e+00 : f32
      %124 = vector.broadcast %cst_57 : f32 to vector<256xf32>
      %125 = arith.cmpf ogt, %123, %124 : vector<256xf32>
      %126 = vector.shape_cast %125 : vector<256xi1> to vector<1x256xi1>
      %127 = arith.ori %113, %126 : vector<1x256xi1>
      %128 = vector.broadcast %72 : vector<1x1xf32> to vector<8x1xf32>
      %129 = arith.addf %128, %35 : vector<8x1xf32>
      %130 = arith.fptosi %129 : vector<8x1xf32> to vector<8x1xi32>
      %131 = vector.broadcast %130 : vector<8x1xi32> to vector<8x256xi32>
      %132 = vector.broadcast %30 : vector<1x256xi32> to vector<8x256xi32>
      %133 = arith.cmpi eq, %131, %132 : vector<8x256xi32>
      %cst_58 = arith.constant 1.000000e+00 : f32
      %cst_59 = arith.constant 0.000000e+00 : f32
      %134 = vector.broadcast %cst_58 : f32 to vector<8x256xf32>
      %135 = vector.broadcast %cst_59 : f32 to vector<8x256xf32>
      %136 = arith.select %133, %134, %135 : vector<8x256xi1>, vector<8x256xf32>
      %cst_60 = arith.constant dense<0xFF800000> : vector<256xf32>
      %137 = vector.multi_reduction <maximumf>, %136, %cst_60 [0] : vector<8x256xf32> to vector<256xf32>
      %cst_61 = arith.constant 0.000000e+00 : f32
      %138 = vector.broadcast %cst_61 : f32 to vector<256xf32>
      %139 = arith.cmpf ogt, %137, %138 : vector<256xf32>
      %140 = vector.shape_cast %139 : vector<256xi1> to vector<1x256xi1>
      %141 = arith.ori %127, %140 : vector<1x256xi1>
      %142 = vector.broadcast %72 : vector<1x1xf32> to vector<8x1xf32>
      %143 = arith.addf %142, %36 : vector<8x1xf32>
      %144 = arith.fptosi %143 : vector<8x1xf32> to vector<8x1xi32>
      %145 = vector.broadcast %144 : vector<8x1xi32> to vector<8x256xi32>
      %146 = vector.broadcast %30 : vector<1x256xi32> to vector<8x256xi32>
      %147 = arith.cmpi eq, %145, %146 : vector<8x256xi32>
      %cst_62 = arith.constant 1.000000e+00 : f32
      %cst_63 = arith.constant 0.000000e+00 : f32
      %148 = vector.broadcast %cst_62 : f32 to vector<8x256xf32>
      %149 = vector.broadcast %cst_63 : f32 to vector<8x256xf32>
      %150 = arith.select %147, %148, %149 : vector<8x256xi1>, vector<8x256xf32>
      %cst_64 = arith.constant dense<0xFF800000> : vector<256xf32>
      %151 = vector.multi_reduction <maximumf>, %150, %cst_64 [0] : vector<8x256xf32> to vector<256xf32>
      %cst_65 = arith.constant 0.000000e+00 : f32
      %152 = vector.broadcast %cst_65 : f32 to vector<256xf32>
      %153 = arith.cmpf ogt, %151, %152 : vector<256xf32>
      %154 = vector.shape_cast %153 : vector<256xi1> to vector<1x256xi1>
      %155 = arith.ori %141, %154 : vector<1x256xi1>
      %156 = vector.broadcast %72 : vector<1x1xf32> to vector<8x1xf32>
      %157 = arith.addf %156, %37 : vector<8x1xf32>
      %158 = arith.fptosi %157 : vector<8x1xf32> to vector<8x1xi32>
      %159 = vector.broadcast %158 : vector<8x1xi32> to vector<8x256xi32>
      %160 = vector.broadcast %30 : vector<1x256xi32> to vector<8x256xi32>
      %161 = arith.cmpi eq, %159, %160 : vector<8x256xi32>
      %cst_66 = arith.constant 1.000000e+00 : f32
      %cst_67 = arith.constant 0.000000e+00 : f32
      %162 = vector.broadcast %cst_66 : f32 to vector<8x256xf32>
      %163 = vector.broadcast %cst_67 : f32 to vector<8x256xf32>
      %164 = arith.select %161, %162, %163 : vector<8x256xi1>, vector<8x256xf32>
      %cst_68 = arith.constant dense<0xFF800000> : vector<256xf32>
      %165 = vector.multi_reduction <maximumf>, %164, %cst_68 [0] : vector<8x256xf32> to vector<256xf32>
      %cst_69 = arith.constant 0.000000e+00 : f32
      %166 = vector.broadcast %cst_69 : f32 to vector<256xf32>
      %167 = arith.cmpf ogt, %165, %166 : vector<256xf32>
      %168 = vector.shape_cast %167 : vector<256xi1> to vector<1x256xi1>
      %169 = arith.ori %155, %168 : vector<1x256xi1>
      %170 = vector.broadcast %72 : vector<1x1xf32> to vector<8x1xf32>
      %171 = arith.addf %170, %38 : vector<8x1xf32>
      %172 = arith.fptosi %171 : vector<8x1xf32> to vector<8x1xi32>
      %173 = vector.broadcast %172 : vector<8x1xi32> to vector<8x256xi32>
      %174 = vector.broadcast %30 : vector<1x256xi32> to vector<8x256xi32>
      %175 = arith.cmpi eq, %173, %174 : vector<8x256xi32>
      %cst_70 = arith.constant 1.000000e+00 : f32
      %cst_71 = arith.constant 0.000000e+00 : f32
      %176 = vector.broadcast %cst_70 : f32 to vector<8x256xf32>
      %177 = vector.broadcast %cst_71 : f32 to vector<8x256xf32>
      %178 = arith.select %175, %176, %177 : vector<8x256xi1>, vector<8x256xf32>
      %cst_72 = arith.constant dense<0xFF800000> : vector<256xf32>
      %179 = vector.multi_reduction <maximumf>, %178, %cst_72 [0] : vector<8x256xf32> to vector<256xf32>
      %cst_73 = arith.constant 0.000000e+00 : f32
      %180 = vector.broadcast %cst_73 : f32 to vector<256xf32>
      %181 = arith.cmpf ogt, %179, %180 : vector<256xf32>
      %182 = vector.shape_cast %181 : vector<256xi1> to vector<1x256xi1>
      %183 = arith.ori %169, %182 : vector<1x256xi1>
      %184 = vector.broadcast %72 : vector<1x1xf32> to vector<8x1xf32>
      %185 = arith.addf %184, %39 : vector<8x1xf32>
      %186 = arith.fptosi %185 : vector<8x1xf32> to vector<8x1xi32>
      %187 = vector.broadcast %186 : vector<8x1xi32> to vector<8x256xi32>
      %188 = vector.broadcast %30 : vector<1x256xi32> to vector<8x256xi32>
      %189 = arith.cmpi eq, %187, %188 : vector<8x256xi32>
      %cst_74 = arith.constant 1.000000e+00 : f32
      %cst_75 = arith.constant 0.000000e+00 : f32
      %190 = vector.broadcast %cst_74 : f32 to vector<8x256xf32>
      %191 = vector.broadcast %cst_75 : f32 to vector<8x256xf32>
      %192 = arith.select %189, %190, %191 : vector<8x256xi1>, vector<8x256xf32>
      %cst_76 = arith.constant dense<0xFF800000> : vector<256xf32>
      %193 = vector.multi_reduction <maximumf>, %192, %cst_76 [0] : vector<8x256xf32> to vector<256xf32>
      %cst_77 = arith.constant 0.000000e+00 : f32
      %194 = vector.broadcast %cst_77 : f32 to vector<256xf32>
      %195 = arith.cmpf ogt, %193, %194 : vector<256xf32>
      %196 = vector.shape_cast %195 : vector<256xi1> to vector<1x256xi1>
      %197 = arith.ori %183, %196 : vector<1x256xi1>
      %198 = vector.broadcast %72 : vector<1x1xf32> to vector<8x1xf32>
      %199 = arith.addf %198, %40 : vector<8x1xf32>
      %200 = arith.fptosi %199 : vector<8x1xf32> to vector<8x1xi32>
      %201 = vector.broadcast %200 : vector<8x1xi32> to vector<8x256xi32>
      %202 = vector.broadcast %30 : vector<1x256xi32> to vector<8x256xi32>
      %203 = arith.cmpi eq, %201, %202 : vector<8x256xi32>
      %cst_78 = arith.constant 1.000000e+00 : f32
      %cst_79 = arith.constant 0.000000e+00 : f32
      %204 = vector.broadcast %cst_78 : f32 to vector<8x256xf32>
      %205 = vector.broadcast %cst_79 : f32 to vector<8x256xf32>
      %206 = arith.select %203, %204, %205 : vector<8x256xi1>, vector<8x256xf32>
      %cst_80 = arith.constant dense<0xFF800000> : vector<256xf32>
      %207 = vector.multi_reduction <maximumf>, %206, %cst_80 [0] : vector<8x256xf32> to vector<256xf32>
      %cst_81 = arith.constant 0.000000e+00 : f32
      %208 = vector.broadcast %cst_81 : f32 to vector<256xf32>
      %209 = arith.cmpf ogt, %207, %208 : vector<256xf32>
      %210 = vector.shape_cast %209 : vector<256xi1> to vector<1x256xi1>
      %211 = arith.ori %197, %210 : vector<1x256xi1>
      %212 = vector.broadcast %72 : vector<1x1xf32> to vector<8x1xf32>
      %213 = arith.addf %212, %41 : vector<8x1xf32>
      %214 = arith.fptosi %213 : vector<8x1xf32> to vector<8x1xi32>
      %215 = vector.broadcast %214 : vector<8x1xi32> to vector<8x256xi32>
      %216 = vector.broadcast %30 : vector<1x256xi32> to vector<8x256xi32>
      %217 = arith.cmpi eq, %215, %216 : vector<8x256xi32>
      %cst_82 = arith.constant 1.000000e+00 : f32
      %cst_83 = arith.constant 0.000000e+00 : f32
      %218 = vector.broadcast %cst_82 : f32 to vector<8x256xf32>
      %219 = vector.broadcast %cst_83 : f32 to vector<8x256xf32>
      %220 = arith.select %217, %218, %219 : vector<8x256xi1>, vector<8x256xf32>
      %cst_84 = arith.constant dense<0xFF800000> : vector<256xf32>
      %221 = vector.multi_reduction <maximumf>, %220, %cst_84 [0] : vector<8x256xf32> to vector<256xf32>
      %cst_85 = arith.constant 0.000000e+00 : f32
      %222 = vector.broadcast %cst_85 : f32 to vector<256xf32>
      %223 = arith.cmpf ogt, %221, %222 : vector<256xf32>
      %224 = vector.shape_cast %223 : vector<256xi1> to vector<1x256xi1>
      %225 = arith.ori %211, %224 : vector<1x256xi1>
      %226 = vector.broadcast %72 : vector<1x1xf32> to vector<8x1xf32>
      %227 = arith.addf %226, %42 : vector<8x1xf32>
      %228 = arith.fptosi %227 : vector<8x1xf32> to vector<8x1xi32>
      %229 = vector.broadcast %228 : vector<8x1xi32> to vector<8x256xi32>
      %230 = vector.broadcast %30 : vector<1x256xi32> to vector<8x256xi32>
      %231 = arith.cmpi eq, %229, %230 : vector<8x256xi32>
      %cst_86 = arith.constant 1.000000e+00 : f32
      %cst_87 = arith.constant 0.000000e+00 : f32
      %232 = vector.broadcast %cst_86 : f32 to vector<8x256xf32>
      %233 = vector.broadcast %cst_87 : f32 to vector<8x256xf32>
      %234 = arith.select %231, %232, %233 : vector<8x256xi1>, vector<8x256xf32>
      %cst_88 = arith.constant dense<0xFF800000> : vector<256xf32>
      %235 = vector.multi_reduction <maximumf>, %234, %cst_88 [0] : vector<8x256xf32> to vector<256xf32>
      %cst_89 = arith.constant 0.000000e+00 : f32
      %236 = vector.broadcast %cst_89 : f32 to vector<256xf32>
      %237 = arith.cmpf ogt, %235, %236 : vector<256xf32>
      %238 = vector.shape_cast %237 : vector<256xi1> to vector<1x256xi1>
      %239 = arith.ori %225, %238 : vector<1x256xi1>
      %240 = vector.broadcast %72 : vector<1x1xf32> to vector<8x1xf32>
      %241 = arith.addf %240, %43 : vector<8x1xf32>
      %242 = arith.fptosi %241 : vector<8x1xf32> to vector<8x1xi32>
      %243 = vector.broadcast %242 : vector<8x1xi32> to vector<8x256xi32>
      %244 = vector.broadcast %30 : vector<1x256xi32> to vector<8x256xi32>
      %245 = arith.cmpi eq, %243, %244 : vector<8x256xi32>
      %cst_90 = arith.constant 1.000000e+00 : f32
      %cst_91 = arith.constant 0.000000e+00 : f32
      %246 = vector.broadcast %cst_90 : f32 to vector<8x256xf32>
      %247 = vector.broadcast %cst_91 : f32 to vector<8x256xf32>
      %248 = arith.select %245, %246, %247 : vector<8x256xi1>, vector<8x256xf32>
      %cst_92 = arith.constant dense<0xFF800000> : vector<256xf32>
      %249 = vector.multi_reduction <maximumf>, %248, %cst_92 [0] : vector<8x256xf32> to vector<256xf32>
      %cst_93 = arith.constant 0.000000e+00 : f32
      %250 = vector.broadcast %cst_93 : f32 to vector<256xf32>
      %251 = arith.cmpf ogt, %249, %250 : vector<256xf32>
      %252 = vector.shape_cast %251 : vector<256xi1> to vector<1x256xi1>
      %253 = arith.ori %239, %252 : vector<1x256xi1>
      %254 = vector.broadcast %72 : vector<1x1xf32> to vector<8x1xf32>
      %255 = arith.addf %254, %44 : vector<8x1xf32>
      %256 = arith.fptosi %255 : vector<8x1xf32> to vector<8x1xi32>
      %257 = vector.broadcast %256 : vector<8x1xi32> to vector<8x256xi32>
      %258 = vector.broadcast %30 : vector<1x256xi32> to vector<8x256xi32>
      %259 = arith.cmpi eq, %257, %258 : vector<8x256xi32>
      %cst_94 = arith.constant 1.000000e+00 : f32
      %cst_95 = arith.constant 0.000000e+00 : f32
      %260 = vector.broadcast %cst_94 : f32 to vector<8x256xf32>
      %261 = vector.broadcast %cst_95 : f32 to vector<8x256xf32>
      %262 = arith.select %259, %260, %261 : vector<8x256xi1>, vector<8x256xf32>
      %cst_96 = arith.constant dense<0xFF800000> : vector<256xf32>
      %263 = vector.multi_reduction <maximumf>, %262, %cst_96 [0] : vector<8x256xf32> to vector<256xf32>
      %cst_97 = arith.constant 0.000000e+00 : f32
      %264 = vector.broadcast %cst_97 : f32 to vector<256xf32>
      %265 = arith.cmpf ogt, %263, %264 : vector<256xf32>
      %266 = vector.shape_cast %265 : vector<256xi1> to vector<1x256xi1>
      %267 = arith.ori %253, %266 : vector<1x256xi1>
      %268 = vector.broadcast %72 : vector<1x1xf32> to vector<8x1xf32>
      %269 = arith.addf %268, %45 : vector<8x1xf32>
      %270 = arith.fptosi %269 : vector<8x1xf32> to vector<8x1xi32>
      %271 = vector.broadcast %270 : vector<8x1xi32> to vector<8x256xi32>
      %272 = vector.broadcast %30 : vector<1x256xi32> to vector<8x256xi32>
      %273 = arith.cmpi eq, %271, %272 : vector<8x256xi32>
      %cst_98 = arith.constant 1.000000e+00 : f32
      %cst_99 = arith.constant 0.000000e+00 : f32
      %274 = vector.broadcast %cst_98 : f32 to vector<8x256xf32>
      %275 = vector.broadcast %cst_99 : f32 to vector<8x256xf32>
      %276 = arith.select %273, %274, %275 : vector<8x256xi1>, vector<8x256xf32>
      %cst_100 = arith.constant dense<0xFF800000> : vector<256xf32>
      %277 = vector.multi_reduction <maximumf>, %276, %cst_100 [0] : vector<8x256xf32> to vector<256xf32>
      %cst_101 = arith.constant 0.000000e+00 : f32
      %278 = vector.broadcast %cst_101 : f32 to vector<256xf32>
      %279 = arith.cmpf ogt, %277, %278 : vector<256xf32>
      %280 = vector.shape_cast %279 : vector<256xi1> to vector<1x256xi1>
      %281 = arith.ori %267, %280 : vector<1x256xi1>
      %c0_102 = arith.constant 0 : index
      %c0_103 = arith.constant 0 : index
      %c0_104 = arith.constant 0 : index
      %282 = vector.load %arg9[%c0_102, %c0_103, %c0_104] : memref<1x1x256xf32, #tpu.memory_space<vmem>>, vector<1x1x256xf32>
      %283 = vector.shape_cast %282 : vector<1x1x256xf32> to vector<1x256xf32>
      %cst_105 = arith.constant 1.000000e+00 : f32
      %284 = vector.broadcast %cst_105 : f32 to vector<1x256xf32>
      %285 = arith.select %281, %284, %283 : vector<1x256xi1>, vector<1x256xf32>
      %c0_106 = arith.constant 0 : index
      %c0_107 = arith.constant 0 : index
      %c0_108 = arith.constant 0 : index
      %286 = vector.load %arg9[%c0_106, %c0_107, %c0_108] : memref<1x1x256xf32, #tpu.memory_space<vmem>>, vector<1x1x256xf32>
      %287 = vector.shape_cast %286 : vector<1x1x256xf32> to vector<1x256xf32>
      %288 = vector.shape_cast %285 : vector<1x256xf32> to vector<1x1x256xf32>
      tpu.vector_store %arg9[%c0_106, %c0_107, %c0_108], %288 {strides = array<i32>} : memref<1x1x256xf32, #tpu.memory_space<vmem>>, vector<1x1x256xf32>,
    } else {
    }
    %c1_i32 = arith.constant 1 : i32
    %51 = arith.cmpi sgt, %1, %c1_i32 : i32
    %52 = arith.extui %51 : i1 to i32
    %c0_i32_35 = arith.constant 0 : i32
    %53 = arith.cmpi ne, %52, %c0_i32_35 : i32
    scf.if %53 {
      %72 = vector.extract_strided_slice %47 {offsets = [1, 0], sizes = [1, 1], strides = [1, 1]} : vector<8x1xf32> to vector<1x1xf32>
      %73 = vector.broadcast %72 : vector<1x1xf32> to vector<8x1xf32>
      %74 = arith.addf %73, %31 : vector<8x1xf32>
      %75 = arith.fptosi %74 : vector<8x1xf32> to vector<8x1xi32>
      %76 = vector.broadcast %75 : vector<8x1xi32> to vector<8x256xi32>
      %77 = vector.broadcast %30 : vector<1x256xi32> to vector<8x256xi32>
      %78 = arith.cmpi eq, %76, %77 : vector<8x256xi32>
      %cst_42 = arith.constant 1.000000e+00 : f32
      %cst_43 = arith.constant 0.000000e+00 : f32
      %79 = vector.broadcast %cst_42 : f32 to vector<8x256xf32>
      %80 = vector.broadcast %cst_43 : f32 to vector<8x256xf32>
      %81 = arith.select %78, %79, %80 : vector<8x256xi1>, vector<8x256xf32>
      %cst_44 = arith.constant dense<0xFF800000> : vector<256xf32>
      %82 = vector.multi_reduction <maximumf>, %81, %cst_44 [0] : vector<8x256xf32> to vector<256xf32>
      %cst_45 = arith.constant 0.000000e+00 : f32
      %83 = vector.broadcast %cst_45 : f32 to vector<256xf32>
      %84 = arith.cmpf ogt, %82, %83 : vector<256xf32>
      %85 = vector.shape_cast %84 : vector<256xi1> to vector<1x256xi1>
      %86 = vector.broadcast %72 : vector<1x1xf32> to vector<8x1xf32>
      %87 = arith.addf %86, %32 : vector<8x1xf32>
      %88 = arith.fptosi %87 : vector<8x1xf32> to vector<8x1xi32>
      %89 = vector.broadcast %88 : vector<8x1xi32> to vector<8x256xi32>
      %90 = vector.broadcast %30 : vector<1x256xi32> to vector<8x256xi32>
      %91 = arith.cmpi eq, %89, %90 : vector<8x256xi32>
      %cst_46 = arith.constant 1.000000e+00 : f32
      %cst_47 = arith.constant 0.000000e+00 : f32
      %92 = vector.broadcast %cst_46 : f32 to vector<8x256xf32>
      %93 = vector.broadcast %cst_47 : f32 to vector<8x256xf32>
      %94 = arith.select %91, %92, %93 : vector<8x256xi1>, vector<8x256xf32>
      %cst_48 = arith.constant dense<0xFF800000> : vector<256xf32>
      %95 = vector.multi_reduction <maximumf>, %94, %cst_48 [0] : vector<8x256xf32> to vector<256xf32>
      %cst_49 = arith.constant 0.000000e+00 : f32
      %96 = vector.broadcast %cst_49 : f32 to vector<256xf32>
      %97 = arith.cmpf ogt, %95, %96 : vector<256xf32>
      %98 = vector.shape_cast %97 : vector<256xi1> to vector<1x256xi1>
      %99 = arith.ori %85, %98 : vector<1x256xi1>
      %100 = vector.broadcast %72 : vector<1x1xf32> to vector<8x1xf32>
      %101 = arith.addf %100, %33 : vector<8x1xf32>
      %102 = arith.fptosi %101 : vector<8x1xf32> to vector<8x1xi32>
      %103 = vector.broadcast %102 : vector<8x1xi32> to vector<8x256xi32>
      %104 = vector.broadcast %30 : vector<1x256xi32> to vector<8x256xi32>
      %105 = arith.cmpi eq, %103, %104 : vector<8x256xi32>
      %cst_50 = arith.constant 1.000000e+00 : f32
      %cst_51 = arith.constant 0.000000e+00 : f32
      %106 = vector.broadcast %cst_50 : f32 to vector<8x256xf32>
      %107 = vector.broadcast %cst_51 : f32 to vector<8x256xf32>
      %108 = arith.select %105, %106, %107 : vector<8x256xi1>, vector<8x256xf32>
      %cst_52 = arith.constant dense<0xFF800000> : vector<256xf32>
      %109 = vector.multi_reduction <maximumf>, %108, %cst_52 [0] : vector<8x256xf32> to vector<256xf32>
      %cst_53 = arith.constant 0.000000e+00 : f32
      %110 = vector.broadcast %cst_53 : f32 to vector<256xf32>
      %111 = arith.cmpf ogt, %109, %110 : vector<256xf32>
      %112 = vector.shape_cast %111 : vector<256xi1> to vector<1x256xi1>
      %113 = arith.ori %99, %112 : vector<1x256xi1>
      %114 = vector.broadcast %72 : vector<1x1xf32> to vector<8x1xf32>
      %115 = arith.addf %114, %34 : vector<8x1xf32>
      %116 = arith.fptosi %115 : vector<8x1xf32> to vector<8x1xi32>
      %117 = vector.broadcast %116 : vector<8x1xi32> to vector<8x256xi32>
      %118 = vector.broadcast %30 : vector<1x256xi32> to vector<8x256xi32>
      %119 = arith.cmpi eq, %117, %118 : vector<8x256xi32>
      %cst_54 = arith.constant 1.000000e+00 : f32
      %cst_55 = arith.constant 0.000000e+00 : f32
      %120 = vector.broadcast %cst_54 : f32 to vector<8x256xf32>
      %121 = vector.broadcast %cst_55 : f32 to vector<8x256xf32>
      %122 = arith.select %119, %120, %121 : vector<8x256xi1>, vector<8x256xf32>
      %cst_56 = arith.constant dense<0xFF800000> : vector<256xf32>
      %123 = vector.multi_reduction <maximumf>, %122, %cst_56 [0] : vector<8x256xf32> to vector<256xf32>
      %cst_57 = arith.constant 0.000000e+00 : f32
      %124 = vector.broadcast %cst_57 : f32 to vector<256xf32>
      %125 = arith.cmpf ogt, %123, %124 : vector<256xf32>
      %126 = vector.shape_cast %125 : vector<256xi1> to vector<1x256xi1>
      %127 = arith.ori %113, %126 : vector<1x256xi1>
      %128 = vector.broadcast %72 : vector<1x1xf32> to vector<8x1xf32>
      %129 = arith.addf %128, %35 : vector<8x1xf32>
      %130 = arith.fptosi %129 : vector<8x1xf32> to vector<8x1xi32>
      %131 = vector.broadcast %130 : vector<8x1xi32> to vector<8x256xi32>
      %132 = vector.broadcast %30 : vector<1x256xi32> to vector<8x256xi32>
      %133 = arith.cmpi eq, %131, %132 : vector<8x256xi32>
      %cst_58 = arith.constant 1.000000e+00 : f32
      %cst_59 = arith.constant 0.000000e+00 : f32
      %134 = vector.broadcast %cst_58 : f32 to vector<8x256xf32>
      %135 = vector.broadcast %cst_59 : f32 to vector<8x256xf32>
      %136 = arith.select %133, %134, %135 : vector<8x256xi1>, vector<8x256xf32>
      %cst_60 = arith.constant dense<0xFF800000> : vector<256xf32>
      %137 = vector.multi_reduction <maximumf>, %136, %cst_60 [0] : vector<8x256xf32> to vector<256xf32>
      %cst_61 = arith.constant 0.000000e+00 : f32
      %138 = vector.broadcast %cst_61 : f32 to vector<256xf32>
      %139 = arith.cmpf ogt, %137, %138 : vector<256xf32>
      %140 = vector.shape_cast %139 : vector<256xi1> to vector<1x256xi1>
      %141 = arith.ori %127, %140 : vector<1x256xi1>
      %142 = vector.broadcast %72 : vector<1x1xf32> to vector<8x1xf32>
      %143 = arith.addf %142, %36 : vector<8x1xf32>
      %144 = arith.fptosi %143 : vector<8x1xf32> to vector<8x1xi32>
      %145 = vector.broadcast %144 : vector<8x1xi32> to vector<8x256xi32>
      %146 = vector.broadcast %30 : vector<1x256xi32> to vector<8x256xi32>
      %147 = arith.cmpi eq, %145, %146 : vector<8x256xi32>
      %cst_62 = arith.constant 1.000000e+00 : f32
      %cst_63 = arith.constant 0.000000e+00 : f32
      %148 = vector.broadcast %cst_62 : f32 to vector<8x256xf32>
      %149 = vector.broadcast %cst_63 : f32 to vector<8x256xf32>
      %150 = arith.select %147, %148, %149 : vector<8x256xi1>, vector<8x256xf32>
      %cst_64 = arith.constant dense<0xFF800000> : vector<256xf32>
      %151 = vector.multi_reduction <maximumf>, %150, %cst_64 [0] : vector<8x256xf32> to vector<256xf32>
      %cst_65 = arith.constant 0.000000e+00 : f32
      %152 = vector.broadcast %cst_65 : f32 to vector<256xf32>
      %153 = arith.cmpf ogt, %151, %152 : vector<256xf32>
      %154 = vector.shape_cast %153 : vector<256xi1> to vector<1x256xi1>
      %155 = arith.ori %141, %154 : vector<1x256xi1>
      %156 = vector.broadcast %72 : vector<1x1xf32> to vector<8x1xf32>
      %157 = arith.addf %156, %37 : vector<8x1xf32>
      %158 = arith.fptosi %157 : vector<8x1xf32> to vector<8x1xi32>
      %159 = vector.broadcast %158 : vector<8x1xi32> to vector<8x256xi32>
      %160 = vector.broadcast %30 : vector<1x256xi32> to vector<8x256xi32>
      %161 = arith.cmpi eq, %159, %160 : vector<8x256xi32>
      %cst_66 = arith.constant 1.000000e+00 : f32
      %cst_67 = arith.constant 0.000000e+00 : f32
      %162 = vector.broadcast %cst_66 : f32 to vector<8x256xf32>
      %163 = vector.broadcast %cst_67 : f32 to vector<8x256xf32>
      %164 = arith.select %161, %162, %163 : vector<8x256xi1>, vector<8x256xf32>
      %cst_68 = arith.constant dense<0xFF800000> : vector<256xf32>
      %165 = vector.multi_reduction <maximumf>, %164, %cst_68 [0] : vector<8x256xf32> to vector<256xf32>
      %cst_69 = arith.constant 0.000000e+00 : f32
      %166 = vector.broadcast %cst_69 : f32 to vector<256xf32>
      %167 = arith.cmpf ogt, %165, %166 : vector<256xf32>
      %168 = vector.shape_cast %167 : vector<256xi1> to vector<1x256xi1>
      %169 = arith.ori %155, %168 : vector<1x256xi1>
      %170 = vector.broadcast %72 : vector<1x1xf32> to vector<8x1xf32>
      %171 = arith.addf %170, %38 : vector<8x1xf32>
      %172 = arith.fptosi %171 : vector<8x1xf32> to vector<8x1xi32>
      %173 = vector.broadcast %172 : vector<8x1xi32> to vector<8x256xi32>
      %174 = vector.broadcast %30 : vector<1x256xi32> to vector<8x256xi32>
      %175 = arith.cmpi eq, %173, %174 : vector<8x256xi32>
      %cst_70 = arith.constant 1.000000e+00 : f32
      %cst_71 = arith.constant 0.000000e+00 : f32
      %176 = vector.broadcast %cst_70 : f32 to vector<8x256xf32>
      %177 = vector.broadcast %cst_71 : f32 to vector<8x256xf32>
      %178 = arith.select %175, %176, %177 : vector<8x256xi1>, vector<8x256xf32>
      %cst_72 = arith.constant dense<0xFF800000> : vector<256xf32>
      %179 = vector.multi_reduction <maximumf>, %178, %cst_72 [0] : vector<8x256xf32> to vector<256xf32>
      %cst_73 = arith.constant 0.000000e+00 : f32
      %180 = vector.broadcast %cst_73 : f32 to vector<256xf32>
      %181 = arith.cmpf ogt, %179, %180 : vector<256xf32>
      %182 = vector.shape_cast %181 : vector<256xi1> to vector<1x256xi1>
      %183 = arith.ori %169, %182 : vector<1x256xi1>
      %184 = vector.broadcast %72 : vector<1x1xf32> to vector<8x1xf32>
      %185 = arith.addf %184, %39 : vector<8x1xf32>
      %186 = arith.fptosi %185 : vector<8x1xf32> to vector<8x1xi32>
      %187 = vector.broadcast %186 : vector<8x1xi32> to vector<8x256xi32>
      %188 = vector.broadcast %30 : vector<1x256xi32> to vector<8x256xi32>
      %189 = arith.cmpi eq, %187, %188 : vector<8x256xi32>
      %cst_74 = arith.constant 1.000000e+00 : f32
      %cst_75 = arith.constant 0.000000e+00 : f32
      %190 = vector.broadcast %cst_74 : f32 to vector<8x256xf32>
      %191 = vector.broadcast %cst_75 : f32 to vector<8x256xf32>
      %192 = arith.select %189, %190, %191 : vector<8x256xi1>, vector<8x256xf32>
      %cst_76 = arith.constant dense<0xFF800000> : vector<256xf32>
      %193 = vector.multi_reduction <maximumf>, %192, %cst_76 [0] : vector<8x256xf32> to vector<256xf32>
      %cst_77 = arith.constant 0.000000e+00 : f32
      %194 = vector.broadcast %cst_77 : f32 to vector<256xf32>
      %195 = arith.cmpf ogt, %193, %194 : vector<256xf32>
      %196 = vector.shape_cast %195 : vector<256xi1> to vector<1x256xi1>
      %197 = arith.ori %183, %196 : vector<1x256xi1>
      %198 = vector.broadcast %72 : vector<1x1xf32> to vector<8x1xf32>
      %199 = arith.addf %198, %40 : vector<8x1xf32>
      %200 = arith.fptosi %199 : vector<8x1xf32> to vector<8x1xi32>
      %201 = vector.broadcast %200 : vector<8x1xi32> to vector<8x256xi32>
      %202 = vector.broadcast %30 : vector<1x256xi32> to vector<8x256xi32>
      %203 = arith.cmpi eq, %201, %202 : vector<8x256xi32>
      %cst_78 = arith.constant 1.000000e+00 : f32
      %cst_79 = arith.constant 0.000000e+00 : f32
      %204 = vector.broadcast %cst_78 : f32 to vector<8x256xf32>
      %205 = vector.broadcast %cst_79 : f32 to vector<8x256xf32>
      %206 = arith.select %203, %204, %205 : vector<8x256xi1>, vector<8x256xf32>
      %cst_80 = arith.constant dense<0xFF800000> : vector<256xf32>
      %207 = vector.multi_reduction <maximumf>, %206, %cst_80 [0] : vector<8x256xf32> to vector<256xf32>
      %cst_81 = arith.constant 0.000000e+00 : f32
      %208 = vector.broadcast %cst_81 : f32 to vector<256xf32>
      %209 = arith.cmpf ogt, %207, %208 : vector<256xf32>
      %210 = vector.shape_cast %209 : vector<256xi1> to vector<1x256xi1>
      %211 = arith.ori %197, %210 : vector<1x256xi1>
      %212 = vector.broadcast %72 : vector<1x1xf32> to vector<8x1xf32>
      %213 = arith.addf %212, %41 : vector<8x1xf32>
      %214 = arith.fptosi %213 : vector<8x1xf32> to vector<8x1xi32>
      %215 = vector.broadcast %214 : vector<8x1xi32> to vector<8x256xi32>
      %216 = vector.broadcast %30 : vector<1x256xi32> to vector<8x256xi32>
      %217 = arith.cmpi eq, %215, %216 : vector<8x256xi32>
      %cst_82 = arith.constant 1.000000e+00 : f32
      %cst_83 = arith.constant 0.000000e+00 : f32
      %218 = vector.broadcast %cst_82 : f32 to vector<8x256xf32>
      %219 = vector.broadcast %cst_83 : f32 to vector<8x256xf32>
      %220 = arith.select %217, %218, %219 : vector<8x256xi1>, vector<8x256xf32>
      %cst_84 = arith.constant dense<0xFF800000> : vector<256xf32>
      %221 = vector.multi_reduction <maximumf>, %220, %cst_84 [0] : vector<8x256xf32> to vector<256xf32>
      %cst_85 = arith.constant 0.000000e+00 : f32
      %222 = vector.broadcast %cst_85 : f32 to vector<256xf32>
      %223 = arith.cmpf ogt, %221, %222 : vector<256xf32>
      %224 = vector.shape_cast %223 : vector<256xi1> to vector<1x256xi1>
      %225 = arith.ori %211, %224 : vector<1x256xi1>
      %226 = vector.broadcast %72 : vector<1x1xf32> to vector<8x1xf32>
      %227 = arith.addf %226, %42 : vector<8x1xf32>
      %228 = arith.fptosi %227 : vector<8x1xf32> to vector<8x1xi32>
      %229 = vector.broadcast %228 : vector<8x1xi32> to vector<8x256xi32>
      %230 = vector.broadcast %30 : vector<1x256xi32> to vector<8x256xi32>
      %231 = arith.cmpi eq, %229, %230 : vector<8x256xi32>
      %cst_86 = arith.constant 1.000000e+00 : f32
      %cst_87 = arith.constant 0.000000e+00 : f32
      %232 = vector.broadcast %cst_86 : f32 to vector<8x256xf32>
      %233 = vector.broadcast %cst_87 : f32 to vector<8x256xf32>
      %234 = arith.select %231, %232, %233 : vector<8x256xi1>, vector<8x256xf32>
      %cst_88 = arith.constant dense<0xFF800000> : vector<256xf32>
      %235 = vector.multi_reduction <maximumf>, %234, %cst_88 [0] : vector<8x256xf32> to vector<256xf32>
      %cst_89 = arith.constant 0.000000e+00 : f32
      %236 = vector.broadcast %cst_89 : f32 to vector<256xf32>
      %237 = arith.cmpf ogt, %235, %236 : vector<256xf32>
      %238 = vector.shape_cast %237 : vector<256xi1> to vector<1x256xi1>
      %239 = arith.ori %225, %238 : vector<1x256xi1>
      %240 = vector.broadcast %72 : vector<1x1xf32> to vector<8x1xf32>
      %241 = arith.addf %240, %43 : vector<8x1xf32>
      %242 = arith.fptosi %241 : vector<8x1xf32> to vector<8x1xi32>
      %243 = vector.broadcast %242 : vector<8x1xi32> to vector<8x256xi32>
      %244 = vector.broadcast %30 : vector<1x256xi32> to vector<8x256xi32>
      %245 = arith.cmpi eq, %243, %244 : vector<8x256xi32>
      %cst_90 = arith.constant 1.000000e+00 : f32
      %cst_91 = arith.constant 0.000000e+00 : f32
      %246 = vector.broadcast %cst_90 : f32 to vector<8x256xf32>
      %247 = vector.broadcast %cst_91 : f32 to vector<8x256xf32>
      %248 = arith.select %245, %246, %247 : vector<8x256xi1>, vector<8x256xf32>
      %cst_92 = arith.constant dense<0xFF800000> : vector<256xf32>
      %249 = vector.multi_reduction <maximumf>, %248, %cst_92 [0] : vector<8x256xf32> to vector<256xf32>
      %cst_93 = arith.constant 0.000000e+00 : f32
      %250 = vector.broadcast %cst_93 : f32 to vector<256xf32>
      %251 = arith.cmpf ogt, %249, %250 : vector<256xf32>
      %252 = vector.shape_cast %251 : vector<256xi1> to vector<1x256xi1>
      %253 = arith.ori %239, %252 : vector<1x256xi1>
      %254 = vector.broadcast %72 : vector<1x1xf32> to vector<8x1xf32>
      %255 = arith.addf %254, %44 : vector<8x1xf32>
      %256 = arith.fptosi %255 : vector<8x1xf32> to vector<8x1xi32>
      %257 = vector.broadcast %256 : vector<8x1xi32> to vector<8x256xi32>
      %258 = vector.broadcast %30 : vector<1x256xi32> to vector<8x256xi32>
      %259 = arith.cmpi eq, %257, %258 : vector<8x256xi32>
      %cst_94 = arith.constant 1.000000e+00 : f32
      %cst_95 = arith.constant 0.000000e+00 : f32
      %260 = vector.broadcast %cst_94 : f32 to vector<8x256xf32>
      %261 = vector.broadcast %cst_95 : f32 to vector<8x256xf32>
      %262 = arith.select %259, %260, %261 : vector<8x256xi1>, vector<8x256xf32>
      %cst_96 = arith.constant dense<0xFF800000> : vector<256xf32>
      %263 = vector.multi_reduction <maximumf>, %262, %cst_96 [0] : vector<8x256xf32> to vector<256xf32>
      %cst_97 = arith.constant 0.000000e+00 : f32
      %264 = vector.broadcast %cst_97 : f32 to vector<256xf32>
      %265 = arith.cmpf ogt, %263, %264 : vector<256xf32>
      %266 = vector.shape_cast %265 : vector<256xi1> to vector<1x256xi1>
      %267 = arith.ori %253, %266 : vector<1x256xi1>
      %268 = vector.broadcast %72 : vector<1x1xf32> to vector<8x1xf32>
      %269 = arith.addf %268, %45 : vector<8x1xf32>
      %270 = arith.fptosi %269 : vector<8x1xf32> to vector<8x1xi32>
      %271 = vector.broadcast %270 : vector<8x1xi32> to vector<8x256xi32>
      %272 = vector.broadcast %30 : vector<1x256xi32> to vector<8x256xi32>
      %273 = arith.cmpi eq, %271, %272 : vector<8x256xi32>
      %cst_98 = arith.constant 1.000000e+00 : f32
      %cst_99 = arith.constant 0.000000e+00 : f32
      %274 = vector.broadcast %cst_98 : f32 to vector<8x256xf32>
      %275 = vector.broadcast %cst_99 : f32 to vector<8x256xf32>
      %276 = arith.select %273, %274, %275 : vector<8x256xi1>, vector<8x256xf32>
      %cst_100 = arith.constant dense<0xFF800000> : vector<256xf32>
      %277 = vector.multi_reduction <maximumf>, %276, %cst_100 [0] : vector<8x256xf32> to vector<256xf32>
      %cst_101 = arith.constant 0.000000e+00 : f32
      %278 = vector.broadcast %cst_101 : f32 to vector<256xf32>
      %279 = arith.cmpf ogt, %277, %278 : vector<256xf32>
      %280 = vector.shape_cast %279 : vector<256xi1> to vector<1x256xi1>
      %281 = arith.ori %267, %280 : vector<1x256xi1>
      %c0_102 = arith.constant 0 : index
      %c0_103 = arith.constant 0 : index
      %c0_104 = arith.constant 0 : index
      %282 = vector.load %arg9[%c0_102, %c0_103, %c0_104] : memref<1x1x256xf32, #tpu.memory_space<vmem>>, vector<1x1x256xf32>
      %283 = vector.shape_cast %282 : vector<1x1x256xf32> to vector<1x256xf32>
      %cst_105 = arith.constant 1.000000e+00 : f32
      %284 = vector.broadcast %cst_105 : f32 to vector<1x256xf32>
      %285 = arith.select %281, %284, %283 : vector<1x256xi1>, vector<1x256xf32>
      %c0_106 = arith.constant 0 : index
      %c0_107 = arith.constant 0 : index
      %c0_108 = arith.constant 0 : index
      %286 = vector.load %arg9[%c0_106, %c0_107, %c0_108] : memref<1x1x256xf32, #tpu.memory_space<vmem>>, vector<1x1x256xf32>
      %287 = vector.shape_cast %286 : vector<1x1x256xf32> to vector<1x256xf32>
      %288 = vector.shape_cast %285 : vector<1x256xf32> to vector<1x1x256xf32>
      tpu.vector_store %arg9[%c0_106, %c0_107, %c0_108], %288 {strides = array<i32>} : memref<1x1x256xf32, #tpu.memory_space<vmem>>, vector<1x1x256xf32>,
    } else {
    }
    %c2_i32 = arith.constant 2 : i32
    %54 = arith.cmpi sgt, %1, %c2_i32 : i32
    %55 = arith.extui %54 : i1 to i32
    %c0_i32_36 = arith.constant 0 : i32
    %56 = arith.cmpi ne, %55, %c0_i32_36 : i32
    scf.if %56 {
      %72 = vector.extract_strided_slice %47 {offsets = [2, 0], sizes = [1, 1], strides = [1, 1]} : vector<8x1xf32> to vector<1x1xf32>
      %73 = vector.broadcast %72 : vector<1x1xf32> to vector<8x1xf32>
      %74 = arith.addf %73, %31 : vector<8x1xf32>
      %75 = arith.fptosi %74 : vector<8x1xf32> to vector<8x1xi32>
      %76 = vector.broadcast %75 : vector<8x1xi32> to vector<8x256xi32>
      %77 = vector.broadcast %30 : vector<1x256xi32> to vector<8x256xi32>
      %78 = arith.cmpi eq, %76, %77 : vector<8x256xi32>
      %cst_42 = arith.constant 1.000000e+00 : f32
      %cst_43 = arith.constant 0.000000e+00 : f32
      %79 = vector.broadcast %cst_42 : f32 to vector<8x256xf32>
      %80 = vector.broadcast %cst_43 : f32 to vector<8x256xf32>
      %81 = arith.select %78, %79, %80 : vector<8x256xi1>, vector<8x256xf32>
      %cst_44 = arith.constant dense<0xFF800000> : vector<256xf32>
      %82 = vector.multi_reduction <maximumf>, %81, %cst_44 [0] : vector<8x256xf32> to vector<256xf32>
      %cst_45 = arith.constant 0.000000e+00 : f32
      %83 = vector.broadcast %cst_45 : f32 to vector<256xf32>
      %84 = arith.cmpf ogt, %82, %83 : vector<256xf32>
      %85 = vector.shape_cast %84 : vector<256xi1> to vector<1x256xi1>
      %86 = vector.broadcast %72 : vector<1x1xf32> to vector<8x1xf32>
      %87 = arith.addf %86, %32 : vector<8x1xf32>
      %88 = arith.fptosi %87 : vector<8x1xf32> to vector<8x1xi32>
      %89 = vector.broadcast %88 : vector<8x1xi32> to vector<8x256xi32>
      %90 = vector.broadcast %30 : vector<1x256xi32> to vector<8x256xi32>
      %91 = arith.cmpi eq, %89, %90 : vector<8x256xi32>
      %cst_46 = arith.constant 1.000000e+00 : f32
      %cst_47 = arith.constant 0.000000e+00 : f32
      %92 = vector.broadcast %cst_46 : f32 to vector<8x256xf32>
      %93 = vector.broadcast %cst_47 : f32 to vector<8x256xf32>
      %94 = arith.select %91, %92, %93 : vector<8x256xi1>, vector<8x256xf32>
      %cst_48 = arith.constant dense<0xFF800000> : vector<256xf32>
      %95 = vector.multi_reduction <maximumf>, %94, %cst_48 [0] : vector<8x256xf32> to vector<256xf32>
      %cst_49 = arith.constant 0.000000e+00 : f32
      %96 = vector.broadcast %cst_49 : f32 to vector<256xf32>
      %97 = arith.cmpf ogt, %95, %96 : vector<256xf32>
      %98 = vector.shape_cast %97 : vector<256xi1> to vector<1x256xi1>
      %99 = arith.ori %85, %98 : vector<1x256xi1>
      %100 = vector.broadcast %72 : vector<1x1xf32> to vector<8x1xf32>
      %101 = arith.addf %100, %33 : vector<8x1xf32>
      %102 = arith.fptosi %101 : vector<8x1xf32> to vector<8x1xi32>
      %103 = vector.broadcast %102 : vector<8x1xi32> to vector<8x256xi32>
      %104 = vector.broadcast %30 : vector<1x256xi32> to vector<8x256xi32>
      %105 = arith.cmpi eq, %103, %104 : vector<8x256xi32>
      %cst_50 = arith.constant 1.000000e+00 : f32
      %cst_51 = arith.constant 0.000000e+00 : f32
      %106 = vector.broadcast %cst_50 : f32 to vector<8x256xf32>
      %107 = vector.broadcast %cst_51 : f32 to vector<8x256xf32>
      %108 = arith.select %105, %106, %107 : vector<8x256xi1>, vector<8x256xf32>
      %cst_52 = arith.constant dense<0xFF800000> : vector<256xf32>
      %109 = vector.multi_reduction <maximumf>, %108, %cst_52 [0] : vector<8x256xf32> to vector<256xf32>
      %cst_53 = arith.constant 0.000000e+00 : f32
      %110 = vector.broadcast %cst_53 : f32 to vector<256xf32>
      %111 = arith.cmpf ogt, %109, %110 : vector<256xf32>
      %112 = vector.shape_cast %111 : vector<256xi1> to vector<1x256xi1>
      %113 = arith.ori %99, %112 : vector<1x256xi1>
      %114 = vector.broadcast %72 : vector<1x1xf32> to vector<8x1xf32>
      %115 = arith.addf %114, %34 : vector<8x1xf32>
      %116 = arith.fptosi %115 : vector<8x1xf32> to vector<8x1xi32>
      %117 = vector.broadcast %116 : vector<8x1xi32> to vector<8x256xi32>
      %118 = vector.broadcast %30 : vector<1x256xi32> to vector<8x256xi32>
      %119 = arith.cmpi eq, %117, %118 : vector<8x256xi32>
      %cst_54 = arith.constant 1.000000e+00 : f32
      %cst_55 = arith.constant 0.000000e+00 : f32
      %120 = vector.broadcast %cst_54 : f32 to vector<8x256xf32>
      %121 = vector.broadcast %cst_55 : f32 to vector<8x256xf32>
      %122 = arith.select %119, %120, %121 : vector<8x256xi1>, vector<8x256xf32>
      %cst_56 = arith.constant dense<0xFF800000> : vector<256xf32>
      %123 = vector.multi_reduction <maximumf>, %122, %cst_56 [0] : vector<8x256xf32> to vector<256xf32>
      %cst_57 = arith.constant 0.000000e+00 : f32
      %124 = vector.broadcast %cst_57 : f32 to vector<256xf32>
      %125 = arith.cmpf ogt, %123, %124 : vector<256xf32>
      %126 = vector.shape_cast %125 : vector<256xi1> to vector<1x256xi1>
      %127 = arith.ori %113, %126 : vector<1x256xi1>
      %128 = vector.broadcast %72 : vector<1x1xf32> to vector<8x1xf32>
      %129 = arith.addf %128, %35 : vector<8x1xf32>
      %130 = arith.fptosi %129 : vector<8x1xf32> to vector<8x1xi32>
      %131 = vector.broadcast %130 : vector<8x1xi32> to vector<8x256xi32>
      %132 = vector.broadcast %30 : vector<1x256xi32> to vector<8x256xi32>
      %133 = arith.cmpi eq, %131, %132 : vector<8x256xi32>
      %cst_58 = arith.constant 1.000000e+00 : f32
      %cst_59 = arith.constant 0.000000e+00 : f32
      %134 = vector.broadcast %cst_58 : f32 to vector<8x256xf32>
      %135 = vector.broadcast %cst_59 : f32 to vector<8x256xf32>
      %136 = arith.select %133, %134, %135 : vector<8x256xi1>, vector<8x256xf32>
      %cst_60 = arith.constant dense<0xFF800000> : vector<256xf32>
      %137 = vector.multi_reduction <maximumf>, %136, %cst_60 [0] : vector<8x256xf32> to vector<256xf32>
      %cst_61 = arith.constant 0.000000e+00 : f32
      %138 = vector.broadcast %cst_61 : f32 to vector<256xf32>
      %139 = arith.cmpf ogt, %137, %138 : vector<256xf32>
      %140 = vector.shape_cast %139 : vector<256xi1> to vector<1x256xi1>
      %141 = arith.ori %127, %140 : vector<1x256xi1>
      %142 = vector.broadcast %72 : vector<1x1xf32> to vector<8x1xf32>
      %143 = arith.addf %142, %36 : vector<8x1xf32>
      %144 = arith.fptosi %143 : vector<8x1xf32> to vector<8x1xi32>
      %145 = vector.broadcast %144 : vector<8x1xi32> to vector<8x256xi32>
      %146 = vector.broadcast %30 : vector<1x256xi32> to vector<8x256xi32>
      %147 = arith.cmpi eq, %145, %146 : vector<8x256xi32>
      %cst_62 = arith.constant 1.000000e+00 : f32
      %cst_63 = arith.constant 0.000000e+00 : f32
      %148 = vector.broadcast %cst_62 : f32 to vector<8x256xf32>
      %149 = vector.broadcast %cst_63 : f32 to vector<8x256xf32>
      %150 = arith.select %147, %148, %149 : vector<8x256xi1>, vector<8x256xf32>
      %cst_64 = arith.constant dense<0xFF800000> : vector<256xf32>
      %151 = vector.multi_reduction <maximumf>, %150, %cst_64 [0] : vector<8x256xf32> to vector<256xf32>
      %cst_65 = arith.constant 0.000000e+00 : f32
      %152 = vector.broadcast %cst_65 : f32 to vector<256xf32>
      %153 = arith.cmpf ogt, %151, %152 : vector<256xf32>
      %154 = vector.shape_cast %153 : vector<256xi1> to vector<1x256xi1>
      %155 = arith.ori %141, %154 : vector<1x256xi1>
      %156 = vector.broadcast %72 : vector<1x1xf32> to vector<8x1xf32>
      %157 = arith.addf %156, %37 : vector<8x1xf32>
      %158 = arith.fptosi %157 : vector<8x1xf32> to vector<8x1xi32>
      %159 = vector.broadcast %158 : vector<8x1xi32> to vector<8x256xi32>
      %160 = vector.broadcast %30 : vector<1x256xi32> to vector<8x256xi32>
      %161 = arith.cmpi eq, %159, %160 : vector<8x256xi32>
      %cst_66 = arith.constant 1.000000e+00 : f32
      %cst_67 = arith.constant 0.000000e+00 : f32
      %162 = vector.broadcast %cst_66 : f32 to vector<8x256xf32>
      %163 = vector.broadcast %cst_67 : f32 to vector<8x256xf32>
      %164 = arith.select %161, %162, %163 : vector<8x256xi1>, vector<8x256xf32>
      %cst_68 = arith.constant dense<0xFF800000> : vector<256xf32>
      %165 = vector.multi_reduction <maximumf>, %164, %cst_68 [0] : vector<8x256xf32> to vector<256xf32>
      %cst_69 = arith.constant 0.000000e+00 : f32
      %166 = vector.broadcast %cst_69 : f32 to vector<256xf32>
      %167 = arith.cmpf ogt, %165, %166 : vector<256xf32>
      %168 = vector.shape_cast %167 : vector<256xi1> to vector<1x256xi1>
      %169 = arith.ori %155, %168 : vector<1x256xi1>
      %170 = vector.broadcast %72 : vector<1x1xf32> to vector<8x1xf32>
      %171 = arith.addf %170, %38 : vector<8x1xf32>
      %172 = arith.fptosi %171 : vector<8x1xf32> to vector<8x1xi32>
      %173 = vector.broadcast %172 : vector<8x1xi32> to vector<8x256xi32>
      %174 = vector.broadcast %30 : vector<1x256xi32> to vector<8x256xi32>
      %175 = arith.cmpi eq, %173, %174 : vector<8x256xi32>
      %cst_70 = arith.constant 1.000000e+00 : f32
      %cst_71 = arith.constant 0.000000e+00 : f32
      %176 = vector.broadcast %cst_70 : f32 to vector<8x256xf32>
      %177 = vector.broadcast %cst_71 : f32 to vector<8x256xf32>
      %178 = arith.select %175, %176, %177 : vector<8x256xi1>, vector<8x256xf32>
      %cst_72 = arith.constant dense<0xFF800000> : vector<256xf32>
      %179 = vector.multi_reduction <maximumf>, %178, %cst_72 [0] : vector<8x256xf32> to vector<256xf32>
      %cst_73 = arith.constant 0.000000e+00 : f32
      %180 = vector.broadcast %cst_73 : f32 to vector<256xf32>
      %181 = arith.cmpf ogt, %179, %180 : vector<256xf32>
      %182 = vector.shape_cast %181 : vector<256xi1> to vector<1x256xi1>
      %183 = arith.ori %169, %182 : vector<1x256xi1>
      %184 = vector.broadcast %72 : vector<1x1xf32> to vector<8x1xf32>
      %185 = arith.addf %184, %39 : vector<8x1xf32>
      %186 = arith.fptosi %185 : vector<8x1xf32> to vector<8x1xi32>
      %187 = vector.broadcast %186 : vector<8x1xi32> to vector<8x256xi32>
      %188 = vector.broadcast %30 : vector<1x256xi32> to vector<8x256xi32>
      %189 = arith.cmpi eq, %187, %188 : vector<8x256xi32>
      %cst_74 = arith.constant 1.000000e+00 : f32
      %cst_75 = arith.constant 0.000000e+00 : f32
      %190 = vector.broadcast %cst_74 : f32 to vector<8x256xf32>
      %191 = vector.broadcast %cst_75 : f32 to vector<8x256xf32>
      %192 = arith.select %189, %190, %191 : vector<8x256xi1>, vector<8x256xf32>
      %cst_76 = arith.constant dense<0xFF800000> : vector<256xf32>
      %193 = vector.multi_reduction <maximumf>, %192, %cst_76 [0] : vector<8x256xf32> to vector<256xf32>
      %cst_77 = arith.constant 0.000000e+00 : f32
      %194 = vector.broadcast %cst_77 : f32 to vector<256xf32>
      %195 = arith.cmpf ogt, %193, %194 : vector<256xf32>
      %196 = vector.shape_cast %195 : vector<256xi1> to vector<1x256xi1>
      %197 = arith.ori %183, %196 : vector<1x256xi1>
      %198 = vector.broadcast %72 : vector<1x1xf32> to vector<8x1xf32>
      %199 = arith.addf %198, %40 : vector<8x1xf32>
      %200 = arith.fptosi %199 : vector<8x1xf32> to vector<8x1xi32>
      %201 = vector.broadcast %200 : vector<8x1xi32> to vector<8x256xi32>
      %202 = vector.broadcast %30 : vector<1x256xi32> to vector<8x256xi32>
      %203 = arith.cmpi eq, %201, %202 : vector<8x256xi32>
      %cst_78 = arith.constant 1.000000e+00 : f32
      %cst_79 = arith.constant 0.000000e+00 : f32
      %204 = vector.broadcast %cst_78 : f32 to vector<8x256xf32>
      %205 = vector.broadcast %cst_79 : f32 to vector<8x256xf32>
      %206 = arith.select %203, %204, %205 : vector<8x256xi1>, vector<8x256xf32>
      %cst_80 = arith.constant dense<0xFF800000> : vector<256xf32>
      %207 = vector.multi_reduction <maximumf>, %206, %cst_80 [0] : vector<8x256xf32> to vector<256xf32>
      %cst_81 = arith.constant 0.000000e+00 : f32
      %208 = vector.broadcast %cst_81 : f32 to vector<256xf32>
      %209 = arith.cmpf ogt, %207, %208 : vector<256xf32>
      %210 = vector.shape_cast %209 : vector<256xi1> to vector<1x256xi1>
      %211 = arith.ori %197, %210 : vector<1x256xi1>
      %212 = vector.broadcast %72 : vector<1x1xf32> to vector<8x1xf32>
      %213 = arith.addf %212, %41 : vector<8x1xf32>
      %214 = arith.fptosi %213 : vector<8x1xf32> to vector<8x1xi32>
      %215 = vector.broadcast %214 : vector<8x1xi32> to vector<8x256xi32>
      %216 = vector.broadcast %30 : vector<1x256xi32> to vector<8x256xi32>
      %217 = arith.cmpi eq, %215, %216 : vector<8x256xi32>
      %cst_82 = arith.constant 1.000000e+00 : f32
      %cst_83 = arith.constant 0.000000e+00 : f32
      %218 = vector.broadcast %cst_82 : f32 to vector<8x256xf32>
      %219 = vector.broadcast %cst_83 : f32 to vector<8x256xf32>
      %220 = arith.select %217, %218, %219 : vector<8x256xi1>, vector<8x256xf32>
      %cst_84 = arith.constant dense<0xFF800000> : vector<256xf32>
      %221 = vector.multi_reduction <maximumf>, %220, %cst_84 [0] : vector<8x256xf32> to vector<256xf32>
      %cst_85 = arith.constant 0.000000e+00 : f32
      %222 = vector.broadcast %cst_85 : f32 to vector<256xf32>
      %223 = arith.cmpf ogt, %221, %222 : vector<256xf32>
      %224 = vector.shape_cast %223 : vector<256xi1> to vector<1x256xi1>
      %225 = arith.ori %211, %224 : vector<1x256xi1>
      %226 = vector.broadcast %72 : vector<1x1xf32> to vector<8x1xf32>
      %227 = arith.addf %226, %42 : vector<8x1xf32>
      %228 = arith.fptosi %227 : vector<8x1xf32> to vector<8x1xi32>
      %229 = vector.broadcast %228 : vector<8x1xi32> to vector<8x256xi32>
      %230 = vector.broadcast %30 : vector<1x256xi32> to vector<8x256xi32>
      %231 = arith.cmpi eq, %229, %230 : vector<8x256xi32>
      %cst_86 = arith.constant 1.000000e+00 : f32
      %cst_87 = arith.constant 0.000000e+00 : f32
      %232 = vector.broadcast %cst_86 : f32 to vector<8x256xf32>
      %233 = vector.broadcast %cst_87 : f32 to vector<8x256xf32>
      %234 = arith.select %231, %232, %233 : vector<8x256xi1>, vector<8x256xf32>
      %cst_88 = arith.constant dense<0xFF800000> : vector<256xf32>
      %235 = vector.multi_reduction <maximumf>, %234, %cst_88 [0] : vector<8x256xf32> to vector<256xf32>
      %cst_89 = arith.constant 0.000000e+00 : f32
      %236 = vector.broadcast %cst_89 : f32 to vector<256xf32>
      %237 = arith.cmpf ogt, %235, %236 : vector<256xf32>
      %238 = vector.shape_cast %237 : vector<256xi1> to vector<1x256xi1>
      %239 = arith.ori %225, %238 : vector<1x256xi1>
      %240 = vector.broadcast %72 : vector<1x1xf32> to vector<8x1xf32>
      %241 = arith.addf %240, %43 : vector<8x1xf32>
      %242 = arith.fptosi %241 : vector<8x1xf32> to vector<8x1xi32>
      %243 = vector.broadcast %242 : vector<8x1xi32> to vector<8x256xi32>
      %244 = vector.broadcast %30 : vector<1x256xi32> to vector<8x256xi32>
      %245 = arith.cmpi eq, %243, %244 : vector<8x256xi32>
      %cst_90 = arith.constant 1.000000e+00 : f32
      %cst_91 = arith.constant 0.000000e+00 : f32
      %246 = vector.broadcast %cst_90 : f32 to vector<8x256xf32>
      %247 = vector.broadcast %cst_91 : f32 to vector<8x256xf32>
      %248 = arith.select %245, %246, %247 : vector<8x256xi1>, vector<8x256xf32>
      %cst_92 = arith.constant dense<0xFF800000> : vector<256xf32>
      %249 = vector.multi_reduction <maximumf>, %248, %cst_92 [0] : vector<8x256xf32> to vector<256xf32>
      %cst_93 = arith.constant 0.000000e+00 : f32
      %250 = vector.broadcast %cst_93 : f32 to vector<256xf32>
      %251 = arith.cmpf ogt, %249, %250 : vector<256xf32>
      %252 = vector.shape_cast %251 : vector<256xi1> to vector<1x256xi1>
      %253 = arith.ori %239, %252 : vector<1x256xi1>
      %254 = vector.broadcast %72 : vector<1x1xf32> to vector<8x1xf32>
      %255 = arith.addf %254, %44 : vector<8x1xf32>
      %256 = arith.fptosi %255 : vector<8x1xf32> to vector<8x1xi32>
      %257 = vector.broadcast %256 : vector<8x1xi32> to vector<8x256xi32>
      %258 = vector.broadcast %30 : vector<1x256xi32> to vector<8x256xi32>
      %259 = arith.cmpi eq, %257, %258 : vector<8x256xi32>
      %cst_94 = arith.constant 1.000000e+00 : f32
      %cst_95 = arith.constant 0.000000e+00 : f32
      %260 = vector.broadcast %cst_94 : f32 to vector<8x256xf32>
      %261 = vector.broadcast %cst_95 : f32 to vector<8x256xf32>
      %262 = arith.select %259, %260, %261 : vector<8x256xi1>, vector<8x256xf32>
      %cst_96 = arith.constant dense<0xFF800000> : vector<256xf32>
      %263 = vector.multi_reduction <maximumf>, %262, %cst_96 [0] : vector<8x256xf32> to vector<256xf32>
      %cst_97 = arith.constant 0.000000e+00 : f32
      %264 = vector.broadcast %cst_97 : f32 to vector<256xf32>
      %265 = arith.cmpf ogt, %263, %264 : vector<256xf32>
      %266 = vector.shape_cast %265 : vector<256xi1> to vector<1x256xi1>
      %267 = arith.ori %253, %266 : vector<1x256xi1>
      %268 = vector.broadcast %72 : vector<1x1xf32> to vector<8x1xf32>
      %269 = arith.addf %268, %45 : vector<8x1xf32>
      %270 = arith.fptosi %269 : vector<8x1xf32> to vector<8x1xi32>
      %271 = vector.broadcast %270 : vector<8x1xi32> to vector<8x256xi32>
      %272 = vector.broadcast %30 : vector<1x256xi32> to vector<8x256xi32>
      %273 = arith.cmpi eq, %271, %272 : vector<8x256xi32>
      %cst_98 = arith.constant 1.000000e+00 : f32
      %cst_99 = arith.constant 0.000000e+00 : f32
      %274 = vector.broadcast %cst_98 : f32 to vector<8x256xf32>
      %275 = vector.broadcast %cst_99 : f32 to vector<8x256xf32>
      %276 = arith.select %273, %274, %275 : vector<8x256xi1>, vector<8x256xf32>
      %cst_100 = arith.constant dense<0xFF800000> : vector<256xf32>
      %277 = vector.multi_reduction <maximumf>, %276, %cst_100 [0] : vector<8x256xf32> to vector<256xf32>
      %cst_101 = arith.constant 0.000000e+00 : f32
      %278 = vector.broadcast %cst_101 : f32 to vector<256xf32>
      %279 = arith.cmpf ogt, %277, %278 : vector<256xf32>
      %280 = vector.shape_cast %279 : vector<256xi1> to vector<1x256xi1>
      %281 = arith.ori %267, %280 : vector<1x256xi1>
      %c0_102 = arith.constant 0 : index
      %c0_103 = arith.constant 0 : index
      %c0_104 = arith.constant 0 : index
      %282 = vector.load %arg9[%c0_102, %c0_103, %c0_104] : memref<1x1x256xf32, #tpu.memory_space<vmem>>, vector<1x1x256xf32>
      %283 = vector.shape_cast %282 : vector<1x1x256xf32> to vector<1x256xf32>
      %cst_105 = arith.constant 1.000000e+00 : f32
      %284 = vector.broadcast %cst_105 : f32 to vector<1x256xf32>
      %285 = arith.select %281, %284, %283 : vector<1x256xi1>, vector<1x256xf32>
      %c0_106 = arith.constant 0 : index
      %c0_107 = arith.constant 0 : index
      %c0_108 = arith.constant 0 : index
      %286 = vector.load %arg9[%c0_106, %c0_107, %c0_108] : memref<1x1x256xf32, #tpu.memory_space<vmem>>, vector<1x1x256xf32>
      %287 = vector.shape_cast %286 : vector<1x1x256xf32> to vector<1x256xf32>
      %288 = vector.shape_cast %285 : vector<1x256xf32> to vector<1x1x256xf32>
      tpu.vector_store %arg9[%c0_106, %c0_107, %c0_108], %288 {strides = array<i32>} : memref<1x1x256xf32, #tpu.memory_space<vmem>>, vector<1x1x256xf32>,
    } else {
    }
    %c3_i32 = arith.constant 3 : i32
    %57 = arith.cmpi sgt, %1, %c3_i32 : i32
    %58 = arith.extui %57 : i1 to i32
    %c0_i32_37 = arith.constant 0 : i32
    %59 = arith.cmpi ne, %58, %c0_i32_37 : i32
    scf.if %59 {
      %72 = vector.extract_strided_slice %47 {offsets = [3, 0], sizes = [1, 1], strides = [1, 1]} : vector<8x1xf32> to vector<1x1xf32>
      %73 = vector.broadcast %72 : vector<1x1xf32> to vector<8x1xf32>
      %74 = arith.addf %73, %31 : vector<8x1xf32>
      %75 = arith.fptosi %74 : vector<8x1xf32> to vector<8x1xi32>
      %76 = vector.broadcast %75 : vector<8x1xi32> to vector<8x256xi32>
      %77 = vector.broadcast %30 : vector<1x256xi32> to vector<8x256xi32>
      %78 = arith.cmpi eq, %76, %77 : vector<8x256xi32>
      %cst_42 = arith.constant 1.000000e+00 : f32
      %cst_43 = arith.constant 0.000000e+00 : f32
      %79 = vector.broadcast %cst_42 : f32 to vector<8x256xf32>
      %80 = vector.broadcast %cst_43 : f32 to vector<8x256xf32>
      %81 = arith.select %78, %79, %80 : vector<8x256xi1>, vector<8x256xf32>
      %cst_44 = arith.constant dense<0xFF800000> : vector<256xf32>
      %82 = vector.multi_reduction <maximumf>, %81, %cst_44 [0] : vector<8x256xf32> to vector<256xf32>
      %cst_45 = arith.constant 0.000000e+00 : f32
      %83 = vector.broadcast %cst_45 : f32 to vector<256xf32>
      %84 = arith.cmpf ogt, %82, %83 : vector<256xf32>
      %85 = vector.shape_cast %84 : vector<256xi1> to vector<1x256xi1>
      %86 = vector.broadcast %72 : vector<1x1xf32> to vector<8x1xf32>
      %87 = arith.addf %86, %32 : vector<8x1xf32>
      %88 = arith.fptosi %87 : vector<8x1xf32> to vector<8x1xi32>
      %89 = vector.broadcast %88 : vector<8x1xi32> to vector<8x256xi32>
      %90 = vector.broadcast %30 : vector<1x256xi32> to vector<8x256xi32>
      %91 = arith.cmpi eq, %89, %90 : vector<8x256xi32>
      %cst_46 = arith.constant 1.000000e+00 : f32
      %cst_47 = arith.constant 0.000000e+00 : f32
      %92 = vector.broadcast %cst_46 : f32 to vector<8x256xf32>
      %93 = vector.broadcast %cst_47 : f32 to vector<8x256xf32>
      %94 = arith.select %91, %92, %93 : vector<8x256xi1>, vector<8x256xf32>
      %cst_48 = arith.constant dense<0xFF800000> : vector<256xf32>
      %95 = vector.multi_reduction <maximumf>, %94, %cst_48 [0] : vector<8x256xf32> to vector<256xf32>
      %cst_49 = arith.constant 0.000000e+00 : f32
      %96 = vector.broadcast %cst_49 : f32 to vector<256xf32>
      %97 = arith.cmpf ogt, %95, %96 : vector<256xf32>
      %98 = vector.shape_cast %97 : vector<256xi1> to vector<1x256xi1>
      %99 = arith.ori %85, %98 : vector<1x256xi1>
      %100 = vector.broadcast %72 : vector<1x1xf32> to vector<8x1xf32>
      %101 = arith.addf %100, %33 : vector<8x1xf32>
      %102 = arith.fptosi %101 : vector<8x1xf32> to vector<8x1xi32>
      %103 = vector.broadcast %102 : vector<8x1xi32> to vector<8x256xi32>
      %104 = vector.broadcast %30 : vector<1x256xi32> to vector<8x256xi32>
      %105 = arith.cmpi eq, %103, %104 : vector<8x256xi32>
      %cst_50 = arith.constant 1.000000e+00 : f32
      %cst_51 = arith.constant 0.000000e+00 : f32
      %106 = vector.broadcast %cst_50 : f32 to vector<8x256xf32>
      %107 = vector.broadcast %cst_51 : f32 to vector<8x256xf32>
      %108 = arith.select %105, %106, %107 : vector<8x256xi1>, vector<8x256xf32>
      %cst_52 = arith.constant dense<0xFF800000> : vector<256xf32>
      %109 = vector.multi_reduction <maximumf>, %108, %cst_52 [0] : vector<8x256xf32> to vector<256xf32>
      %cst_53 = arith.constant 0.000000e+00 : f32
      %110 = vector.broadcast %cst_53 : f32 to vector<256xf32>
      %111 = arith.cmpf ogt, %109, %110 : vector<256xf32>
      %112 = vector.shape_cast %111 : vector<256xi1> to vector<1x256xi1>
      %113 = arith.ori %99, %112 : vector<1x256xi1>
      %114 = vector.broadcast %72 : vector<1x1xf32> to vector<8x1xf32>
      %115 = arith.addf %114, %34 : vector<8x1xf32>
      %116 = arith.fptosi %115 : vector<8x1xf32> to vector<8x1xi32>
      %117 = vector.broadcast %116 : vector<8x1xi32> to vector<8x256xi32>
      %118 = vector.broadcast %30 : vector<1x256xi32> to vector<8x256xi32>
      %119 = arith.cmpi eq, %117, %118 : vector<8x256xi32>
      %cst_54 = arith.constant 1.000000e+00 : f32
      %cst_55 = arith.constant 0.000000e+00 : f32
      %120 = vector.broadcast %cst_54 : f32 to vector<8x256xf32>
      %121 = vector.broadcast %cst_55 : f32 to vector<8x256xf32>
      %122 = arith.select %119, %120, %121 : vector<8x256xi1>, vector<8x256xf32>
      %cst_56 = arith.constant dense<0xFF800000> : vector<256xf32>
      %123 = vector.multi_reduction <maximumf>, %122, %cst_56 [0] : vector<8x256xf32> to vector<256xf32>
      %cst_57 = arith.constant 0.000000e+00 : f32
      %124 = vector.broadcast %cst_57 : f32 to vector<256xf32>
      %125 = arith.cmpf ogt, %123, %124 : vector<256xf32>
      %126 = vector.shape_cast %125 : vector<256xi1> to vector<1x256xi1>
      %127 = arith.ori %113, %126 : vector<1x256xi1>
      %128 = vector.broadcast %72 : vector<1x1xf32> to vector<8x1xf32>
      %129 = arith.addf %128, %35 : vector<8x1xf32>
      %130 = arith.fptosi %129 : vector<8x1xf32> to vector<8x1xi32>
      %131 = vector.broadcast %130 : vector<8x1xi32> to vector<8x256xi32>
      %132 = vector.broadcast %30 : vector<1x256xi32> to vector<8x256xi32>
      %133 = arith.cmpi eq, %131, %132 : vector<8x256xi32>
      %cst_58 = arith.constant 1.000000e+00 : f32
      %cst_59 = arith.constant 0.000000e+00 : f32
      %134 = vector.broadcast %cst_58 : f32 to vector<8x256xf32>
      %135 = vector.broadcast %cst_59 : f32 to vector<8x256xf32>
      %136 = arith.select %133, %134, %135 : vector<8x256xi1>, vector<8x256xf32>
      %cst_60 = arith.constant dense<0xFF800000> : vector<256xf32>
      %137 = vector.multi_reduction <maximumf>, %136, %cst_60 [0] : vector<8x256xf32> to vector<256xf32>
      %cst_61 = arith.constant 0.000000e+00 : f32
      %138 = vector.broadcast %cst_61 : f32 to vector<256xf32>
      %139 = arith.cmpf ogt, %137, %138 : vector<256xf32>
      %140 = vector.shape_cast %139 : vector<256xi1> to vector<1x256xi1>
      %141 = arith.ori %127, %140 : vector<1x256xi1>
      %142 = vector.broadcast %72 : vector<1x1xf32> to vector<8x1xf32>
      %143 = arith.addf %142, %36 : vector<8x1xf32>
      %144 = arith.fptosi %143 : vector<8x1xf32> to vector<8x1xi32>
      %145 = vector.broadcast %144 : vector<8x1xi32> to vector<8x256xi32>
      %146 = vector.broadcast %30 : vector<1x256xi32> to vector<8x256xi32>
      %147 = arith.cmpi eq, %145, %146 : vector<8x256xi32>
      %cst_62 = arith.constant 1.000000e+00 : f32
      %cst_63 = arith.constant 0.000000e+00 : f32
      %148 = vector.broadcast %cst_62 : f32 to vector<8x256xf32>
      %149 = vector.broadcast %cst_63 : f32 to vector<8x256xf32>
      %150 = arith.select %147, %148, %149 : vector<8x256xi1>, vector<8x256xf32>
      %cst_64 = arith.constant dense<0xFF800000> : vector<256xf32>
      %151 = vector.multi_reduction <maximumf>, %150, %cst_64 [0] : vector<8x256xf32> to vector<256xf32>
      %cst_65 = arith.constant 0.000000e+00 : f32
      %152 = vector.broadcast %cst_65 : f32 to vector<256xf32>
      %153 = arith.cmpf ogt, %151, %152 : vector<256xf32>
      %154 = vector.shape_cast %153 : vector<256xi1> to vector<1x256xi1>
      %155 = arith.ori %141, %154 : vector<1x256xi1>
      %156 = vector.broadcast %72 : vector<1x1xf32> to vector<8x1xf32>
      %157 = arith.addf %156, %37 : vector<8x1xf32>
      %158 = arith.fptosi %157 : vector<8x1xf32> to vector<8x1xi32>
      %159 = vector.broadcast %158 : vector<8x1xi32> to vector<8x256xi32>
      %160 = vector.broadcast %30 : vector<1x256xi32> to vector<8x256xi32>
      %161 = arith.cmpi eq, %159, %160 : vector<8x256xi32>
      %cst_66 = arith.constant 1.000000e+00 : f32
      %cst_67 = arith.constant 0.000000e+00 : f32
      %162 = vector.broadcast %cst_66 : f32 to vector<8x256xf32>
      %163 = vector.broadcast %cst_67 : f32 to vector<8x256xf32>
      %164 = arith.select %161, %162, %163 : vector<8x256xi1>, vector<8x256xf32>
      %cst_68 = arith.constant dense<0xFF800000> : vector<256xf32>
      %165 = vector.multi_reduction <maximumf>, %164, %cst_68 [0] : vector<8x256xf32> to vector<256xf32>
      %cst_69 = arith.constant 0.000000e+00 : f32
      %166 = vector.broadcast %cst_69 : f32 to vector<256xf32>
      %167 = arith.cmpf ogt, %165, %166 : vector<256xf32>
      %168 = vector.shape_cast %167 : vector<256xi1> to vector<1x256xi1>
      %169 = arith.ori %155, %168 : vector<1x256xi1>
      %170 = vector.broadcast %72 : vector<1x1xf32> to vector<8x1xf32>
      %171 = arith.addf %170, %38 : vector<8x1xf32>
      %172 = arith.fptosi %171 : vector<8x1xf32> to vector<8x1xi32>
      %173 = vector.broadcast %172 : vector<8x1xi32> to vector<8x256xi32>
      %174 = vector.broadcast %30 : vector<1x256xi32> to vector<8x256xi32>
      %175 = arith.cmpi eq, %173, %174 : vector<8x256xi32>
      %cst_70 = arith.constant 1.000000e+00 : f32
      %cst_71 = arith.constant 0.000000e+00 : f32
      %176 = vector.broadcast %cst_70 : f32 to vector<8x256xf32>
      %177 = vector.broadcast %cst_71 : f32 to vector<8x256xf32>
      %178 = arith.select %175, %176, %177 : vector<8x256xi1>, vector<8x256xf32>
      %cst_72 = arith.constant dense<0xFF800000> : vector<256xf32>
      %179 = vector.multi_reduction <maximumf>, %178, %cst_72 [0] : vector<8x256xf32> to vector<256xf32>
      %cst_73 = arith.constant 0.000000e+00 : f32
      %180 = vector.broadcast %cst_73 : f32 to vector<256xf32>
      %181 = arith.cmpf ogt, %179, %180 : vector<256xf32>
      %182 = vector.shape_cast %181 : vector<256xi1> to vector<1x256xi1>
      %183 = arith.ori %169, %182 : vector<1x256xi1>
      %184 = vector.broadcast %72 : vector<1x1xf32> to vector<8x1xf32>
      %185 = arith.addf %184, %39 : vector<8x1xf32>
      %186 = arith.fptosi %185 : vector<8x1xf32> to vector<8x1xi32>
      %187 = vector.broadcast %186 : vector<8x1xi32> to vector<8x256xi32>
      %188 = vector.broadcast %30 : vector<1x256xi32> to vector<8x256xi32>
      %189 = arith.cmpi eq, %187, %188 : vector<8x256xi32>
      %cst_74 = arith.constant 1.000000e+00 : f32
      %cst_75 = arith.constant 0.000000e+00 : f32
      %190 = vector.broadcast %cst_74 : f32 to vector<8x256xf32>
      %191 = vector.broadcast %cst_75 : f32 to vector<8x256xf32>
      %192 = arith.select %189, %190, %191 : vector<8x256xi1>, vector<8x256xf32>
      %cst_76 = arith.constant dense<0xFF800000> : vector<256xf32>
      %193 = vector.multi_reduction <maximumf>, %192, %cst_76 [0] : vector<8x256xf32> to vector<256xf32>
      %cst_77 = arith.constant 0.000000e+00 : f32
      %194 = vector.broadcast %cst_77 : f32 to vector<256xf32>
      %195 = arith.cmpf ogt, %193, %194 : vector<256xf32>
      %196 = vector.shape_cast %195 : vector<256xi1> to vector<1x256xi1>
      %197 = arith.ori %183, %196 : vector<1x256xi1>
      %198 = vector.broadcast %72 : vector<1x1xf32> to vector<8x1xf32>
      %199 = arith.addf %198, %40 : vector<8x1xf32>
      %200 = arith.fptosi %199 : vector<8x1xf32> to vector<8x1xi32>
      %201 = vector.broadcast %200 : vector<8x1xi32> to vector<8x256xi32>
      %202 = vector.broadcast %30 : vector<1x256xi32> to vector<8x256xi32>
      %203 = arith.cmpi eq, %201, %202 : vector<8x256xi32>
      %cst_78 = arith.constant 1.000000e+00 : f32
      %cst_79 = arith.constant 0.000000e+00 : f32
      %204 = vector.broadcast %cst_78 : f32 to vector<8x256xf32>
      %205 = vector.broadcast %cst_79 : f32 to vector<8x256xf32>
      %206 = arith.select %203, %204, %205 : vector<8x256xi1>, vector<8x256xf32>
      %cst_80 = arith.constant dense<0xFF800000> : vector<256xf32>
      %207 = vector.multi_reduction <maximumf>, %206, %cst_80 [0] : vector<8x256xf32> to vector<256xf32>
      %cst_81 = arith.constant 0.000000e+00 : f32
      %208 = vector.broadcast %cst_81 : f32 to vector<256xf32>
      %209 = arith.cmpf ogt, %207, %208 : vector<256xf32>
      %210 = vector.shape_cast %209 : vector<256xi1> to vector<1x256xi1>
      %211 = arith.ori %197, %210 : vector<1x256xi1>
      %212 = vector.broadcast %72 : vector<1x1xf32> to vector<8x1xf32>
      %213 = arith.addf %212, %41 : vector<8x1xf32>
      %214 = arith.fptosi %213 : vector<8x1xf32> to vector<8x1xi32>
      %215 = vector.broadcast %214 : vector<8x1xi32> to vector<8x256xi32>
      %216 = vector.broadcast %30 : vector<1x256xi32> to vector<8x256xi32>
      %217 = arith.cmpi eq, %215, %216 : vector<8x256xi32>
      %cst_82 = arith.constant 1.000000e+00 : f32
      %cst_83 = arith.constant 0.000000e+00 : f32
      %218 = vector.broadcast %cst_82 : f32 to vector<8x256xf32>
      %219 = vector.broadcast %cst_83 : f32 to vector<8x256xf32>
      %220 = arith.select %217, %218, %219 : vector<8x256xi1>, vector<8x256xf32>
      %cst_84 = arith.constant dense<0xFF800000> : vector<256xf32>
      %221 = vector.multi_reduction <maximumf>, %220, %cst_84 [0] : vector<8x256xf32> to vector<256xf32>
      %cst_85 = arith.constant 0.000000e+00 : f32
      %222 = vector.broadcast %cst_85 : f32 to vector<256xf32>
      %223 = arith.cmpf ogt, %221, %222 : vector<256xf32>
      %224 = vector.shape_cast %223 : vector<256xi1> to vector<1x256xi1>
      %225 = arith.ori %211, %224 : vector<1x256xi1>
      %226 = vector.broadcast %72 : vector<1x1xf32> to vector<8x1xf32>
      %227 = arith.addf %226, %42 : vector<8x1xf32>
      %228 = arith.fptosi %227 : vector<8x1xf32> to vector<8x1xi32>
      %229 = vector.broadcast %228 : vector<8x1xi32> to vector<8x256xi32>
      %230 = vector.broadcast %30 : vector<1x256xi32> to vector<8x256xi32>
      %231 = arith.cmpi eq, %229, %230 : vector<8x256xi32>
      %cst_86 = arith.constant 1.000000e+00 : f32
      %cst_87 = arith.constant 0.000000e+00 : f32
      %232 = vector.broadcast %cst_86 : f32 to vector<8x256xf32>
      %233 = vector.broadcast %cst_87 : f32 to vector<8x256xf32>
      %234 = arith.select %231, %232, %233 : vector<8x256xi1>, vector<8x256xf32>
      %cst_88 = arith.constant dense<0xFF800000> : vector<256xf32>
      %235 = vector.multi_reduction <maximumf>, %234, %cst_88 [0] : vector<8x256xf32> to vector<256xf32>
      %cst_89 = arith.constant 0.000000e+00 : f32
      %236 = vector.broadcast %cst_89 : f32 to vector<256xf32>
      %237 = arith.cmpf ogt, %235, %236 : vector<256xf32>
      %238 = vector.shape_cast %237 : vector<256xi1> to vector<1x256xi1>
      %239 = arith.ori %225, %238 : vector<1x256xi1>
      %240 = vector.broadcast %72 : vector<1x1xf32> to vector<8x1xf32>
      %241 = arith.addf %240, %43 : vector<8x1xf32>
      %242 = arith.fptosi %241 : vector<8x1xf32> to vector<8x1xi32>
      %243 = vector.broadcast %242 : vector<8x1xi32> to vector<8x256xi32>
      %244 = vector.broadcast %30 : vector<1x256xi32> to vector<8x256xi32>
      %245 = arith.cmpi eq, %243, %244 : vector<8x256xi32>
      %cst_90 = arith.constant 1.000000e+00 : f32
      %cst_91 = arith.constant 0.000000e+00 : f32
      %246 = vector.broadcast %cst_90 : f32 to vector<8x256xf32>
      %247 = vector.broadcast %cst_91 : f32 to vector<8x256xf32>
      %248 = arith.select %245, %246, %247 : vector<8x256xi1>, vector<8x256xf32>
      %cst_92 = arith.constant dense<0xFF800000> : vector<256xf32>
      %249 = vector.multi_reduction <maximumf>, %248, %cst_92 [0] : vector<8x256xf32> to vector<256xf32>
      %cst_93 = arith.constant 0.000000e+00 : f32
      %250 = vector.broadcast %cst_93 : f32 to vector<256xf32>
      %251 = arith.cmpf ogt, %249, %250 : vector<256xf32>
      %252 = vector.shape_cast %251 : vector<256xi1> to vector<1x256xi1>
      %253 = arith.ori %239, %252 : vector<1x256xi1>
      %254 = vector.broadcast %72 : vector<1x1xf32> to vector<8x1xf32>
      %255 = arith.addf %254, %44 : vector<8x1xf32>
      %256 = arith.fptosi %255 : vector<8x1xf32> to vector<8x1xi32>
      %257 = vector.broadcast %256 : vector<8x1xi32> to vector<8x256xi32>
      %258 = vector.broadcast %30 : vector<1x256xi32> to vector<8x256xi32>
      %259 = arith.cmpi eq, %257, %258 : vector<8x256xi32>
      %cst_94 = arith.constant 1.000000e+00 : f32
      %cst_95 = arith.constant 0.000000e+00 : f32
      %260 = vector.broadcast %cst_94 : f32 to vector<8x256xf32>
      %261 = vector.broadcast %cst_95 : f32 to vector<8x256xf32>
      %262 = arith.select %259, %260, %261 : vector<8x256xi1>, vector<8x256xf32>
      %cst_96 = arith.constant dense<0xFF800000> : vector<256xf32>
      %263 = vector.multi_reduction <maximumf>, %262, %cst_96 [0] : vector<8x256xf32> to vector<256xf32>
      %cst_97 = arith.constant 0.000000e+00 : f32
      %264 = vector.broadcast %cst_97 : f32 to vector<256xf32>
      %265 = arith.cmpf ogt, %263, %264 : vector<256xf32>
      %266 = vector.shape_cast %265 : vector<256xi1> to vector<1x256xi1>
      %267 = arith.ori %253, %266 : vector<1x256xi1>
      %268 = vector.broadcast %72 : vector<1x1xf32> to vector<8x1xf32>
      %269 = arith.addf %268, %45 : vector<8x1xf32>
      %270 = arith.fptosi %269 : vector<8x1xf32> to vector<8x1xi32>
      %271 = vector.broadcast %270 : vector<8x1xi32> to vector<8x256xi32>
      %272 = vector.broadcast %30 : vector<1x256xi32> to vector<8x256xi32>
      %273 = arith.cmpi eq, %271, %272 : vector<8x256xi32>
      %cst_98 = arith.constant 1.000000e+00 : f32
      %cst_99 = arith.constant 0.000000e+00 : f32
      %274 = vector.broadcast %cst_98 : f32 to vector<8x256xf32>
      %275 = vector.broadcast %cst_99 : f32 to vector<8x256xf32>
      %276 = arith.select %273, %274, %275 : vector<8x256xi1>, vector<8x256xf32>
      %cst_100 = arith.constant dense<0xFF800000> : vector<256xf32>
      %277 = vector.multi_reduction <maximumf>, %276, %cst_100 [0] : vector<8x256xf32> to vector<256xf32>
      %cst_101 = arith.constant 0.000000e+00 : f32
      %278 = vector.broadcast %cst_101 : f32 to vector<256xf32>
      %279 = arith.cmpf ogt, %277, %278 : vector<256xf32>
      %280 = vector.shape_cast %279 : vector<256xi1> to vector<1x256xi1>
      %281 = arith.ori %267, %280 : vector<1x256xi1>
      %c0_102 = arith.constant 0 : index
      %c0_103 = arith.constant 0 : index
      %c0_104 = arith.constant 0 : index
      %282 = vector.load %arg9[%c0_102, %c0_103, %c0_104] : memref<1x1x256xf32, #tpu.memory_space<vmem>>, vector<1x1x256xf32>
      %283 = vector.shape_cast %282 : vector<1x1x256xf32> to vector<1x256xf32>
      %cst_105 = arith.constant 1.000000e+00 : f32
      %284 = vector.broadcast %cst_105 : f32 to vector<1x256xf32>
      %285 = arith.select %281, %284, %283 : vector<1x256xi1>, vector<1x256xf32>
      %c0_106 = arith.constant 0 : index
      %c0_107 = arith.constant 0 : index
      %c0_108 = arith.constant 0 : index
      %286 = vector.load %arg9[%c0_106, %c0_107, %c0_108] : memref<1x1x256xf32, #tpu.memory_space<vmem>>, vector<1x1x256xf32>
      %287 = vector.shape_cast %286 : vector<1x1x256xf32> to vector<1x256xf32>
      %288 = vector.shape_cast %285 : vector<1x256xf32> to vector<1x1x256xf32>
      tpu.vector_store %arg9[%c0_106, %c0_107, %c0_108], %288 {strides = array<i32>} : memref<1x1x256xf32, #tpu.memory_space<vmem>>, vector<1x1x256xf32>,
    } else {
    }
    %c4_i32 = arith.constant 4 : i32
    %60 = arith.cmpi sgt, %1, %c4_i32 : i32
    %61 = arith.extui %60 : i1 to i32
    %c0_i32_38 = arith.constant 0 : i32
    %62 = arith.cmpi ne, %61, %c0_i32_38 : i32
    scf.if %62 {
      %72 = vector.extract_strided_slice %47 {offsets = [4, 0], sizes = [1, 1], strides = [1, 1]} : vector<8x1xf32> to vector<1x1xf32>
      %73 = vector.broadcast %72 : vector<1x1xf32> to vector<8x1xf32>
      %74 = arith.addf %73, %31 : vector<8x1xf32>
      %75 = arith.fptosi %74 : vector<8x1xf32> to vector<8x1xi32>
      %76 = vector.broadcast %75 : vector<8x1xi32> to vector<8x256xi32>
      %77 = vector.broadcast %30 : vector<1x256xi32> to vector<8x256xi32>
      %78 = arith.cmpi eq, %76, %77 : vector<8x256xi32>
      %cst_42 = arith.constant 1.000000e+00 : f32
      %cst_43 = arith.constant 0.000000e+00 : f32
      %79 = vector.broadcast %cst_42 : f32 to vector<8x256xf32>
      %80 = vector.broadcast %cst_43 : f32 to vector<8x256xf32>
      %81 = arith.select %78, %79, %80 : vector<8x256xi1>, vector<8x256xf32>
      %cst_44 = arith.constant dense<0xFF800000> : vector<256xf32>
      %82 = vector.multi_reduction <maximumf>, %81, %cst_44 [0] : vector<8x256xf32> to vector<256xf32>
      %cst_45 = arith.constant 0.000000e+00 : f32
      %83 = vector.broadcast %cst_45 : f32 to vector<256xf32>
      %84 = arith.cmpf ogt, %82, %83 : vector<256xf32>
      %85 = vector.shape_cast %84 : vector<256xi1> to vector<1x256xi1>
      %86 = vector.broadcast %72 : vector<1x1xf32> to vector<8x1xf32>
      %87 = arith.addf %86, %32 : vector<8x1xf32>
      %88 = arith.fptosi %87 : vector<8x1xf32> to vector<8x1xi32>
      %89 = vector.broadcast %88 : vector<8x1xi32> to vector<8x256xi32>
      %90 = vector.broadcast %30 : vector<1x256xi32> to vector<8x256xi32>
      %91 = arith.cmpi eq, %89, %90 : vector<8x256xi32>
      %cst_46 = arith.constant 1.000000e+00 : f32
      %cst_47 = arith.constant 0.000000e+00 : f32
      %92 = vector.broadcast %cst_46 : f32 to vector<8x256xf32>
      %93 = vector.broadcast %cst_47 : f32 to vector<8x256xf32>
      %94 = arith.select %91, %92, %93 : vector<8x256xi1>, vector<8x256xf32>
      %cst_48 = arith.constant dense<0xFF800000> : vector<256xf32>
      %95 = vector.multi_reduction <maximumf>, %94, %cst_48 [0] : vector<8x256xf32> to vector<256xf32>
      %cst_49 = arith.constant 0.000000e+00 : f32
      %96 = vector.broadcast %cst_49 : f32 to vector<256xf32>
      %97 = arith.cmpf ogt, %95, %96 : vector<256xf32>
      %98 = vector.shape_cast %97 : vector<256xi1> to vector<1x256xi1>
      %99 = arith.ori %85, %98 : vector<1x256xi1>
      %100 = vector.broadcast %72 : vector<1x1xf32> to vector<8x1xf32>
      %101 = arith.addf %100, %33 : vector<8x1xf32>
      %102 = arith.fptosi %101 : vector<8x1xf32> to vector<8x1xi32>
      %103 = vector.broadcast %102 : vector<8x1xi32> to vector<8x256xi32>
      %104 = vector.broadcast %30 : vector<1x256xi32> to vector<8x256xi32>
      %105 = arith.cmpi eq, %103, %104 : vector<8x256xi32>
      %cst_50 = arith.constant 1.000000e+00 : f32
      %cst_51 = arith.constant 0.000000e+00 : f32
      %106 = vector.broadcast %cst_50 : f32 to vector<8x256xf32>
      %107 = vector.broadcast %cst_51 : f32 to vector<8x256xf32>
      %108 = arith.select %105, %106, %107 : vector<8x256xi1>, vector<8x256xf32>
      %cst_52 = arith.constant dense<0xFF800000> : vector<256xf32>
      %109 = vector.multi_reduction <maximumf>, %108, %cst_52 [0] : vector<8x256xf32> to vector<256xf32>
      %cst_53 = arith.constant 0.000000e+00 : f32
      %110 = vector.broadcast %cst_53 : f32 to vector<256xf32>
      %111 = arith.cmpf ogt, %109, %110 : vector<256xf32>
      %112 = vector.shape_cast %111 : vector<256xi1> to vector<1x256xi1>
      %113 = arith.ori %99, %112 : vector<1x256xi1>
      %114 = vector.broadcast %72 : vector<1x1xf32> to vector<8x1xf32>
      %115 = arith.addf %114, %34 : vector<8x1xf32>
      %116 = arith.fptosi %115 : vector<8x1xf32> to vector<8x1xi32>
      %117 = vector.broadcast %116 : vector<8x1xi32> to vector<8x256xi32>
      %118 = vector.broadcast %30 : vector<1x256xi32> to vector<8x256xi32>
      %119 = arith.cmpi eq, %117, %118 : vector<8x256xi32>
      %cst_54 = arith.constant 1.000000e+00 : f32
      %cst_55 = arith.constant 0.000000e+00 : f32
      %120 = vector.broadcast %cst_54 : f32 to vector<8x256xf32>
      %121 = vector.broadcast %cst_55 : f32 to vector<8x256xf32>
      %122 = arith.select %119, %120, %121 : vector<8x256xi1>, vector<8x256xf32>
      %cst_56 = arith.constant dense<0xFF800000> : vector<256xf32>
      %123 = vector.multi_reduction <maximumf>, %122, %cst_56 [0] : vector<8x256xf32> to vector<256xf32>
      %cst_57 = arith.constant 0.000000e+00 : f32
      %124 = vector.broadcast %cst_57 : f32 to vector<256xf32>
      %125 = arith.cmpf ogt, %123, %124 : vector<256xf32>
      %126 = vector.shape_cast %125 : vector<256xi1> to vector<1x256xi1>
      %127 = arith.ori %113, %126 : vector<1x256xi1>
      %128 = vector.broadcast %72 : vector<1x1xf32> to vector<8x1xf32>
      %129 = arith.addf %128, %35 : vector<8x1xf32>
      %130 = arith.fptosi %129 : vector<8x1xf32> to vector<8x1xi32>
      %131 = vector.broadcast %130 : vector<8x1xi32> to vector<8x256xi32>
      %132 = vector.broadcast %30 : vector<1x256xi32> to vector<8x256xi32>
      %133 = arith.cmpi eq, %131, %132 : vector<8x256xi32>
      %cst_58 = arith.constant 1.000000e+00 : f32
      %cst_59 = arith.constant 0.000000e+00 : f32
      %134 = vector.broadcast %cst_58 : f32 to vector<8x256xf32>
      %135 = vector.broadcast %cst_59 : f32 to vector<8x256xf32>
      %136 = arith.select %133, %134, %135 : vector<8x256xi1>, vector<8x256xf32>
      %cst_60 = arith.constant dense<0xFF800000> : vector<256xf32>
      %137 = vector.multi_reduction <maximumf>, %136, %cst_60 [0] : vector<8x256xf32> to vector<256xf32>
      %cst_61 = arith.constant 0.000000e+00 : f32
      %138 = vector.broadcast %cst_61 : f32 to vector<256xf32>
      %139 = arith.cmpf ogt, %137, %138 : vector<256xf32>
      %140 = vector.shape_cast %139 : vector<256xi1> to vector<1x256xi1>
      %141 = arith.ori %127, %140 : vector<1x256xi1>
      %142 = vector.broadcast %72 : vector<1x1xf32> to vector<8x1xf32>
      %143 = arith.addf %142, %36 : vector<8x1xf32>
      %144 = arith.fptosi %143 : vector<8x1xf32> to vector<8x1xi32>
      %145 = vector.broadcast %144 : vector<8x1xi32> to vector<8x256xi32>
      %146 = vector.broadcast %30 : vector<1x256xi32> to vector<8x256xi32>
      %147 = arith.cmpi eq, %145, %146 : vector<8x256xi32>
      %cst_62 = arith.constant 1.000000e+00 : f32
      %cst_63 = arith.constant 0.000000e+00 : f32
      %148 = vector.broadcast %cst_62 : f32 to vector<8x256xf32>
      %149 = vector.broadcast %cst_63 : f32 to vector<8x256xf32>
      %150 = arith.select %147, %148, %149 : vector<8x256xi1>, vector<8x256xf32>
      %cst_64 = arith.constant dense<0xFF800000> : vector<256xf32>
      %151 = vector.multi_reduction <maximumf>, %150, %cst_64 [0] : vector<8x256xf32> to vector<256xf32>
      %cst_65 = arith.constant 0.000000e+00 : f32
      %152 = vector.broadcast %cst_65 : f32 to vector<256xf32>
      %153 = arith.cmpf ogt, %151, %152 : vector<256xf32>
      %154 = vector.shape_cast %153 : vector<256xi1> to vector<1x256xi1>
      %155 = arith.ori %141, %154 : vector<1x256xi1>
      %156 = vector.broadcast %72 : vector<1x1xf32> to vector<8x1xf32>
      %157 = arith.addf %156, %37 : vector<8x1xf32>
      %158 = arith.fptosi %157 : vector<8x1xf32> to vector<8x1xi32>
      %159 = vector.broadcast %158 : vector<8x1xi32> to vector<8x256xi32>
      %160 = vector.broadcast %30 : vector<1x256xi32> to vector<8x256xi32>
      %161 = arith.cmpi eq, %159, %160 : vector<8x256xi32>
      %cst_66 = arith.constant 1.000000e+00 : f32
      %cst_67 = arith.constant 0.000000e+00 : f32
      %162 = vector.broadcast %cst_66 : f32 to vector<8x256xf32>
      %163 = vector.broadcast %cst_67 : f32 to vector<8x256xf32>
      %164 = arith.select %161, %162, %163 : vector<8x256xi1>, vector<8x256xf32>
      %cst_68 = arith.constant dense<0xFF800000> : vector<256xf32>
      %165 = vector.multi_reduction <maximumf>, %164, %cst_68 [0] : vector<8x256xf32> to vector<256xf32>
      %cst_69 = arith.constant 0.000000e+00 : f32
      %166 = vector.broadcast %cst_69 : f32 to vector<256xf32>
      %167 = arith.cmpf ogt, %165, %166 : vector<256xf32>
      %168 = vector.shape_cast %167 : vector<256xi1> to vector<1x256xi1>
      %169 = arith.ori %155, %168 : vector<1x256xi1>
      %170 = vector.broadcast %72 : vector<1x1xf32> to vector<8x1xf32>
      %171 = arith.addf %170, %38 : vector<8x1xf32>
      %172 = arith.fptosi %171 : vector<8x1xf32> to vector<8x1xi32>
      %173 = vector.broadcast %172 : vector<8x1xi32> to vector<8x256xi32>
      %174 = vector.broadcast %30 : vector<1x256xi32> to vector<8x256xi32>
      %175 = arith.cmpi eq, %173, %174 : vector<8x256xi32>
      %cst_70 = arith.constant 1.000000e+00 : f32
      %cst_71 = arith.constant 0.000000e+00 : f32
      %176 = vector.broadcast %cst_70 : f32 to vector<8x256xf32>
      %177 = vector.broadcast %cst_71 : f32 to vector<8x256xf32>
      %178 = arith.select %175, %176, %177 : vector<8x256xi1>, vector<8x256xf32>
      %cst_72 = arith.constant dense<0xFF800000> : vector<256xf32>
      %179 = vector.multi_reduction <maximumf>, %178, %cst_72 [0] : vector<8x256xf32> to vector<256xf32>
      %cst_73 = arith.constant 0.000000e+00 : f32
      %180 = vector.broadcast %cst_73 : f32 to vector<256xf32>
      %181 = arith.cmpf ogt, %179, %180 : vector<256xf32>
      %182 = vector.shape_cast %181 : vector<256xi1> to vector<1x256xi1>
      %183 = arith.ori %169, %182 : vector<1x256xi1>
      %184 = vector.broadcast %72 : vector<1x1xf32> to vector<8x1xf32>
      %185 = arith.addf %184, %39 : vector<8x1xf32>
      %186 = arith.fptosi %185 : vector<8x1xf32> to vector<8x1xi32>
      %187 = vector.broadcast %186 : vector<8x1xi32> to vector<8x256xi32>
      %188 = vector.broadcast %30 : vector<1x256xi32> to vector<8x256xi32>
      %189 = arith.cmpi eq, %187, %188 : vector<8x256xi32>
      %cst_74 = arith.constant 1.000000e+00 : f32
      %cst_75 = arith.constant 0.000000e+00 : f32
      %190 = vector.broadcast %cst_74 : f32 to vector<8x256xf32>
      %191 = vector.broadcast %cst_75 : f32 to vector<8x256xf32>
      %192 = arith.select %189, %190, %191 : vector<8x256xi1>, vector<8x256xf32>
      %cst_76 = arith.constant dense<0xFF800000> : vector<256xf32>
      %193 = vector.multi_reduction <maximumf>, %192, %cst_76 [0] : vector<8x256xf32> to vector<256xf32>
      %cst_77 = arith.constant 0.000000e+00 : f32
      %194 = vector.broadcast %cst_77 : f32 to vector<256xf32>
      %195 = arith.cmpf ogt, %193, %194 : vector<256xf32>
      %196 = vector.shape_cast %195 : vector<256xi1> to vector<1x256xi1>
      %197 = arith.ori %183, %196 : vector<1x256xi1>
      %198 = vector.broadcast %72 : vector<1x1xf32> to vector<8x1xf32>
      %199 = arith.addf %198, %40 : vector<8x1xf32>
      %200 = arith.fptosi %199 : vector<8x1xf32> to vector<8x1xi32>
      %201 = vector.broadcast %200 : vector<8x1xi32> to vector<8x256xi32>
      %202 = vector.broadcast %30 : vector<1x256xi32> to vector<8x256xi32>
      %203 = arith.cmpi eq, %201, %202 : vector<8x256xi32>
      %cst_78 = arith.constant 1.000000e+00 : f32
      %cst_79 = arith.constant 0.000000e+00 : f32
      %204 = vector.broadcast %cst_78 : f32 to vector<8x256xf32>
      %205 = vector.broadcast %cst_79 : f32 to vector<8x256xf32>
      %206 = arith.select %203, %204, %205 : vector<8x256xi1>, vector<8x256xf32>
      %cst_80 = arith.constant dense<0xFF800000> : vector<256xf32>
      %207 = vector.multi_reduction <maximumf>, %206, %cst_80 [0] : vector<8x256xf32> to vector<256xf32>
      %cst_81 = arith.constant 0.000000e+00 : f32
      %208 = vector.broadcast %cst_81 : f32 to vector<256xf32>
      %209 = arith.cmpf ogt, %207, %208 : vector<256xf32>
      %210 = vector.shape_cast %209 : vector<256xi1> to vector<1x256xi1>
      %211 = arith.ori %197, %210 : vector<1x256xi1>
      %212 = vector.broadcast %72 : vector<1x1xf32> to vector<8x1xf32>
      %213 = arith.addf %212, %41 : vector<8x1xf32>
      %214 = arith.fptosi %213 : vector<8x1xf32> to vector<8x1xi32>
      %215 = vector.broadcast %214 : vector<8x1xi32> to vector<8x256xi32>
      %216 = vector.broadcast %30 : vector<1x256xi32> to vector<8x256xi32>
      %217 = arith.cmpi eq, %215, %216 : vector<8x256xi32>
      %cst_82 = arith.constant 1.000000e+00 : f32
      %cst_83 = arith.constant 0.000000e+00 : f32
      %218 = vector.broadcast %cst_82 : f32 to vector<8x256xf32>
      %219 = vector.broadcast %cst_83 : f32 to vector<8x256xf32>
      %220 = arith.select %217, %218, %219 : vector<8x256xi1>, vector<8x256xf32>
      %cst_84 = arith.constant dense<0xFF800000> : vector<256xf32>
      %221 = vector.multi_reduction <maximumf>, %220, %cst_84 [0] : vector<8x256xf32> to vector<256xf32>
      %cst_85 = arith.constant 0.000000e+00 : f32
      %222 = vector.broadcast %cst_85 : f32 to vector<256xf32>
      %223 = arith.cmpf ogt, %221, %222 : vector<256xf32>
      %224 = vector.shape_cast %223 : vector<256xi1> to vector<1x256xi1>
      %225 = arith.ori %211, %224 : vector<1x256xi1>
      %226 = vector.broadcast %72 : vector<1x1xf32> to vector<8x1xf32>
      %227 = arith.addf %226, %42 : vector<8x1xf32>
      %228 = arith.fptosi %227 : vector<8x1xf32> to vector<8x1xi32>
      %229 = vector.broadcast %228 : vector<8x1xi32> to vector<8x256xi32>
      %230 = vector.broadcast %30 : vector<1x256xi32> to vector<8x256xi32>
      %231 = arith.cmpi eq, %229, %230 : vector<8x256xi32>
      %cst_86 = arith.constant 1.000000e+00 : f32
      %cst_87 = arith.constant 0.000000e+00 : f32
      %232 = vector.broadcast %cst_86 : f32 to vector<8x256xf32>
      %233 = vector.broadcast %cst_87 : f32 to vector<8x256xf32>
      %234 = arith.select %231, %232, %233 : vector<8x256xi1>, vector<8x256xf32>
      %cst_88 = arith.constant dense<0xFF800000> : vector<256xf32>
      %235 = vector.multi_reduction <maximumf>, %234, %cst_88 [0] : vector<8x256xf32> to vector<256xf32>
      %cst_89 = arith.constant 0.000000e+00 : f32
      %236 = vector.broadcast %cst_89 : f32 to vector<256xf32>
      %237 = arith.cmpf ogt, %235, %236 : vector<256xf32>
      %238 = vector.shape_cast %237 : vector<256xi1> to vector<1x256xi1>
      %239 = arith.ori %225, %238 : vector<1x256xi1>
      %240 = vector.broadcast %72 : vector<1x1xf32> to vector<8x1xf32>
      %241 = arith.addf %240, %43 : vector<8x1xf32>
      %242 = arith.fptosi %241 : vector<8x1xf32> to vector<8x1xi32>
      %243 = vector.broadcast %242 : vector<8x1xi32> to vector<8x256xi32>
      %244 = vector.broadcast %30 : vector<1x256xi32> to vector<8x256xi32>
      %245 = arith.cmpi eq, %243, %244 : vector<8x256xi32>
      %cst_90 = arith.constant 1.000000e+00 : f32
      %cst_91 = arith.constant 0.000000e+00 : f32
      %246 = vector.broadcast %cst_90 : f32 to vector<8x256xf32>
      %247 = vector.broadcast %cst_91 : f32 to vector<8x256xf32>
      %248 = arith.select %245, %246, %247 : vector<8x256xi1>, vector<8x256xf32>
      %cst_92 = arith.constant dense<0xFF800000> : vector<256xf32>
      %249 = vector.multi_reduction <maximumf>, %248, %cst_92 [0] : vector<8x256xf32> to vector<256xf32>
      %cst_93 = arith.constant 0.000000e+00 : f32
      %250 = vector.broadcast %cst_93 : f32 to vector<256xf32>
      %251 = arith.cmpf ogt, %249, %250 : vector<256xf32>
      %252 = vector.shape_cast %251 : vector<256xi1> to vector<1x256xi1>
      %253 = arith.ori %239, %252 : vector<1x256xi1>
      %254 = vector.broadcast %72 : vector<1x1xf32> to vector<8x1xf32>
      %255 = arith.addf %254, %44 : vector<8x1xf32>
      %256 = arith.fptosi %255 : vector<8x1xf32> to vector<8x1xi32>
      %257 = vector.broadcast %256 : vector<8x1xi32> to vector<8x256xi32>
      %258 = vector.broadcast %30 : vector<1x256xi32> to vector<8x256xi32>
      %259 = arith.cmpi eq, %257, %258 : vector<8x256xi32>
      %cst_94 = arith.constant 1.000000e+00 : f32
      %cst_95 = arith.constant 0.000000e+00 : f32
      %260 = vector.broadcast %cst_94 : f32 to vector<8x256xf32>
      %261 = vector.broadcast %cst_95 : f32 to vector<8x256xf32>
      %262 = arith.select %259, %260, %261 : vector<8x256xi1>, vector<8x256xf32>
      %cst_96 = arith.constant dense<0xFF800000> : vector<256xf32>
      %263 = vector.multi_reduction <maximumf>, %262, %cst_96 [0] : vector<8x256xf32> to vector<256xf32>
      %cst_97 = arith.constant 0.000000e+00 : f32
      %264 = vector.broadcast %cst_97 : f32 to vector<256xf32>
      %265 = arith.cmpf ogt, %263, %264 : vector<256xf32>
      %266 = vector.shape_cast %265 : vector<256xi1> to vector<1x256xi1>
      %267 = arith.ori %253, %266 : vector<1x256xi1>
      %268 = vector.broadcast %72 : vector<1x1xf32> to vector<8x1xf32>
      %269 = arith.addf %268, %45 : vector<8x1xf32>
      %270 = arith.fptosi %269 : vector<8x1xf32> to vector<8x1xi32>
      %271 = vector.broadcast %270 : vector<8x1xi32> to vector<8x256xi32>
      %272 = vector.broadcast %30 : vector<1x256xi32> to vector<8x256xi32>
      %273 = arith.cmpi eq, %271, %272 : vector<8x256xi32>
      %cst_98 = arith.constant 1.000000e+00 : f32
      %cst_99 = arith.constant 0.000000e+00 : f32
      %274 = vector.broadcast %cst_98 : f32 to vector<8x256xf32>
      %275 = vector.broadcast %cst_99 : f32 to vector<8x256xf32>
      %276 = arith.select %273, %274, %275 : vector<8x256xi1>, vector<8x256xf32>
      %cst_100 = arith.constant dense<0xFF800000> : vector<256xf32>
      %277 = vector.multi_reduction <maximumf>, %276, %cst_100 [0] : vector<8x256xf32> to vector<256xf32>
      %cst_101 = arith.constant 0.000000e+00 : f32
      %278 = vector.broadcast %cst_101 : f32 to vector<256xf32>
      %279 = arith.cmpf ogt, %277, %278 : vector<256xf32>
      %280 = vector.shape_cast %279 : vector<256xi1> to vector<1x256xi1>
      %281 = arith.ori %267, %280 : vector<1x256xi1>
      %c0_102 = arith.constant 0 : index
      %c0_103 = arith.constant 0 : index
      %c0_104 = arith.constant 0 : index
      %282 = vector.load %arg9[%c0_102, %c0_103, %c0_104] : memref<1x1x256xf32, #tpu.memory_space<vmem>>, vector<1x1x256xf32>
      %283 = vector.shape_cast %282 : vector<1x1x256xf32> to vector<1x256xf32>
      %cst_105 = arith.constant 1.000000e+00 : f32
      %284 = vector.broadcast %cst_105 : f32 to vector<1x256xf32>
      %285 = arith.select %281, %284, %283 : vector<1x256xi1>, vector<1x256xf32>
      %c0_106 = arith.constant 0 : index
      %c0_107 = arith.constant 0 : index
      %c0_108 = arith.constant 0 : index
      %286 = vector.load %arg9[%c0_106, %c0_107, %c0_108] : memref<1x1x256xf32, #tpu.memory_space<vmem>>, vector<1x1x256xf32>
      %287 = vector.shape_cast %286 : vector<1x1x256xf32> to vector<1x256xf32>
      %288 = vector.shape_cast %285 : vector<1x256xf32> to vector<1x1x256xf32>
      tpu.vector_store %arg9[%c0_106, %c0_107, %c0_108], %288 {strides = array<i32>} : memref<1x1x256xf32, #tpu.memory_space<vmem>>, vector<1x1x256xf32>,
    } else {
    }
    %c5_i32 = arith.constant 5 : i32
    %63 = arith.cmpi sgt, %1, %c5_i32 : i32
    %64 = arith.extui %63 : i1 to i32
    %c0_i32_39 = arith.constant 0 : i32
    %65 = arith.cmpi ne, %64, %c0_i32_39 : i32
    scf.if %65 {
      %72 = vector.extract_strided_slice %47 {offsets = [5, 0], sizes = [1, 1], strides = [1, 1]} : vector<8x1xf32> to vector<1x1xf32>
      %73 = vector.broadcast %72 : vector<1x1xf32> to vector<8x1xf32>
      %74 = arith.addf %73, %31 : vector<8x1xf32>
      %75 = arith.fptosi %74 : vector<8x1xf32> to vector<8x1xi32>
      %76 = vector.broadcast %75 : vector<8x1xi32> to vector<8x256xi32>
      %77 = vector.broadcast %30 : vector<1x256xi32> to vector<8x256xi32>
      %78 = arith.cmpi eq, %76, %77 : vector<8x256xi32>
      %cst_42 = arith.constant 1.000000e+00 : f32
      %cst_43 = arith.constant 0.000000e+00 : f32
      %79 = vector.broadcast %cst_42 : f32 to vector<8x256xf32>
      %80 = vector.broadcast %cst_43 : f32 to vector<8x256xf32>
      %81 = arith.select %78, %79, %80 : vector<8x256xi1>, vector<8x256xf32>
      %cst_44 = arith.constant dense<0xFF800000> : vector<256xf32>
      %82 = vector.multi_reduction <maximumf>, %81, %cst_44 [0] : vector<8x256xf32> to vector<256xf32>
      %cst_45 = arith.constant 0.000000e+00 : f32
      %83 = vector.broadcast %cst_45 : f32 to vector<256xf32>
      %84 = arith.cmpf ogt, %82, %83 : vector<256xf32>
      %85 = vector.shape_cast %84 : vector<256xi1> to vector<1x256xi1>
      %86 = vector.broadcast %72 : vector<1x1xf32> to vector<8x1xf32>
      %87 = arith.addf %86, %32 : vector<8x1xf32>
      %88 = arith.fptosi %87 : vector<8x1xf32> to vector<8x1xi32>
      %89 = vector.broadcast %88 : vector<8x1xi32> to vector<8x256xi32>
      %90 = vector.broadcast %30 : vector<1x256xi32> to vector<8x256xi32>
      %91 = arith.cmpi eq, %89, %90 : vector<8x256xi32>
      %cst_46 = arith.constant 1.000000e+00 : f32
      %cst_47 = arith.constant 0.000000e+00 : f32
      %92 = vector.broadcast %cst_46 : f32 to vector<8x256xf32>
      %93 = vector.broadcast %cst_47 : f32 to vector<8x256xf32>
      %94 = arith.select %91, %92, %93 : vector<8x256xi1>, vector<8x256xf32>
      %cst_48 = arith.constant dense<0xFF800000> : vector<256xf32>
      %95 = vector.multi_reduction <maximumf>, %94, %cst_48 [0] : vector<8x256xf32> to vector<256xf32>
      %cst_49 = arith.constant 0.000000e+00 : f32
      %96 = vector.broadcast %cst_49 : f32 to vector<256xf32>
      %97 = arith.cmpf ogt, %95, %96 : vector<256xf32>
      %98 = vector.shape_cast %97 : vector<256xi1> to vector<1x256xi1>
      %99 = arith.ori %85, %98 : vector<1x256xi1>
      %100 = vector.broadcast %72 : vector<1x1xf32> to vector<8x1xf32>
      %101 = arith.addf %100, %33 : vector<8x1xf32>
      %102 = arith.fptosi %101 : vector<8x1xf32> to vector<8x1xi32>
      %103 = vector.broadcast %102 : vector<8x1xi32> to vector<8x256xi32>
      %104 = vector.broadcast %30 : vector<1x256xi32> to vector<8x256xi32>
      %105 = arith.cmpi eq, %103, %104 : vector<8x256xi32>
      %cst_50 = arith.constant 1.000000e+00 : f32
      %cst_51 = arith.constant 0.000000e+00 : f32
      %106 = vector.broadcast %cst_50 : f32 to vector<8x256xf32>
      %107 = vector.broadcast %cst_51 : f32 to vector<8x256xf32>
      %108 = arith.select %105, %106, %107 : vector<8x256xi1>, vector<8x256xf32>
      %cst_52 = arith.constant dense<0xFF800000> : vector<256xf32>
      %109 = vector.multi_reduction <maximumf>, %108, %cst_52 [0] : vector<8x256xf32> to vector<256xf32>
      %cst_53 = arith.constant 0.000000e+00 : f32
      %110 = vector.broadcast %cst_53 : f32 to vector<256xf32>
      %111 = arith.cmpf ogt, %109, %110 : vector<256xf32>
      %112 = vector.shape_cast %111 : vector<256xi1> to vector<1x256xi1>
      %113 = arith.ori %99, %112 : vector<1x256xi1>
      %114 = vector.broadcast %72 : vector<1x1xf32> to vector<8x1xf32>
      %115 = arith.addf %114, %34 : vector<8x1xf32>
      %116 = arith.fptosi %115 : vector<8x1xf32> to vector<8x1xi32>
      %117 = vector.broadcast %116 : vector<8x1xi32> to vector<8x256xi32>
      %118 = vector.broadcast %30 : vector<1x256xi32> to vector<8x256xi32>
      %119 = arith.cmpi eq, %117, %118 : vector<8x256xi32>
      %cst_54 = arith.constant 1.000000e+00 : f32
      %cst_55 = arith.constant 0.000000e+00 : f32
      %120 = vector.broadcast %cst_54 : f32 to vector<8x256xf32>
      %121 = vector.broadcast %cst_55 : f32 to vector<8x256xf32>
      %122 = arith.select %119, %120, %121 : vector<8x256xi1>, vector<8x256xf32>
      %cst_56 = arith.constant dense<0xFF800000> : vector<256xf32>
      %123 = vector.multi_reduction <maximumf>, %122, %cst_56 [0] : vector<8x256xf32> to vector<256xf32>
      %cst_57 = arith.constant 0.000000e+00 : f32
      %124 = vector.broadcast %cst_57 : f32 to vector<256xf32>
      %125 = arith.cmpf ogt, %123, %124 : vector<256xf32>
      %126 = vector.shape_cast %125 : vector<256xi1> to vector<1x256xi1>
      %127 = arith.ori %113, %126 : vector<1x256xi1>
      %128 = vector.broadcast %72 : vector<1x1xf32> to vector<8x1xf32>
      %129 = arith.addf %128, %35 : vector<8x1xf32>
      %130 = arith.fptosi %129 : vector<8x1xf32> to vector<8x1xi32>
      %131 = vector.broadcast %130 : vector<8x1xi32> to vector<8x256xi32>
      %132 = vector.broadcast %30 : vector<1x256xi32> to vector<8x256xi32>
      %133 = arith.cmpi eq, %131, %132 : vector<8x256xi32>
      %cst_58 = arith.constant 1.000000e+00 : f32
      %cst_59 = arith.constant 0.000000e+00 : f32
      %134 = vector.broadcast %cst_58 : f32 to vector<8x256xf32>
      %135 = vector.broadcast %cst_59 : f32 to vector<8x256xf32>
      %136 = arith.select %133, %134, %135 : vector<8x256xi1>, vector<8x256xf32>
      %cst_60 = arith.constant dense<0xFF800000> : vector<256xf32>
      %137 = vector.multi_reduction <maximumf>, %136, %cst_60 [0] : vector<8x256xf32> to vector<256xf32>
      %cst_61 = arith.constant 0.000000e+00 : f32
      %138 = vector.broadcast %cst_61 : f32 to vector<256xf32>
      %139 = arith.cmpf ogt, %137, %138 : vector<256xf32>
      %140 = vector.shape_cast %139 : vector<256xi1> to vector<1x256xi1>
      %141 = arith.ori %127, %140 : vector<1x256xi1>
      %142 = vector.broadcast %72 : vector<1x1xf32> to vector<8x1xf32>
      %143 = arith.addf %142, %36 : vector<8x1xf32>
      %144 = arith.fptosi %143 : vector<8x1xf32> to vector<8x1xi32>
      %145 = vector.broadcast %144 : vector<8x1xi32> to vector<8x256xi32>
      %146 = vector.broadcast %30 : vector<1x256xi32> to vector<8x256xi32>
      %147 = arith.cmpi eq, %145, %146 : vector<8x256xi32>
      %cst_62 = arith.constant 1.000000e+00 : f32
      %cst_63 = arith.constant 0.000000e+00 : f32
      %148 = vector.broadcast %cst_62 : f32 to vector<8x256xf32>
      %149 = vector.broadcast %cst_63 : f32 to vector<8x256xf32>
      %150 = arith.select %147, %148, %149 : vector<8x256xi1>, vector<8x256xf32>
      %cst_64 = arith.constant dense<0xFF800000> : vector<256xf32>
      %151 = vector.multi_reduction <maximumf>, %150, %cst_64 [0] : vector<8x256xf32> to vector<256xf32>
      %cst_65 = arith.constant 0.000000e+00 : f32
      %152 = vector.broadcast %cst_65 : f32 to vector<256xf32>
      %153 = arith.cmpf ogt, %151, %152 : vector<256xf32>
      %154 = vector.shape_cast %153 : vector<256xi1> to vector<1x256xi1>
      %155 = arith.ori %141, %154 : vector<1x256xi1>
      %156 = vector.broadcast %72 : vector<1x1xf32> to vector<8x1xf32>
      %157 = arith.addf %156, %37 : vector<8x1xf32>
      %158 = arith.fptosi %157 : vector<8x1xf32> to vector<8x1xi32>
      %159 = vector.broadcast %158 : vector<8x1xi32> to vector<8x256xi32>
      %160 = vector.broadcast %30 : vector<1x256xi32> to vector<8x256xi32>
      %161 = arith.cmpi eq, %159, %160 : vector<8x256xi32>
      %cst_66 = arith.constant 1.000000e+00 : f32
      %cst_67 = arith.constant 0.000000e+00 : f32
      %162 = vector.broadcast %cst_66 : f32 to vector<8x256xf32>
      %163 = vector.broadcast %cst_67 : f32 to vector<8x256xf32>
      %164 = arith.select %161, %162, %163 : vector<8x256xi1>, vector<8x256xf32>
      %cst_68 = arith.constant dense<0xFF800000> : vector<256xf32>
      %165 = vector.multi_reduction <maximumf>, %164, %cst_68 [0] : vector<8x256xf32> to vector<256xf32>
      %cst_69 = arith.constant 0.000000e+00 : f32
      %166 = vector.broadcast %cst_69 : f32 to vector<256xf32>
      %167 = arith.cmpf ogt, %165, %166 : vector<256xf32>
      %168 = vector.shape_cast %167 : vector<256xi1> to vector<1x256xi1>
      %169 = arith.ori %155, %168 : vector<1x256xi1>
      %170 = vector.broadcast %72 : vector<1x1xf32> to vector<8x1xf32>
      %171 = arith.addf %170, %38 : vector<8x1xf32>
      %172 = arith.fptosi %171 : vector<8x1xf32> to vector<8x1xi32>
      %173 = vector.broadcast %172 : vector<8x1xi32> to vector<8x256xi32>
      %174 = vector.broadcast %30 : vector<1x256xi32> to vector<8x256xi32>
      %175 = arith.cmpi eq, %173, %174 : vector<8x256xi32>
      %cst_70 = arith.constant 1.000000e+00 : f32
      %cst_71 = arith.constant 0.000000e+00 : f32
      %176 = vector.broadcast %cst_70 : f32 to vector<8x256xf32>
      %177 = vector.broadcast %cst_71 : f32 to vector<8x256xf32>
      %178 = arith.select %175, %176, %177 : vector<8x256xi1>, vector<8x256xf32>
      %cst_72 = arith.constant dense<0xFF800000> : vector<256xf32>
      %179 = vector.multi_reduction <maximumf>, %178, %cst_72 [0] : vector<8x256xf32> to vector<256xf32>
      %cst_73 = arith.constant 0.000000e+00 : f32
      %180 = vector.broadcast %cst_73 : f32 to vector<256xf32>
      %181 = arith.cmpf ogt, %179, %180 : vector<256xf32>
      %182 = vector.shape_cast %181 : vector<256xi1> to vector<1x256xi1>
      %183 = arith.ori %169, %182 : vector<1x256xi1>
      %184 = vector.broadcast %72 : vector<1x1xf32> to vector<8x1xf32>
      %185 = arith.addf %184, %39 : vector<8x1xf32>
      %186 = arith.fptosi %185 : vector<8x1xf32> to vector<8x1xi32>
      %187 = vector.broadcast %186 : vector<8x1xi32> to vector<8x256xi32>
      %188 = vector.broadcast %30 : vector<1x256xi32> to vector<8x256xi32>
      %189 = arith.cmpi eq, %187, %188 : vector<8x256xi32>
      %cst_74 = arith.constant 1.000000e+00 : f32
      %cst_75 = arith.constant 0.000000e+00 : f32
      %190 = vector.broadcast %cst_74 : f32 to vector<8x256xf32>
      %191 = vector.broadcast %cst_75 : f32 to vector<8x256xf32>
      %192 = arith.select %189, %190, %191 : vector<8x256xi1>, vector<8x256xf32>
      %cst_76 = arith.constant dense<0xFF800000> : vector<256xf32>
      %193 = vector.multi_reduction <maximumf>, %192, %cst_76 [0] : vector<8x256xf32> to vector<256xf32>
      %cst_77 = arith.constant 0.000000e+00 : f32
      %194 = vector.broadcast %cst_77 : f32 to vector<256xf32>
      %195 = arith.cmpf ogt, %193, %194 : vector<256xf32>
      %196 = vector.shape_cast %195 : vector<256xi1> to vector<1x256xi1>
      %197 = arith.ori %183, %196 : vector<1x256xi1>
      %198 = vector.broadcast %72 : vector<1x1xf32> to vector<8x1xf32>
      %199 = arith.addf %198, %40 : vector<8x1xf32>
      %200 = arith.fptosi %199 : vector<8x1xf32> to vector<8x1xi32>
      %201 = vector.broadcast %200 : vector<8x1xi32> to vector<8x256xi32>
      %202 = vector.broadcast %30 : vector<1x256xi32> to vector<8x256xi32>
      %203 = arith.cmpi eq, %201, %202 : vector<8x256xi32>
      %cst_78 = arith.constant 1.000000e+00 : f32
      %cst_79 = arith.constant 0.000000e+00 : f32
      %204 = vector.broadcast %cst_78 : f32 to vector<8x256xf32>
      %205 = vector.broadcast %cst_79 : f32 to vector<8x256xf32>
      %206 = arith.select %203, %204, %205 : vector<8x256xi1>, vector<8x256xf32>
      %cst_80 = arith.constant dense<0xFF800000> : vector<256xf32>
      %207 = vector.multi_reduction <maximumf>, %206, %cst_80 [0] : vector<8x256xf32> to vector<256xf32>
      %cst_81 = arith.constant 0.000000e+00 : f32
      %208 = vector.broadcast %cst_81 : f32 to vector<256xf32>
      %209 = arith.cmpf ogt, %207, %208 : vector<256xf32>
      %210 = vector.shape_cast %209 : vector<256xi1> to vector<1x256xi1>
      %211 = arith.ori %197, %210 : vector<1x256xi1>
      %212 = vector.broadcast %72 : vector<1x1xf32> to vector<8x1xf32>
      %213 = arith.addf %212, %41 : vector<8x1xf32>
      %214 = arith.fptosi %213 : vector<8x1xf32> to vector<8x1xi32>
      %215 = vector.broadcast %214 : vector<8x1xi32> to vector<8x256xi32>
      %216 = vector.broadcast %30 : vector<1x256xi32> to vector<8x256xi32>
      %217 = arith.cmpi eq, %215, %216 : vector<8x256xi32>
      %cst_82 = arith.constant 1.000000e+00 : f32
      %cst_83 = arith.constant 0.000000e+00 : f32
      %218 = vector.broadcast %cst_82 : f32 to vector<8x256xf32>
      %219 = vector.broadcast %cst_83 : f32 to vector<8x256xf32>
      %220 = arith.select %217, %218, %219 : vector<8x256xi1>, vector<8x256xf32>
      %cst_84 = arith.constant dense<0xFF800000> : vector<256xf32>
      %221 = vector.multi_reduction <maximumf>, %220, %cst_84 [0] : vector<8x256xf32> to vector<256xf32>
      %cst_85 = arith.constant 0.000000e+00 : f32
      %222 = vector.broadcast %cst_85 : f32 to vector<256xf32>
      %223 = arith.cmpf ogt, %221, %222 : vector<256xf32>
      %224 = vector.shape_cast %223 : vector<256xi1> to vector<1x256xi1>
      %225 = arith.ori %211, %224 : vector<1x256xi1>
      %226 = vector.broadcast %72 : vector<1x1xf32> to vector<8x1xf32>
      %227 = arith.addf %226, %42 : vector<8x1xf32>
      %228 = arith.fptosi %227 : vector<8x1xf32> to vector<8x1xi32>
      %229 = vector.broadcast %228 : vector<8x1xi32> to vector<8x256xi32>
      %230 = vector.broadcast %30 : vector<1x256xi32> to vector<8x256xi32>
      %231 = arith.cmpi eq, %229, %230 : vector<8x256xi32>
      %cst_86 = arith.constant 1.000000e+00 : f32
      %cst_87 = arith.constant 0.000000e+00 : f32
      %232 = vector.broadcast %cst_86 : f32 to vector<8x256xf32>
      %233 = vector.broadcast %cst_87 : f32 to vector<8x256xf32>
      %234 = arith.select %231, %232, %233 : vector<8x256xi1>, vector<8x256xf32>
      %cst_88 = arith.constant dense<0xFF800000> : vector<256xf32>
      %235 = vector.multi_reduction <maximumf>, %234, %cst_88 [0] : vector<8x256xf32> to vector<256xf32>
      %cst_89 = arith.constant 0.000000e+00 : f32
      %236 = vector.broadcast %cst_89 : f32 to vector<256xf32>
      %237 = arith.cmpf ogt, %235, %236 : vector<256xf32>
      %238 = vector.shape_cast %237 : vector<256xi1> to vector<1x256xi1>
      %239 = arith.ori %225, %238 : vector<1x256xi1>
      %240 = vector.broadcast %72 : vector<1x1xf32> to vector<8x1xf32>
      %241 = arith.addf %240, %43 : vector<8x1xf32>
      %242 = arith.fptosi %241 : vector<8x1xf32> to vector<8x1xi32>
      %243 = vector.broadcast %242 : vector<8x1xi32> to vector<8x256xi32>
      %244 = vector.broadcast %30 : vector<1x256xi32> to vector<8x256xi32>
      %245 = arith.cmpi eq, %243, %244 : vector<8x256xi32>
      %cst_90 = arith.constant 1.000000e+00 : f32
      %cst_91 = arith.constant 0.000000e+00 : f32
      %246 = vector.broadcast %cst_90 : f32 to vector<8x256xf32>
      %247 = vector.broadcast %cst_91 : f32 to vector<8x256xf32>
      %248 = arith.select %245, %246, %247 : vector<8x256xi1>, vector<8x256xf32>
      %cst_92 = arith.constant dense<0xFF800000> : vector<256xf32>
      %249 = vector.multi_reduction <maximumf>, %248, %cst_92 [0] : vector<8x256xf32> to vector<256xf32>
      %cst_93 = arith.constant 0.000000e+00 : f32
      %250 = vector.broadcast %cst_93 : f32 to vector<256xf32>
      %251 = arith.cmpf ogt, %249, %250 : vector<256xf32>
      %252 = vector.shape_cast %251 : vector<256xi1> to vector<1x256xi1>
      %253 = arith.ori %239, %252 : vector<1x256xi1>
      %254 = vector.broadcast %72 : vector<1x1xf32> to vector<8x1xf32>
      %255 = arith.addf %254, %44 : vector<8x1xf32>
      %256 = arith.fptosi %255 : vector<8x1xf32> to vector<8x1xi32>
      %257 = vector.broadcast %256 : vector<8x1xi32> to vector<8x256xi32>
      %258 = vector.broadcast %30 : vector<1x256xi32> to vector<8x256xi32>
      %259 = arith.cmpi eq, %257, %258 : vector<8x256xi32>
      %cst_94 = arith.constant 1.000000e+00 : f32
      %cst_95 = arith.constant 0.000000e+00 : f32
      %260 = vector.broadcast %cst_94 : f32 to vector<8x256xf32>
      %261 = vector.broadcast %cst_95 : f32 to vector<8x256xf32>
      %262 = arith.select %259, %260, %261 : vector<8x256xi1>, vector<8x256xf32>
      %cst_96 = arith.constant dense<0xFF800000> : vector<256xf32>
      %263 = vector.multi_reduction <maximumf>, %262, %cst_96 [0] : vector<8x256xf32> to vector<256xf32>
      %cst_97 = arith.constant 0.000000e+00 : f32
      %264 = vector.broadcast %cst_97 : f32 to vector<256xf32>
      %265 = arith.cmpf ogt, %263, %264 : vector<256xf32>
      %266 = vector.shape_cast %265 : vector<256xi1> to vector<1x256xi1>
      %267 = arith.ori %253, %266 : vector<1x256xi1>
      %268 = vector.broadcast %72 : vector<1x1xf32> to vector<8x1xf32>
      %269 = arith.addf %268, %45 : vector<8x1xf32>
      %270 = arith.fptosi %269 : vector<8x1xf32> to vector<8x1xi32>
      %271 = vector.broadcast %270 : vector<8x1xi32> to vector<8x256xi32>
      %272 = vector.broadcast %30 : vector<1x256xi32> to vector<8x256xi32>
      %273 = arith.cmpi eq, %271, %272 : vector<8x256xi32>
      %cst_98 = arith.constant 1.000000e+00 : f32
      %cst_99 = arith.constant 0.000000e+00 : f32
      %274 = vector.broadcast %cst_98 : f32 to vector<8x256xf32>
      %275 = vector.broadcast %cst_99 : f32 to vector<8x256xf32>
      %276 = arith.select %273, %274, %275 : vector<8x256xi1>, vector<8x256xf32>
      %cst_100 = arith.constant dense<0xFF800000> : vector<256xf32>
      %277 = vector.multi_reduction <maximumf>, %276, %cst_100 [0] : vector<8x256xf32> to vector<256xf32>
      %cst_101 = arith.constant 0.000000e+00 : f32
      %278 = vector.broadcast %cst_101 : f32 to vector<256xf32>
      %279 = arith.cmpf ogt, %277, %278 : vector<256xf32>
      %280 = vector.shape_cast %279 : vector<256xi1> to vector<1x256xi1>
      %281 = arith.ori %267, %280 : vector<1x256xi1>
      %c0_102 = arith.constant 0 : index
      %c0_103 = arith.constant 0 : index
      %c0_104 = arith.constant 0 : index
      %282 = vector.load %arg9[%c0_102, %c0_103, %c0_104] : memref<1x1x256xf32, #tpu.memory_space<vmem>>, vector<1x1x256xf32>
      %283 = vector.shape_cast %282 : vector<1x1x256xf32> to vector<1x256xf32>
      %cst_105 = arith.constant 1.000000e+00 : f32
      %284 = vector.broadcast %cst_105 : f32 to vector<1x256xf32>
      %285 = arith.select %281, %284, %283 : vector<1x256xi1>, vector<1x256xf32>
      %c0_106 = arith.constant 0 : index
      %c0_107 = arith.constant 0 : index
      %c0_108 = arith.constant 0 : index
      %286 = vector.load %arg9[%c0_106, %c0_107, %c0_108] : memref<1x1x256xf32, #tpu.memory_space<vmem>>, vector<1x1x256xf32>
      %287 = vector.shape_cast %286 : vector<1x1x256xf32> to vector<1x256xf32>
      %288 = vector.shape_cast %285 : vector<1x256xf32> to vector<1x1x256xf32>
      tpu.vector_store %arg9[%c0_106, %c0_107, %c0_108], %288 {strides = array<i32>} : memref<1x1x256xf32, #tpu.memory_space<vmem>>, vector<1x1x256xf32>,
    } else {
    }
    %c6_i32 = arith.constant 6 : i32
    %66 = arith.cmpi sgt, %1, %c6_i32 : i32
    %67 = arith.extui %66 : i1 to i32
    %c0_i32_40 = arith.constant 0 : i32
    %68 = arith.cmpi ne, %67, %c0_i32_40 : i32
    scf.if %68 {
      %72 = vector.extract_strided_slice %47 {offsets = [6, 0], sizes = [1, 1], strides = [1, 1]} : vector<8x1xf32> to vector<1x1xf32>
      %73 = vector.broadcast %72 : vector<1x1xf32> to vector<8x1xf32>
      %74 = arith.addf %73, %31 : vector<8x1xf32>
      %75 = arith.fptosi %74 : vector<8x1xf32> to vector<8x1xi32>
      %76 = vector.broadcast %75 : vector<8x1xi32> to vector<8x256xi32>
      %77 = vector.broadcast %30 : vector<1x256xi32> to vector<8x256xi32>
      %78 = arith.cmpi eq, %76, %77 : vector<8x256xi32>
      %cst_42 = arith.constant 1.000000e+00 : f32
      %cst_43 = arith.constant 0.000000e+00 : f32
      %79 = vector.broadcast %cst_42 : f32 to vector<8x256xf32>
      %80 = vector.broadcast %cst_43 : f32 to vector<8x256xf32>
      %81 = arith.select %78, %79, %80 : vector<8x256xi1>, vector<8x256xf32>
      %cst_44 = arith.constant dense<0xFF800000> : vector<256xf32>
      %82 = vector.multi_reduction <maximumf>, %81, %cst_44 [0] : vector<8x256xf32> to vector<256xf32>
      %cst_45 = arith.constant 0.000000e+00 : f32
      %83 = vector.broadcast %cst_45 : f32 to vector<256xf32>
      %84 = arith.cmpf ogt, %82, %83 : vector<256xf32>
      %85 = vector.shape_cast %84 : vector<256xi1> to vector<1x256xi1>
      %86 = vector.broadcast %72 : vector<1x1xf32> to vector<8x1xf32>
      %87 = arith.addf %86, %32 : vector<8x1xf32>
      %88 = arith.fptosi %87 : vector<8x1xf32> to vector<8x1xi32>
      %89 = vector.broadcast %88 : vector<8x1xi32> to vector<8x256xi32>
      %90 = vector.broadcast %30 : vector<1x256xi32> to vector<8x256xi32>
      %91 = arith.cmpi eq, %89, %90 : vector<8x256xi32>
      %cst_46 = arith.constant 1.000000e+00 : f32
      %cst_47 = arith.constant 0.000000e+00 : f32
      %92 = vector.broadcast %cst_46 : f32 to vector<8x256xf32>
      %93 = vector.broadcast %cst_47 : f32 to vector<8x256xf32>
      %94 = arith.select %91, %92, %93 : vector<8x256xi1>, vector<8x256xf32>
      %cst_48 = arith.constant dense<0xFF800000> : vector<256xf32>
      %95 = vector.multi_reduction <maximumf>, %94, %cst_48 [0] : vector<8x256xf32> to vector<256xf32>
      %cst_49 = arith.constant 0.000000e+00 : f32
      %96 = vector.broadcast %cst_49 : f32 to vector<256xf32>
      %97 = arith.cmpf ogt, %95, %96 : vector<256xf32>
      %98 = vector.shape_cast %97 : vector<256xi1> to vector<1x256xi1>
      %99 = arith.ori %85, %98 : vector<1x256xi1>
      %100 = vector.broadcast %72 : vector<1x1xf32> to vector<8x1xf32>
      %101 = arith.addf %100, %33 : vector<8x1xf32>
      %102 = arith.fptosi %101 : vector<8x1xf32> to vector<8x1xi32>
      %103 = vector.broadcast %102 : vector<8x1xi32> to vector<8x256xi32>
      %104 = vector.broadcast %30 : vector<1x256xi32> to vector<8x256xi32>
      %105 = arith.cmpi eq, %103, %104 : vector<8x256xi32>
      %cst_50 = arith.constant 1.000000e+00 : f32
      %cst_51 = arith.constant 0.000000e+00 : f32
      %106 = vector.broadcast %cst_50 : f32 to vector<8x256xf32>
      %107 = vector.broadcast %cst_51 : f32 to vector<8x256xf32>
      %108 = arith.select %105, %106, %107 : vector<8x256xi1>, vector<8x256xf32>
      %cst_52 = arith.constant dense<0xFF800000> : vector<256xf32>
      %109 = vector.multi_reduction <maximumf>, %108, %cst_52 [0] : vector<8x256xf32> to vector<256xf32>
      %cst_53 = arith.constant 0.000000e+00 : f32
      %110 = vector.broadcast %cst_53 : f32 to vector<256xf32>
      %111 = arith.cmpf ogt, %109, %110 : vector<256xf32>
      %112 = vector.shape_cast %111 : vector<256xi1> to vector<1x256xi1>
      %113 = arith.ori %99, %112 : vector<1x256xi1>
      %114 = vector.broadcast %72 : vector<1x1xf32> to vector<8x1xf32>
      %115 = arith.addf %114, %34 : vector<8x1xf32>
      %116 = arith.fptosi %115 : vector<8x1xf32> to vector<8x1xi32>
      %117 = vector.broadcast %116 : vector<8x1xi32> to vector<8x256xi32>
      %118 = vector.broadcast %30 : vector<1x256xi32> to vector<8x256xi32>
      %119 = arith.cmpi eq, %117, %118 : vector<8x256xi32>
      %cst_54 = arith.constant 1.000000e+00 : f32
      %cst_55 = arith.constant 0.000000e+00 : f32
      %120 = vector.broadcast %cst_54 : f32 to vector<8x256xf32>
      %121 = vector.broadcast %cst_55 : f32 to vector<8x256xf32>
      %122 = arith.select %119, %120, %121 : vector<8x256xi1>, vector<8x256xf32>
      %cst_56 = arith.constant dense<0xFF800000> : vector<256xf32>
      %123 = vector.multi_reduction <maximumf>, %122, %cst_56 [0] : vector<8x256xf32> to vector<256xf32>
      %cst_57 = arith.constant 0.000000e+00 : f32
      %124 = vector.broadcast %cst_57 : f32 to vector<256xf32>
      %125 = arith.cmpf ogt, %123, %124 : vector<256xf32>
      %126 = vector.shape_cast %125 : vector<256xi1> to vector<1x256xi1>
      %127 = arith.ori %113, %126 : vector<1x256xi1>
      %128 = vector.broadcast %72 : vector<1x1xf32> to vector<8x1xf32>
      %129 = arith.addf %128, %35 : vector<8x1xf32>
      %130 = arith.fptosi %129 : vector<8x1xf32> to vector<8x1xi32>
      %131 = vector.broadcast %130 : vector<8x1xi32> to vector<8x256xi32>
      %132 = vector.broadcast %30 : vector<1x256xi32> to vector<8x256xi32>
      %133 = arith.cmpi eq, %131, %132 : vector<8x256xi32>
      %cst_58 = arith.constant 1.000000e+00 : f32
      %cst_59 = arith.constant 0.000000e+00 : f32
      %134 = vector.broadcast %cst_58 : f32 to vector<8x256xf32>
      %135 = vector.broadcast %cst_59 : f32 to vector<8x256xf32>
      %136 = arith.select %133, %134, %135 : vector<8x256xi1>, vector<8x256xf32>
      %cst_60 = arith.constant dense<0xFF800000> : vector<256xf32>
      %137 = vector.multi_reduction <maximumf>, %136, %cst_60 [0] : vector<8x256xf32> to vector<256xf32>
      %cst_61 = arith.constant 0.000000e+00 : f32
      %138 = vector.broadcast %cst_61 : f32 to vector<256xf32>
      %139 = arith.cmpf ogt, %137, %138 : vector<256xf32>
      %140 = vector.shape_cast %139 : vector<256xi1> to vector<1x256xi1>
      %141 = arith.ori %127, %140 : vector<1x256xi1>
      %142 = vector.broadcast %72 : vector<1x1xf32> to vector<8x1xf32>
      %143 = arith.addf %142, %36 : vector<8x1xf32>
      %144 = arith.fptosi %143 : vector<8x1xf32> to vector<8x1xi32>
      %145 = vector.broadcast %144 : vector<8x1xi32> to vector<8x256xi32>
      %146 = vector.broadcast %30 : vector<1x256xi32> to vector<8x256xi32>
      %147 = arith.cmpi eq, %145, %146 : vector<8x256xi32>
      %cst_62 = arith.constant 1.000000e+00 : f32
      %cst_63 = arith.constant 0.000000e+00 : f32
      %148 = vector.broadcast %cst_62 : f32 to vector<8x256xf32>
      %149 = vector.broadcast %cst_63 : f32 to vector<8x256xf32>
      %150 = arith.select %147, %148, %149 : vector<8x256xi1>, vector<8x256xf32>
      %cst_64 = arith.constant dense<0xFF800000> : vector<256xf32>
      %151 = vector.multi_reduction <maximumf>, %150, %cst_64 [0] : vector<8x256xf32> to vector<256xf32>
      %cst_65 = arith.constant 0.000000e+00 : f32
      %152 = vector.broadcast %cst_65 : f32 to vector<256xf32>
      %153 = arith.cmpf ogt, %151, %152 : vector<256xf32>
      %154 = vector.shape_cast %153 : vector<256xi1> to vector<1x256xi1>
      %155 = arith.ori %141, %154 : vector<1x256xi1>
      %156 = vector.broadcast %72 : vector<1x1xf32> to vector<8x1xf32>
      %157 = arith.addf %156, %37 : vector<8x1xf32>
      %158 = arith.fptosi %157 : vector<8x1xf32> to vector<8x1xi32>
      %159 = vector.broadcast %158 : vector<8x1xi32> to vector<8x256xi32>
      %160 = vector.broadcast %30 : vector<1x256xi32> to vector<8x256xi32>
      %161 = arith.cmpi eq, %159, %160 : vector<8x256xi32>
      %cst_66 = arith.constant 1.000000e+00 : f32
      %cst_67 = arith.constant 0.000000e+00 : f32
      %162 = vector.broadcast %cst_66 : f32 to vector<8x256xf32>
      %163 = vector.broadcast %cst_67 : f32 to vector<8x256xf32>
      %164 = arith.select %161, %162, %163 : vector<8x256xi1>, vector<8x256xf32>
      %cst_68 = arith.constant dense<0xFF800000> : vector<256xf32>
      %165 = vector.multi_reduction <maximumf>, %164, %cst_68 [0] : vector<8x256xf32> to vector<256xf32>
      %cst_69 = arith.constant 0.000000e+00 : f32
      %166 = vector.broadcast %cst_69 : f32 to vector<256xf32>
      %167 = arith.cmpf ogt, %165, %166 : vector<256xf32>
      %168 = vector.shape_cast %167 : vector<256xi1> to vector<1x256xi1>
      %169 = arith.ori %155, %168 : vector<1x256xi1>
      %170 = vector.broadcast %72 : vector<1x1xf32> to vector<8x1xf32>
      %171 = arith.addf %170, %38 : vector<8x1xf32>
      %172 = arith.fptosi %171 : vector<8x1xf32> to vector<8x1xi32>
      %173 = vector.broadcast %172 : vector<8x1xi32> to vector<8x256xi32>
      %174 = vector.broadcast %30 : vector<1x256xi32> to vector<8x256xi32>
      %175 = arith.cmpi eq, %173, %174 : vector<8x256xi32>
      %cst_70 = arith.constant 1.000000e+00 : f32
      %cst_71 = arith.constant 0.000000e+00 : f32
      %176 = vector.broadcast %cst_70 : f32 to vector<8x256xf32>
      %177 = vector.broadcast %cst_71 : f32 to vector<8x256xf32>
      %178 = arith.select %175, %176, %177 : vector<8x256xi1>, vector<8x256xf32>
      %cst_72 = arith.constant dense<0xFF800000> : vector<256xf32>
      %179 = vector.multi_reduction <maximumf>, %178, %cst_72 [0] : vector<8x256xf32> to vector<256xf32>
      %cst_73 = arith.constant 0.000000e+00 : f32
      %180 = vector.broadcast %cst_73 : f32 to vector<256xf32>
      %181 = arith.cmpf ogt, %179, %180 : vector<256xf32>
      %182 = vector.shape_cast %181 : vector<256xi1> to vector<1x256xi1>
      %183 = arith.ori %169, %182 : vector<1x256xi1>
      %184 = vector.broadcast %72 : vector<1x1xf32> to vector<8x1xf32>
      %185 = arith.addf %184, %39 : vector<8x1xf32>
      %186 = arith.fptosi %185 : vector<8x1xf32> to vector<8x1xi32>
      %187 = vector.broadcast %186 : vector<8x1xi32> to vector<8x256xi32>
      %188 = vector.broadcast %30 : vector<1x256xi32> to vector<8x256xi32>
      %189 = arith.cmpi eq, %187, %188 : vector<8x256xi32>
      %cst_74 = arith.constant 1.000000e+00 : f32
      %cst_75 = arith.constant 0.000000e+00 : f32
      %190 = vector.broadcast %cst_74 : f32 to vector<8x256xf32>
      %191 = vector.broadcast %cst_75 : f32 to vector<8x256xf32>
      %192 = arith.select %189, %190, %191 : vector<8x256xi1>, vector<8x256xf32>
      %cst_76 = arith.constant dense<0xFF800000> : vector<256xf32>
      %193 = vector.multi_reduction <maximumf>, %192, %cst_76 [0] : vector<8x256xf32> to vector<256xf32>
      %cst_77 = arith.constant 0.000000e+00 : f32
      %194 = vector.broadcast %cst_77 : f32 to vector<256xf32>
      %195 = arith.cmpf ogt, %193, %194 : vector<256xf32>
      %196 = vector.shape_cast %195 : vector<256xi1> to vector<1x256xi1>
      %197 = arith.ori %183, %196 : vector<1x256xi1>
      %198 = vector.broadcast %72 : vector<1x1xf32> to vector<8x1xf32>
      %199 = arith.addf %198, %40 : vector<8x1xf32>
      %200 = arith.fptosi %199 : vector<8x1xf32> to vector<8x1xi32>
      %201 = vector.broadcast %200 : vector<8x1xi32> to vector<8x256xi32>
      %202 = vector.broadcast %30 : vector<1x256xi32> to vector<8x256xi32>
      %203 = arith.cmpi eq, %201, %202 : vector<8x256xi32>
      %cst_78 = arith.constant 1.000000e+00 : f32
      %cst_79 = arith.constant 0.000000e+00 : f32
      %204 = vector.broadcast %cst_78 : f32 to vector<8x256xf32>
      %205 = vector.broadcast %cst_79 : f32 to vector<8x256xf32>
      %206 = arith.select %203, %204, %205 : vector<8x256xi1>, vector<8x256xf32>
      %cst_80 = arith.constant dense<0xFF800000> : vector<256xf32>
      %207 = vector.multi_reduction <maximumf>, %206, %cst_80 [0] : vector<8x256xf32> to vector<256xf32>
      %cst_81 = arith.constant 0.000000e+00 : f32
      %208 = vector.broadcast %cst_81 : f32 to vector<256xf32>
      %209 = arith.cmpf ogt, %207, %208 : vector<256xf32>
      %210 = vector.shape_cast %209 : vector<256xi1> to vector<1x256xi1>
      %211 = arith.ori %197, %210 : vector<1x256xi1>
      %212 = vector.broadcast %72 : vector<1x1xf32> to vector<8x1xf32>
      %213 = arith.addf %212, %41 : vector<8x1xf32>
      %214 = arith.fptosi %213 : vector<8x1xf32> to vector<8x1xi32>
      %215 = vector.broadcast %214 : vector<8x1xi32> to vector<8x256xi32>
      %216 = vector.broadcast %30 : vector<1x256xi32> to vector<8x256xi32>
      %217 = arith.cmpi eq, %215, %216 : vector<8x256xi32>
      %cst_82 = arith.constant 1.000000e+00 : f32
      %cst_83 = arith.constant 0.000000e+00 : f32
      %218 = vector.broadcast %cst_82 : f32 to vector<8x256xf32>
      %219 = vector.broadcast %cst_83 : f32 to vector<8x256xf32>
      %220 = arith.select %217, %218, %219 : vector<8x256xi1>, vector<8x256xf32>
      %cst_84 = arith.constant dense<0xFF800000> : vector<256xf32>
      %221 = vector.multi_reduction <maximumf>, %220, %cst_84 [0] : vector<8x256xf32> to vector<256xf32>
      %cst_85 = arith.constant 0.000000e+00 : f32
      %222 = vector.broadcast %cst_85 : f32 to vector<256xf32>
      %223 = arith.cmpf ogt, %221, %222 : vector<256xf32>
      %224 = vector.shape_cast %223 : vector<256xi1> to vector<1x256xi1>
      %225 = arith.ori %211, %224 : vector<1x256xi1>
      %226 = vector.broadcast %72 : vector<1x1xf32> to vector<8x1xf32>
      %227 = arith.addf %226, %42 : vector<8x1xf32>
      %228 = arith.fptosi %227 : vector<8x1xf32> to vector<8x1xi32>
      %229 = vector.broadcast %228 : vector<8x1xi32> to vector<8x256xi32>
      %230 = vector.broadcast %30 : vector<1x256xi32> to vector<8x256xi32>
      %231 = arith.cmpi eq, %229, %230 : vector<8x256xi32>
      %cst_86 = arith.constant 1.000000e+00 : f32
      %cst_87 = arith.constant 0.000000e+00 : f32
      %232 = vector.broadcast %cst_86 : f32 to vector<8x256xf32>
      %233 = vector.broadcast %cst_87 : f32 to vector<8x256xf32>
      %234 = arith.select %231, %232, %233 : vector<8x256xi1>, vector<8x256xf32>
      %cst_88 = arith.constant dense<0xFF800000> : vector<256xf32>
      %235 = vector.multi_reduction <maximumf>, %234, %cst_88 [0] : vector<8x256xf32> to vector<256xf32>
      %cst_89 = arith.constant 0.000000e+00 : f32
      %236 = vector.broadcast %cst_89 : f32 to vector<256xf32>
      %237 = arith.cmpf ogt, %235, %236 : vector<256xf32>
      %238 = vector.shape_cast %237 : vector<256xi1> to vector<1x256xi1>
      %239 = arith.ori %225, %238 : vector<1x256xi1>
      %240 = vector.broadcast %72 : vector<1x1xf32> to vector<8x1xf32>
      %241 = arith.addf %240, %43 : vector<8x1xf32>
      %242 = arith.fptosi %241 : vector<8x1xf32> to vector<8x1xi32>
      %243 = vector.broadcast %242 : vector<8x1xi32> to vector<8x256xi32>
      %244 = vector.broadcast %30 : vector<1x256xi32> to vector<8x256xi32>
      %245 = arith.cmpi eq, %243, %244 : vector<8x256xi32>
      %cst_90 = arith.constant 1.000000e+00 : f32
      %cst_91 = arith.constant 0.000000e+00 : f32
      %246 = vector.broadcast %cst_90 : f32 to vector<8x256xf32>
      %247 = vector.broadcast %cst_91 : f32 to vector<8x256xf32>
      %248 = arith.select %245, %246, %247 : vector<8x256xi1>, vector<8x256xf32>
      %cst_92 = arith.constant dense<0xFF800000> : vector<256xf32>
      %249 = vector.multi_reduction <maximumf>, %248, %cst_92 [0] : vector<8x256xf32> to vector<256xf32>
      %cst_93 = arith.constant 0.000000e+00 : f32
      %250 = vector.broadcast %cst_93 : f32 to vector<256xf32>
      %251 = arith.cmpf ogt, %249, %250 : vector<256xf32>
      %252 = vector.shape_cast %251 : vector<256xi1> to vector<1x256xi1>
      %253 = arith.ori %239, %252 : vector<1x256xi1>
      %254 = vector.broadcast %72 : vector<1x1xf32> to vector<8x1xf32>
      %255 = arith.addf %254, %44 : vector<8x1xf32>
      %256 = arith.fptosi %255 : vector<8x1xf32> to vector<8x1xi32>
      %257 = vector.broadcast %256 : vector<8x1xi32> to vector<8x256xi32>
      %258 = vector.broadcast %30 : vector<1x256xi32> to vector<8x256xi32>
      %259 = arith.cmpi eq, %257, %258 : vector<8x256xi32>
      %cst_94 = arith.constant 1.000000e+00 : f32
      %cst_95 = arith.constant 0.000000e+00 : f32
      %260 = vector.broadcast %cst_94 : f32 to vector<8x256xf32>
      %261 = vector.broadcast %cst_95 : f32 to vector<8x256xf32>
      %262 = arith.select %259, %260, %261 : vector<8x256xi1>, vector<8x256xf32>
      %cst_96 = arith.constant dense<0xFF800000> : vector<256xf32>
      %263 = vector.multi_reduction <maximumf>, %262, %cst_96 [0] : vector<8x256xf32> to vector<256xf32>
      %cst_97 = arith.constant 0.000000e+00 : f32
      %264 = vector.broadcast %cst_97 : f32 to vector<256xf32>
      %265 = arith.cmpf ogt, %263, %264 : vector<256xf32>
      %266 = vector.shape_cast %265 : vector<256xi1> to vector<1x256xi1>
      %267 = arith.ori %253, %266 : vector<1x256xi1>
      %268 = vector.broadcast %72 : vector<1x1xf32> to vector<8x1xf32>
      %269 = arith.addf %268, %45 : vector<8x1xf32>
      %270 = arith.fptosi %269 : vector<8x1xf32> to vector<8x1xi32>
      %271 = vector.broadcast %270 : vector<8x1xi32> to vector<8x256xi32>
      %272 = vector.broadcast %30 : vector<1x256xi32> to vector<8x256xi32>
      %273 = arith.cmpi eq, %271, %272 : vector<8x256xi32>
      %cst_98 = arith.constant 1.000000e+00 : f32
      %cst_99 = arith.constant 0.000000e+00 : f32
      %274 = vector.broadcast %cst_98 : f32 to vector<8x256xf32>
      %275 = vector.broadcast %cst_99 : f32 to vector<8x256xf32>
      %276 = arith.select %273, %274, %275 : vector<8x256xi1>, vector<8x256xf32>
      %cst_100 = arith.constant dense<0xFF800000> : vector<256xf32>
      %277 = vector.multi_reduction <maximumf>, %276, %cst_100 [0] : vector<8x256xf32> to vector<256xf32>
      %cst_101 = arith.constant 0.000000e+00 : f32
      %278 = vector.broadcast %cst_101 : f32 to vector<256xf32>
      %279 = arith.cmpf ogt, %277, %278 : vector<256xf32>
      %280 = vector.shape_cast %279 : vector<256xi1> to vector<1x256xi1>
      %281 = arith.ori %267, %280 : vector<1x256xi1>
      %c0_102 = arith.constant 0 : index
      %c0_103 = arith.constant 0 : index
      %c0_104 = arith.constant 0 : index
      %282 = vector.load %arg9[%c0_102, %c0_103, %c0_104] : memref<1x1x256xf32, #tpu.memory_space<vmem>>, vector<1x1x256xf32>
      %283 = vector.shape_cast %282 : vector<1x1x256xf32> to vector<1x256xf32>
      %cst_105 = arith.constant 1.000000e+00 : f32
      %284 = vector.broadcast %cst_105 : f32 to vector<1x256xf32>
      %285 = arith.select %281, %284, %283 : vector<1x256xi1>, vector<1x256xf32>
      %c0_106 = arith.constant 0 : index
      %c0_107 = arith.constant 0 : index
      %c0_108 = arith.constant 0 : index
      %286 = vector.load %arg9[%c0_106, %c0_107, %c0_108] : memref<1x1x256xf32, #tpu.memory_space<vmem>>, vector<1x1x256xf32>
      %287 = vector.shape_cast %286 : vector<1x1x256xf32> to vector<1x256xf32>
      %288 = vector.shape_cast %285 : vector<1x256xf32> to vector<1x1x256xf32>
      tpu.vector_store %arg9[%c0_106, %c0_107, %c0_108], %288 {strides = array<i32>} : memref<1x1x256xf32, #tpu.memory_space<vmem>>, vector<1x1x256xf32>,
    } else {
    }
    %c7_i32 = arith.constant 7 : i32
    %69 = arith.cmpi sgt, %1, %c7_i32 : i32
    %70 = arith.extui %69 : i1 to i32
    %c0_i32_41 = arith.constant 0 : i32
    %71 = arith.cmpi ne, %70, %c0_i32_41 : i32
    scf.if %71 {
      %72 = vector.extract_strided_slice %47 {offsets = [7, 0], sizes = [1, 1], strides = [1, 1]} : vector<8x1xf32> to vector<1x1xf32>
      %73 = vector.broadcast %72 : vector<1x1xf32> to vector<8x1xf32>
      %74 = arith.addf %73, %31 : vector<8x1xf32>
      %75 = arith.fptosi %74 : vector<8x1xf32> to vector<8x1xi32>
      %76 = vector.broadcast %75 : vector<8x1xi32> to vector<8x256xi32>
      %77 = vector.broadcast %30 : vector<1x256xi32> to vector<8x256xi32>
      %78 = arith.cmpi eq, %76, %77 : vector<8x256xi32>
      %cst_42 = arith.constant 1.000000e+00 : f32
      %cst_43 = arith.constant 0.000000e+00 : f32
      %79 = vector.broadcast %cst_42 : f32 to vector<8x256xf32>
      %80 = vector.broadcast %cst_43 : f32 to vector<8x256xf32>
      %81 = arith.select %78, %79, %80 : vector<8x256xi1>, vector<8x256xf32>
      %cst_44 = arith.constant dense<0xFF800000> : vector<256xf32>
      %82 = vector.multi_reduction <maximumf>, %81, %cst_44 [0] : vector<8x256xf32> to vector<256xf32>
      %cst_45 = arith.constant 0.000000e+00 : f32
      %83 = vector.broadcast %cst_45 : f32 to vector<256xf32>
      %84 = arith.cmpf ogt, %82, %83 : vector<256xf32>
      %85 = vector.shape_cast %84 : vector<256xi1> to vector<1x256xi1>
      %86 = vector.broadcast %72 : vector<1x1xf32> to vector<8x1xf32>
      %87 = arith.addf %86, %32 : vector<8x1xf32>
      %88 = arith.fptosi %87 : vector<8x1xf32> to vector<8x1xi32>
      %89 = vector.broadcast %88 : vector<8x1xi32> to vector<8x256xi32>
      %90 = vector.broadcast %30 : vector<1x256xi32> to vector<8x256xi32>
      %91 = arith.cmpi eq, %89, %90 : vector<8x256xi32>
      %cst_46 = arith.constant 1.000000e+00 : f32
      %cst_47 = arith.constant 0.000000e+00 : f32
      %92 = vector.broadcast %cst_46 : f32 to vector<8x256xf32>
      %93 = vector.broadcast %cst_47 : f32 to vector<8x256xf32>
      %94 = arith.select %91, %92, %93 : vector<8x256xi1>, vector<8x256xf32>
      %cst_48 = arith.constant dense<0xFF800000> : vector<256xf32>
      %95 = vector.multi_reduction <maximumf>, %94, %cst_48 [0] : vector<8x256xf32> to vector<256xf32>
      %cst_49 = arith.constant 0.000000e+00 : f32
      %96 = vector.broadcast %cst_49 : f32 to vector<256xf32>
      %97 = arith.cmpf ogt, %95, %96 : vector<256xf32>
      %98 = vector.shape_cast %97 : vector<256xi1> to vector<1x256xi1>
      %99 = arith.ori %85, %98 : vector<1x256xi1>
      %100 = vector.broadcast %72 : vector<1x1xf32> to vector<8x1xf32>
      %101 = arith.addf %100, %33 : vector<8x1xf32>
      %102 = arith.fptosi %101 : vector<8x1xf32> to vector<8x1xi32>
      %103 = vector.broadcast %102 : vector<8x1xi32> to vector<8x256xi32>
      %104 = vector.broadcast %30 : vector<1x256xi32> to vector<8x256xi32>
      %105 = arith.cmpi eq, %103, %104 : vector<8x256xi32>
      %cst_50 = arith.constant 1.000000e+00 : f32
      %cst_51 = arith.constant 0.000000e+00 : f32
      %106 = vector.broadcast %cst_50 : f32 to vector<8x256xf32>
      %107 = vector.broadcast %cst_51 : f32 to vector<8x256xf32>
      %108 = arith.select %105, %106, %107 : vector<8x256xi1>, vector<8x256xf32>
      %cst_52 = arith.constant dense<0xFF800000> : vector<256xf32>
      %109 = vector.multi_reduction <maximumf>, %108, %cst_52 [0] : vector<8x256xf32> to vector<256xf32>
      %cst_53 = arith.constant 0.000000e+00 : f32
      %110 = vector.broadcast %cst_53 : f32 to vector<256xf32>
      %111 = arith.cmpf ogt, %109, %110 : vector<256xf32>
      %112 = vector.shape_cast %111 : vector<256xi1> to vector<1x256xi1>
      %113 = arith.ori %99, %112 : vector<1x256xi1>
      %114 = vector.broadcast %72 : vector<1x1xf32> to vector<8x1xf32>
      %115 = arith.addf %114, %34 : vector<8x1xf32>
      %116 = arith.fptosi %115 : vector<8x1xf32> to vector<8x1xi32>
      %117 = vector.broadcast %116 : vector<8x1xi32> to vector<8x256xi32>
      %118 = vector.broadcast %30 : vector<1x256xi32> to vector<8x256xi32>
      %119 = arith.cmpi eq, %117, %118 : vector<8x256xi32>
      %cst_54 = arith.constant 1.000000e+00 : f32
      %cst_55 = arith.constant 0.000000e+00 : f32
      %120 = vector.broadcast %cst_54 : f32 to vector<8x256xf32>
      %121 = vector.broadcast %cst_55 : f32 to vector<8x256xf32>
      %122 = arith.select %119, %120, %121 : vector<8x256xi1>, vector<8x256xf32>
      %cst_56 = arith.constant dense<0xFF800000> : vector<256xf32>
      %123 = vector.multi_reduction <maximumf>, %122, %cst_56 [0] : vector<8x256xf32> to vector<256xf32>
      %cst_57 = arith.constant 0.000000e+00 : f32
      %124 = vector.broadcast %cst_57 : f32 to vector<256xf32>
      %125 = arith.cmpf ogt, %123, %124 : vector<256xf32>
      %126 = vector.shape_cast %125 : vector<256xi1> to vector<1x256xi1>
      %127 = arith.ori %113, %126 : vector<1x256xi1>
      %128 = vector.broadcast %72 : vector<1x1xf32> to vector<8x1xf32>
      %129 = arith.addf %128, %35 : vector<8x1xf32>
      %130 = arith.fptosi %129 : vector<8x1xf32> to vector<8x1xi32>
      %131 = vector.broadcast %130 : vector<8x1xi32> to vector<8x256xi32>
      %132 = vector.broadcast %30 : vector<1x256xi32> to vector<8x256xi32>
      %133 = arith.cmpi eq, %131, %132 : vector<8x256xi32>
      %cst_58 = arith.constant 1.000000e+00 : f32
      %cst_59 = arith.constant 0.000000e+00 : f32
      %134 = vector.broadcast %cst_58 : f32 to vector<8x256xf32>
      %135 = vector.broadcast %cst_59 : f32 to vector<8x256xf32>
      %136 = arith.select %133, %134, %135 : vector<8x256xi1>, vector<8x256xf32>
      %cst_60 = arith.constant dense<0xFF800000> : vector<256xf32>
      %137 = vector.multi_reduction <maximumf>, %136, %cst_60 [0] : vector<8x256xf32> to vector<256xf32>
      %cst_61 = arith.constant 0.000000e+00 : f32
      %138 = vector.broadcast %cst_61 : f32 to vector<256xf32>
      %139 = arith.cmpf ogt, %137, %138 : vector<256xf32>
      %140 = vector.shape_cast %139 : vector<256xi1> to vector<1x256xi1>
      %141 = arith.ori %127, %140 : vector<1x256xi1>
      %142 = vector.broadcast %72 : vector<1x1xf32> to vector<8x1xf32>
      %143 = arith.addf %142, %36 : vector<8x1xf32>
      %144 = arith.fptosi %143 : vector<8x1xf32> to vector<8x1xi32>
      %145 = vector.broadcast %144 : vector<8x1xi32> to vector<8x256xi32>
      %146 = vector.broadcast %30 : vector<1x256xi32> to vector<8x256xi32>
      %147 = arith.cmpi eq, %145, %146 : vector<8x256xi32>
      %cst_62 = arith.constant 1.000000e+00 : f32
      %cst_63 = arith.constant 0.000000e+00 : f32
      %148 = vector.broadcast %cst_62 : f32 to vector<8x256xf32>
      %149 = vector.broadcast %cst_63 : f32 to vector<8x256xf32>
      %150 = arith.select %147, %148, %149 : vector<8x256xi1>, vector<8x256xf32>
      %cst_64 = arith.constant dense<0xFF800000> : vector<256xf32>
      %151 = vector.multi_reduction <maximumf>, %150, %cst_64 [0] : vector<8x256xf32> to vector<256xf32>
      %cst_65 = arith.constant 0.000000e+00 : f32
      %152 = vector.broadcast %cst_65 : f32 to vector<256xf32>
      %153 = arith.cmpf ogt, %151, %152 : vector<256xf32>
      %154 = vector.shape_cast %153 : vector<256xi1> to vector<1x256xi1>
      %155 = arith.ori %141, %154 : vector<1x256xi1>
      %156 = vector.broadcast %72 : vector<1x1xf32> to vector<8x1xf32>
      %157 = arith.addf %156, %37 : vector<8x1xf32>
      %158 = arith.fptosi %157 : vector<8x1xf32> to vector<8x1xi32>
      %159 = vector.broadcast %158 : vector<8x1xi32> to vector<8x256xi32>
      %160 = vector.broadcast %30 : vector<1x256xi32> to vector<8x256xi32>
      %161 = arith.cmpi eq, %159, %160 : vector<8x256xi32>
      %cst_66 = arith.constant 1.000000e+00 : f32
      %cst_67 = arith.constant 0.000000e+00 : f32
      %162 = vector.broadcast %cst_66 : f32 to vector<8x256xf32>
      %163 = vector.broadcast %cst_67 : f32 to vector<8x256xf32>
      %164 = arith.select %161, %162, %163 : vector<8x256xi1>, vector<8x256xf32>
      %cst_68 = arith.constant dense<0xFF800000> : vector<256xf32>
      %165 = vector.multi_reduction <maximumf>, %164, %cst_68 [0] : vector<8x256xf32> to vector<256xf32>
      %cst_69 = arith.constant 0.000000e+00 : f32
      %166 = vector.broadcast %cst_69 : f32 to vector<256xf32>
      %167 = arith.cmpf ogt, %165, %166 : vector<256xf32>
      %168 = vector.shape_cast %167 : vector<256xi1> to vector<1x256xi1>
      %169 = arith.ori %155, %168 : vector<1x256xi1>
      %170 = vector.broadcast %72 : vector<1x1xf32> to vector<8x1xf32>
      %171 = arith.addf %170, %38 : vector<8x1xf32>
      %172 = arith.fptosi %171 : vector<8x1xf32> to vector<8x1xi32>
      %173 = vector.broadcast %172 : vector<8x1xi32> to vector<8x256xi32>
      %174 = vector.broadcast %30 : vector<1x256xi32> to vector<8x256xi32>
      %175 = arith.cmpi eq, %173, %174 : vector<8x256xi32>
      %cst_70 = arith.constant 1.000000e+00 : f32
      %cst_71 = arith.constant 0.000000e+00 : f32
      %176 = vector.broadcast %cst_70 : f32 to vector<8x256xf32>
      %177 = vector.broadcast %cst_71 : f32 to vector<8x256xf32>
      %178 = arith.select %175, %176, %177 : vector<8x256xi1>, vector<8x256xf32>
      %cst_72 = arith.constant dense<0xFF800000> : vector<256xf32>
      %179 = vector.multi_reduction <maximumf>, %178, %cst_72 [0] : vector<8x256xf32> to vector<256xf32>
      %cst_73 = arith.constant 0.000000e+00 : f32
      %180 = vector.broadcast %cst_73 : f32 to vector<256xf32>
      %181 = arith.cmpf ogt, %179, %180 : vector<256xf32>
      %182 = vector.shape_cast %181 : vector<256xi1> to vector<1x256xi1>
      %183 = arith.ori %169, %182 : vector<1x256xi1>
      %184 = vector.broadcast %72 : vector<1x1xf32> to vector<8x1xf32>
      %185 = arith.addf %184, %39 : vector<8x1xf32>
      %186 = arith.fptosi %185 : vector<8x1xf32> to vector<8x1xi32>
      %187 = vector.broadcast %186 : vector<8x1xi32> to vector<8x256xi32>
      %188 = vector.broadcast %30 : vector<1x256xi32> to vector<8x256xi32>
      %189 = arith.cmpi eq, %187, %188 : vector<8x256xi32>
      %cst_74 = arith.constant 1.000000e+00 : f32
      %cst_75 = arith.constant 0.000000e+00 : f32
      %190 = vector.broadcast %cst_74 : f32 to vector<8x256xf32>
      %191 = vector.broadcast %cst_75 : f32 to vector<8x256xf32>
      %192 = arith.select %189, %190, %191 : vector<8x256xi1>, vector<8x256xf32>
      %cst_76 = arith.constant dense<0xFF800000> : vector<256xf32>
      %193 = vector.multi_reduction <maximumf>, %192, %cst_76 [0] : vector<8x256xf32> to vector<256xf32>
      %cst_77 = arith.constant 0.000000e+00 : f32
      %194 = vector.broadcast %cst_77 : f32 to vector<256xf32>
      %195 = arith.cmpf ogt, %193, %194 : vector<256xf32>
      %196 = vector.shape_cast %195 : vector<256xi1> to vector<1x256xi1>
      %197 = arith.ori %183, %196 : vector<1x256xi1>
      %198 = vector.broadcast %72 : vector<1x1xf32> to vector<8x1xf32>
      %199 = arith.addf %198, %40 : vector<8x1xf32>
      %200 = arith.fptosi %199 : vector<8x1xf32> to vector<8x1xi32>
      %201 = vector.broadcast %200 : vector<8x1xi32> to vector<8x256xi32>
      %202 = vector.broadcast %30 : vector<1x256xi32> to vector<8x256xi32>
      %203 = arith.cmpi eq, %201, %202 : vector<8x256xi32>
      %cst_78 = arith.constant 1.000000e+00 : f32
      %cst_79 = arith.constant 0.000000e+00 : f32
      %204 = vector.broadcast %cst_78 : f32 to vector<8x256xf32>
      %205 = vector.broadcast %cst_79 : f32 to vector<8x256xf32>
      %206 = arith.select %203, %204, %205 : vector<8x256xi1>, vector<8x256xf32>
      %cst_80 = arith.constant dense<0xFF800000> : vector<256xf32>
      %207 = vector.multi_reduction <maximumf>, %206, %cst_80 [0] : vector<8x256xf32> to vector<256xf32>
      %cst_81 = arith.constant 0.000000e+00 : f32
      %208 = vector.broadcast %cst_81 : f32 to vector<256xf32>
      %209 = arith.cmpf ogt, %207, %208 : vector<256xf32>
      %210 = vector.shape_cast %209 : vector<256xi1> to vector<1x256xi1>
      %211 = arith.ori %197, %210 : vector<1x256xi1>
      %212 = vector.broadcast %72 : vector<1x1xf32> to vector<8x1xf32>
      %213 = arith.addf %212, %41 : vector<8x1xf32>
      %214 = arith.fptosi %213 : vector<8x1xf32> to vector<8x1xi32>
      %215 = vector.broadcast %214 : vector<8x1xi32> to vector<8x256xi32>
      %216 = vector.broadcast %30 : vector<1x256xi32> to vector<8x256xi32>
      %217 = arith.cmpi eq, %215, %216 : vector<8x256xi32>
      %cst_82 = arith.constant 1.000000e+00 : f32
      %cst_83 = arith.constant 0.000000e+00 : f32
      %218 = vector.broadcast %cst_82 : f32 to vector<8x256xf32>
      %219 = vector.broadcast %cst_83 : f32 to vector<8x256xf32>
      %220 = arith.select %217, %218, %219 : vector<8x256xi1>, vector<8x256xf32>
      %cst_84 = arith.constant dense<0xFF800000> : vector<256xf32>
      %221 = vector.multi_reduction <maximumf>, %220, %cst_84 [0] : vector<8x256xf32> to vector<256xf32>
      %cst_85 = arith.constant 0.000000e+00 : f32
      %222 = vector.broadcast %cst_85 : f32 to vector<256xf32>
      %223 = arith.cmpf ogt, %221, %222 : vector<256xf32>
      %224 = vector.shape_cast %223 : vector<256xi1> to vector<1x256xi1>
      %225 = arith.ori %211, %224 : vector<1x256xi1>
      %226 = vector.broadcast %72 : vector<1x1xf32> to vector<8x1xf32>
      %227 = arith.addf %226, %42 : vector<8x1xf32>
      %228 = arith.fptosi %227 : vector<8x1xf32> to vector<8x1xi32>
      %229 = vector.broadcast %228 : vector<8x1xi32> to vector<8x256xi32>
      %230 = vector.broadcast %30 : vector<1x256xi32> to vector<8x256xi32>
      %231 = arith.cmpi eq, %229, %230 : vector<8x256xi32>
      %cst_86 = arith.constant 1.000000e+00 : f32
      %cst_87 = arith.constant 0.000000e+00 : f32
      %232 = vector.broadcast %cst_86 : f32 to vector<8x256xf32>
      %233 = vector.broadcast %cst_87 : f32 to vector<8x256xf32>
      %234 = arith.select %231, %232, %233 : vector<8x256xi1>, vector<8x256xf32>
      %cst_88 = arith.constant dense<0xFF800000> : vector<256xf32>
      %235 = vector.multi_reduction <maximumf>, %234, %cst_88 [0] : vector<8x256xf32> to vector<256xf32>
      %cst_89 = arith.constant 0.000000e+00 : f32
      %236 = vector.broadcast %cst_89 : f32 to vector<256xf32>
      %237 = arith.cmpf ogt, %235, %236 : vector<256xf32>
      %238 = vector.shape_cast %237 : vector<256xi1> to vector<1x256xi1>
      %239 = arith.ori %225, %238 : vector<1x256xi1>
      %240 = vector.broadcast %72 : vector<1x1xf32> to vector<8x1xf32>
      %241 = arith.addf %240, %43 : vector<8x1xf32>
      %242 = arith.fptosi %241 : vector<8x1xf32> to vector<8x1xi32>
      %243 = vector.broadcast %242 : vector<8x1xi32> to vector<8x256xi32>
      %244 = vector.broadcast %30 : vector<1x256xi32> to vector<8x256xi32>
      %245 = arith.cmpi eq, %243, %244 : vector<8x256xi32>
      %cst_90 = arith.constant 1.000000e+00 : f32
      %cst_91 = arith.constant 0.000000e+00 : f32
      %246 = vector.broadcast %cst_90 : f32 to vector<8x256xf32>
      %247 = vector.broadcast %cst_91 : f32 to vector<8x256xf32>
      %248 = arith.select %245, %246, %247 : vector<8x256xi1>, vector<8x256xf32>
      %cst_92 = arith.constant dense<0xFF800000> : vector<256xf32>
      %249 = vector.multi_reduction <maximumf>, %248, %cst_92 [0] : vector<8x256xf32> to vector<256xf32>
      %cst_93 = arith.constant 0.000000e+00 : f32
      %250 = vector.broadcast %cst_93 : f32 to vector<256xf32>
      %251 = arith.cmpf ogt, %249, %250 : vector<256xf32>
      %252 = vector.shape_cast %251 : vector<256xi1> to vector<1x256xi1>
      %253 = arith.ori %239, %252 : vector<1x256xi1>
      %254 = vector.broadcast %72 : vector<1x1xf32> to vector<8x1xf32>
      %255 = arith.addf %254, %44 : vector<8x1xf32>
      %256 = arith.fptosi %255 : vector<8x1xf32> to vector<8x1xi32>
      %257 = vector.broadcast %256 : vector<8x1xi32> to vector<8x256xi32>
      %258 = vector.broadcast %30 : vector<1x256xi32> to vector<8x256xi32>
      %259 = arith.cmpi eq, %257, %258 : vector<8x256xi32>
      %cst_94 = arith.constant 1.000000e+00 : f32
      %cst_95 = arith.constant 0.000000e+00 : f32
      %260 = vector.broadcast %cst_94 : f32 to vector<8x256xf32>
      %261 = vector.broadcast %cst_95 : f32 to vector<8x256xf32>
      %262 = arith.select %259, %260, %261 : vector<8x256xi1>, vector<8x256xf32>
      %cst_96 = arith.constant dense<0xFF800000> : vector<256xf32>
      %263 = vector.multi_reduction <maximumf>, %262, %cst_96 [0] : vector<8x256xf32> to vector<256xf32>
      %cst_97 = arith.constant 0.000000e+00 : f32
      %264 = vector.broadcast %cst_97 : f32 to vector<256xf32>
      %265 = arith.cmpf ogt, %263, %264 : vector<256xf32>
      %266 = vector.shape_cast %265 : vector<256xi1> to vector<1x256xi1>
      %267 = arith.ori %253, %266 : vector<1x256xi1>
      %268 = vector.broadcast %72 : vector<1x1xf32> to vector<8x1xf32>
      %269 = arith.addf %268, %45 : vector<8x1xf32>
      %270 = arith.fptosi %269 : vector<8x1xf32> to vector<8x1xi32>
      %271 = vector.broadcast %270 : vector<8x1xi32> to vector<8x256xi32>
      %272 = vector.broadcast %30 : vector<1x256xi32> to vector<8x256xi32>
      %273 = arith.cmpi eq, %271, %272 : vector<8x256xi32>
      %cst_98 = arith.constant 1.000000e+00 : f32
      %cst_99 = arith.constant 0.000000e+00 : f32
      %274 = vector.broadcast %cst_98 : f32 to vector<8x256xf32>
      %275 = vector.broadcast %cst_99 : f32 to vector<8x256xf32>
      %276 = arith.select %273, %274, %275 : vector<8x256xi1>, vector<8x256xf32>
      %cst_100 = arith.constant dense<0xFF800000> : vector<256xf32>
      %277 = vector.multi_reduction <maximumf>, %276, %cst_100 [0] : vector<8x256xf32> to vector<256xf32>
      %cst_101 = arith.constant 0.000000e+00 : f32
      %278 = vector.broadcast %cst_101 : f32 to vector<256xf32>
      %279 = arith.cmpf ogt, %277, %278 : vector<256xf32>
      %280 = vector.shape_cast %279 : vector<256xi1> to vector<1x256xi1>
      %281 = arith.ori %267, %280 : vector<1x256xi1>
      %c0_102 = arith.constant 0 : index
      %c0_103 = arith.constant 0 : index
      %c0_104 = arith.constant 0 : index
      %282 = vector.load %arg9[%c0_102, %c0_103, %c0_104] : memref<1x1x256xf32, #tpu.memory_space<vmem>>, vector<1x1x256xf32>
      %283 = vector.shape_cast %282 : vector<1x1x256xf32> to vector<1x256xf32>
      %cst_105 = arith.constant 1.000000e+00 : f32
      %284 = vector.broadcast %cst_105 : f32 to vector<1x256xf32>
      %285 = arith.select %281, %284, %283 : vector<1x256xi1>, vector<1x256xf32>
      %c0_106 = arith.constant 0 : index
      %c0_107 = arith.constant 0 : index
      %c0_108 = arith.constant 0 : index
      %286 = vector.load %arg9[%c0_106, %c0_107, %c0_108] : memref<1x1x256xf32, #tpu.memory_space<vmem>>, vector<1x1x256xf32>
      %287 = vector.shape_cast %286 : vector<1x1x256xf32> to vector<1x256xf32>
      %288 = vector.shape_cast %285 : vector<1x256xf32> to vector<1x1x256xf32>
      tpu.vector_store %arg9[%c0_106, %c0_107, %c0_108], %288 {strides = array<i32>} : memref<1x1x256xf32, #tpu.memory_space<vmem>>, vector<1x1x256xf32>,
    } else {
    }
    return
  }
  func.func @transform_0(%arg0: i32, %arg1: i32, %arg2: memref<2xi32, #tpu.memory_space<smem>>) -> (i32, i32, i32) {
    %c0_i32 = arith.constant 0 : i32
    %c0_i32_0 = arith.constant 0 : i32
    %c0_i32_1 = arith.constant 0 : i32
    return %arg0, %c0_i32, %c0_i32_0 : i32, i32, i32
  }
  func.func @transform_1(%arg0: i32, %arg1: i32, %arg2: memref<2xi32, #tpu.memory_space<smem>>) -> (i32, i32, i32) {
    %c0_i32 = arith.constant 0 : i32
    %c0_i32_0 = arith.constant 0 : i32
    %c0_i32_1 = arith.constant 0 : i32
    return %arg0, %c0_i32, %c0_i32_0 : i32, i32, i32
  }
  func.func @transform_2(%arg0: i32, %arg1: i32, %arg2: memref<2xi32, #tpu.memory_space<smem>>) -> (i32, i32, i32) {
    %c0_i32 = arith.constant 0 : i32
    %c0_i32_0 = arith.constant 0 : i32
    %c0_i32_1 = arith.constant 0 : i32
    return %arg0, %c0_i32, %c0_i32_0 : i32, i32, i32
  }
  func.func @transform_3(%arg0: i32, %arg1: i32, %arg2: memref<2xi32, #tpu.memory_space<smem>>) -> (i32, i32) {
    %c0_i32 = arith.constant 0 : i32
    %c0_i32_0 = arith.constant 0 : i32
    return %c0_i32, %arg1 : i32, i32
  }
  func.func @transform_4(%arg0: i32, %arg1: i32, %arg2: memref<2xi32, #tpu.memory_space<smem>>) -> (i32, i32) {
    %c0_i32 = arith.constant 0 : i32
    %c0_i32_0 = arith.constant 0 : i32
    return %c0_i32, %arg1 : i32, i32
  }
  func.func @transform_5(%arg0: i32, %arg1: i32, %arg2: memref<2xi32, #tpu.memory_space<smem>>) -> (i32, i32) {
    %c0_i32 = arith.constant 0 : i32
    %c0_i32_0 = arith.constant 0 : i32
    %c0_i32_1 = arith.constant 0 : i32
    return %c0_i32, %c0_i32_0 : i32, i32
  }
  func.func @transform_6(%arg0: i32, %arg1: i32, %arg2: memref<2xi32, #tpu.memory_space<smem>>) -> (i32, i32, i32) {
    %c0_i32 = arith.constant 0 : i32
    %c0_i32_0 = arith.constant 0 : i32
    return %arg0, %c0_i32, %arg1 : i32, i32, i32
  }
}

</mosaic_0001>

<llo_original>
// kernel: tpu_custom_call.1
$region0: #{tpu_custom_call.1}
  #allocation0 [shape = 'u32[]', space=smem, size = 0x4, offset = 0x4, fixed_abs, tag = 'smem constant byte address 0x4 - core index']
  #allocation1 [shape = 'u32[72,128]{1,0:T(1,128)}', space=vmem, size = 0x9000, scoped, tag = 'internal scratch']
  #allocation2 [shape = 's32[1]{0}', space=sflag, size = 0x4, scoped, tag = 'scoped memory for tpu_custom_call.1']
  #allocation3 [shape = 'u8[512]{0}', space=smem, size = 0x200, scoped, tag = 'prefetched SMEM operand 0']
  %s0 = inlined_call_operand.vmem [shape: s32[2], index: 0, kind: input, shape index: {}]
  %s1 = inlined_call_operand.vmem [shape: f32[2,8,1], index: 1, kind: input, shape index: {}]
  %s2 = inlined_call_operand.vmem [shape: f32[2,8,1], index: 2, kind: input, shape index: {}]
  %s3 = inlined_call_operand.vmem [shape: f32[2,8,1], index: 3, kind: input, shape index: {}]
  %s4 = inlined_call_operand.vmem [shape: f32[1,256], index: 4, kind: input, shape index: {}]
  %s5 = inlined_call_operand.vmem [shape: f32[1,256], index: 5, kind: input, shape index: {}]
  %s6 = inlined_call_operand.vmem [shape: f32[120,1], index: 6, kind: input, shape index: {}]
  %s7 = inlined_call_operand.hbm [shape: f32[2,1,256], index: 7, kind: output, shape index: {}]
  %s8 = sld [smem:[#allocation0]]
  $region89: #{tpu_custom_call.1} parent=0
    _
  %s10 = ssub.s32 1, %s8
  %s11 = scalar_select 0, %s10, %s8
  %s13 = sshll.u32 %s0, 4
  %s14 = int_to_ptr.vmem [resolvable:$true] %s13
  %16 = dma.vmem_to_smem %s14, 16, [#allocation3], [#allocation2]
  %18 = dma.done [#allocation2], 16
  %19 = sfence
  $region1: #{tpu_custom_call.1} parent=0
    #allocation4 [shape = 'u8[2048]{0}', space=vmem, size = 0x800, scoped, tag = 'output window, operand 0']
    #allocation5 [shape = 's32[2]{0}', space=sflag, size = 0x8, scoped, tag = 'scoped memory for tpu_custom_call.1']
    %20 = vsyncpa [#allocation5], 0
    %s21 = scalar_lea.sflag [#allocation5], 1
    %22 = vsyncpa %s21, 0
    loop: start=0, step=1, limit=4
    $region2: #{tpu_custom_call.1} parent=1 // loop_pre_header
      _
    $region3: #{tpu_custom_call.1} parent=1 // loop_header
      %s24 = sphi 0, %s28
      %p25 = scmp.ge.s32.totalorder %s24, 4
      %s31 = sphi 0, %s43
      %s32 = sphi 0, %s39
      %s33 = sphi 0, %s31
      %s34 = sphi 0, %s32
      %s35 = sphi 0, %s33
      %s36 = sphi 0, %s34
      %s46 = sphi 0, %s48
      %s49 = sphi 0, %s46
      %s50 = sphi 0, %s49
      %s66 = sphi 0, %s50
      %s72 = sphi 0, %s74
      %s75 = sphi 0, %s72
      %s76 = sphi 0, %s75
      %s92 = sphi 0, %s76
      %s98 = sphi 0, %s100
      %s101 = sphi 0, %s98
      %s102 = sphi 0, %s101
      %s118 = sphi 0, %s102
      %s124 = sphi 0, %s126
      %s127 = sphi 0, %s124
      %s128 = sphi 0, %s127
      %s144 = sphi 0, %s128
      %s150 = sphi 0, %s152
      %s153 = sphi 0, %s150
      %s154 = sphi 0, %s153
      %s170 = sphi 0, %s154
      %s174 = sphi 0, %s174
      %s176 = sphi 0, %s174
      %s177 = sphi 0, %s176
      %s191 = sphi 0, %s177
      %s199 = sphi 0, %s201
      %s202 = sphi 0, %s199
      %s203 = sphi 0, %s202
      %s219 = sphi 0, %s203
    $region4: #{tpu_custom_call.1} parent=1 // loop_header_branch
      %27 = sbr.rel (%p25) target = $region8
    $region5: #{tpu_custom_call.1} parent=1 // loop_body
      %s29 = ssub.s32 %s24, 1
      %s30 = ssub.s32 %s24, 2
      %s37 = sadd.s32 1, %s32
      %p38 = scmp.ge.s32.totalorder %s37, 1
      %s39 = scalar_select %p38, 0, %s37
      %s40 = sadd.s32 1, %s31
      %s41 = scalar_select %p38, %s40, %s31
      %p42 = scmp.ge.s32.totalorder %s41, 2
      %s43 = scalar_select %p42, 0, %s41
      %s44 = ssub.s32 %s31, %s43
      %p45 = scmp.eq.s32.totalorder %s44, 0
      %s47 = sadd.s32 %s46, 1
      %s48 = scalar_select %p45, %s46, %s47
      %p51 = pneg %p45
      %p52 = scmp.eq.s32.totalorder %s24, 1
      %p53 = por %p51, %p52
      %p54 = scmp.ne.s32.totalorder %s46, %s49
      %p55 = scmp.eq.s32.totalorder %s24, 0
      %p56 = por %p54, %p55
      %p57 = scmp.ne.s32.totalorder %s46, %s49
      %p58 = scmp.eq.s32.totalorder %s29, 1
      %p59 = por %p57, %p58
      %p60 = scmp.ne.s32.totalorder %s49, %s50
      %p61 = scmp.eq.s32.totalorder %s29, 0
      %p62 = por %p60, %p61
      %p63 = scmp.ne.s32.totalorder %s49, %s50
      %p64 = scmp.eq.s32.totalorder %s30, 1
      %p65 = por %p63, %p64
      %p67 = scmp.ne.s32.totalorder %s50, %s66
      %p68 = scmp.eq.s32.totalorder %s30, 0
      %p69 = por %p67, %p68
      %s70 = ssub.s32 %s31, %s43
      %p71 = scmp.eq.s32.totalorder %s70, 0
      %s73 = sadd.s32 %s72, 1
      %s74 = scalar_select %p71, %s72, %s73
      %p77 = pneg %p71
      %p78 = scmp.eq.s32.totalorder %s24, 1
      %p79 = por %p77, %p78
      %p80 = scmp.ne.s32.totalorder %s72, %s75
      %p81 = scmp.eq.s32.totalorder %s24, 0
      %p82 = por %p80, %p81
      %p83 = scmp.ne.s32.totalorder %s72, %s75
      %p84 = scmp.eq.s32.totalorder %s29, 1
      %p85 = por %p83, %p84
      %p86 = scmp.ne.s32.totalorder %s75, %s76
      %p87 = scmp.eq.s32.totalorder %s29, 0
      %p88 = por %p86, %p87
      %p89 = scmp.ne.s32.totalorder %s75, %s76
      %p90 = scmp.eq.s32.totalorder %s30, 1
      %p91 = por %p89, %p90
      %p93 = scmp.ne.s32.totalorder %s76, %s92
      %p94 = scmp.eq.s32.totalorder %s30, 0
      %p95 = por %p93, %p94
      %s96 = ssub.s32 %s31, %s43
      %p97 = scmp.eq.s32.totalorder %s96, 0
      %s99 = sadd.s32 %s98, 1
      %s100 = scalar_select %p97, %s98, %s99
      %p103 = pneg %p97
      %p104 = scmp.eq.s32.totalorder %s24, 1
      %p105 = por %p103, %p104
      %p106 = scmp.ne.s32.totalorder %s98, %s101
      %p107 = scmp.eq.s32.totalorder %s24, 0
      %p108 = por %p106, %p107
      %p109 = scmp.ne.s32.totalorder %s98, %s101
      %p110 = scmp.eq.s32.totalorder %s29, 1
      %p111 = por %p109, %p110
      %p112 = scmp.ne.s32.totalorder %s101, %s102
      %p113 = scmp.eq.s32.totalorder %s29, 0
      %p114 = por %p112, %p113
      %p115 = scmp.ne.s32.totalorder %s101, %s102
      %p116 = scmp.eq.s32.totalorder %s30, 1
      %p117 = por %p115, %p116
      %p119 = scmp.ne.s32.totalorder %s102, %s118
      %p120 = scmp.eq.s32.totalorder %s30, 0
      %p121 = por %p119, %p120
      %s122 = ssub.s32 %s32, %s39
      %p123 = scmp.eq.s32.totalorder %s122, 0
      %s125 = sadd.s32 %s124, 1
      %s126 = scalar_select %p123, %s124, %s125
      %p129 = pneg %p123
      %p130 = scmp.eq.s32.totalorder %s24, 1
      %p131 = por %p129, %p130
      %p132 = scmp.ne.s32.totalorder %s124, %s127
      %p133 = scmp.eq.s32.totalorder %s24, 0
      %p134 = por %p132, %p133
      %p135 = scmp.ne.s32.totalorder %s124, %s127
      %p136 = scmp.eq.s32.totalorder %s29, 1
      %p137 = por %p135, %p136
      %p138 = scmp.ne.s32.totalorder %s127, %s128
      %p139 = scmp.eq.s32.totalorder %s29, 0
      %p140 = por %p138, %p139
      %p141 = scmp.ne.s32.totalorder %s127, %s128
      %p142 = scmp.eq.s32.totalorder %s30, 1
      %p143 = por %p141, %p142
      %p145 = scmp.ne.s32.totalorder %s128, %s144
      %p146 = scmp.eq.s32.totalorder %s30, 0
      %p147 = por %p145, %p146
      %s148 = ssub.s32 %s32, %s39
      %p149 = scmp.eq.s32.totalorder %s148, 0
      %s151 = sadd.s32 %s150, 1
      %s152 = scalar_select %p149, %s150, %s151
      %p155 = pneg %p149
      %p156 = scmp.eq.s32.totalorder %s24, 1
      %p157 = por %p155, %p156
      %p158 = scmp.ne.s32.totalorder %s150, %s153
      %p159 = scmp.eq.s32.totalorder %s24, 0
      %p160 = por %p158, %p159
      %p161 = scmp.ne.s32.totalorder %s150, %s153
      %p162 = scmp.eq.s32.totalorder %s29, 1
      %p163 = por %p161, %p162
      %p164 = scmp.ne.s32.totalorder %s153, %s154
      %p165 = scmp.eq.s32.totalorder %s29, 0
      %p166 = por %p164, %p165
      %p167 = scmp.ne.s32.totalorder %s153, %s154
      %p168 = scmp.eq.s32.totalorder %s30, 1
      %p169 = por %p167, %p168
      %p171 = scmp.ne.s32.totalorder %s154, %s170
      %p172 = scmp.eq.s32.totalorder %s30, 0
      %p173 = por %p171, %p172
      %s175 = sadd.s32 %s174, 1
      %p178 = scmp.eq.s32.totalorder %s24, 1
      %p179 = scmp.ne.s32.totalorder %s174, %s176
      %p180 = scmp.eq.s32.totalorder %s24, 0
      %p181 = por %p179, %p180
      %p182 = scmp.ne.s32.totalorder %s174, %s176
      %p183 = scmp.eq.s32.totalorder %s29, 1
      %p184 = por %p182, %p183
      %p185 = scmp.ne.s32.totalorder %s176, %s177
      %p186 = scmp.eq.s32.totalorder %s29, 0
      %p187 = por %p185, %p186
      %p188 = scmp.ne.s32.totalorder %s176, %s177
      %p189 = scmp.eq.s32.totalorder %s30, 1
      %p190 = por %p188, %p189
      %p192 = scmp.ne.s32.totalorder %s177, %s191
      %p193 = scmp.eq.s32.totalorder %s30, 0
      %p194 = por %p192, %p193
      %s195 = ssub.s32 %s31, %s43
      %s196 = ssub.s32 %s32, %s39
      %s197 = sor.u32 %s195, %s196
      %p198 = scmp.eq.s32.totalorder %s197, 0
      %s200 = sadd.s32 %s199, 1
      %s201 = scalar_select %p198, %s199, %s200
      %p204 = pneg %p198
      %p205 = scmp.eq.s32.totalorder %s24, 1
      %p206 = por %p204, %p205
      %p207 = scmp.ne.s32.totalorder %s199, %s202
      %p208 = scmp.eq.s32.totalorder %s24, 0
      %p209 = por %p207, %p208
      %p210 = scmp.ne.s32.totalorder %s199, %s202
      %p211 = scmp.eq.s32.totalorder %s29, 1
      %p212 = por %p210, %p211
      %p213 = scmp.ne.s32.totalorder %s202, %s203
      %p214 = scmp.eq.s32.totalorder %s29, 0
      %p215 = por %p213, %p214
      %p216 = scmp.ne.s32.totalorder %s202, %s203
      %p217 = scmp.eq.s32.totalorder %s30, 1
      %p218 = por %p216, %p217
      %p220 = scmp.ne.s32.totalorder %s203, %s219
      %p221 = scmp.eq.s32.totalorder %s30, 0
      %p222 = por %p220, %p221
      %p223 = scmp.le.s32.totalorder 1, %s24
      %p224 = scmp.lt.s32.totalorder %s24, 3
      %p225 = pnand %p223, %p224
      %p226 = pneg %p225
      // Predicated region
      $region9: #{tpu_custom_call.1} parent=5 // pred_check
        _
      $region10: #{tpu_custom_call.1} parent=5 // pred_check_branch
        %228 = sbr.rel (%p225) target = $region12
      $region11: #{tpu_custom_call.1} parent=5 // pred_region
        %s229 = ssub.s32 %s24, 1
        // Predicated region
        $region13: #{tpu_custom_call.1} parent=11 // pred_check
          %p230 = pneg %p140
        $region14: #{tpu_custom_call.1} parent=11 // pred_check_branch
          %232 = sbr.rel (%p230) target = $region16
        $region15: #{tpu_custom_call.1} parent=11 // pred_region
          %s233 = smul.u32 2, %s34
          %p234 = scmp.lt.s32.totalorder %s233, 1
          %s235 = scalar_select %p234, %s233, 1
          %s236 = scalar_lea.vmem %s4, %s235
          %s237 = smul.u32 2, %s34
        $region16: #{tpu_custom_call.1} parent=11 // pred_fallthru
          _
        // Predicated region
        $region17: #{tpu_custom_call.1} parent=11 // pred_check
          %p238 = pneg %p166
        $region18: #{tpu_custom_call.1} parent=11 // pred_check_branch
          %240 = sbr.rel (%p238) target = $region20
        $region19: #{tpu_custom_call.1} parent=11 // pred_region
          %s241 = smul.u32 2, %s34
          %p242 = scmp.lt.s32.totalorder %s241, 1
          %s243 = scalar_select %p242, %s241, 1
          %s244 = scalar_lea.vmem %s5, %s243
          %s245 = smul.u32 2, %s34
        $region20: #{tpu_custom_call.1} parent=11 // pred_fallthru
          _
        // Predicated region
        $region21: #{tpu_custom_call.1} parent=11 // pred_check
          %p246 = pneg %p187
        $region22: #{tpu_custom_call.1} parent=11 // pred_check_branch
          %248 = sbr.rel (%p246) target = $region24
        $region23: #{tpu_custom_call.1} parent=11 // pred_region
          _
        $region24: #{tpu_custom_call.1} parent=11 // pred_fallthru
          _
      $region12: #{tpu_custom_call.1} parent=5 // pred_fallthru
        _
      %p249 = scmp.lt.s32.totalorder %s24, 2
      // Predicated region
      $region25: #{tpu_custom_call.1} parent=5 // pred_check
        %p250 = pneg %p249
      $region26: #{tpu_custom_call.1} parent=5 // pred_check_branch
        %252 = sbr.rel (%p250) target = $region28
      $region27: #{tpu_custom_call.1} parent=5 // pred_region
        // Predicated region
        $region29: #{tpu_custom_call.1} parent=27 // pred_check
          %p253 = pneg %p56
        $region30: #{tpu_custom_call.1} parent=27 // pred_check_branch
          %255 = sbr.rel (%p253) target = $region32
        $region31: #{tpu_custom_call.1} parent=27 // pred_region
          %p256 = scmp.lt.s32.totalorder %s31, 1
          %s257 = scalar_select %p256, %s31, 1
          %s258 = smul.addr %s257, 8
          %s259 = scalar_lea.vmem %s1, %s258
        $region32: #{tpu_custom_call.1} parent=27 // pred_fallthru
          _
        // Predicated region
        $region33: #{tpu_custom_call.1} parent=27 // pred_check
          %p260 = pneg %p82
        $region34: #{tpu_custom_call.1} parent=27 // pred_check_branch
          %262 = sbr.rel (%p260) target = $region36
        $region35: #{tpu_custom_call.1} parent=27 // pred_region
          %p263 = scmp.lt.s32.totalorder %s31, 1
          %s264 = scalar_select %p263, %s31, 1
          %s265 = smul.addr %s264, 8
          %s266 = scalar_lea.vmem %s2, %s265
        $region36: #{tpu_custom_call.1} parent=27 // pred_fallthru
          _
        // Predicated region
        $region37: #{tpu_custom_call.1} parent=27 // pred_check
          %p267 = pneg %p108
        $region38: #{tpu_custom_call.1} parent=27 // pred_check_branch
          %269 = sbr.rel (%p267) target = $region40
        $region39: #{tpu_custom_call.1} parent=27 // pred_region
          %p270 = scmp.lt.s32.totalorder %s31, 1
          %s271 = scalar_select %p270, %s31, 1
          %s272 = smul.addr %s271, 8
          %s273 = scalar_lea.vmem %s3, %s272
        $region40: #{tpu_custom_call.1} parent=27 // pred_fallthru
          _
      $region28: #{tpu_custom_call.1} parent=5 // pred_fallthru
        _
      %p274 = scmp.le.s32.totalorder 1, %s24
      %p275 = scmp.lt.s32.totalorder %s24, 3
      %p276 = pnand %p274, %p275
      %p277 = pneg %p276
      // Predicated region
      $region41: #{tpu_custom_call.1} parent=5 // pred_check
        _
      $region42: #{tpu_custom_call.1} parent=5 // pred_check_branch
        %279 = sbr.rel (%p276) target = $region44
      $region43: #{tpu_custom_call.1} parent=5 // pred_region
        %s280 = ssub.s32 %s24, 1
        %p281 = scmp.lt.s32.totalorder %s33, 1
        %s282 = scalar_select %p281, %s33, 1
        %s283 = smul.addr %s282, 8
        %s284 = scalar_lea.vmem %s1, %s283
        %p285 = pneg %p62
        %p286 = pneg %p59
        %p287 = scmp.lt.s32.totalorder %s33, 1
        %s288 = scalar_select %p287, %s33, 1
        %s289 = smul.addr %s288, 8
        %s290 = scalar_lea.vmem %s2, %s289
        %p291 = pneg %p88
        %p292 = pneg %p85
        %p293 = scmp.lt.s32.totalorder %s33, 1
        %s294 = scalar_select %p293, %s33, 1
        %s295 = smul.addr %s294, 8
        %s296 = scalar_lea.vmem %s3, %s295
        %p297 = pneg %p114
        %p298 = pneg %p111
        %s299 = smul.u32 2, %s34
        %p300 = scmp.lt.s32.totalorder %s299, 1
        %s301 = scalar_select %p300, %s299, 1
        %s302 = scalar_lea.vmem %s4, %s301
        %p303 = pneg %p140
        %p304 = pneg %p137
        %s305 = smul.u32 2, %s34
        %p306 = scmp.lt.s32.totalorder %s305, 1
        %s307 = scalar_select %p306, %s305, 1
        %s308 = scalar_lea.vmem %s5, %s307
        %p309 = pneg %p166
        %p310 = pneg %p163
        %p311 = pneg %p187
        %p312 = pneg %p184
        %p313 = pneg %p215
        %p314 = pneg %p212
        %s315 = sand.u32 %s202, 1
        %s316 = scalar_lea.sflag [#allocation5], %s315
        %s317 = sand.u32 %s202, 1
        %s318 = smul.addr %s317, 2
        %s319 = scalar_lea.vmem [#allocation4], %s318
        %p320 = scmp.lt.s32.totalorder %s33, 1
        %s321 = scalar_select %p320, %s33, 1
        %s322 = smul.addr %s321, 8
        %s323 = scalar_lea.vmem %s1, %s322
        %p324 = scmp.lt.s32.totalorder %s33, 1
        %s325 = scalar_select %p324, %s33, 1
        %s326 = smul.addr %s325, 8
        %s327 = scalar_lea.vmem %s2, %s326
        %p328 = scmp.lt.s32.totalorder %s33, 1
        %s329 = scalar_select %p328, %s33, 1
        %s330 = smul.addr %s329, 8
        %s331 = scalar_lea.vmem %s3, %s330
        %s332 = smul.u32 2, %s34
        %p333 = scmp.lt.s32.totalorder %s332, 1
        %s334 = scalar_select %p333, %s332, 1
        %s335 = scalar_lea.vmem %s4, %s334
        %s336 = smul.u32 2, %s34
        %s337 = smul.u32 2, %s34
        %p338 = scmp.lt.s32.totalorder %s337, 1
        %s339 = scalar_select %p338, %s337, 1
        %s340 = scalar_lea.vmem %s5, %s339
        %s341 = smul.u32 2, %s34
        %s342 = smul.u32 2, %s34
        %s343 = sld [smem:[#allocation3 + %s33]]
        %v344 = vld [vmem:[%s335] sm:$0x3]
        %v345 = vld [vmem:[%s340] sm:$0x3]
        %v346 = vld [vmem:[%s327] sm:$0xff]
        %v347 = vld [vmem:[%s331] sm:$0xff]
        %v349 = vperm.slane %v344, 0
        %v350 = vperm.slane %v344, 1
        %354 = vset.pattern.permute.xlu0 0
        %355 = vperm.xlu0 %354, %v346
        %v356 = vpop.permute.xlu0 %355
        %v358 = vsub.f32 %v349, %v356
        %v359 = vsub.f32 %v350, %v356
        %v361 = vperm.slane %v345, 0
        %v362 = vperm.slane %v345, 1
        %366 = vset.pattern.permute.xlu0 0
        %367 = vperm.xlu0 %366, %v347
        %v368 = vpop.permute.xlu0 %367
        %v370 = vsub.f32 %v361, %v368
        %v371 = vsub.f32 %v362, %v368
        %v372 = vmul.f32 %v358, %v358
        %v373 = vmul.f32 %v359, %v359
        %v374 = vmul.f32 %v370, %v370
        %v375 = vmul.f32 %v371, %v371
        %v376 = vadd.f32 %v372, %v374
        %v377 = vadd.f32 %v373, %v375
        %v378 = vrot.slane %v376, 4
        %v379 = vmin.f32 %v376, %v378
        %v380 = vrot.slane %v379, 2
        %v381 = vmin.f32 %v379, %v380
        %v382 = vrot.slane %v381, 1
        %v383 = vmin.f32 %v381, %v382
        %v384 = vrot.slane %v377, 4
        %v385 = vmin.f32 %v377, %v384
        %v386 = vrot.slane %v385, 2
        %v387 = vmin.f32 %v385, %v386
        %v388 = vrot.slane %v387, 1
        %v389 = vmin.f32 %v387, %v388
        %vm390 = vcmp.gt.f32.partialorder %v383, 400.0
        %vm391 = vcmp.gt.f32.partialorder %v389, 400.0
        %v392 = vsel %vm390, -1.0, 0.0
        %v393 = vsel %vm391, -1.0, 0.0
        %v396 = vrot.slane %v393, 7
        %vm397 = vcmask 1040384
        %v398 = vsel %vm397, %v392, %v396
        %v400 = vlaneseq
        %vm401 = vcmp.ge.s32.totalorder %v400, 0
        %vm402 = vcmp.lt.s32.totalorder %v400, 256
        %vm403 = vmand %vm401, %vm402
        %404 = vst.msk [vmem:[%s319] sm:$0x3] %vm403, %v398
        %s405 = smul.u32 %s34, 256
        %v406 = vlaneseq
        %v407 = vand.u32 %v406, 127
        %v408 = vadd.s32 %v407, 128
        %v409 = vstv %s405
        %v410 = vadd.s32 %v409, %v407
        %v411 = vadd.s32 %v409, %v408
        %v412 = vld [vmem:[%s6] sm:$0xff]
        %v413 = vld [vmem:[%s6 + $0x8] sm:$0xff]
        %v414 = vld [vmem:[%s6 + $0x10] sm:$0xff]
        %v415 = vld [vmem:[%s6 + $0x18] sm:$0xff]
        %v416 = vld [vmem:[%s6 + $0x20] sm:$0xff]
        %v417 = vld [vmem:[%s6 + $0x28] sm:$0xff]
        %v418 = vld [vmem:[%s6 + $0x30] sm:$0xff]
        %v419 = vld [vmem:[%s6 + $0x38] sm:$0xff]
        %v420 = vld [vmem:[%s6 + $0x40] sm:$0xff]
        %v421 = vld [vmem:[%s6 + $0x48] sm:$0xff]
        %v422 = vld [vmem:[%s6 + $0x50] sm:$0xff]
        %v423 = vld [vmem:[%s6 + $0x58] sm:$0xff]
        %v424 = vld [vmem:[%s6 + $0x60] sm:$0xff]
        %v425 = vld [vmem:[%s6 + $0x68] sm:$0xff]
        %v426 = vld [vmem:[%s6 + $0x70] sm:$0xff]
        %v427 = vld [vmem:[%s323] sm:$0xff]
        %p428 = scmp.gt.s32.totalorder %s343, 0
        // Predicated region
        $region45: #{tpu_custom_call.1} parent=43 // pred_check
          %p429 = pneg %p428
        $region46: #{tpu_custom_call.1} parent=43 // pred_check_branch
          %431 = sbr.rel (%p429) target = $region48
        $region47: #{tpu_custom_call.1} parent=43 // pred_region
          %v432 = vperm.slane %v427, 0
          %v433 = vadd.f32 %v432, %v412
          %v434 = vcvt.f32.s32.to.zero.pseudo %v433
          %435 = vset.pattern.permute.xlu0 0
          %436 = vperm.xlu0 %435, %v434
          %v437 = vpop.permute.xlu0 %436
          %vm438 = vcmp.eq.s32.totalorder %v437, %v410
          %vm439 = vcmp.eq.s32.totalorder %v437, %v411
          %v440 = vsel %vm438, 1.0, 0.0
          %v441 = vsel %vm439, 1.0, 0.0
          %v442 = vrot.slane %v440, 4
          %v443 = vmax.f32 %v440, %v442
          %v444 = vrot.slane %v443, 2
          %v445 = vmax.f32 %v443, %v444
          %v446 = vrot.slane %v445, 1
          %v447 = vmax.f32 %v445, %v446
          %v448 = vrot.slane %v441, 4
          %v449 = vmax.f32 %v441, %v448
          %v450 = vrot.slane %v449, 2
          %v451 = vmax.f32 %v449, %v450
          %v452 = vrot.slane %v451, 1
          %v453 = vmax.f32 %v451, %v452
          %vm454 = vcmp.gt.f32.partialorder %v447, 0.0
          %vm455 = vcmp.gt.f32.partialorder %v453, 0.0
          %v456 = vadd.f32 %v432, %v413
          %v457 = vcvt.f32.s32.to.zero.pseudo %v456
          %458 = vset.pattern.permute.xlu0 0
          %459 = vperm.xlu0 %458, %v457
          %v460 = vpop.permute.xlu0 %459
          %vm461 = vcmp.eq.s32.totalorder %v460, %v410
          %vm462 = vcmp.eq.s32.totalorder %v460, %v411
          %v463 = vsel %vm461, 1.0, 0.0
          %v464 = vsel %vm462, 1.0, 0.0
          %v465 = vrot.slane %v463, 4
          %v466 = vmax.f32 %v463, %v465
          %v467 = vrot.slane %v466, 2
          %v468 = vmax.f32 %v466, %v467
          %v469 = vrot.slane %v468, 1
          %v470 = vmax.f32 %v468, %v469
          %v471 = vrot.slane %v464, 4
          %v472 = vmax.f32 %v464, %v471
          %v473 = vrot.slane %v472, 2
          %v474 = vmax.f32 %v472, %v473
          %v475 = vrot.slane %v474, 1
          %v476 = vmax.f32 %v474, %v475
          %vm477 = vcmp.gt.f32.partialorder %v470, 0.0
          %vm478 = vcmp.gt.f32.partialorder %v476, 0.0
          %vm479 = vmor %vm454, %vm477
          %vm480 = vmor %vm455, %vm478
          %v481 = vadd.f32 %v432, %v414
          %v482 = vcvt.f32.s32.to.zero.pseudo %v481
          %483 = vset.pattern.permute.xlu0 0
          %484 = vperm.xlu0 %483, %v482
          %v485 = vpop.permute.xlu0 %484
          %vm486 = vcmp.eq.s32.totalorder %v485, %v410
          %vm487 = vcmp.eq.s32.totalorder %v485, %v411
          %v488 = vsel %vm486, 1.0, 0.0
          %v489 = vsel %vm487, 1.0, 0.0
          %v490 = vrot.slane %v488, 4
          %v491 = vmax.f32 %v488, %v490
          %v492 = vrot.slane %v491, 2
          %v493 = vmax.f32 %v491, %v492
          %v494 = vrot.slane %v493, 1
          %v495 = vmax.f32 %v493, %v494
          %v496 = vrot.slane %v489, 4
          %v497 = vmax.f32 %v489, %v496
          %v498 = vrot.slane %v497, 2
          %v499 = vmax.f32 %v497, %v498
          %v500 = vrot.slane %v499, 1
          %v501 = vmax.f32 %v499, %v500
          %vm502 = vcmp.gt.f32.partialorder %v495, 0.0
          %vm503 = vcmp.gt.f32.partialorder %v501, 0.0
          %vm504 = vmor %vm479, %vm502
          %vm505 = vmor %vm480, %vm503
          %v506 = vadd.f32 %v432, %v415
          %v507 = vcvt.f32.s32.to.zero.pseudo %v506
          %508 = vset.pattern.permute.xlu0 0
          %509 = vperm.xlu0 %508, %v507
          %v510 = vpop.permute.xlu0 %509
          %vm511 = vcmp.eq.s32.totalorder %v510, %v410
          %vm512 = vcmp.eq.s32.totalorder %v510, %v411
          %v513 = vsel %vm511, 1.0, 0.0
          %v514 = vsel %vm512, 1.0, 0.0
          %v515 = vrot.slane %v513, 4
          %v516 = vmax.f32 %v513, %v515
          %v517 = vrot.slane %v516, 2
          %v518 = vmax.f32 %v516, %v517
          %v519 = vrot.slane %v518, 1
          %v520 = vmax.f32 %v518, %v519
          %v521 = vrot.slane %v514, 4
          %v522 = vmax.f32 %v514, %v521
          %v523 = vrot.slane %v522, 2
          %v524 = vmax.f32 %v522, %v523
          %v525 = vrot.slane %v524, 1
          %v526 = vmax.f32 %v524, %v525
          %vm527 = vcmp.gt.f32.partialorder %v520, 0.0
          %vm528 = vcmp.gt.f32.partialorder %v526, 0.0
          %vm529 = vmor %vm504, %vm527
          %vm530 = vmor %vm505, %vm528
          %v531 = vadd.f32 %v432, %v416
          %v532 = vcvt.f32.s32.to.zero.pseudo %v531
          %533 = vset.pattern.permute.xlu0 0
          %534 = vperm.xlu0 %533, %v532
          %v535 = vpop.permute.xlu0 %534
          %vm536 = vcmp.eq.s32.totalorder %v535, %v410
          %vm537 = vcmp.eq.s32.totalorder %v535, %v411
          %v538 = vsel %vm536, 1.0, 0.0
          %v539 = vsel %vm537, 1.0, 0.0
          %v540 = vrot.slane %v538, 4
          %v541 = vmax.f32 %v538, %v540
          %v542 = vrot.slane %v541, 2
          %v543 = vmax.f32 %v541, %v542
          %v544 = vrot.slane %v543, 1
          %v545 = vmax.f32 %v543, %v544
          %v546 = vrot.slane %v539, 4
          %v547 = vmax.f32 %v539, %v546
          %v548 = vrot.slane %v547, 2
          %v549 = vmax.f32 %v547, %v548
          %v550 = vrot.slane %v549, 1
          %v551 = vmax.f32 %v549, %v550
          %vm552 = vcmp.gt.f32.partialorder %v545, 0.0
          %vm553 = vcmp.gt.f32.partialorder %v551, 0.0
          %vm554 = vmor %vm529, %vm552
          %vm555 = vmor %vm530, %vm553
          %v556 = vadd.f32 %v432, %v417
          %v557 = vcvt.f32.s32.to.zero.pseudo %v556
          %558 = vset.pattern.permute.xlu0 0
          %559 = vperm.xlu0 %558, %v557
          %v560 = vpop.permute.xlu0 %559
          %vm561 = vcmp.eq.s32.totalorder %v560, %v410
          %vm562 = vcmp.eq.s32.totalorder %v560, %v411
          %v563 = vsel %vm561, 1.0, 0.0
          %v564 = vsel %vm562, 1.0, 0.0
          %v565 = vrot.slane %v563, 4
          %v566 = vmax.f32 %v563, %v565
          %v567 = vrot.slane %v566, 2
          %v568 = vmax.f32 %v566, %v567
          %v569 = vrot.slane %v568, 1
          %v570 = vmax.f32 %v568, %v569
          %v571 = vrot.slane %v564, 4
          %v572 = vmax.f32 %v564, %v571
          %v573 = vrot.slane %v572, 2
          %v574 = vmax.f32 %v572, %v573
          %v575 = vrot.slane %v574, 1
          %v576 = vmax.f32 %v574, %v575
          %vm577 = vcmp.gt.f32.partialorder %v570, 0.0
          %vm578 = vcmp.gt.f32.partialorder %v576, 0.0
          %vm579 = vmor %vm554, %vm577
          %vm580 = vmor %vm555, %vm578
          %v581 = vadd.f32 %v432, %v418
          %v582 = vcvt.f32.s32.to.zero.pseudo %v581
          %583 = vset.pattern.permute.xlu0 0
          %584 = vperm.xlu0 %583, %v582
          %v585 = vpop.permute.xlu0 %584
          %vm586 = vcmp.eq.s32.totalorder %v585, %v410
          %vm587 = vcmp.eq.s32.totalorder %v585, %v411
          %v588 = vsel %vm586, 1.0, 0.0
          %v589 = vsel %vm587, 1.0, 0.0
          %v590 = vrot.slane %v588, 4
          %v591 = vmax.f32 %v588, %v590
          %v592 = vrot.slane %v591, 2
          %v593 = vmax.f32 %v591, %v592
          %v594 = vrot.slane %v593, 1
          %v595 = vmax.f32 %v593, %v594
          %v596 = vrot.slane %v589, 4
          %v597 = vmax.f32 %v589, %v596
          %v598 = vrot.slane %v597, 2
          %v599 = vmax.f32 %v597, %v598
          %v600 = vrot.slane %v599, 1
          %v601 = vmax.f32 %v599, %v600
          %vm602 = vcmp.gt.f32.partialorder %v595, 0.0
          %vm603 = vcmp.gt.f32.partialorder %v601, 0.0
          %vm604 = vmor %vm579, %vm602
          %vm605 = vmor %vm580, %vm603
          %v606 = vadd.f32 %v432, %v419
          %v607 = vcvt.f32.s32.to.zero.pseudo %v606
          %608 = vset.pattern.permute.xlu0 0
          %609 = vperm.xlu0 %608, %v607
          %v610 = vpop.permute.xlu0 %609
          %vm611 = vcmp.eq.s32.totalorder %v610, %v410
          %vm612 = vcmp.eq.s32.totalorder %v610, %v411
          %v613 = vsel %vm611, 1.0, 0.0
          %v614 = vsel %vm612, 1.0, 0.0
          %v615 = vrot.slane %v613, 4
          %v616 = vmax.f32 %v613, %v615
          %v617 = vrot.slane %v616, 2
          %v618 = vmax.f32 %v616, %v617
          %v619 = vrot.slane %v618, 1
          %v620 = vmax.f32 %v618, %v619
          %v621 = vrot.slane %v614, 4
          %v622 = vmax.f32 %v614, %v621
          %v623 = vrot.slane %v622, 2
          %v624 = vmax.f32 %v622, %v623
          %v625 = vrot.slane %v624, 1
          %v626 = vmax.f32 %v624, %v625
          %vm627 = vcmp.gt.f32.partialorder %v620, 0.0
          %vm628 = vcmp.gt.f32.partialorder %v626, 0.0
          %vm629 = vmor %vm604, %vm627
          %vm630 = vmor %vm605, %vm628
          %v631 = vadd.f32 %v432, %v420
          %v632 = vcvt.f32.s32.to.zero.pseudo %v631
          %633 = vset.pattern.permute.xlu0 0
          %634 = vperm.xlu0 %633, %v632
          %v635 = vpop.permute.xlu0 %634
          %vm636 = vcmp.eq.s32.totalorder %v635, %v410
          %vm637 = vcmp.eq.s32.totalorder %v635, %v411
          %v638 = vsel %vm636, 1.0, 0.0
          %v639 = vsel %vm637, 1.0, 0.0
          %v640 = vrot.slane %v638, 4
          %v641 = vmax.f32 %v638, %v640
          %v642 = vrot.slane %v641, 2
          %v643 = vmax.f32 %v641, %v642
          %v644 = vrot.slane %v643, 1
          %v645 = vmax.f32 %v643, %v644
          %v646 = vrot.slane %v639, 4
          %v647 = vmax.f32 %v639, %v646
          %v648 = vrot.slane %v647, 2
          %v649 = vmax.f32 %v647, %v648
          %v650 = vrot.slane %v649, 1
          %v651 = vmax.f32 %v649, %v650
          %vm652 = vcmp.gt.f32.partialorder %v645, 0.0
          %vm653 = vcmp.gt.f32.partialorder %v651, 0.0
          %vm654 = vmor %vm629, %vm652
          %vm655 = vmor %vm630, %vm653
          %v656 = vadd.f32 %v432, %v421
          %v657 = vcvt.f32.s32.to.zero.pseudo %v656
          %658 = vset.pattern.permute.xlu0 0
          %659 = vperm.xlu0 %658, %v657
          %v660 = vpop.permute.xlu0 %659
          %vm661 = vcmp.eq.s32.totalorder %v660, %v410
          %vm662 = vcmp.eq.s32.totalorder %v660, %v411
          %v663 = vsel %vm661, 1.0, 0.0
          %v664 = vsel %vm662, 1.0, 0.0
          %v665 = vrot.slane %v663, 4
          %v666 = vmax.f32 %v663, %v665
          %v667 = vrot.slane %v666, 2
          %v668 = vmax.f32 %v666, %v667
          %v669 = vrot.slane %v668, 1
          %v670 = vmax.f32 %v668, %v669
          %v671 = vrot.slane %v664, 4
          %v672 = vmax.f32 %v664, %v671
          %v673 = vrot.slane %v672, 2
          %v674 = vmax.f32 %v672, %v673
          %v675 = vrot.slane %v674, 1
          %v676 = vmax.f32 %v674, %v675
          %vm677 = vcmp.gt.f32.partialorder %v670, 0.0
          %vm678 = vcmp.gt.f32.partialorder %v676, 0.0
          %vm679 = vmor %vm654, %vm677
          %vm680 = vmor %vm655, %vm678
          %v681 = vadd.f32 %v432, %v422
          %v682 = vcvt.f32.s32.to.zero.pseudo %v681
          %683 = vset.pattern.permute.xlu0 0
          %684 = vperm.xlu0 %683, %v682
          %v685 = vpop.permute.xlu0 %684
          %vm686 = vcmp.eq.s32.totalorder %v685, %v410
          %vm687 = vcmp.eq.s32.totalorder %v685, %v411
          %v688 = vsel %vm686, 1.0, 0.0
          %v689 = vsel %vm687, 1.0, 0.0
          %v690 = vrot.slane %v688, 4
          %v691 = vmax.f32 %v688, %v690
          %v692 = vrot.slane %v691, 2
          %v693 = vmax.f32 %v691, %v692
          %v694 = vrot.slane %v693, 1
          %v695 = vmax.f32 %v693, %v694
          %v696 = vrot.slane %v689, 4
          %v697 = vmax.f32 %v689, %v696
          %v698 = vrot.slane %v697, 2
          %v699 = vmax.f32 %v697, %v698
          %v700 = vrot.slane %v699, 1
          %v701 = vmax.f32 %v699, %v700
          %vm702 = vcmp.gt.f32.partialorder %v695, 0.0
          %vm703 = vcmp.gt.f32.partialorder %v701, 0.0
          %vm704 = vmor %vm679, %vm702
          %vm705 = vmor %vm680, %vm703
          %v706 = vadd.f32 %v432, %v423
          %v707 = vcvt.f32.s32.to.zero.pseudo %v706
          %708 = vset.pattern.permute.xlu0 0
          %709 = vperm.xlu0 %708, %v707
          %v710 = vpop.permute.xlu0 %709
          %vm711 = vcmp.eq.s32.totalorder %v710, %v410
          %vm712 = vcmp.eq.s32.totalorder %v710, %v411
          %v713 = vsel %vm711, 1.0, 0.0
          %v714 = vsel %vm712, 1.0, 0.0
          %v715 = vrot.slane %v713, 4
          %v716 = vmax.f32 %v713, %v715
          %v717 = vrot.slane %v716, 2
          %v718 = vmax.f32 %v716, %v717
          %v719 = vrot.slane %v718, 1
          %v720 = vmax.f32 %v718, %v719
          %v721 = vrot.slane %v714, 4
          %v722 = vmax.f32 %v714, %v721
          %v723 = vrot.slane %v722, 2
          %v724 = vmax.f32 %v722, %v723
          %v725 = vrot.slane %v724, 1
          %v726 = vmax.f32 %v724, %v725
          %vm727 = vcmp.gt.f32.partialorder %v720, 0.0
          %vm728 = vcmp.gt.f32.partialorder %v726, 0.0
          %vm729 = vmor %vm704, %vm727
          %vm730 = vmor %vm705, %vm728
          %v731 = vadd.f32 %v432, %v424
          %v732 = vcvt.f32.s32.to.zero.pseudo %v731
          %733 = vset.pattern.permute.xlu0 0
          %734 = vperm.xlu0 %733, %v732
          %v735 = vpop.permute.xlu0 %734
          %vm736 = vcmp.eq.s32.totalorder %v735, %v410
          %vm737 = vcmp.eq.s32.totalorder %v735, %v411
          %v738 = vsel %vm736, 1.0, 0.0
          %v739 = vsel %vm737, 1.0, 0.0
          %v740 = vrot.slane %v738, 4
          %v741 = vmax.f32 %v738, %v740
          %v742 = vrot.slane %v741, 2
          %v743 = vmax.f32 %v741, %v742
          %v744 = vrot.slane %v743, 1
          %v745 = vmax.f32 %v743, %v744
          %v746 = vrot.slane %v739, 4
          %v747 = vmax.f32 %v739, %v746
          %v748 = vrot.slane %v747, 2
          %v749 = vmax.f32 %v747, %v748
          %v750 = vrot.slane %v749, 1
          %v751 = vmax.f32 %v749, %v750
          %vm752 = vcmp.gt.f32.partialorder %v745, 0.0
          %vm753 = vcmp.gt.f32.partialorder %v751, 0.0
          %vm754 = vmor %vm729, %vm752
          %vm755 = vmor %vm730, %vm753
          %v756 = vadd.f32 %v432, %v425
          %v757 = vcvt.f32.s32.to.zero.pseudo %v756
          %758 = vset.pattern.permute.xlu0 0
          %759 = vperm.xlu0 %758, %v757
          %v760 = vpop.permute.xlu0 %759
          %vm761 = vcmp.eq.s32.totalorder %v760, %v410
          %vm762 = vcmp.eq.s32.totalorder %v760, %v411
          %v763 = vsel %vm761, 1.0, 0.0
          %v764 = vsel %vm762, 1.0, 0.0
          %v765 = vrot.slane %v763, 4
          %v766 = vmax.f32 %v763, %v765
          %v767 = vrot.slane %v766, 2
          %v768 = vmax.f32 %v766, %v767
          %v769 = vrot.slane %v768, 1
          %v770 = vmax.f32 %v768, %v769
          %v771 = vrot.slane %v764, 4
          %v772 = vmax.f32 %v764, %v771
          %v773 = vrot.slane %v772, 2
          %v774 = vmax.f32 %v772, %v773
          %v775 = vrot.slane %v774, 1
          %v776 = vmax.f32 %v774, %v775
          %vm777 = vcmp.gt.f32.partialorder %v770, 0.0
          %vm778 = vcmp.gt.f32.partialorder %v776, 0.0
          %vm779 = vmor %vm754, %vm777
          %vm780 = vmor %vm755, %vm778
          %v781 = vadd.f32 %v432, %v426
          %v782 = vcvt.f32.s32.to.zero.pseudo %v781
          %783 = vset.pattern.permute.xlu0 0
          %784 = vperm.xlu0 %783, %v782
          %v785 = vpop.permute.xlu0 %784
          %vm786 = vcmp.eq.s32.totalorder %v785, %v410
          %vm787 = vcmp.eq.s32.totalorder %v785, %v411
          %v788 = vsel %vm786, 1.0, 0.0
          %v789 = vsel %vm787, 1.0, 0.0
          %v790 = vrot.slane %v788, 4
          %v791 = vmax.f32 %v788, %v790
          %v792 = vrot.slane %v791, 2
          %v793 = vmax.f32 %v791, %v792
          %v794 = vrot.slane %v793, 1
          %v795 = vmax.f32 %v793, %v794
          %v796 = vrot.slane %v789, 4
          %v797 = vmax.f32 %v789, %v796
          %v798 = vrot.slane %v797, 2
          %v799 = vmax.f32 %v797, %v798
          %v800 = vrot.slane %v799, 1
          %v801 = vmax.f32 %v799, %v800
          %vm802 = vcmp.gt.f32.partialorder %v795, 0.0
          %vm803 = vcmp.gt.f32.partialorder %v801, 0.0
          %vm804 = vmor %vm779, %vm802
          %vm805 = vmor %vm780, %vm803
          %v806 = vld [vmem:[%s319] sm:$0x3]
          %v808 = vperm.slane %v806, 0
          %v809 = vperm.slane %v806, 1
          %v812 = vsel %vm804, 1.0, %v808
          %v813 = vsel %vm805, 1.0, %v809
          %v816 = vrot.slane %v813, 7
          %v817 = vsel %vm397, %v812, %v816
          %819 = vst.msk [vmem:[%s319] sm:$0x3] %vm403, %v817
        $region48: #{tpu_custom_call.1} parent=43 // pred_fallthru
          _
        %p820 = scmp.gt.s32.totalorder %s343, 1
        // Predicated region
        $region49: #{tpu_custom_call.1} parent=43 // pred_check
          %p821 = pneg %p820
        $region50: #{tpu_custom_call.1} parent=43 // pred_check_branch
          %823 = sbr.rel (%p821) target = $region52
        $region51: #{tpu_custom_call.1} parent=43 // pred_region
          %v824 = vperm.slane %v427, 1
          %v825 = vadd.f32 %v824, %v412
          %v826 = vcvt.f32.s32.to.zero.pseudo %v825
          %827 = vset.pattern.permute.xlu0 0
          %828 = vperm.xlu0 %827, %v826
          %v829 = vpop.permute.xlu0 %828
          %vm830 = vcmp.eq.s32.totalorder %v829, %v410
          %vm831 = vcmp.eq.s32.totalorder %v829, %v411
          %v832 = vsel %vm830, 1.0, 0.0
          %v833 = vsel %vm831, 1.0, 0.0
          %v834 = vrot.slane %v832, 4
          %v835 = vmax.f32 %v832, %v834
          %v836 = vrot.slane %v835, 2
          %v837 = vmax.f32 %v835, %v836
          %v838 = vrot.slane %v837, 1
          %v839 = vmax.f32 %v837, %v838
          %v840 = vrot.slane %v833, 4
          %v841 = vmax.f32 %v833, %v840
          %v842 = vrot.slane %v841, 2
          %v843 = vmax.f32 %v841, %v842
          %v844 = vrot.slane %v843, 1
          %v845 = vmax.f32 %v843, %v844
          %vm846 = vcmp.gt.f32.partialorder %v839, 0.0
          %vm847 = vcmp.gt.f32.partialorder %v845, 0.0
          %v848 = vadd.f32 %v824, %v413
          %v849 = vcvt.f32.s32.to.zero.pseudo %v848
          %850 = vset.pattern.permute.xlu0 0
          %851 = vperm.xlu0 %850, %v849
          %v852 = vpop.permute.xlu0 %851
          %vm853 = vcmp.eq.s32.totalorder %v852, %v410
          %vm854 = vcmp.eq.s32.totalorder %v852, %v411
          %v855 = vsel %vm853, 1.0, 0.0
          %v856 = vsel %vm854, 1.0, 0.0
          %v857 = vrot.slane %v855, 4
          %v858 = vmax.f32 %v855, %v857
          %v859 = vrot.slane %v858, 2
          %v860 = vmax.f32 %v858, %v859
          %v861 = vrot.slane %v860, 1
          %v862 = vmax.f32 %v860, %v861
          %v863 = vrot.slane %v856, 4
          %v864 = vmax.f32 %v856, %v863
          %v865 = vrot.slane %v864, 2
          %v866 = vmax.f32 %v864, %v865
          %v867 = vrot.slane %v866, 1
          %v868 = vmax.f32 %v866, %v867
          %vm869 = vcmp.gt.f32.partialorder %v862, 0.0
          %vm870 = vcmp.gt.f32.partialorder %v868, 0.0
          %vm871 = vmor %vm846, %vm869
          %vm872 = vmor %vm847, %vm870
          %v873 = vadd.f32 %v824, %v414
          %v874 = vcvt.f32.s32.to.zero.pseudo %v873
          %875 = vset.pattern.permute.xlu0 0
          %876 = vperm.xlu0 %875, %v874
          %v877 = vpop.permute.xlu0 %876
          %vm878 = vcmp.eq.s32.totalorder %v877, %v410
          %vm879 = vcmp.eq.s32.totalorder %v877, %v411
          %v880 = vsel %vm878, 1.0, 0.0
          %v881 = vsel %vm879, 1.0, 0.0
          %v882 = vrot.slane %v880, 4
          %v883 = vmax.f32 %v880, %v882
          %v884 = vrot.slane %v883, 2
          %v885 = vmax.f32 %v883, %v884
          %v886 = vrot.slane %v885, 1
          %v887 = vmax.f32 %v885, %v886
          %v888 = vrot.slane %v881, 4
          %v889 = vmax.f32 %v881, %v888
          %v890 = vrot.slane %v889, 2
          %v891 = vmax.f32 %v889, %v890
          %v892 = vrot.slane %v891, 1
          %v893 = vmax.f32 %v891, %v892
          %vm894 = vcmp.gt.f32.partialorder %v887, 0.0
          %vm895 = vcmp.gt.f32.partialorder %v893, 0.0
          %vm896 = vmor %vm871, %vm894
          %vm897 = vmor %vm872, %vm895
          %v898 = vadd.f32 %v824, %v415
          %v899 = vcvt.f32.s32.to.zero.pseudo %v898
          %900 = vset.pattern.permute.xlu0 0
          %901 = vperm.xlu0 %900, %v899
          %v902 = vpop.permute.xlu0 %901
          %vm903 = vcmp.eq.s32.totalorder %v902, %v410
          %vm904 = vcmp.eq.s32.totalorder %v902, %v411
          %v905 = vsel %vm903, 1.0, 0.0
          %v906 = vsel %vm904, 1.0, 0.0
          %v907 = vrot.slane %v905, 4
          %v908 = vmax.f32 %v905, %v907
          %v909 = vrot.slane %v908, 2
          %v910 = vmax.f32 %v908, %v909
          %v911 = vrot.slane %v910, 1
          %v912 = vmax.f32 %v910, %v911
          %v913 = vrot.slane %v906, 4
          %v914 = vmax.f32 %v906, %v913
          %v915 = vrot.slane %v914, 2
          %v916 = vmax.f32 %v914, %v915
          %v917 = vrot.slane %v916, 1
          %v918 = vmax.f32 %v916, %v917
          %vm919 = vcmp.gt.f32.partialorder %v912, 0.0
          %vm920 = vcmp.gt.f32.partialorder %v918, 0.0
          %vm921 = vmor %vm896, %vm919
          %vm922 = vmor %vm897, %vm920
          %v923 = vadd.f32 %v824, %v416
          %v924 = vcvt.f32.s32.to.zero.pseudo %v923
          %925 = vset.pattern.permute.xlu0 0
          %926 = vperm.xlu0 %925, %v924
          %v927 = vpop.permute.xlu0 %926
          %vm928 = vcmp.eq.s32.totalorder %v927, %v410
          %vm929 = vcmp.eq.s32.totalorder %v927, %v411
          %v930 = vsel %vm928, 1.0, 0.0
          %v931 = vsel %vm929, 1.0, 0.0
          %v932 = vrot.slane %v930, 4
          %v933 = vmax.f32 %v930, %v932
          %v934 = vrot.slane %v933, 2
          %v935 = vmax.f32 %v933, %v934
          %v936 = vrot.slane %v935, 1
          %v937 = vmax.f32 %v935, %v936
          %v938 = vrot.slane %v931, 4
          %v939 = vmax.f32 %v931, %v938
          %v940 = vrot.slane %v939, 2
          %v941 = vmax.f32 %v939, %v940
          %v942 = vrot.slane %v941, 1
          %v943 = vmax.f32 %v941, %v942
          %vm944 = vcmp.gt.f32.partialorder %v937, 0.0
          %vm945 = vcmp.gt.f32.partialorder %v943, 0.0
          %vm946 = vmor %vm921, %vm944
          %vm947 = vmor %vm922, %vm945
          %v948 = vadd.f32 %v824, %v417
          %v949 = vcvt.f32.s32.to.zero.pseudo %v948
          %950 = vset.pattern.permute.xlu0 0
          %951 = vperm.xlu0 %950, %v949
          %v952 = vpop.permute.xlu0 %951
          %vm953 = vcmp.eq.s32.totalorder %v952, %v410
          %vm954 = vcmp.eq.s32.totalorder %v952, %v411
          %v955 = vsel %vm953, 1.0, 0.0
          %v956 = vsel %vm954, 1.0, 0.0
          %v957 = vrot.slane %v955, 4
          %v958 = vmax.f32 %v955, %v957
          %v959 = vrot.slane %v958, 2
          %v960 = vmax.f32 %v958, %v959
          %v961 = vrot.slane %v960, 1
          %v962 = vmax.f32 %v960, %v961
          %v963 = vrot.slane %v956, 4
          %v964 = vmax.f32 %v956, %v963
          %v965 = vrot.slane %v964, 2
          %v966 = vmax.f32 %v964, %v965
          %v967 = vrot.slane %v966, 1
          %v968 = vmax.f32 %v966, %v967
          %vm969 = vcmp.gt.f32.partialorder %v962, 0.0
          %vm970 = vcmp.gt.f32.partialorder %v968, 0.0
          %vm971 = vmor %vm946, %vm969
          %vm972 = vmor %vm947, %vm970
          %v973 = vadd.f32 %v824, %v418
          %v974 = vcvt.f32.s32.to.zero.pseudo %v973
          %975 = vset.pattern.permute.xlu0 0
          %976 = vperm.xlu0 %975, %v974
          %v977 = vpop.permute.xlu0 %976
          %vm978 = vcmp.eq.s32.totalorder %v977, %v410
          %vm979 = vcmp.eq.s32.totalorder %v977, %v411
          %v980 = vsel %vm978, 1.0, 0.0
          %v981 = vsel %vm979, 1.0, 0.0
          %v982 = vrot.slane %v980, 4
          %v983 = vmax.f32 %v980, %v982
          %v984 = vrot.slane %v983, 2
          %v985 = vmax.f32 %v983, %v984
          %v986 = vrot.slane %v985, 1
          %v987 = vmax.f32 %v985, %v986
          %v988 = vrot.slane %v981, 4
          %v989 = vmax.f32 %v981, %v988
          %v990 = vrot.slane %v989, 2
          %v991 = vmax.f32 %v989, %v990
          %v992 = vrot.slane %v991, 1
          %v993 = vmax.f32 %v991, %v992
          %vm994 = vcmp.gt.f32.partialorder %v987, 0.0
          %vm995 = vcmp.gt.f32.partialorder %v993, 0.0
          %vm996 = vmor %vm971, %vm994
          %vm997 = vmor %vm972, %vm995
          %v998 = vadd.f32 %v824, %v419
          %v999 = vcvt.f32.s32.to.zero.pseudo %v998
          %1000 = vset.pattern.permute.xlu0 0
          %1001 = vperm.xlu0 %1000, %v999
          %v1002 = vpop.permute.xlu0 %1001
          %vm1003 = vcmp.eq.s32.totalorder %v1002, %v410
          %vm1004 = vcmp.eq.s32.totalorder %v1002, %v411
          %v1005 = vsel %vm1003, 1.0, 0.0
          %v1006 = vsel %vm1004, 1.0, 0.0
          %v1007 = vrot.slane %v1005, 4
          %v1008 = vmax.f32 %v1005, %v1007
          %v1009 = vrot.slane %v1008, 2
          %v1010 = vmax.f32 %v1008, %v1009
          %v1011 = vrot.slane %v1010, 1
          %v1012 = vmax.f32 %v1010, %v1011
          %v1013 = vrot.slane %v1006, 4
          %v1014 = vmax.f32 %v1006, %v1013
          %v1015 = vrot.slane %v1014, 2
          %v1016 = vmax.f32 %v1014, %v1015
          %v1017 = vrot.slane %v1016, 1
          %v1018 = vmax.f32 %v1016, %v1017
          %vm1019 = vcmp.gt.f32.partialorder %v1012, 0.0
          %vm1020 = vcmp.gt.f32.partialorder %v1018, 0.0
          %vm1021 = vmor %vm996, %vm1019
          %vm1022 = vmor %vm997, %vm1020
          %v1023 = vadd.f32 %v824, %v420
          %v1024 = vcvt.f32.s32.to.zero.pseudo %v1023
          %1025 = vset.pattern.permute.xlu0 0
          %1026 = vperm.xlu0 %1025, %v1024
          %v1027 = vpop.permute.xlu0 %1026
          %vm1028 = vcmp.eq.s32.totalorder %v1027, %v410
          %vm1029 = vcmp.eq.s32.totalorder %v1027, %v411
          %v1030 = vsel %vm1028, 1.0, 0.0
          %v1031 = vsel %vm1029, 1.0, 0.0
          %v1032 = vrot.slane %v1030, 4
          %v1033 = vmax.f32 %v1030, %v1032
          %v1034 = vrot.slane %v1033, 2
          %v1035 = vmax.f32 %v1033, %v1034
          %v1036 = vrot.slane %v1035, 1
          %v1037 = vmax.f32 %v1035, %v1036
          %v1038 = vrot.slane %v1031, 4
          %v1039 = vmax.f32 %v1031, %v1038
          %v1040 = vrot.slane %v1039, 2
          %v1041 = vmax.f32 %v1039, %v1040
          %v1042 = vrot.slane %v1041, 1
          %v1043 = vmax.f32 %v1041, %v1042
          %vm1044 = vcmp.gt.f32.partialorder %v1037, 0.0
          %vm1045 = vcmp.gt.f32.partialorder %v1043, 0.0
          %vm1046 = vmor %vm1021, %vm1044
          %vm1047 = vmor %vm1022, %vm1045
          %v1048 = vadd.f32 %v824, %v421
          %v1049 = vcvt.f32.s32.to.zero.pseudo %v1048
          %1050 = vset.pattern.permute.xlu0 0
          %1051 = vperm.xlu0 %1050, %v1049
          %v1052 = vpop.permute.xlu0 %1051
          %vm1053 = vcmp.eq.s32.totalorder %v1052, %v410
          %vm1054 = vcmp.eq.s32.totalorder %v1052, %v411
          %v1055 = vsel %vm1053, 1.0, 0.0
          %v1056 = vsel %vm1054, 1.0, 0.0
          %v1057 = vrot.slane %v1055, 4
          %v1058 = vmax.f32 %v1055, %v1057
          %v1059 = vrot.slane %v1058, 2
          %v1060 = vmax.f32 %v1058, %v1059
          %v1061 = vrot.slane %v1060, 1
          %v1062 = vmax.f32 %v1060, %v1061
          %v1063 = vrot.slane %v1056, 4
          %v1064 = vmax.f32 %v1056, %v1063
          %v1065 = vrot.slane %v1064, 2
          %v1066 = vmax.f32 %v1064, %v1065
          %v1067 = vrot.slane %v1066, 1
          %v1068 = vmax.f32 %v1066, %v1067
          %vm1069 = vcmp.gt.f32.partialorder %v1062, 0.0
          %vm1070 = vcmp.gt.f32.partialorder %v1068, 0.0
          %vm1071 = vmor %vm1046, %vm1069
          %vm1072 = vmor %vm1047, %vm1070
          %v1073 = vadd.f32 %v824, %v422
          %v1074 = vcvt.f32.s32.to.zero.pseudo %v1073
          %1075 = vset.pattern.permute.xlu0 0
          %1076 = vperm.xlu0 %1075, %v1074
          %v1077 = vpop.permute.xlu0 %1076
          %vm1078 = vcmp.eq.s32.totalorder %v1077, %v410
          %vm1079 = vcmp.eq.s32.totalorder %v1077, %v411
          %v1080 = vsel %vm1078, 1.0, 0.0
          %v1081 = vsel %vm1079, 1.0, 0.0
          %v1082 = vrot.slane %v1080, 4
          %v1083 = vmax.f32 %v1080, %v1082
          %v1084 = vrot.slane %v1083, 2
          %v1085 = vmax.f32 %v1083, %v1084
          %v1086 = vrot.slane %v1085, 1
          %v1087 = vmax.f32 %v1085, %v1086
          %v1088 = vrot.slane %v1081, 4
          %v1089 = vmax.f32 %v1081, %v1088
          %v1090 = vrot.slane %v1089, 2
          %v1091 = vmax.f32 %v1089, %v1090
          %v1092 = vrot.slane %v1091, 1
          %v1093 = vmax.f32 %v1091, %v1092
          %vm1094 = vcmp.gt.f32.partialorder %v1087, 0.0
          %vm1095 = vcmp.gt.f32.partialorder %v1093, 0.0
          %vm1096 = vmor %vm1071, %vm1094
          %vm1097 = vmor %vm1072, %vm1095
          %v1098 = vadd.f32 %v824, %v423
          %v1099 = vcvt.f32.s32.to.zero.pseudo %v1098
          %1100 = vset.pattern.permute.xlu0 0
          %1101 = vperm.xlu0 %1100, %v1099
          %v1102 = vpop.permute.xlu0 %1101
          %vm1103 = vcmp.eq.s32.totalorder %v1102, %v410
          %vm1104 = vcmp.eq.s32.totalorder %v1102, %v411
          %v1105 = vsel %vm1103, 1.0, 0.0
          %v1106 = vsel %vm1104, 1.0, 0.0
          %v1107 = vrot.slane %v1105, 4
          %v1108 = vmax.f32 %v1105, %v1107
          %v1109 = vrot.slane %v1108, 2
          %v1110 = vmax.f32 %v1108, %v1109
          %v1111 = vrot.slane %v1110, 1
          %v1112 = vmax.f32 %v1110, %v1111
          %v1113 = vrot.slane %v1106, 4
          %v1114 = vmax.f32 %v1106, %v1113
          %v1115 = vrot.slane %v1114, 2
          %v1116 = vmax.f32 %v1114, %v1115
          %v1117 = vrot.slane %v1116, 1
          %v1118 = vmax.f32 %v1116, %v1117
          %vm1119 = vcmp.gt.f32.partialorder %v1112, 0.0
          %vm1120 = vcmp.gt.f32.partialorder %v1118, 0.0
          %vm1121 = vmor %vm1096, %vm1119
          %vm1122 = vmor %vm1097, %vm1120
          %v1123 = vadd.f32 %v824, %v424
          %v1124 = vcvt.f32.s32.to.zero.pseudo %v1123
          %1125 = vset.pattern.permute.xlu0 0
          %1126 = vperm.xlu0 %1125, %v1124
          %v1127 = vpop.permute.xlu0 %1126
          %vm1128 = vcmp.eq.s32.totalorder %v1127, %v410
          %vm1129 = vcmp.eq.s32.totalorder %v1127, %v411
          %v1130 = vsel %vm1128, 1.0, 0.0
          %v1131 = vsel %vm1129, 1.0, 0.0
          %v1132 = vrot.slane %v1130, 4
          %v1133 = vmax.f32 %v1130, %v1132
          %v1134 = vrot.slane %v1133, 2
          %v1135 = vmax.f32 %v1133, %v1134
          %v1136 = vrot.slane %v1135, 1
          %v1137 = vmax.f32 %v1135, %v1136
          %v1138 = vrot.slane %v1131, 4
          %v1139 = vmax.f32 %v1131, %v1138
          %v1140 = vrot.slane %v1139, 2
          %v1141 = vmax.f32 %v1139, %v1140
          %v1142 = vrot.slane %v1141, 1
          %v1143 = vmax.f32 %v1141, %v1142
          %vm1144 = vcmp.gt.f32.partialorder %v1137, 0.0
          %vm1145 = vcmp.gt.f32.partialorder %v1143, 0.0
          %vm1146 = vmor %vm1121, %vm1144
          %vm1147 = vmor %vm1122, %vm1145
          %v1148 = vadd.f32 %v824, %v425
          %v1149 = vcvt.f32.s32.to.zero.pseudo %v1148
          %1150 = vset.pattern.permute.xlu0 0
          %1151 = vperm.xlu0 %1150, %v1149
          %v1152 = vpop.permute.xlu0 %1151
          %vm1153 = vcmp.eq.s32.totalorder %v1152, %v410
          %vm1154 = vcmp.eq.s32.totalorder %v1152, %v411
          %v1155 = vsel %vm1153, 1.0, 0.0
          %v1156 = vsel %vm1154, 1.0, 0.0
          %v1157 = vrot.slane %v1155, 4
          %v1158 = vmax.f32 %v1155, %v1157
          %v1159 = vrot.slane %v1158, 2
          %v1160 = vmax.f32 %v1158, %v1159
          %v1161 = vrot.slane %v1160, 1
          %v1162 = vmax.f32 %v1160, %v1161
          %v1163 = vrot.slane %v1156, 4
          %v1164 = vmax.f32 %v1156, %v1163
          %v1165 = vrot.slane %v1164, 2
          %v1166 = vmax.f32 %v1164, %v1165
          %v1167 = vrot.slane %v1166, 1
          %v1168 = vmax.f32 %v1166, %v1167
          %vm1169 = vcmp.gt.f32.partialorder %v1162, 0.0
          %vm1170 = vcmp.gt.f32.partialorder %v1168, 0.0
          %vm1171 = vmor %vm1146, %vm1169
          %vm1172 = vmor %vm1147, %vm1170
          %v1173 = vadd.f32 %v824, %v426
          %v1174 = vcvt.f32.s32.to.zero.pseudo %v1173
          %1175 = vset.pattern.permute.xlu0 0
          %1176 = vperm.xlu0 %1175, %v1174
          %v1177 = vpop.permute.xlu0 %1176
          %vm1178 = vcmp.eq.s32.totalorder %v1177, %v410
          %vm1179 = vcmp.eq.s32.totalorder %v1177, %v411
          %v1180 = vsel %vm1178, 1.0, 0.0
          %v1181 = vsel %vm1179, 1.0, 0.0
          %v1182 = vrot.slane %v1180, 4
          %v1183 = vmax.f32 %v1180, %v1182
          %v1184 = vrot.slane %v1183, 2
          %v1185 = vmax.f32 %v1183, %v1184
          %v1186 = vrot.slane %v1185, 1
          %v1187 = vmax.f32 %v1185, %v1186
          %v1188 = vrot.slane %v1181, 4
          %v1189 = vmax.f32 %v1181, %v1188
          %v1190 = vrot.slane %v1189, 2
          %v1191 = vmax.f32 %v1189, %v1190
          %v1192 = vrot.slane %v1191, 1
          %v1193 = vmax.f32 %v1191, %v1192
          %vm1194 = vcmp.gt.f32.partialorder %v1187, 0.0
          %vm1195 = vcmp.gt.f32.partialorder %v1193, 0.0
          %vm1196 = vmor %vm1171, %vm1194
          %vm1197 = vmor %vm1172, %vm1195
          %v1198 = vld [vmem:[%s319] sm:$0x3]
          %v1200 = vperm.slane %v1198, 0
          %v1201 = vperm.slane %v1198, 1
          %v1204 = vsel %vm1196, 1.0, %v1200
          %v1205 = vsel %vm1197, 1.0, %v1201
          %v1208 = vrot.slane %v1205, 7
          %v1209 = vsel %vm397, %v1204, %v1208
          %1211 = vst.msk [vmem:[%s319] sm:$0x3] %vm403, %v1209
        $region52: #{tpu_custom_call.1} parent=43 // pred_fallthru
          _
        %p1212 = scmp.gt.s32.totalorder %s343, 2
        // Predicated region
        $region53: #{tpu_custom_call.1} parent=43 // pred_check
          %p1213 = pneg %p1212
        $region54: #{tpu_custom_call.1} parent=43 // pred_check_branch
          %1215 = sbr.rel (%p1213) target = $region56
        $region55: #{tpu_custom_call.1} parent=43 // pred_region
          %v1216 = vperm.slane %v427, 2
          %v1217 = vadd.f32 %v1216, %v412
          %v1218 = vcvt.f32.s32.to.zero.pseudo %v1217
          %1219 = vset.pattern.permute.xlu0 0
          %1220 = vperm.xlu0 %1219, %v1218
          %v1221 = vpop.permute.xlu0 %1220
          %vm1222 = vcmp.eq.s32.totalorder %v1221, %v410
          %vm1223 = vcmp.eq.s32.totalorder %v1221, %v411
          %v1224 = vsel %vm1222, 1.0, 0.0
          %v1225 = vsel %vm1223, 1.0, 0.0
          %v1226 = vrot.slane %v1224, 4
          %v1227 = vmax.f32 %v1224, %v1226
          %v1228 = vrot.slane %v1227, 2
          %v1229 = vmax.f32 %v1227, %v1228
          %v1230 = vrot.slane %v1229, 1
          %v1231 = vmax.f32 %v1229, %v1230
          %v1232 = vrot.slane %v1225, 4
          %v1233 = vmax.f32 %v1225, %v1232
          %v1234 = vrot.slane %v1233, 2
          %v1235 = vmax.f32 %v1233, %v1234
          %v1236 = vrot.slane %v1235, 1
          %v1237 = vmax.f32 %v1235, %v1236
          %vm1238 = vcmp.gt.f32.partialorder %v1231, 0.0
          %vm1239 = vcmp.gt.f32.partialorder %v1237, 0.0
          %v1240 = vadd.f32 %v1216, %v413
          %v1241 = vcvt.f32.s32.to.zero.pseudo %v1240
          %1242 = vset.pattern.permute.xlu0 0
          %1243 = vperm.xlu0 %1242, %v1241
          %v1244 = vpop.permute.xlu0 %1243
          %vm1245 = vcmp.eq.s32.totalorder %v1244, %v410
          %vm1246 = vcmp.eq.s32.totalorder %v1244, %v411
          %v1247 = vsel %vm1245, 1.0, 0.0
          %v1248 = vsel %vm1246, 1.0, 0.0
          %v1249 = vrot.slane %v1247, 4
          %v1250 = vmax.f32 %v1247, %v1249
          %v1251 = vrot.slane %v1250, 2
          %v1252 = vmax.f32 %v1250, %v1251
          %v1253 = vrot.slane %v1252, 1
          %v1254 = vmax.f32 %v1252, %v1253
          %v1255 = vrot.slane %v1248, 4
          %v1256 = vmax.f32 %v1248, %v1255
          %v1257 = vrot.slane %v1256, 2
          %v1258 = vmax.f32 %v1256, %v1257
          %v1259 = vrot.slane %v1258, 1
          %v1260 = vmax.f32 %v1258, %v1259
          %vm1261 = vcmp.gt.f32.partialorder %v1254, 0.0
          %vm1262 = vcmp.gt.f32.partialorder %v1260, 0.0
          %vm1263 = vmor %vm1238, %vm1261
          %vm1264 = vmor %vm1239, %vm1262
          %v1265 = vadd.f32 %v1216, %v414
          %v1266 = vcvt.f32.s32.to.zero.pseudo %v1265
          %1267 = vset.pattern.permute.xlu0 0
          %1268 = vperm.xlu0 %1267, %v1266
          %v1269 = vpop.permute.xlu0 %1268
          %vm1270 = vcmp.eq.s32.totalorder %v1269, %v410
          %vm1271 = vcmp.eq.s32.totalorder %v1269, %v411
          %v1272 = vsel %vm1270, 1.0, 0.0
          %v1273 = vsel %vm1271, 1.0, 0.0
          %v1274 = vrot.slane %v1272, 4
          %v1275 = vmax.f32 %v1272, %v1274
          %v1276 = vrot.slane %v1275, 2
          %v1277 = vmax.f32 %v1275, %v1276
          %v1278 = vrot.slane %v1277, 1
          %v1279 = vmax.f32 %v1277, %v1278
          %v1280 = vrot.slane %v1273, 4
          %v1281 = vmax.f32 %v1273, %v1280
          %v1282 = vrot.slane %v1281, 2
          %v1283 = vmax.f32 %v1281, %v1282
          %v1284 = vrot.slane %v1283, 1
          %v1285 = vmax.f32 %v1283, %v1284
          %vm1286 = vcmp.gt.f32.partialorder %v1279, 0.0
          %vm1287 = vcmp.gt.f32.partialorder %v1285, 0.0
          %vm1288 = vmor %vm1263, %vm1286
          %vm1289 = vmor %vm1264, %vm1287
          %v1290 = vadd.f32 %v1216, %v415
          %v1291 = vcvt.f32.s32.to.zero.pseudo %v1290
          %1292 = vset.pattern.permute.xlu0 0
          %1293 = vperm.xlu0 %1292, %v1291
          %v1294 = vpop.permute.xlu0 %1293
          %vm1295 = vcmp.eq.s32.totalorder %v1294, %v410
          %vm1296 = vcmp.eq.s32.totalorder %v1294, %v411
          %v1297 = vsel %vm1295, 1.0, 0.0
          %v1298 = vsel %vm1296, 1.0, 0.0
          %v1299 = vrot.slane %v1297, 4
          %v1300 = vmax.f32 %v1297, %v1299
          %v1301 = vrot.slane %v1300, 2
          %v1302 = vmax.f32 %v1300, %v1301
          %v1303 = vrot.slane %v1302, 1
          %v1304 = vmax.f32 %v1302, %v1303
          %v1305 = vrot.slane %v1298, 4
          %v1306 = vmax.f32 %v1298, %v1305
          %v1307 = vrot.slane %v1306, 2
          %v1308 = vmax.f32 %v1306, %v1307
          %v1309 = vrot.slane %v1308, 1
          %v1310 = vmax.f32 %v1308, %v1309
          %vm1311 = vcmp.gt.f32.partialorder %v1304, 0.0
          %vm1312 = vcmp.gt.f32.partialorder %v1310, 0.0
          %vm1313 = vmor %vm1288, %vm1311
          %vm1314 = vmor %vm1289, %vm1312
          %v1315 = vadd.f32 %v1216, %v416
          %v1316 = vcvt.f32.s32.to.zero.pseudo %v1315
          %1317 = vset.pattern.permute.xlu0 0
          %1318 = vperm.xlu0 %1317, %v1316
          %v1319 = vpop.permute.xlu0 %1318
          %vm1320 = vcmp.eq.s32.totalorder %v1319, %v410
          %vm1321 = vcmp.eq.s32.totalorder %v1319, %v411
          %v1322 = vsel %vm1320, 1.0, 0.0
          %v1323 = vsel %vm1321, 1.0, 0.0
          %v1324 = vrot.slane %v1322, 4
          %v1325 = vmax.f32 %v1322, %v1324
          %v1326 = vrot.slane %v1325, 2
          %v1327 = vmax.f32 %v1325, %v1326
          %v1328 = vrot.slane %v1327, 1
          %v1329 = vmax.f32 %v1327, %v1328
          %v1330 = vrot.slane %v1323, 4
          %v1331 = vmax.f32 %v1323, %v1330
          %v1332 = vrot.slane %v1331, 2
          %v1333 = vmax.f32 %v1331, %v1332
          %v1334 = vrot.slane %v1333, 1
          %v1335 = vmax.f32 %v1333, %v1334
          %vm1336 = vcmp.gt.f32.partialorder %v1329, 0.0
          %vm1337 = vcmp.gt.f32.partialorder %v1335, 0.0
          %vm1338 = vmor %vm1313, %vm1336
          %vm1339 = vmor %vm1314, %vm1337
          %v1340 = vadd.f32 %v1216, %v417
          %v1341 = vcvt.f32.s32.to.zero.pseudo %v1340
          %1342 = vset.pattern.permute.xlu0 0
          %1343 = vperm.xlu0 %1342, %v1341
          %v1344 = vpop.permute.xlu0 %1343
          %vm1345 = vcmp.eq.s32.totalorder %v1344, %v410
          %vm1346 = vcmp.eq.s32.totalorder %v1344, %v411
          %v1347 = vsel %vm1345, 1.0, 0.0
          %v1348 = vsel %vm1346, 1.0, 0.0
          %v1349 = vrot.slane %v1347, 4
          %v1350 = vmax.f32 %v1347, %v1349
          %v1351 = vrot.slane %v1350, 2
          %v1352 = vmax.f32 %v1350, %v1351
          %v1353 = vrot.slane %v1352, 1
          %v1354 = vmax.f32 %v1352, %v1353
          %v1355 = vrot.slane %v1348, 4
          %v1356 = vmax.f32 %v1348, %v1355
          %v1357 = vrot.slane %v1356, 2
          %v1358 = vmax.f32 %v1356, %v1357
          %v1359 = vrot.slane %v1358, 1
          %v1360 = vmax.f32 %v1358, %v1359
          %vm1361 = vcmp.gt.f32.partialorder %v1354, 0.0
          %vm1362 = vcmp.gt.f32.partialorder %v1360, 0.0
          %vm1363 = vmor %vm1338, %vm1361
          %vm1364 = vmor %vm1339, %vm1362
          %v1365 = vadd.f32 %v1216, %v418
          %v1366 = vcvt.f32.s32.to.zero.pseudo %v1365
          %1367 = vset.pattern.permute.xlu0 0
          %1368 = vperm.xlu0 %1367, %v1366
          %v1369 = vpop.permute.xlu0 %1368
          %vm1370 = vcmp.eq.s32.totalorder %v1369, %v410
          %vm1371 = vcmp.eq.s32.totalorder %v1369, %v411
          %v1372 = vsel %vm1370, 1.0, 0.0
          %v1373 = vsel %vm1371, 1.0, 0.0
          %v1374 = vrot.slane %v1372, 4
          %v1375 = vmax.f32 %v1372, %v1374
          %v1376 = vrot.slane %v1375, 2
          %v1377 = vmax.f32 %v1375, %v1376
          %v1378 = vrot.slane %v1377, 1
          %v1379 = vmax.f32 %v1377, %v1378
          %v1380 = vrot.slane %v1373, 4
          %v1381 = vmax.f32 %v1373, %v1380
          %v1382 = vrot.slane %v1381, 2
          %v1383 = vmax.f32 %v1381, %v1382
          %v1384 = vrot.slane %v1383, 1
          %v1385 = vmax.f32 %v1383, %v1384
          %vm1386 = vcmp.gt.f32.partialorder %v1379, 0.0
          %vm1387 = vcmp.gt.f32.partialorder %v1385, 0.0
          %vm1388 = vmor %vm1363, %vm1386
          %vm1389 = vmor %vm1364, %vm1387
          %v1390 = vadd.f32 %v1216, %v419
          %v1391 = vcvt.f32.s32.to.zero.pseudo %v1390
          %1392 = vset.pattern.permute.xlu0 0
          %1393 = vperm.xlu0 %1392, %v1391
          %v1394 = vpop.permute.xlu0 %1393
          %vm1395 = vcmp.eq.s32.totalorder %v1394, %v410
          %vm1396 = vcmp.eq.s32.totalorder %v1394, %v411
          %v1397 = vsel %vm1395, 1.0, 0.0
          %v1398 = vsel %vm1396, 1.0, 0.0
          %v1399 = vrot.slane %v1397, 4
          %v1400 = vmax.f32 %v1397, %v1399
          %v1401 = vrot.slane %v1400, 2
          %v1402 = vmax.f32 %v1400, %v1401
          %v1403 = vrot.slane %v1402, 1
          %v1404 = vmax.f32 %v1402, %v1403
          %v1405 = vrot.slane %v1398, 4
          %v1406 = vmax.f32 %v1398, %v1405
          %v1407 = vrot.slane %v1406, 2
          %v1408 = vmax.f32 %v1406, %v1407
          %v1409 = vrot.slane %v1408, 1
          %v1410 = vmax.f32 %v1408, %v1409
          %vm1411 = vcmp.gt.f32.partialorder %v1404, 0.0
          %vm1412 = vcmp.gt.f32.partialorder %v1410, 0.0
          %vm1413 = vmor %vm1388, %vm1411
          %vm1414 = vmor %vm1389, %vm1412
          %v1415 = vadd.f32 %v1216, %v420
          %v1416 = vcvt.f32.s32.to.zero.pseudo %v1415
          %1417 = vset.pattern.permute.xlu0 0
          %1418 = vperm.xlu0 %1417, %v1416
          %v1419 = vpop.permute.xlu0 %1418
          %vm1420 = vcmp.eq.s32.totalorder %v1419, %v410
          %vm1421 = vcmp.eq.s32.totalorder %v1419, %v411
          %v1422 = vsel %vm1420, 1.0, 0.0
          %v1423 = vsel %vm1421, 1.0, 0.0
          %v1424 = vrot.slane %v1422, 4
          %v1425 = vmax.f32 %v1422, %v1424
          %v1426 = vrot.slane %v1425, 2
          %v1427 = vmax.f32 %v1425, %v1426
          %v1428 = vrot.slane %v1427, 1
          %v1429 = vmax.f32 %v1427, %v1428
          %v1430 = vrot.slane %v1423, 4
          %v1431 = vmax.f32 %v1423, %v1430
          %v1432 = vrot.slane %v1431, 2
          %v1433 = vmax.f32 %v1431, %v1432
          %v1434 = vrot.slane %v1433, 1
          %v1435 = vmax.f32 %v1433, %v1434
          %vm1436 = vcmp.gt.f32.partialorder %v1429, 0.0
          %vm1437 = vcmp.gt.f32.partialorder %v1435, 0.0
          %vm1438 = vmor %vm1413, %vm1436
          %vm1439 = vmor %vm1414, %vm1437
          %v1440 = vadd.f32 %v1216, %v421
          %v1441 = vcvt.f32.s32.to.zero.pseudo %v1440
          %1442 = vset.pattern.permute.xlu0 0
          %1443 = vperm.xlu0 %1442, %v1441
          %v1444 = vpop.permute.xlu0 %1443
          %vm1445 = vcmp.eq.s32.totalorder %v1444, %v410
          %vm1446 = vcmp.eq.s32.totalorder %v1444, %v411
          %v1447 = vsel %vm1445, 1.0, 0.0
          %v1448 = vsel %vm1446, 1.0, 0.0
          %v1449 = vrot.slane %v1447, 4
          %v1450 = vmax.f32 %v1447, %v1449
          %v1451 = vrot.slane %v1450, 2
          %v1452 = vmax.f32 %v1450, %v1451
          %v1453 = vrot.slane %v1452, 1
          %v1454 = vmax.f32 %v1452, %v1453
          %v1455 = vrot.slane %v1448, 4
          %v1456 = vmax.f32 %v1448, %v1455
          %v1457 = vrot.slane %v1456, 2
          %v1458 = vmax.f32 %v1456, %v1457
          %v1459 = vrot.slane %v1458, 1
          %v1460 = vmax.f32 %v1458, %v1459
          %vm1461 = vcmp.gt.f32.partialorder %v1454, 0.0
          %vm1462 = vcmp.gt.f32.partialorder %v1460, 0.0
          %vm1463 = vmor %vm1438, %vm1461
          %vm1464 = vmor %vm1439, %vm1462
          %v1465 = vadd.f32 %v1216, %v422
          %v1466 = vcvt.f32.s32.to.zero.pseudo %v1465
          %1467 = vset.pattern.permute.xlu0 0
          %1468 = vperm.xlu0 %1467, %v1466
          %v1469 = vpop.permute.xlu0 %1468
          %vm1470 = vcmp.eq.s32.totalorder %v1469, %v410
          %vm1471 = vcmp.eq.s32.totalorder %v1469, %v411
          %v1472 = vsel %vm1470, 1.0, 0.0
          %v1473 = vsel %vm1471, 1.0, 0.0
          %v1474 = vrot.slane %v1472, 4
          %v1475 = vmax.f32 %v1472, %v1474
          %v1476 = vrot.slane %v1475, 2
          %v1477 = vmax.f32 %v1475, %v1476
          %v1478 = vrot.slane %v1477, 1
          %v1479 = vmax.f32 %v1477, %v1478
          %v1480 = vrot.slane %v1473, 4
          %v1481 = vmax.f32 %v1473, %v1480
          %v1482 = vrot.slane %v1481, 2
          %v1483 = vmax.f32 %v1481, %v1482
          %v1484 = vrot.slane %v1483, 1
          %v1485 = vmax.f32 %v1483, %v1484
          %vm1486 = vcmp.gt.f32.partialorder %v1479, 0.0
          %vm1487 = vcmp.gt.f32.partialorder %v1485, 0.0
          %vm1488 = vmor %vm1463, %vm1486
          %vm1489 = vmor %vm1464, %vm1487
          %v1490 = vadd.f32 %v1216, %v423
          %v1491 = vcvt.f32.s32.to.zero.pseudo %v1490
          %1492 = vset.pattern.permute.xlu0 0
          %1493 = vperm.xlu0 %1492, %v1491
          %v1494 = vpop.permute.xlu0 %1493
          %vm1495 = vcmp.eq.s32.totalorder %v1494, %v410
          %vm1496 = vcmp.eq.s32.totalorder %v1494, %v411
          %v1497 = vsel %vm1495, 1.0, 0.0
          %v1498 = vsel %vm1496, 1.0, 0.0
          %v1499 = vrot.slane %v1497, 4
          %v1500 = vmax.f32 %v1497, %v1499
          %v1501 = vrot.slane %v1500, 2
          %v1502 = vmax.f32 %v1500, %v1501
          %v1503 = vrot.slane %v1502, 1
          %v1504 = vmax.f32 %v1502, %v1503
          %v1505 = vrot.slane %v1498, 4
          %v1506 = vmax.f32 %v1498, %v1505
          %v1507 = vrot.slane %v1506, 2
          %v1508 = vmax.f32 %v1506, %v1507
          %v1509 = vrot.slane %v1508, 1
          %v1510 = vmax.f32 %v1508, %v1509
          %vm1511 = vcmp.gt.f32.partialorder %v1504, 0.0
          %vm1512 = vcmp.gt.f32.partialorder %v1510, 0.0
          %vm1513 = vmor %vm1488, %vm1511
          %vm1514 = vmor %vm1489, %vm1512
          %v1515 = vadd.f32 %v1216, %v424
          %v1516 = vcvt.f32.s32.to.zero.pseudo %v1515
          %1517 = vset.pattern.permute.xlu0 0
          %1518 = vperm.xlu0 %1517, %v1516
          %v1519 = vpop.permute.xlu0 %1518
          %vm1520 = vcmp.eq.s32.totalorder %v1519, %v410
          %vm1521 = vcmp.eq.s32.totalorder %v1519, %v411
          %v1522 = vsel %vm1520, 1.0, 0.0
          %v1523 = vsel %vm1521, 1.0, 0.0
          %v1524 = vrot.slane %v1522, 4
          %v1525 = vmax.f32 %v1522, %v1524
          %v1526 = vrot.slane %v1525, 2
          %v1527 = vmax.f32 %v1525, %v1526
          %v1528 = vrot.slane %v1527, 1
          %v1529 = vmax.f32 %v1527, %v1528
          %v1530 = vrot.slane %v1523, 4
          %v1531 = vmax.f32 %v1523, %v1530
          %v1532 = vrot.slane %v1531, 2
          %v1533 = vmax.f32 %v1531, %v1532
          %v1534 = vrot.slane %v1533, 1
          %v1535 = vmax.f32 %v1533, %v1534
          %vm1536 = vcmp.gt.f32.partialorder %v1529, 0.0
          %vm1537 = vcmp.gt.f32.partialorder %v1535, 0.0
          %vm1538 = vmor %vm1513, %vm1536
          %vm1539 = vmor %vm1514, %vm1537
          %v1540 = vadd.f32 %v1216, %v425
          %v1541 = vcvt.f32.s32.to.zero.pseudo %v1540
          %1542 = vset.pattern.permute.xlu0 0
          %1543 = vperm.xlu0 %1542, %v1541
          %v1544 = vpop.permute.xlu0 %1543
          %vm1545 = vcmp.eq.s32.totalorder %v1544, %v410
          %vm1546 = vcmp.eq.s32.totalorder %v1544, %v411
          %v1547 = vsel %vm1545, 1.0, 0.0
          %v1548 = vsel %vm1546, 1.0, 0.0
          %v1549 = vrot.slane %v1547, 4
          %v1550 = vmax.f32 %v1547, %v1549
          %v1551 = vrot.slane %v1550, 2
          %v1552 = vmax.f32 %v1550, %v1551
          %v1553 = vrot.slane %v1552, 1
          %v1554 = vmax.f32 %v1552, %v1553
          %v1555 = vrot.slane %v1548, 4
          %v1556 = vmax.f32 %v1548, %v1555
          %v1557 = vrot.slane %v1556, 2
          %v1558 = vmax.f32 %v1556, %v1557
          %v1559 = vrot.slane %v1558, 1
          %v1560 = vmax.f32 %v1558, %v1559
          %vm1561 = vcmp.gt.f32.partialorder %v1554, 0.0
          %vm1562 = vcmp.gt.f32.partialorder %v1560, 0.0
          %vm1563 = vmor %vm1538, %vm1561
          %vm1564 = vmor %vm1539, %vm1562
          %v1565 = vadd.f32 %v1216, %v426
          %v1566 = vcvt.f32.s32.to.zero.pseudo %v1565
          %1567 = vset.pattern.permute.xlu0 0
          %1568 = vperm.xlu0 %1567, %v1566
          %v1569 = vpop.permute.xlu0 %1568
          %vm1570 = vcmp.eq.s32.totalorder %v1569, %v410
          %vm1571 = vcmp.eq.s32.totalorder %v1569, %v411
          %v1572 = vsel %vm1570, 1.0, 0.0
          %v1573 = vsel %vm1571, 1.0, 0.0
          %v1574 = vrot.slane %v1572, 4
          %v1575 = vmax.f32 %v1572, %v1574
          %v1576 = vrot.slane %v1575, 2
          %v1577 = vmax.f32 %v1575, %v1576
          %v1578 = vrot.slane %v1577, 1
          %v1579 = vmax.f32 %v1577, %v1578
          %v1580 = vrot.slane %v1573, 4
          %v1581 = vmax.f32 %v1573, %v1580
          %v1582 = vrot.slane %v1581, 2
          %v1583 = vmax.f32 %v1581, %v1582
          %v1584 = vrot.slane %v1583, 1
          %v1585 = vmax.f32 %v1583, %v1584
          %vm1586 = vcmp.gt.f32.partialorder %v1579, 0.0
          %vm1587 = vcmp.gt.f32.partialorder %v1585, 0.0
          %vm1588 = vmor %vm1563, %vm1586
          %vm1589 = vmor %vm1564, %vm1587
          %v1590 = vld [vmem:[%s319] sm:$0x3]
          %v1592 = vperm.slane %v1590, 0
          %v1593 = vperm.slane %v1590, 1
          %v1596 = vsel %vm1588, 1.0, %v1592
          %v1597 = vsel %vm1589, 1.0, %v1593
          %v1600 = vrot.slane %v1597, 7
          %v1601 = vsel %vm397, %v1596, %v1600
          %1603 = vst.msk [vmem:[%s319] sm:$0x3] %vm403, %v1601
        $region56: #{tpu_custom_call.1} parent=43 // pred_fallthru
          _
        %p1604 = scmp.gt.s32.totalorder %s343, 3
        // Predicated region
        $region57: #{tpu_custom_call.1} parent=43 // pred_check
          %p1605 = pneg %p1604
        $region58: #{tpu_custom_call.1} parent=43 // pred_check_branch
          %1607 = sbr.rel (%p1605) target = $region60
        $region59: #{tpu_custom_call.1} parent=43 // pred_region
          %v1608 = vperm.slane %v427, 3
          %v1609 = vadd.f32 %v1608, %v412
          %v1610 = vcvt.f32.s32.to.zero.pseudo %v1609
          %1611 = vset.pattern.permute.xlu0 0
          %1612 = vperm.xlu0 %1611, %v1610
          %v1613 = vpop.permute.xlu0 %1612
          %vm1614 = vcmp.eq.s32.totalorder %v1613, %v410
          %vm1615 = vcmp.eq.s32.totalorder %v1613, %v411
          %v1616 = vsel %vm1614, 1.0, 0.0
          %v1617 = vsel %vm1615, 1.0, 0.0
          %v1618 = vrot.slane %v1616, 4
          %v1619 = vmax.f32 %v1616, %v1618
          %v1620 = vrot.slane %v1619, 2
          %v1621 = vmax.f32 %v1619, %v1620
          %v1622 = vrot.slane %v1621, 1
          %v1623 = vmax.f32 %v1621, %v1622
          %v1624 = vrot.slane %v1617, 4
          %v1625 = vmax.f32 %v1617, %v1624
          %v1626 = vrot.slane %v1625, 2
          %v1627 = vmax.f32 %v1625, %v1626
          %v1628 = vrot.slane %v1627, 1
          %v1629 = vmax.f32 %v1627, %v1628
          %vm1630 = vcmp.gt.f32.partialorder %v1623, 0.0
          %vm1631 = vcmp.gt.f32.partialorder %v1629, 0.0
          %v1632 = vadd.f32 %v1608, %v413
          %v1633 = vcvt.f32.s32.to.zero.pseudo %v1632
          %1634 = vset.pattern.permute.xlu0 0
          %1635 = vperm.xlu0 %1634, %v1633
          %v1636 = vpop.permute.xlu0 %1635
          %vm1637 = vcmp.eq.s32.totalorder %v1636, %v410
          %vm1638 = vcmp.eq.s32.totalorder %v1636, %v411
          %v1639 = vsel %vm1637, 1.0, 0.0
          %v1640 = vsel %vm1638, 1.0, 0.0
          %v1641 = vrot.slane %v1639, 4
          %v1642 = vmax.f32 %v1639, %v1641
          %v1643 = vrot.slane %v1642, 2
          %v1644 = vmax.f32 %v1642, %v1643
          %v1645 = vrot.slane %v1644, 1
          %v1646 = vmax.f32 %v1644, %v1645
          %v1647 = vrot.slane %v1640, 4
          %v1648 = vmax.f32 %v1640, %v1647
          %v1649 = vrot.slane %v1648, 2
          %v1650 = vmax.f32 %v1648, %v1649
          %v1651 = vrot.slane %v1650, 1
          %v1652 = vmax.f32 %v1650, %v1651
          %vm1653 = vcmp.gt.f32.partialorder %v1646, 0.0
          %vm1654 = vcmp.gt.f32.partialorder %v1652, 0.0
          %vm1655 = vmor %vm1630, %vm1653
          %vm1656 = vmor %vm1631, %vm1654
          %v1657 = vadd.f32 %v1608, %v414
          %v1658 = vcvt.f32.s32.to.zero.pseudo %v1657
          %1659 = vset.pattern.permute.xlu0 0
          %1660 = vperm.xlu0 %1659, %v1658
          %v1661 = vpop.permute.xlu0 %1660
          %vm1662 = vcmp.eq.s32.totalorder %v1661, %v410
          %vm1663 = vcmp.eq.s32.totalorder %v1661, %v411
          %v1664 = vsel %vm1662, 1.0, 0.0
          %v1665 = vsel %vm1663, 1.0, 0.0
          %v1666 = vrot.slane %v1664, 4
          %v1667 = vmax.f32 %v1664, %v1666
          %v1668 = vrot.slane %v1667, 2
          %v1669 = vmax.f32 %v1667, %v1668
          %v1670 = vrot.slane %v1669, 1
          %v1671 = vmax.f32 %v1669, %v1670
          %v1672 = vrot.slane %v1665, 4
          %v1673 = vmax.f32 %v1665, %v1672
          %v1674 = vrot.slane %v1673, 2
          %v1675 = vmax.f32 %v1673, %v1674
          %v1676 = vrot.slane %v1675, 1
          %v1677 = vmax.f32 %v1675, %v1676
          %vm1678 = vcmp.gt.f32.partialorder %v1671, 0.0
          %vm1679 = vcmp.gt.f32.partialorder %v1677, 0.0
          %vm1680 = vmor %vm1655, %vm1678
          %vm1681 = vmor %vm1656, %vm1679
          %v1682 = vadd.f32 %v1608, %v415
          %v1683 = vcvt.f32.s32.to.zero.pseudo %v1682
          %1684 = vset.pattern.permute.xlu0 0
          %1685 = vperm.xlu0 %1684, %v1683
          %v1686 = vpop.permute.xlu0 %1685
          %vm1687 = vcmp.eq.s32.totalorder %v1686, %v410
          %vm1688 = vcmp.eq.s32.totalorder %v1686, %v411
          %v1689 = vsel %vm1687, 1.0, 0.0
          %v1690 = vsel %vm1688, 1.0, 0.0
          %v1691 = vrot.slane %v1689, 4
          %v1692 = vmax.f32 %v1689, %v1691
          %v1693 = vrot.slane %v1692, 2
          %v1694 = vmax.f32 %v1692, %v1693
          %v1695 = vrot.slane %v1694, 1
          %v1696 = vmax.f32 %v1694, %v1695
          %v1697 = vrot.slane %v1690, 4
          %v1698 = vmax.f32 %v1690, %v1697
          %v1699 = vrot.slane %v1698, 2
          %v1700 = vmax.f32 %v1698, %v1699
          %v1701 = vrot.slane %v1700, 1
          %v1702 = vmax.f32 %v1700, %v1701
          %vm1703 = vcmp.gt.f32.partialorder %v1696, 0.0
          %vm1704 = vcmp.gt.f32.partialorder %v1702, 0.0
          %vm1705 = vmor %vm1680, %vm1703
          %vm1706 = vmor %vm1681, %vm1704
          %v1707 = vadd.f32 %v1608, %v416
          %v1708 = vcvt.f32.s32.to.zero.pseudo %v1707
          %1709 = vset.pattern.permute.xlu0 0
          %1710 = vperm.xlu0 %1709, %v1708
          %v1711 = vpop.permute.xlu0 %1710
          %vm1712 = vcmp.eq.s32.totalorder %v1711, %v410
          %vm1713 = vcmp.eq.s32.totalorder %v1711, %v411
          %v1714 = vsel %vm1712, 1.0, 0.0
          %v1715 = vsel %vm1713, 1.0, 0.0
          %v1716 = vrot.slane %v1714, 4
          %v1717 = vmax.f32 %v1714, %v1716
          %v1718 = vrot.slane %v1717, 2
          %v1719 = vmax.f32 %v1717, %v1718
          %v1720 = vrot.slane %v1719, 1
          %v1721 = vmax.f32 %v1719, %v1720
          %v1722 = vrot.slane %v1715, 4
          %v1723 = vmax.f32 %v1715, %v1722
          %v1724 = vrot.slane %v1723, 2
          %v1725 = vmax.f32 %v1723, %v1724
          %v1726 = vrot.slane %v1725, 1
          %v1727 = vmax.f32 %v1725, %v1726
          %vm1728 = vcmp.gt.f32.partialorder %v1721, 0.0
          %vm1729 = vcmp.gt.f32.partialorder %v1727, 0.0
          %vm1730 = vmor %vm1705, %vm1728
          %vm1731 = vmor %vm1706, %vm1729
          %v1732 = vadd.f32 %v1608, %v417
          %v1733 = vcvt.f32.s32.to.zero.pseudo %v1732
          %1734 = vset.pattern.permute.xlu0 0
          %1735 = vperm.xlu0 %1734, %v1733
          %v1736 = vpop.permute.xlu0 %1735
          %vm1737 = vcmp.eq.s32.totalorder %v1736, %v410
          %vm1738 = vcmp.eq.s32.totalorder %v1736, %v411
          %v1739 = vsel %vm1737, 1.0, 0.0
          %v1740 = vsel %vm1738, 1.0, 0.0
          %v1741 = vrot.slane %v1739, 4
          %v1742 = vmax.f32 %v1739, %v1741
          %v1743 = vrot.slane %v1742, 2
          %v1744 = vmax.f32 %v1742, %v1743
          %v1745 = vrot.slane %v1744, 1
          %v1746 = vmax.f32 %v1744, %v1745
          %v1747 = vrot.slane %v1740, 4
          %v1748 = vmax.f32 %v1740, %v1747
          %v1749 = vrot.slane %v1748, 2
          %v1750 = vmax.f32 %v1748, %v1749
          %v1751 = vrot.slane %v1750, 1
          %v1752 = vmax.f32 %v1750, %v1751
          %vm1753 = vcmp.gt.f32.partialorder %v1746, 0.0
          %vm1754 = vcmp.gt.f32.partialorder %v1752, 0.0
          %vm1755 = vmor %vm1730, %vm1753
          %vm1756 = vmor %vm1731, %vm1754
          %v1757 = vadd.f32 %v1608, %v418
          %v1758 = vcvt.f32.s32.to.zero.pseudo %v1757
          %1759 = vset.pattern.permute.xlu0 0
          %1760 = vperm.xlu0 %1759, %v1758
          %v1761 = vpop.permute.xlu0 %1760
          %vm1762 = vcmp.eq.s32.totalorder %v1761, %v410
          %vm1763 = vcmp.eq.s32.totalorder %v1761, %v411
          %v1764 = vsel %vm1762, 1.0, 0.0
          %v1765 = vsel %vm1763, 1.0, 0.0
          %v1766 = vrot.slane %v1764, 4
          %v1767 = vmax.f32 %v1764, %v1766
          %v1768 = vrot.slane %v1767, 2
          %v1769 = vmax.f32 %v1767, %v1768
          %v1770 = vrot.slane %v1769, 1
          %v1771 = vmax.f32 %v1769, %v1770
          %v1772 = vrot.slane %v1765, 4
          %v1773 = vmax.f32 %v1765, %v1772
          %v1774 = vrot.slane %v1773, 2
          %v1775 = vmax.f32 %v1773, %v1774
          %v1776 = vrot.slane %v1775, 1
          %v1777 = vmax.f32 %v1775, %v1776
          %vm1778 = vcmp.gt.f32.partialorder %v1771, 0.0
          %vm1779 = vcmp.gt.f32.partialorder %v1777, 0.0
          %vm1780 = vmor %vm1755, %vm1778
          %vm1781 = vmor %vm1756, %vm1779
          %v1782 = vadd.f32 %v1608, %v419
          %v1783 = vcvt.f32.s32.to.zero.pseudo %v1782
          %1784 = vset.pattern.permute.xlu0 0
          %1785 = vperm.xlu0 %1784, %v1783
          %v1786 = vpop.permute.xlu0 %1785
          %vm1787 = vcmp.eq.s32.totalorder %v1786, %v410
          %vm1788 = vcmp.eq.s32.totalorder %v1786, %v411
          %v1789 = vsel %vm1787, 1.0, 0.0
          %v1790 = vsel %vm1788, 1.0, 0.0
          %v1791 = vrot.slane %v1789, 4
          %v1792 = vmax.f32 %v1789, %v1791
          %v1793 = vrot.slane %v1792, 2
          %v1794 = vmax.f32 %v1792, %v1793
          %v1795 = vrot.slane %v1794, 1
          %v1796 = vmax.f32 %v1794, %v1795
          %v1797 = vrot.slane %v1790, 4
          %v1798 = vmax.f32 %v1790, %v1797
          %v1799 = vrot.slane %v1798, 2
          %v1800 = vmax.f32 %v1798, %v1799
          %v1801 = vrot.slane %v1800, 1
          %v1802 = vmax.f32 %v1800, %v1801
          %vm1803 = vcmp.gt.f32.partialorder %v1796, 0.0
          %vm1804 = vcmp.gt.f32.partialorder %v1802, 0.0
          %vm1805 = vmor %vm1780, %vm1803
          %vm1806 = vmor %vm1781, %vm1804
          %v1807 = vadd.f32 %v1608, %v420
          %v1808 = vcvt.f32.s32.to.zero.pseudo %v1807
          %1809 = vset.pattern.permute.xlu0 0
          %1810 = vperm.xlu0 %1809, %v1808
          %v1811 = vpop.permute.xlu0 %1810
          %vm1812 = vcmp.eq.s32.totalorder %v1811, %v410
          %vm1813 = vcmp.eq.s32.totalorder %v1811, %v411
          %v1814 = vsel %vm1812, 1.0, 0.0
          %v1815 = vsel %vm1813, 1.0, 0.0
          %v1816 = vrot.slane %v1814, 4
          %v1817 = vmax.f32 %v1814, %v1816
          %v1818 = vrot.slane %v1817, 2
          %v1819 = vmax.f32 %v1817, %v1818
          %v1820 = vrot.slane %v1819, 1
          %v1821 = vmax.f32 %v1819, %v1820
          %v1822 = vrot.slane %v1815, 4
          %v1823 = vmax.f32 %v1815, %v1822
          %v1824 = vrot.slane %v1823, 2
          %v1825 = vmax.f32 %v1823, %v1824
          %v1826 = vrot.slane %v1825, 1
          %v1827 = vmax.f32 %v1825, %v1826
          %vm1828 = vcmp.gt.f32.partialorder %v1821, 0.0
          %vm1829 = vcmp.gt.f32.partialorder %v1827, 0.0
          %vm1830 = vmor %vm1805, %vm1828
          %vm1831 = vmor %vm1806, %vm1829
          %v1832 = vadd.f32 %v1608, %v421
          %v1833 = vcvt.f32.s32.to.zero.pseudo %v1832
          %1834 = vset.pattern.permute.xlu0 0
          %1835 = vperm.xlu0 %1834, %v1833
          %v1836 = vpop.permute.xlu0 %1835
          %vm1837 = vcmp.eq.s32.totalorder %v1836, %v410
          %vm1838 = vcmp.eq.s32.totalorder %v1836, %v411
          %v1839 = vsel %vm1837, 1.0, 0.0
          %v1840 = vsel %vm1838, 1.0, 0.0
          %v1841 = vrot.slane %v1839, 4
          %v1842 = vmax.f32 %v1839, %v1841
          %v1843 = vrot.slane %v1842, 2
          %v1844 = vmax.f32 %v1842, %v1843
          %v1845 = vrot.slane %v1844, 1
          %v1846 = vmax.f32 %v1844, %v1845
          %v1847 = vrot.slane %v1840, 4
          %v1848 = vmax.f32 %v1840, %v1847
          %v1849 = vrot.slane %v1848, 2
          %v1850 = vmax.f32 %v1848, %v1849
          %v1851 = vrot.slane %v1850, 1
          %v1852 = vmax.f32 %v1850, %v1851
          %vm1853 = vcmp.gt.f32.partialorder %v1846, 0.0
          %vm1854 = vcmp.gt.f32.partialorder %v1852, 0.0
          %vm1855 = vmor %vm1830, %vm1853
          %vm1856 = vmor %vm1831, %vm1854
          %v1857 = vadd.f32 %v1608, %v422
          %v1858 = vcvt.f32.s32.to.zero.pseudo %v1857
          %1859 = vset.pattern.permute.xlu0 0
          %1860 = vperm.xlu0 %1859, %v1858
          %v1861 = vpop.permute.xlu0 %1860
          %vm1862 = vcmp.eq.s32.totalorder %v1861, %v410
          %vm1863 = vcmp.eq.s32.totalorder %v1861, %v411
          %v1864 = vsel %vm1862, 1.0, 0.0
          %v1865 = vsel %vm1863, 1.0, 0.0
          %v1866 = vrot.slane %v1864, 4
          %v1867 = vmax.f32 %v1864, %v1866
          %v1868 = vrot.slane %v1867, 2
          %v1869 = vmax.f32 %v1867, %v1868
          %v1870 = vrot.slane %v1869, 1
          %v1871 = vmax.f32 %v1869, %v1870
          %v1872 = vrot.slane %v1865, 4
          %v1873 = vmax.f32 %v1865, %v1872
          %v1874 = vrot.slane %v1873, 2
          %v1875 = vmax.f32 %v1873, %v1874
          %v1876 = vrot.slane %v1875, 1
          %v1877 = vmax.f32 %v1875, %v1876
          %vm1878 = vcmp.gt.f32.partialorder %v1871, 0.0
          %vm1879 = vcmp.gt.f32.partialorder %v1877, 0.0
          %vm1880 = vmor %vm1855, %vm1878
          %vm1881 = vmor %vm1856, %vm1879
          %v1882 = vadd.f32 %v1608, %v423
          %v1883 = vcvt.f32.s32.to.zero.pseudo %v1882
          %1884 = vset.pattern.permute.xlu0 0
          %1885 = vperm.xlu0 %1884, %v1883
          %v1886 = vpop.permute.xlu0 %1885
          %vm1887 = vcmp.eq.s32.totalorder %v1886, %v410
          %vm1888 = vcmp.eq.s32.totalorder %v1886, %v411
          %v1889 = vsel %vm1887, 1.0, 0.0
          %v1890 = vsel %vm1888, 1.0, 0.0
          %v1891 = vrot.slane %v1889, 4
          %v1892 = vmax.f32 %v1889, %v1891
          %v1893 = vrot.slane %v1892, 2
          %v1894 = vmax.f32 %v1892, %v1893
          %v1895 = vrot.slane %v1894, 1
          %v1896 = vmax.f32 %v1894, %v1895
          %v1897 = vrot.slane %v1890, 4
          %v1898 = vmax.f32 %v1890, %v1897
          %v1899 = vrot.slane %v1898, 2
          %v1900 = vmax.f32 %v1898, %v1899
          %v1901 = vrot.slane %v1900, 1
          %v1902 = vmax.f32 %v1900, %v1901
          %vm1903 = vcmp.gt.f32.partialorder %v1896, 0.0
          %vm1904 = vcmp.gt.f32.partialorder %v1902, 0.0
          %vm1905 = vmor %vm1880, %vm1903
          %vm1906 = vmor %vm1881, %vm1904
          %v1907 = vadd.f32 %v1608, %v424
          %v1908 = vcvt.f32.s32.to.zero.pseudo %v1907
          %1909 = vset.pattern.permute.xlu0 0
          %1910 = vperm.xlu0 %1909, %v1908
          %v1911 = vpop.permute.xlu0 %1910
          %vm1912 = vcmp.eq.s32.totalorder %v1911, %v410
          %vm1913 = vcmp.eq.s32.totalorder %v1911, %v411
          %v1914 = vsel %vm1912, 1.0, 0.0
          %v1915 = vsel %vm1913, 1.0, 0.0
          %v1916 = vrot.slane %v1914, 4
          %v1917 = vmax.f32 %v1914, %v1916
          %v1918 = vrot.slane %v1917, 2
          %v1919 = vmax.f32 %v1917, %v1918
          %v1920 = vrot.slane %v1919, 1
          %v1921 = vmax.f32 %v1919, %v1920
          %v1922 = vrot.slane %v1915, 4
          %v1923 = vmax.f32 %v1915, %v1922
          %v1924 = vrot.slane %v1923, 2
          %v1925 = vmax.f32 %v1923, %v1924
          %v1926 = vrot.slane %v1925, 1
          %v1927 = vmax.f32 %v1925, %v1926
          %vm1928 = vcmp.gt.f32.partialorder %v1921, 0.0
          %vm1929 = vcmp.gt.f32.partialorder %v1927, 0.0
          %vm1930 = vmor %vm1905, %vm1928
          %vm1931 = vmor %vm1906, %vm1929
          %v1932 = vadd.f32 %v1608, %v425
          %v1933 = vcvt.f32.s32.to.zero.pseudo %v1932
          %1934 = vset.pattern.permute.xlu0 0
          %1935 = vperm.xlu0 %1934, %v1933
          %v1936 = vpop.permute.xlu0 %1935
          %vm1937 = vcmp.eq.s32.totalorder %v1936, %v410
          %vm1938 = vcmp.eq.s32.totalorder %v1936, %v411
          %v1939 = vsel %vm1937, 1.0, 0.0
          %v1940 = vsel %vm1938, 1.0, 0.0
          %v1941 = vrot.slane %v1939, 4
          %v1942 = vmax.f32 %v1939, %v1941
          %v1943 = vrot.slane %v1942, 2
          %v1944 = vmax.f32 %v1942, %v1943
          %v1945 = vrot.slane %v1944, 1
          %v1946 = vmax.f32 %v1944, %v1945
          %v1947 = vrot.slane %v1940, 4
          %v1948 = vmax.f32 %v1940, %v1947
          %v1949 = vrot.slane %v1948, 2
          %v1950 = vmax.f32 %v1948, %v1949
          %v1951 = vrot.slane %v1950, 1
          %v1952 = vmax.f32 %v1950, %v1951
          %vm1953 = vcmp.gt.f32.partialorder %v1946, 0.0
          %vm1954 = vcmp.gt.f32.partialorder %v1952, 0.0
          %vm1955 = vmor %vm1930, %vm1953
          %vm1956 = vmor %vm1931, %vm1954
          %v1957 = vadd.f32 %v1608, %v426
          %v1958 = vcvt.f32.s32.to.zero.pseudo %v1957
          %1959 = vset.pattern.permute.xlu0 0
          %1960 = vperm.xlu0 %1959, %v1958
          %v1961 = vpop.permute.xlu0 %1960
          %vm1962 = vcmp.eq.s32.totalorder %v1961, %v410
          %vm1963 = vcmp.eq.s32.totalorder %v1961, %v411
          %v1964 = vsel %vm1962, 1.0, 0.0
          %v1965 = vsel %vm1963, 1.0, 0.0
          %v1966 = vrot.slane %v1964, 4
          %v1967 = vmax.f32 %v1964, %v1966
          %v1968 = vrot.slane %v1967, 2
          %v1969 = vmax.f32 %v1967, %v1968
          %v1970 = vrot.slane %v1969, 1
          %v1971 = vmax.f32 %v1969, %v1970
          %v1972 = vrot.slane %v1965, 4
          %v1973 = vmax.f32 %v1965, %v1972
          %v1974 = vrot.slane %v1973, 2
          %v1975 = vmax.f32 %v1973, %v1974
          %v1976 = vrot.slane %v1975, 1
          %v1977 = vmax.f32 %v1975, %v1976
          %vm1978 = vcmp.gt.f32.partialorder %v1971, 0.0
          %vm1979 = vcmp.gt.f32.partialorder %v1977, 0.0
          %vm1980 = vmor %vm1955, %vm1978
          %vm1981 = vmor %vm1956, %vm1979
          %v1982 = vld [vmem:[%s319] sm:$0x3]
          %v1984 = vperm.slane %v1982, 0
          %v1985 = vperm.slane %v1982, 1
          %v1988 = vsel %vm1980, 1.0, %v1984
          %v1989 = vsel %vm1981, 1.0, %v1985
          %v1992 = vrot.slane %v1989, 7
          %v1993 = vsel %vm397, %v1988, %v1992
          %1995 = vst.msk [vmem:[%s319] sm:$0x3] %vm403, %v1993
        $region60: #{tpu_custom_call.1} parent=43 // pred_fallthru
          _
        %p1996 = scmp.gt.s32.totalorder %s343, 4
        // Predicated region
        $region61: #{tpu_custom_call.1} parent=43 // pred_check
          %p1997 = pneg %p1996
        $region62: #{tpu_custom_call.1} parent=43 // pred_check_branch
          %1999 = sbr.rel (%p1997) target = $region64
        $region63: #{tpu_custom_call.1} parent=43 // pred_region
          %v2000 = vperm.slane %v427, 4
          %v2001 = vadd.f32 %v2000, %v412
          %v2002 = vcvt.f32.s32.to.zero.pseudo %v2001
          %2003 = vset.pattern.permute.xlu0 0
          %2004 = vperm.xlu0 %2003, %v2002
          %v2005 = vpop.permute.xlu0 %2004
          %vm2006 = vcmp.eq.s32.totalorder %v2005, %v410
          %vm2007 = vcmp.eq.s32.totalorder %v2005, %v411
          %v2008 = vsel %vm2006, 1.0, 0.0
          %v2009 = vsel %vm2007, 1.0, 0.0
          %v2010 = vrot.slane %v2008, 4
          %v2011 = vmax.f32 %v2008, %v2010
          %v2012 = vrot.slane %v2011, 2
          %v2013 = vmax.f32 %v2011, %v2012
          %v2014 = vrot.slane %v2013, 1
          %v2015 = vmax.f32 %v2013, %v2014
          %v2016 = vrot.slane %v2009, 4
          %v2017 = vmax.f32 %v2009, %v2016
          %v2018 = vrot.slane %v2017, 2
          %v2019 = vmax.f32 %v2017, %v2018
          %v2020 = vrot.slane %v2019, 1
          %v2021 = vmax.f32 %v2019, %v2020
          %vm2022 = vcmp.gt.f32.partialorder %v2015, 0.0
          %vm2023 = vcmp.gt.f32.partialorder %v2021, 0.0
          %v2024 = vadd.f32 %v2000, %v413
          %v2025 = vcvt.f32.s32.to.zero.pseudo %v2024
          %2026 = vset.pattern.permute.xlu0 0
          %2027 = vperm.xlu0 %2026, %v2025
          %v2028 = vpop.permute.xlu0 %2027
          %vm2029 = vcmp.eq.s32.totalorder %v2028, %v410
          %vm2030 = vcmp.eq.s32.totalorder %v2028, %v411
          %v2031 = vsel %vm2029, 1.0, 0.0
          %v2032 = vsel %vm2030, 1.0, 0.0
          %v2033 = vrot.slane %v2031, 4
          %v2034 = vmax.f32 %v2031, %v2033
          %v2035 = vrot.slane %v2034, 2
          %v2036 = vmax.f32 %v2034, %v2035
          %v2037 = vrot.slane %v2036, 1
          %v2038 = vmax.f32 %v2036, %v2037
          %v2039 = vrot.slane %v2032, 4
          %v2040 = vmax.f32 %v2032, %v2039
          %v2041 = vrot.slane %v2040, 2
          %v2042 = vmax.f32 %v2040, %v2041
          %v2043 = vrot.slane %v2042, 1
          %v2044 = vmax.f32 %v2042, %v2043
          %vm2045 = vcmp.gt.f32.partialorder %v2038, 0.0
          %vm2046 = vcmp.gt.f32.partialorder %v2044, 0.0
          %vm2047 = vmor %vm2022, %vm2045
          %vm2048 = vmor %vm2023, %vm2046
          %v2049 = vadd.f32 %v2000, %v414
          %v2050 = vcvt.f32.s32.to.zero.pseudo %v2049
          %2051 = vset.pattern.permute.xlu0 0
          %2052 = vperm.xlu0 %2051, %v2050
          %v2053 = vpop.permute.xlu0 %2052
          %vm2054 = vcmp.eq.s32.totalorder %v2053, %v410
          %vm2055 = vcmp.eq.s32.totalorder %v2053, %v411
          %v2056 = vsel %vm2054, 1.0, 0.0
          %v2057 = vsel %vm2055, 1.0, 0.0
          %v2058 = vrot.slane %v2056, 4
          %v2059 = vmax.f32 %v2056, %v2058
          %v2060 = vrot.slane %v2059, 2
          %v2061 = vmax.f32 %v2059, %v2060
          %v2062 = vrot.slane %v2061, 1
          %v2063 = vmax.f32 %v2061, %v2062
          %v2064 = vrot.slane %v2057, 4
          %v2065 = vmax.f32 %v2057, %v2064
          %v2066 = vrot.slane %v2065, 2
          %v2067 = vmax.f32 %v2065, %v2066
          %v2068 = vrot.slane %v2067, 1
          %v2069 = vmax.f32 %v2067, %v2068
          %vm2070 = vcmp.gt.f32.partialorder %v2063, 0.0
          %vm2071 = vcmp.gt.f32.partialorder %v2069, 0.0
          %vm2072 = vmor %vm2047, %vm2070
          %vm2073 = vmor %vm2048, %vm2071
          %v2074 = vadd.f32 %v2000, %v415
          %v2075 = vcvt.f32.s32.to.zero.pseudo %v2074
          %2076 = vset.pattern.permute.xlu0 0
          %2077 = vperm.xlu0 %2076, %v2075
          %v2078 = vpop.permute.xlu0 %2077
          %vm2079 = vcmp.eq.s32.totalorder %v2078, %v410
          %vm2080 = vcmp.eq.s32.totalorder %v2078, %v411
          %v2081 = vsel %vm2079, 1.0, 0.0
          %v2082 = vsel %vm2080, 1.0, 0.0
          %v2083 = vrot.slane %v2081, 4
          %v2084 = vmax.f32 %v2081, %v2083
          %v2085 = vrot.slane %v2084, 2
          %v2086 = vmax.f32 %v2084, %v2085
          %v2087 = vrot.slane %v2086, 1
          %v2088 = vmax.f32 %v2086, %v2087
          %v2089 = vrot.slane %v2082, 4
          %v2090 = vmax.f32 %v2082, %v2089
          %v2091 = vrot.slane %v2090, 2
          %v2092 = vmax.f32 %v2090, %v2091
          %v2093 = vrot.slane %v2092, 1
          %v2094 = vmax.f32 %v2092, %v2093
          %vm2095 = vcmp.gt.f32.partialorder %v2088, 0.0
          %vm2096 = vcmp.gt.f32.partialorder %v2094, 0.0
          %vm2097 = vmor %vm2072, %vm2095
          %vm2098 = vmor %vm2073, %vm2096
          %v2099 = vadd.f32 %v2000, %v416
          %v2100 = vcvt.f32.s32.to.zero.pseudo %v2099
          %2101 = vset.pattern.permute.xlu0 0
          %2102 = vperm.xlu0 %2101, %v2100
          %v2103 = vpop.permute.xlu0 %2102
          %vm2104 = vcmp.eq.s32.totalorder %v2103, %v410
          %vm2105 = vcmp.eq.s32.totalorder %v2103, %v411
          %v2106 = vsel %vm2104, 1.0, 0.0
          %v2107 = vsel %vm2105, 1.0, 0.0
          %v2108 = vrot.slane %v2106, 4
          %v2109 = vmax.f32 %v2106, %v2108
          %v2110 = vrot.slane %v2109, 2
          %v2111 = vmax.f32 %v2109, %v2110
          %v2112 = vrot.slane %v2111, 1
          %v2113 = vmax.f32 %v2111, %v2112
          %v2114 = vrot.slane %v2107, 4
          %v2115 = vmax.f32 %v2107, %v2114
          %v2116 = vrot.slane %v2115, 2
          %v2117 = vmax.f32 %v2115, %v2116
          %v2118 = vrot.slane %v2117, 1
          %v2119 = vmax.f32 %v2117, %v2118
          %vm2120 = vcmp.gt.f32.partialorder %v2113, 0.0
          %vm2121 = vcmp.gt.f32.partialorder %v2119, 0.0
          %vm2122 = vmor %vm2097, %vm2120
          %vm2123 = vmor %vm2098, %vm2121
          %v2124 = vadd.f32 %v2000, %v417
          %v2125 = vcvt.f32.s32.to.zero.pseudo %v2124
          %2126 = vset.pattern.permute.xlu0 0
          %2127 = vperm.xlu0 %2126, %v2125
          %v2128 = vpop.permute.xlu0 %2127
          %vm2129 = vcmp.eq.s32.totalorder %v2128, %v410
          %vm2130 = vcmp.eq.s32.totalorder %v2128, %v411
          %v2131 = vsel %vm2129, 1.0, 0.0
          %v2132 = vsel %vm2130, 1.0, 0.0
          %v2133 = vrot.slane %v2131, 4
          %v2134 = vmax.f32 %v2131, %v2133
          %v2135 = vrot.slane %v2134, 2
          %v2136 = vmax.f32 %v2134, %v2135
          %v2137 = vrot.slane %v2136, 1
          %v2138 = vmax.f32 %v2136, %v2137
          %v2139 = vrot.slane %v2132, 4
          %v2140 = vmax.f32 %v2132, %v2139
          %v2141 = vrot.slane %v2140, 2
          %v2142 = vmax.f32 %v2140, %v2141
          %v2143 = vrot.slane %v2142, 1
          %v2144 = vmax.f32 %v2142, %v2143
          %vm2145 = vcmp.gt.f32.partialorder %v2138, 0.0
          %vm2146 = vcmp.gt.f32.partialorder %v2144, 0.0
          %vm2147 = vmor %vm2122, %vm2145
          %vm2148 = vmor %vm2123, %vm2146
          %v2149 = vadd.f32 %v2000, %v418
          %v2150 = vcvt.f32.s32.to.zero.pseudo %v2149
          %2151 = vset.pattern.permute.xlu0 0
          %2152 = vperm.xlu0 %2151, %v2150
          %v2153 = vpop.permute.xlu0 %2152
          %vm2154 = vcmp.eq.s32.totalorder %v2153, %v410
          %vm2155 = vcmp.eq.s32.totalorder %v2153, %v411
          %v2156 = vsel %vm2154, 1.0, 0.0
          %v2157 = vsel %vm2155, 1.0, 0.0
          %v2158 = vrot.slane %v2156, 4
          %v2159 = vmax.f32 %v2156, %v2158
          %v2160 = vrot.slane %v2159, 2
          %v2161 = vmax.f32 %v2159, %v2160
          %v2162 = vrot.slane %v2161, 1
          %v2163 = vmax.f32 %v2161, %v2162
          %v2164 = vrot.slane %v2157, 4
          %v2165 = vmax.f32 %v2157, %v2164
          %v2166 = vrot.slane %v2165, 2
          %v2167 = vmax.f32 %v2165, %v2166
          %v2168 = vrot.slane %v2167, 1
          %v2169 = vmax.f32 %v2167, %v2168
          %vm2170 = vcmp.gt.f32.partialorder %v2163, 0.0
          %vm2171 = vcmp.gt.f32.partialorder %v2169, 0.0
          %vm2172 = vmor %vm2147, %vm2170
          %vm2173 = vmor %vm2148, %vm2171
          %v2174 = vadd.f32 %v2000, %v419
          %v2175 = vcvt.f32.s32.to.zero.pseudo %v2174
          %2176 = vset.pattern.permute.xlu0 0
          %2177 = vperm.xlu0 %2176, %v2175
          %v2178 = vpop.permute.xlu0 %2177
          %vm2179 = vcmp.eq.s32.totalorder %v2178, %v410
          %vm2180 = vcmp.eq.s32.totalorder %v2178, %v411
          %v2181 = vsel %vm2179, 1.0, 0.0
          %v2182 = vsel %vm2180, 1.0, 0.0
          %v2183 = vrot.slane %v2181, 4
          %v2184 = vmax.f32 %v2181, %v2183
          %v2185 = vrot.slane %v2184, 2
          %v2186 = vmax.f32 %v2184, %v2185
          %v2187 = vrot.slane %v2186, 1
          %v2188 = vmax.f32 %v2186, %v2187
          %v2189 = vrot.slane %v2182, 4
          %v2190 = vmax.f32 %v2182, %v2189
          %v2191 = vrot.slane %v2190, 2
          %v2192 = vmax.f32 %v2190, %v2191
          %v2193 = vrot.slane %v2192, 1
          %v2194 = vmax.f32 %v2192, %v2193
          %vm2195 = vcmp.gt.f32.partialorder %v2188, 0.0
          %vm2196 = vcmp.gt.f32.partialorder %v2194, 0.0
          %vm2197 = vmor %vm2172, %vm2195
          %vm2198 = vmor %vm2173, %vm2196
          %v2199 = vadd.f32 %v2000, %v420
          %v2200 = vcvt.f32.s32.to.zero.pseudo %v2199
          %2201 = vset.pattern.permute.xlu0 0
          %2202 = vperm.xlu0 %2201, %v2200
          %v2203 = vpop.permute.xlu0 %2202
          %vm2204 = vcmp.eq.s32.totalorder %v2203, %v410
          %vm2205 = vcmp.eq.s32.totalorder %v2203, %v411
          %v2206 = vsel %vm2204, 1.0, 0.0
          %v2207 = vsel %vm2205, 1.0, 0.0
          %v2208 = vrot.slane %v2206, 4
          %v2209 = vmax.f32 %v2206, %v2208
          %v2210 = vrot.slane %v2209, 2
          %v2211 = vmax.f32 %v2209, %v2210
          %v2212 = vrot.slane %v2211, 1
          %v2213 = vmax.f32 %v2211, %v2212
          %v2214 = vrot.slane %v2207, 4
          %v2215 = vmax.f32 %v2207, %v2214
          %v2216 = vrot.slane %v2215, 2
          %v2217 = vmax.f32 %v2215, %v2216
          %v2218 = vrot.slane %v2217, 1
          %v2219 = vmax.f32 %v2217, %v2218
          %vm2220 = vcmp.gt.f32.partialorder %v2213, 0.0
          %vm2221 = vcmp.gt.f32.partialorder %v2219, 0.0
          %vm2222 = vmor %vm2197, %vm2220
          %vm2223 = vmor %vm2198, %vm2221
          %v2224 = vadd.f32 %v2000, %v421
          %v2225 = vcvt.f32.s32.to.zero.pseudo %v2224
          %2226 = vset.pattern.permute.xlu0 0
          %2227 = vperm.xlu0 %2226, %v2225
          %v2228 = vpop.permute.xlu0 %2227
          %vm2229 = vcmp.eq.s32.totalorder %v2228, %v410
          %vm2230 = vcmp.eq.s32.totalorder %v2228, %v411
          %v2231 = vsel %vm2229, 1.0, 0.0
          %v2232 = vsel %vm2230, 1.0, 0.0
          %v2233 = vrot.slane %v2231, 4
          %v2234 = vmax.f32 %v2231, %v2233
          %v2235 = vrot.slane %v2234, 2
          %v2236 = vmax.f32 %v2234, %v2235
          %v2237 = vrot.slane %v2236, 1
          %v2238 = vmax.f32 %v2236, %v2237
          %v2239 = vrot.slane %v2232, 4
          %v2240 = vmax.f32 %v2232, %v2239
          %v2241 = vrot.slane %v2240, 2
          %v2242 = vmax.f32 %v2240, %v2241
          %v2243 = vrot.slane %v2242, 1
          %v2244 = vmax.f32 %v2242, %v2243
          %vm2245 = vcmp.gt.f32.partialorder %v2238, 0.0
          %vm2246 = vcmp.gt.f32.partialorder %v2244, 0.0
          %vm2247 = vmor %vm2222, %vm2245
          %vm2248 = vmor %vm2223, %vm2246
          %v2249 = vadd.f32 %v2000, %v422
          %v2250 = vcvt.f32.s32.to.zero.pseudo %v2249
          %2251 = vset.pattern.permute.xlu0 0
          %2252 = vperm.xlu0 %2251, %v2250
          %v2253 = vpop.permute.xlu0 %2252
          %vm2254 = vcmp.eq.s32.totalorder %v2253, %v410
          %vm2255 = vcmp.eq.s32.totalorder %v2253, %v411
          %v2256 = vsel %vm2254, 1.0, 0.0
          %v2257 = vsel %vm2255, 1.0, 0.0
          %v2258 = vrot.slane %v2256, 4
          %v2259 = vmax.f32 %v2256, %v2258
          %v2260 = vrot.slane %v2259, 2
          %v2261 = vmax.f32 %v2259, %v2260
          %v2262 = vrot.slane %v2261, 1
          %v2263 = vmax.f32 %v2261, %v2262
          %v2264 = vrot.slane %v2257, 4
          %v2265 = vmax.f32 %v2257, %v2264
          %v2266 = vrot.slane %v2265, 2
          %v2267 = vmax.f32 %v2265, %v2266
          %v2268 = vrot.slane %v2267, 1
          %v2269 = vmax.f32 %v2267, %v2268
          %vm2270 = vcmp.gt.f32.partialorder %v2263, 0.0
          %vm2271 = vcmp.gt.f32.partialorder %v2269, 0.0
          %vm2272 = vmor %vm2247, %vm2270
          %vm2273 = vmor %vm2248, %vm2271
          %v2274 = vadd.f32 %v2000, %v423
          %v2275 = vcvt.f32.s32.to.zero.pseudo %v2274
          %2276 = vset.pattern.permute.xlu0 0
          %2277 = vperm.xlu0 %2276, %v2275
          %v2278 = vpop.permute.xlu0 %2277
          %vm2279 = vcmp.eq.s32.totalorder %v2278, %v410
          %vm2280 = vcmp.eq.s32.totalorder %v2278, %v411
          %v2281 = vsel %vm2279, 1.0, 0.0
          %v2282 = vsel %vm2280, 1.0, 0.0
          %v2283 = vrot.slane %v2281, 4
          %v2284 = vmax.f32 %v2281, %v2283
          %v2285 = vrot.slane %v2284, 2
          %v2286 = vmax.f32 %v2284, %v2285
          %v2287 = vrot.slane %v2286, 1
          %v2288 = vmax.f32 %v2286, %v2287
          %v2289 = vrot.slane %v2282, 4
          %v2290 = vmax.f32 %v2282, %v2289
          %v2291 = vrot.slane %v2290, 2
          %v2292 = vmax.f32 %v2290, %v2291
          %v2293 = vrot.slane %v2292, 1
          %v2294 = vmax.f32 %v2292, %v2293
          %vm2295 = vcmp.gt.f32.partialorder %v2288, 0.0
          %vm2296 = vcmp.gt.f32.partialorder %v2294, 0.0
          %vm2297 = vmor %vm2272, %vm2295
          %vm2298 = vmor %vm2273, %vm2296
          %v2299 = vadd.f32 %v2000, %v424
          %v2300 = vcvt.f32.s32.to.zero.pseudo %v2299
          %2301 = vset.pattern.permute.xlu0 0
          %2302 = vperm.xlu0 %2301, %v2300
          %v2303 = vpop.permute.xlu0 %2302
          %vm2304 = vcmp.eq.s32.totalorder %v2303, %v410
          %vm2305 = vcmp.eq.s32.totalorder %v2303, %v411
          %v2306 = vsel %vm2304, 1.0, 0.0
          %v2307 = vsel %vm2305, 1.0, 0.0
          %v2308 = vrot.slane %v2306, 4
          %v2309 = vmax.f32 %v2306, %v2308
          %v2310 = vrot.slane %v2309, 2
          %v2311 = vmax.f32 %v2309, %v2310
          %v2312 = vrot.slane %v2311, 1
          %v2313 = vmax.f32 %v2311, %v2312
          %v2314 = vrot.slane %v2307, 4
          %v2315 = vmax.f32 %v2307, %v2314
          %v2316 = vrot.slane %v2315, 2
          %v2317 = vmax.f32 %v2315, %v2316
          %v2318 = vrot.slane %v2317, 1
          %v2319 = vmax.f32 %v2317, %v2318
          %vm2320 = vcmp.gt.f32.partialorder %v2313, 0.0
          %vm2321 = vcmp.gt.f32.partialorder %v2319, 0.0
          %vm2322 = vmor %vm2297, %vm2320
          %vm2323 = vmor %vm2298, %vm2321
          %v2324 = vadd.f32 %v2000, %v425
          %v2325 = vcvt.f32.s32.to.zero.pseudo %v2324
          %2326 = vset.pattern.permute.xlu0 0
          %2327 = vperm.xlu0 %2326, %v2325
          %v2328 = vpop.permute.xlu0 %2327
          %vm2329 = vcmp.eq.s32.totalorder %v2328, %v410
          %vm2330 = vcmp.eq.s32.totalorder %v2328, %v411
          %v2331 = vsel %vm2329, 1.0, 0.0
          %v2332 = vsel %vm2330, 1.0, 0.0
          %v2333 = vrot.slane %v2331, 4
          %v2334 = vmax.f32 %v2331, %v2333
          %v2335 = vrot.slane %v2334, 2
          %v2336 = vmax.f32 %v2334, %v2335
          %v2337 = vrot.slane %v2336, 1
          %v2338 = vmax.f32 %v2336, %v2337
          %v2339 = vrot.slane %v2332, 4
          %v2340 = vmax.f32 %v2332, %v2339
          %v2341 = vrot.slane %v2340, 2
          %v2342 = vmax.f32 %v2340, %v2341
          %v2343 = vrot.slane %v2342, 1
          %v2344 = vmax.f32 %v2342, %v2343
          %vm2345 = vcmp.gt.f32.partialorder %v2338, 0.0
          %vm2346 = vcmp.gt.f32.partialorder %v2344, 0.0
          %vm2347 = vmor %vm2322, %vm2345
          %vm2348 = vmor %vm2323, %vm2346
          %v2349 = vadd.f32 %v2000, %v426
          %v2350 = vcvt.f32.s32.to.zero.pseudo %v2349
          %2351 = vset.pattern.permute.xlu0 0
          %2352 = vperm.xlu0 %2351, %v2350
          %v2353 = vpop.permute.xlu0 %2352
          %vm2354 = vcmp.eq.s32.totalorder %v2353, %v410
          %vm2355 = vcmp.eq.s32.totalorder %v2353, %v411
          %v2356 = vsel %vm2354, 1.0, 0.0
          %v2357 = vsel %vm2355, 1.0, 0.0
          %v2358 = vrot.slane %v2356, 4
          %v2359 = vmax.f32 %v2356, %v2358
          %v2360 = vrot.slane %v2359, 2
          %v2361 = vmax.f32 %v2359, %v2360
          %v2362 = vrot.slane %v2361, 1
          %v2363 = vmax.f32 %v2361, %v2362
          %v2364 = vrot.slane %v2357, 4
          %v2365 = vmax.f32 %v2357, %v2364
          %v2366 = vrot.slane %v2365, 2
          %v2367 = vmax.f32 %v2365, %v2366
          %v2368 = vrot.slane %v2367, 1
          %v2369 = vmax.f32 %v2367, %v2368
          %vm2370 = vcmp.gt.f32.partialorder %v2363, 0.0
          %vm2371 = vcmp.gt.f32.partialorder %v2369, 0.0
          %vm2372 = vmor %vm2347, %vm2370
          %vm2373 = vmor %vm2348, %vm2371
          %v2374 = vld [vmem:[%s319] sm:$0x3]
          %v2376 = vperm.slane %v2374, 0
          %v2377 = vperm.slane %v2374, 1
          %v2380 = vsel %vm2372, 1.0, %v2376
          %v2381 = vsel %vm2373, 1.0, %v2377
          %v2384 = vrot.slane %v2381, 7
          %v2385 = vsel %vm397, %v2380, %v2384
          %2387 = vst.msk [vmem:[%s319] sm:$0x3] %vm403, %v2385
        $region64: #{tpu_custom_call.1} parent=43 // pred_fallthru
          _
        %p2388 = scmp.gt.s32.totalorder %s343, 5
        // Predicated region
        $region65: #{tpu_custom_call.1} parent=43 // pred_check
          %p2389 = pneg %p2388
        $region66: #{tpu_custom_call.1} parent=43 // pred_check_branch
          %2391 = sbr.rel (%p2389) target = $region68
        $region67: #{tpu_custom_call.1} parent=43 // pred_region
          %v2392 = vperm.slane %v427, 5
          %v2393 = vadd.f32 %v2392, %v412
          %v2394 = vcvt.f32.s32.to.zero.pseudo %v2393
          %2395 = vset.pattern.permute.xlu0 0
          %2396 = vperm.xlu0 %2395, %v2394
          %v2397 = vpop.permute.xlu0 %2396
          %vm2398 = vcmp.eq.s32.totalorder %v2397, %v410
          %vm2399 = vcmp.eq.s32.totalorder %v2397, %v411
          %v2400 = vsel %vm2398, 1.0, 0.0
          %v2401 = vsel %vm2399, 1.0, 0.0
          %v2402 = vrot.slane %v2400, 4
          %v2403 = vmax.f32 %v2400, %v2402
          %v2404 = vrot.slane %v2403, 2
          %v2405 = vmax.f32 %v2403, %v2404
          %v2406 = vrot.slane %v2405, 1
          %v2407 = vmax.f32 %v2405, %v2406
          %v2408 = vrot.slane %v2401, 4
          %v2409 = vmax.f32 %v2401, %v2408
          %v2410 = vrot.slane %v2409, 2
          %v2411 = vmax.f32 %v2409, %v2410
          %v2412 = vrot.slane %v2411, 1
          %v2413 = vmax.f32 %v2411, %v2412
          %vm2414 = vcmp.gt.f32.partialorder %v2407, 0.0
          %vm2415 = vcmp.gt.f32.partialorder %v2413, 0.0
          %v2416 = vadd.f32 %v2392, %v413
          %v2417 = vcvt.f32.s32.to.zero.pseudo %v2416
          %2418 = vset.pattern.permute.xlu0 0
          %2419 = vperm.xlu0 %2418, %v2417
          %v2420 = vpop.permute.xlu0 %2419
          %vm2421 = vcmp.eq.s32.totalorder %v2420, %v410
          %vm2422 = vcmp.eq.s32.totalorder %v2420, %v411
          %v2423 = vsel %vm2421, 1.0, 0.0
          %v2424 = vsel %vm2422, 1.0, 0.0
          %v2425 = vrot.slane %v2423, 4
          %v2426 = vmax.f32 %v2423, %v2425
          %v2427 = vrot.slane %v2426, 2
          %v2428 = vmax.f32 %v2426, %v2427
          %v2429 = vrot.slane %v2428, 1
          %v2430 = vmax.f32 %v2428, %v2429
          %v2431 = vrot.slane %v2424, 4
          %v2432 = vmax.f32 %v2424, %v2431
          %v2433 = vrot.slane %v2432, 2
          %v2434 = vmax.f32 %v2432, %v2433
          %v2435 = vrot.slane %v2434, 1
          %v2436 = vmax.f32 %v2434, %v2435
          %vm2437 = vcmp.gt.f32.partialorder %v2430, 0.0
          %vm2438 = vcmp.gt.f32.partialorder %v2436, 0.0
          %vm2439 = vmor %vm2414, %vm2437
          %vm2440 = vmor %vm2415, %vm2438
          %v2441 = vadd.f32 %v2392, %v414
          %v2442 = vcvt.f32.s32.to.zero.pseudo %v2441
          %2443 = vset.pattern.permute.xlu0 0
          %2444 = vperm.xlu0 %2443, %v2442
          %v2445 = vpop.permute.xlu0 %2444
          %vm2446 = vcmp.eq.s32.totalorder %v2445, %v410
          %vm2447 = vcmp.eq.s32.totalorder %v2445, %v411
          %v2448 = vsel %vm2446, 1.0, 0.0
          %v2449 = vsel %vm2447, 1.0, 0.0
          %v2450 = vrot.slane %v2448, 4
          %v2451 = vmax.f32 %v2448, %v2450
          %v2452 = vrot.slane %v2451, 2
          %v2453 = vmax.f32 %v2451, %v2452
          %v2454 = vrot.slane %v2453, 1
          %v2455 = vmax.f32 %v2453, %v2454
          %v2456 = vrot.slane %v2449, 4
          %v2457 = vmax.f32 %v2449, %v2456
          %v2458 = vrot.slane %v2457, 2
          %v2459 = vmax.f32 %v2457, %v2458
          %v2460 = vrot.slane %v2459, 1
          %v2461 = vmax.f32 %v2459, %v2460
          %vm2462 = vcmp.gt.f32.partialorder %v2455, 0.0
          %vm2463 = vcmp.gt.f32.partialorder %v2461, 0.0
          %vm2464 = vmor %vm2439, %vm2462
          %vm2465 = vmor %vm2440, %vm2463
          %v2466 = vadd.f32 %v2392, %v415
          %v2467 = vcvt.f32.s32.to.zero.pseudo %v2466
          %2468 = vset.pattern.permute.xlu0 0
          %2469 = vperm.xlu0 %2468, %v2467
          %v2470 = vpop.permute.xlu0 %2469
          %vm2471 = vcmp.eq.s32.totalorder %v2470, %v410
          %vm2472 = vcmp.eq.s32.totalorder %v2470, %v411
          %v2473 = vsel %vm2471, 1.0, 0.0
          %v2474 = vsel %vm2472, 1.0, 0.0
          %v2475 = vrot.slane %v2473, 4
          %v2476 = vmax.f32 %v2473, %v2475
          %v2477 = vrot.slane %v2476, 2
          %v2478 = vmax.f32 %v2476, %v2477
          %v2479 = vrot.slane %v2478, 1
          %v2480 = vmax.f32 %v2478, %v2479
          %v2481 = vrot.slane %v2474, 4
          %v2482 = vmax.f32 %v2474, %v2481
          %v2483 = vrot.slane %v2482, 2
          %v2484 = vmax.f32 %v2482, %v2483
          %v2485 = vrot.slane %v2484, 1
          %v2486 = vmax.f32 %v2484, %v2485
          %vm2487 = vcmp.gt.f32.partialorder %v2480, 0.0
          %vm2488 = vcmp.gt.f32.partialorder %v2486, 0.0
          %vm2489 = vmor %vm2464, %vm2487
          %vm2490 = vmor %vm2465, %vm2488
          %v2491 = vadd.f32 %v2392, %v416
          %v2492 = vcvt.f32.s32.to.zero.pseudo %v2491
          %2493 = vset.pattern.permute.xlu0 0
          %2494 = vperm.xlu0 %2493, %v2492
          %v2495 = vpop.permute.xlu0 %2494
          %vm2496 = vcmp.eq.s32.totalorder %v2495, %v410
          %vm2497 = vcmp.eq.s32.totalorder %v2495, %v411
          %v2498 = vsel %vm2496, 1.0, 0.0
          %v2499 = vsel %vm2497, 1.0, 0.0
          %v2500 = vrot.slane %v2498, 4
          %v2501 = vmax.f32 %v2498, %v2500
          %v2502 = vrot.slane %v2501, 2
          %v2503 = vmax.f32 %v2501, %v2502
          %v2504 = vrot.slane %v2503, 1
          %v2505 = vmax.f32 %v2503, %v2504
          %v2506 = vrot.slane %v2499, 4
          %v2507 = vmax.f32 %v2499, %v2506
          %v2508 = vrot.slane %v2507, 2
          %v2509 = vmax.f32 %v2507, %v2508
          %v2510 = vrot.slane %v2509, 1
          %v2511 = vmax.f32 %v2509, %v2510
          %vm2512 = vcmp.gt.f32.partialorder %v2505, 0.0
          %vm2513 = vcmp.gt.f32.partialorder %v2511, 0.0
          %vm2514 = vmor %vm2489, %vm2512
          %vm2515 = vmor %vm2490, %vm2513
          %v2516 = vadd.f32 %v2392, %v417
          %v2517 = vcvt.f32.s32.to.zero.pseudo %v2516
          %2518 = vset.pattern.permute.xlu0 0
          %2519 = vperm.xlu0 %2518, %v2517
          %v2520 = vpop.permute.xlu0 %2519
          %vm2521 = vcmp.eq.s32.totalorder %v2520, %v410
          %vm2522 = vcmp.eq.s32.totalorder %v2520, %v411
          %v2523 = vsel %vm2521, 1.0, 0.0
          %v2524 = vsel %vm2522, 1.0, 0.0
          %v2525 = vrot.slane %v2523, 4
          %v2526 = vmax.f32 %v2523, %v2525
          %v2527 = vrot.slane %v2526, 2
          %v2528 = vmax.f32 %v2526, %v2527
          %v2529 = vrot.slane %v2528, 1
          %v2530 = vmax.f32 %v2528, %v2529
          %v2531 = vrot.slane %v2524, 4
          %v2532 = vmax.f32 %v2524, %v2531
          %v2533 = vrot.slane %v2532, 2
          %v2534 = vmax.f32 %v2532, %v2533
          %v2535 = vrot.slane %v2534, 1
          %v2536 = vmax.f32 %v2534, %v2535
          %vm2537 = vcmp.gt.f32.partialorder %v2530, 0.0
          %vm2538 = vcmp.gt.f32.partialorder %v2536, 0.0
          %vm2539 = vmor %vm2514, %vm2537
          %vm2540 = vmor %vm2515, %vm2538
          %v2541 = vadd.f32 %v2392, %v418
          %v2542 = vcvt.f32.s32.to.zero.pseudo %v2541
          %2543 = vset.pattern.permute.xlu0 0
          %2544 = vperm.xlu0 %2543, %v2542
          %v2545 = vpop.permute.xlu0 %2544
          %vm2546 = vcmp.eq.s32.totalorder %v2545, %v410
          %vm2547 = vcmp.eq.s32.totalorder %v2545, %v411
          %v2548 = vsel %vm2546, 1.0, 0.0
          %v2549 = vsel %vm2547, 1.0, 0.0
          %v2550 = vrot.slane %v2548, 4
          %v2551 = vmax.f32 %v2548, %v2550
          %v2552 = vrot.slane %v2551, 2
          %v2553 = vmax.f32 %v2551, %v2552
          %v2554 = vrot.slane %v2553, 1
          %v2555 = vmax.f32 %v2553, %v2554
          %v2556 = vrot.slane %v2549, 4
          %v2557 = vmax.f32 %v2549, %v2556
          %v2558 = vrot.slane %v2557, 2
          %v2559 = vmax.f32 %v2557, %v2558
          %v2560 = vrot.slane %v2559, 1
          %v2561 = vmax.f32 %v2559, %v2560
          %vm2562 = vcmp.gt.f32.partialorder %v2555, 0.0
          %vm2563 = vcmp.gt.f32.partialorder %v2561, 0.0
          %vm2564 = vmor %vm2539, %vm2562
          %vm2565 = vmor %vm2540, %vm2563
          %v2566 = vadd.f32 %v2392, %v419
          %v2567 = vcvt.f32.s32.to.zero.pseudo %v2566
          %2568 = vset.pattern.permute.xlu0 0
          %2569 = vperm.xlu0 %2568, %v2567
          %v2570 = vpop.permute.xlu0 %2569
          %vm2571 = vcmp.eq.s32.totalorder %v2570, %v410
          %vm2572 = vcmp.eq.s32.totalorder %v2570, %v411
          %v2573 = vsel %vm2571, 1.0, 0.0
          %v2574 = vsel %vm2572, 1.0, 0.0
          %v2575 = vrot.slane %v2573, 4
          %v2576 = vmax.f32 %v2573, %v2575
          %v2577 = vrot.slane %v2576, 2
          %v2578 = vmax.f32 %v2576, %v2577
          %v2579 = vrot.slane %v2578, 1
          %v2580 = vmax.f32 %v2578, %v2579
          %v2581 = vrot.slane %v2574, 4
          %v2582 = vmax.f32 %v2574, %v2581
          %v2583 = vrot.slane %v2582, 2
          %v2584 = vmax.f32 %v2582, %v2583
          %v2585 = vrot.slane %v2584, 1
          %v2586 = vmax.f32 %v2584, %v2585
          %vm2587 = vcmp.gt.f32.partialorder %v2580, 0.0
          %vm2588 = vcmp.gt.f32.partialorder %v2586, 0.0
          %vm2589 = vmor %vm2564, %vm2587
          %vm2590 = vmor %vm2565, %vm2588
          %v2591 = vadd.f32 %v2392, %v420
          %v2592 = vcvt.f32.s32.to.zero.pseudo %v2591
          %2593 = vset.pattern.permute.xlu0 0
          %2594 = vperm.xlu0 %2593, %v2592
          %v2595 = vpop.permute.xlu0 %2594
          %vm2596 = vcmp.eq.s32.totalorder %v2595, %v410
          %vm2597 = vcmp.eq.s32.totalorder %v2595, %v411
          %v2598 = vsel %vm2596, 1.0, 0.0
          %v2599 = vsel %vm2597, 1.0, 0.0
          %v2600 = vrot.slane %v2598, 4
          %v2601 = vmax.f32 %v2598, %v2600
          %v2602 = vrot.slane %v2601, 2
          %v2603 = vmax.f32 %v2601, %v2602
          %v2604 = vrot.slane %v2603, 1
          %v2605 = vmax.f32 %v2603, %v2604
          %v2606 = vrot.slane %v2599, 4
          %v2607 = vmax.f32 %v2599, %v2606
          %v2608 = vrot.slane %v2607, 2
          %v2609 = vmax.f32 %v2607, %v2608
          %v2610 = vrot.slane %v2609, 1
          %v2611 = vmax.f32 %v2609, %v2610
          %vm2612 = vcmp.gt.f32.partialorder %v2605, 0.0
          %vm2613 = vcmp.gt.f32.partialorder %v2611, 0.0
          %vm2614 = vmor %vm2589, %vm2612
          %vm2615 = vmor %vm2590, %vm2613
          %v2616 = vadd.f32 %v2392, %v421
          %v2617 = vcvt.f32.s32.to.zero.pseudo %v2616
          %2618 = vset.pattern.permute.xlu0 0
          %2619 = vperm.xlu0 %2618, %v2617
          %v2620 = vpop.permute.xlu0 %2619
          %vm2621 = vcmp.eq.s32.totalorder %v2620, %v410
          %vm2622 = vcmp.eq.s32.totalorder %v2620, %v411
          %v2623 = vsel %vm2621, 1.0, 0.0
          %v2624 = vsel %vm2622, 1.0, 0.0
          %v2625 = vrot.slane %v2623, 4
          %v2626 = vmax.f32 %v2623, %v2625
          %v2627 = vrot.slane %v2626, 2
          %v2628 = vmax.f32 %v2626, %v2627
          %v2629 = vrot.slane %v2628, 1
          %v2630 = vmax.f32 %v2628, %v2629
          %v2631 = vrot.slane %v2624, 4
          %v2632 = vmax.f32 %v2624, %v2631
          %v2633 = vrot.slane %v2632, 2
          %v2634 = vmax.f32 %v2632, %v2633
          %v2635 = vrot.slane %v2634, 1
          %v2636 = vmax.f32 %v2634, %v2635
          %vm2637 = vcmp.gt.f32.partialorder %v2630, 0.0
          %vm2638 = vcmp.gt.f32.partialorder %v2636, 0.0
          %vm2639 = vmor %vm2614, %vm2637
          %vm2640 = vmor %vm2615, %vm2638
          %v2641 = vadd.f32 %v2392, %v422
          %v2642 = vcvt.f32.s32.to.zero.pseudo %v2641
          %2643 = vset.pattern.permute.xlu0 0
          %2644 = vperm.xlu0 %2643, %v2642
          %v2645 = vpop.permute.xlu0 %2644
          %vm2646 = vcmp.eq.s32.totalorder %v2645, %v410
          %vm2647 = vcmp.eq.s32.totalorder %v2645, %v411
          %v2648 = vsel %vm2646, 1.0, 0.0
          %v2649 = vsel %vm2647, 1.0, 0.0
          %v2650 = vrot.slane %v2648, 4
          %v2651 = vmax.f32 %v2648, %v2650
          %v2652 = vrot.slane %v2651, 2
          %v2653 = vmax.f32 %v2651, %v2652
          %v2654 = vrot.slane %v2653, 1
          %v2655 = vmax.f32 %v2653, %v2654
          %v2656 = vrot.slane %v2649, 4
          %v2657 = vmax.f32 %v2649, %v2656
          %v2658 = vrot.slane %v2657, 2
          %v2659 = vmax.f32 %v2657, %v2658
          %v2660 = vrot.slane %v2659, 1
          %v2661 = vmax.f32 %v2659, %v2660
          %vm2662 = vcmp.gt.f32.partialorder %v2655, 0.0
          %vm2663 = vcmp.gt.f32.partialorder %v2661, 0.0
          %vm2664 = vmor %vm2639, %vm2662
          %vm2665 = vmor %vm2640, %vm2663
          %v2666 = vadd.f32 %v2392, %v423
          %v2667 = vcvt.f32.s32.to.zero.pseudo %v2666
          %2668 = vset.pattern.permute.xlu0 0
          %2669 = vperm.xlu0 %2668, %v2667
          %v2670 = vpop.permute.xlu0 %2669
          %vm2671 = vcmp.eq.s32.totalorder %v2670, %v410
          %vm2672 = vcmp.eq.s32.totalorder %v2670, %v411
          %v2673 = vsel %vm2671, 1.0, 0.0
          %v2674 = vsel %vm2672, 1.0, 0.0
          %v2675 = vrot.slane %v2673, 4
          %v2676 = vmax.f32 %v2673, %v2675
          %v2677 = vrot.slane %v2676, 2
          %v2678 = vmax.f32 %v2676, %v2677
          %v2679 = vrot.slane %v2678, 1
          %v2680 = vmax.f32 %v2678, %v2679
          %v2681 = vrot.slane %v2674, 4
          %v2682 = vmax.f32 %v2674, %v2681
          %v2683 = vrot.slane %v2682, 2
          %v2684 = vmax.f32 %v2682, %v2683
          %v2685 = vrot.slane %v2684, 1
          %v2686 = vmax.f32 %v2684, %v2685
          %vm2687 = vcmp.gt.f32.partialorder %v2680, 0.0
          %vm2688 = vcmp.gt.f32.partialorder %v2686, 0.0
          %vm2689 = vmor %vm2664, %vm2687
          %vm2690 = vmor %vm2665, %vm2688
          %v2691 = vadd.f32 %v2392, %v424
          %v2692 = vcvt.f32.s32.to.zero.pseudo %v2691
          %2693 = vset.pattern.permute.xlu0 0
          %2694 = vperm.xlu0 %2693, %v2692
          %v2695 = vpop.permute.xlu0 %2694
          %vm2696 = vcmp.eq.s32.totalorder %v2695, %v410
          %vm2697 = vcmp.eq.s32.totalorder %v2695, %v411
          %v2698 = vsel %vm2696, 1.0, 0.0
          %v2699 = vsel %vm2697, 1.0, 0.0
          %v2700 = vrot.slane %v2698, 4
          %v2701 = vmax.f32 %v2698, %v2700
          %v2702 = vrot.slane %v2701, 2
          %v2703 = vmax.f32 %v2701, %v2702
          %v2704 = vrot.slane %v2703, 1
          %v2705 = vmax.f32 %v2703, %v2704
          %v2706 = vrot.slane %v2699, 4
          %v2707 = vmax.f32 %v2699, %v2706
          %v2708 = vrot.slane %v2707, 2
          %v2709 = vmax.f32 %v2707, %v2708
          %v2710 = vrot.slane %v2709, 1
          %v2711 = vmax.f32 %v2709, %v2710
          %vm2712 = vcmp.gt.f32.partialorder %v2705, 0.0
          %vm2713 = vcmp.gt.f32.partialorder %v2711, 0.0
          %vm2714 = vmor %vm2689, %vm2712
          %vm2715 = vmor %vm2690, %vm2713
          %v2716 = vadd.f32 %v2392, %v425
          %v2717 = vcvt.f32.s32.to.zero.pseudo %v2716
          %2718 = vset.pattern.permute.xlu0 0
          %2719 = vperm.xlu0 %2718, %v2717
          %v2720 = vpop.permute.xlu0 %2719
          %vm2721 = vcmp.eq.s32.totalorder %v2720, %v410
          %vm2722 = vcmp.eq.s32.totalorder %v2720, %v411
          %v2723 = vsel %vm2721, 1.0, 0.0
          %v2724 = vsel %vm2722, 1.0, 0.0
          %v2725 = vrot.slane %v2723, 4
          %v2726 = vmax.f32 %v2723, %v2725
          %v2727 = vrot.slane %v2726, 2
          %v2728 = vmax.f32 %v2726, %v2727
          %v2729 = vrot.slane %v2728, 1
          %v2730 = vmax.f32 %v2728, %v2729
          %v2731 = vrot.slane %v2724, 4
          %v2732 = vmax.f32 %v2724, %v2731
          %v2733 = vrot.slane %v2732, 2
          %v2734 = vmax.f32 %v2732, %v2733
          %v2735 = vrot.slane %v2734, 1
          %v2736 = vmax.f32 %v2734, %v2735
          %vm2737 = vcmp.gt.f32.partialorder %v2730, 0.0
          %vm2738 = vcmp.gt.f32.partialorder %v2736, 0.0
          %vm2739 = vmor %vm2714, %vm2737
          %vm2740 = vmor %vm2715, %vm2738
          %v2741 = vadd.f32 %v2392, %v426
          %v2742 = vcvt.f32.s32.to.zero.pseudo %v2741
          %2743 = vset.pattern.permute.xlu0 0
          %2744 = vperm.xlu0 %2743, %v2742
          %v2745 = vpop.permute.xlu0 %2744
          %vm2746 = vcmp.eq.s32.totalorder %v2745, %v410
          %vm2747 = vcmp.eq.s32.totalorder %v2745, %v411
          %v2748 = vsel %vm2746, 1.0, 0.0
          %v2749 = vsel %vm2747, 1.0, 0.0
          %v2750 = vrot.slane %v2748, 4
          %v2751 = vmax.f32 %v2748, %v2750
          %v2752 = vrot.slane %v2751, 2
          %v2753 = vmax.f32 %v2751, %v2752
          %v2754 = vrot.slane %v2753, 1
          %v2755 = vmax.f32 %v2753, %v2754
          %v2756 = vrot.slane %v2749, 4
          %v2757 = vmax.f32 %v2749, %v2756
          %v2758 = vrot.slane %v2757, 2
          %v2759 = vmax.f32 %v2757, %v2758
          %v2760 = vrot.slane %v2759, 1
          %v2761 = vmax.f32 %v2759, %v2760
          %vm2762 = vcmp.gt.f32.partialorder %v2755, 0.0
          %vm2763 = vcmp.gt.f32.partialorder %v2761, 0.0
          %vm2764 = vmor %vm2739, %vm2762
          %vm2765 = vmor %vm2740, %vm2763
          %v2766 = vld [vmem:[%s319] sm:$0x3]
          %v2768 = vperm.slane %v2766, 0
          %v2769 = vperm.slane %v2766, 1
          %v2772 = vsel %vm2764, 1.0, %v2768
          %v2773 = vsel %vm2765, 1.0, %v2769
          %v2776 = vrot.slane %v2773, 7
          %v2777 = vsel %vm397, %v2772, %v2776
          %2779 = vst.msk [vmem:[%s319] sm:$0x3] %vm403, %v2777
        $region68: #{tpu_custom_call.1} parent=43 // pred_fallthru
          _
        %p2780 = scmp.gt.s32.totalorder %s343, 6
        // Predicated region
        $region69: #{tpu_custom_call.1} parent=43 // pred_check
          %p2781 = pneg %p2780
        $region70: #{tpu_custom_call.1} parent=43 // pred_check_branch
          %2783 = sbr.rel (%p2781) target = $region72
        $region71: #{tpu_custom_call.1} parent=43 // pred_region
          %v2784 = vperm.slane %v427, 6
          %v2785 = vadd.f32 %v2784, %v412
          %v2786 = vcvt.f32.s32.to.zero.pseudo %v2785
          %2787 = vset.pattern.permute.xlu0 0
          %2788 = vperm.xlu0 %2787, %v2786
          %v2789 = vpop.permute.xlu0 %2788
          %vm2790 = vcmp.eq.s32.totalorder %v2789, %v410
          %vm2791 = vcmp.eq.s32.totalorder %v2789, %v411
          %v2792 = vsel %vm2790, 1.0, 0.0
          %v2793 = vsel %vm2791, 1.0, 0.0
          %v2794 = vrot.slane %v2792, 4
          %v2795 = vmax.f32 %v2792, %v2794
          %v2796 = vrot.slane %v2795, 2
          %v2797 = vmax.f32 %v2795, %v2796
          %v2798 = vrot.slane %v2797, 1
          %v2799 = vmax.f32 %v2797, %v2798
          %v2800 = vrot.slane %v2793, 4
          %v2801 = vmax.f32 %v2793, %v2800
          %v2802 = vrot.slane %v2801, 2
          %v2803 = vmax.f32 %v2801, %v2802
          %v2804 = vrot.slane %v2803, 1
          %v2805 = vmax.f32 %v2803, %v2804
          %vm2806 = vcmp.gt.f32.partialorder %v2799, 0.0
          %vm2807 = vcmp.gt.f32.partialorder %v2805, 0.0
          %v2808 = vadd.f32 %v2784, %v413
          %v2809 = vcvt.f32.s32.to.zero.pseudo %v2808
          %2810 = vset.pattern.permute.xlu0 0
          %2811 = vperm.xlu0 %2810, %v2809
          %v2812 = vpop.permute.xlu0 %2811
          %vm2813 = vcmp.eq.s32.totalorder %v2812, %v410
          %vm2814 = vcmp.eq.s32.totalorder %v2812, %v411
          %v2815 = vsel %vm2813, 1.0, 0.0
          %v2816 = vsel %vm2814, 1.0, 0.0
          %v2817 = vrot.slane %v2815, 4
          %v2818 = vmax.f32 %v2815, %v2817
          %v2819 = vrot.slane %v2818, 2
          %v2820 = vmax.f32 %v2818, %v2819
          %v2821 = vrot.slane %v2820, 1
          %v2822 = vmax.f32 %v2820, %v2821
          %v2823 = vrot.slane %v2816, 4
          %v2824 = vmax.f32 %v2816, %v2823
          %v2825 = vrot.slane %v2824, 2
          %v2826 = vmax.f32 %v2824, %v2825
          %v2827 = vrot.slane %v2826, 1
          %v2828 = vmax.f32 %v2826, %v2827
          %vm2829 = vcmp.gt.f32.partialorder %v2822, 0.0
          %vm2830 = vcmp.gt.f32.partialorder %v2828, 0.0
          %vm2831 = vmor %vm2806, %vm2829
          %vm2832 = vmor %vm2807, %vm2830
          %v2833 = vadd.f32 %v2784, %v414
          %v2834 = vcvt.f32.s32.to.zero.pseudo %v2833
          %2835 = vset.pattern.permute.xlu0 0
          %2836 = vperm.xlu0 %2835, %v2834
          %v2837 = vpop.permute.xlu0 %2836
          %vm2838 = vcmp.eq.s32.totalorder %v2837, %v410
          %vm2839 = vcmp.eq.s32.totalorder %v2837, %v411
          %v2840 = vsel %vm2838, 1.0, 0.0
          %v2841 = vsel %vm2839, 1.0, 0.0
          %v2842 = vrot.slane %v2840, 4
          %v2843 = vmax.f32 %v2840, %v2842
          %v2844 = vrot.slane %v2843, 2
          %v2845 = vmax.f32 %v2843, %v2844
          %v2846 = vrot.slane %v2845, 1
          %v2847 = vmax.f32 %v2845, %v2846
          %v2848 = vrot.slane %v2841, 4
          %v2849 = vmax.f32 %v2841, %v2848
          %v2850 = vrot.slane %v2849, 2
          %v2851 = vmax.f32 %v2849, %v2850
          %v2852 = vrot.slane %v2851, 1
          %v2853 = vmax.f32 %v2851, %v2852
          %vm2854 = vcmp.gt.f32.partialorder %v2847, 0.0
          %vm2855 = vcmp.gt.f32.partialorder %v2853, 0.0
          %vm2856 = vmor %vm2831, %vm2854
          %vm2857 = vmor %vm2832, %vm2855
          %v2858 = vadd.f32 %v2784, %v415
          %v2859 = vcvt.f32.s32.to.zero.pseudo %v2858
          %2860 = vset.pattern.permute.xlu0 0
          %2861 = vperm.xlu0 %2860, %v2859
          %v2862 = vpop.permute.xlu0 %2861
          %vm2863 = vcmp.eq.s32.totalorder %v2862, %v410
          %vm2864 = vcmp.eq.s32.totalorder %v2862, %v411
          %v2865 = vsel %vm2863, 1.0, 0.0
          %v2866 = vsel %vm2864, 1.0, 0.0
          %v2867 = vrot.slane %v2865, 4
          %v2868 = vmax.f32 %v2865, %v2867
          %v2869 = vrot.slane %v2868, 2
          %v2870 = vmax.f32 %v2868, %v2869
          %v2871 = vrot.slane %v2870, 1
          %v2872 = vmax.f32 %v2870, %v2871
          %v2873 = vrot.slane %v2866, 4
          %v2874 = vmax.f32 %v2866, %v2873
          %v2875 = vrot.slane %v2874, 2
          %v2876 = vmax.f32 %v2874, %v2875
          %v2877 = vrot.slane %v2876, 1
          %v2878 = vmax.f32 %v2876, %v2877
          %vm2879 = vcmp.gt.f32.partialorder %v2872, 0.0
          %vm2880 = vcmp.gt.f32.partialorder %v2878, 0.0
          %vm2881 = vmor %vm2856, %vm2879
          %vm2882 = vmor %vm2857, %vm2880
          %v2883 = vadd.f32 %v2784, %v416
          %v2884 = vcvt.f32.s32.to.zero.pseudo %v2883
          %2885 = vset.pattern.permute.xlu0 0
          %2886 = vperm.xlu0 %2885, %v2884
          %v2887 = vpop.permute.xlu0 %2886
          %vm2888 = vcmp.eq.s32.totalorder %v2887, %v410
          %vm2889 = vcmp.eq.s32.totalorder %v2887, %v411
          %v2890 = vsel %vm2888, 1.0, 0.0
          %v2891 = vsel %vm2889, 1.0, 0.0
          %v2892 = vrot.slane %v2890, 4
          %v2893 = vmax.f32 %v2890, %v2892
          %v2894 = vrot.slane %v2893, 2
          %v2895 = vmax.f32 %v2893, %v2894
          %v2896 = vrot.slane %v2895, 1
          %v2897 = vmax.f32 %v2895, %v2896
          %v2898 = vrot.slane %v2891, 4
          %v2899 = vmax.f32 %v2891, %v2898
          %v2900 = vrot.slane %v2899, 2
          %v2901 = vmax.f32 %v2899, %v2900
          %v2902 = vrot.slane %v2901, 1
          %v2903 = vmax.f32 %v2901, %v2902
          %vm2904 = vcmp.gt.f32.partialorder %v2897, 0.0
          %vm2905 = vcmp.gt.f32.partialorder %v2903, 0.0
          %vm2906 = vmor %vm2881, %vm2904
          %vm2907 = vmor %vm2882, %vm2905
          %v2908 = vadd.f32 %v2784, %v417
          %v2909 = vcvt.f32.s32.to.zero.pseudo %v2908
          %2910 = vset.pattern.permute.xlu0 0
          %2911 = vperm.xlu0 %2910, %v2909
          %v2912 = vpop.permute.xlu0 %2911
          %vm2913 = vcmp.eq.s32.totalorder %v2912, %v410
          %vm2914 = vcmp.eq.s32.totalorder %v2912, %v411
          %v2915 = vsel %vm2913, 1.0, 0.0
          %v2916 = vsel %vm2914, 1.0, 0.0
          %v2917 = vrot.slane %v2915, 4
          %v2918 = vmax.f32 %v2915, %v2917
          %v2919 = vrot.slane %v2918, 2
          %v2920 = vmax.f32 %v2918, %v2919
          %v2921 = vrot.slane %v2920, 1
          %v2922 = vmax.f32 %v2920, %v2921
          %v2923 = vrot.slane %v2916, 4
          %v2924 = vmax.f32 %v2916, %v2923
          %v2925 = vrot.slane %v2924, 2
          %v2926 = vmax.f32 %v2924, %v2925
          %v2927 = vrot.slane %v2926, 1
          %v2928 = vmax.f32 %v2926, %v2927
          %vm2929 = vcmp.gt.f32.partialorder %v2922, 0.0
          %vm2930 = vcmp.gt.f32.partialorder %v2928, 0.0
          %vm2931 = vmor %vm2906, %vm2929
          %vm2932 = vmor %vm2907, %vm2930
          %v2933 = vadd.f32 %v2784, %v418
          %v2934 = vcvt.f32.s32.to.zero.pseudo %v2933
          %2935 = vset.pattern.permute.xlu0 0
          %2936 = vperm.xlu0 %2935, %v2934
          %v2937 = vpop.permute.xlu0 %2936
          %vm2938 = vcmp.eq.s32.totalorder %v2937, %v410
          %vm2939 = vcmp.eq.s32.totalorder %v2937, %v411
          %v2940 = vsel %vm2938, 1.0, 0.0
          %v2941 = vsel %vm2939, 1.0, 0.0
          %v2942 = vrot.slane %v2940, 4
          %v2943 = vmax.f32 %v2940, %v2942
          %v2944 = vrot.slane %v2943, 2
          %v2945 = vmax.f32 %v2943, %v2944
          %v2946 = vrot.slane %v2945, 1
          %v2947 = vmax.f32 %v2945, %v2946
          %v2948 = vrot.slane %v2941, 4
          %v2949 = vmax.f32 %v2941, %v2948
          %v2950 = vrot.slane %v2949, 2
          %v2951 = vmax.f32 %v2949, %v2950
          %v2952 = vrot.slane %v2951, 1
          %v2953 = vmax.f32 %v2951, %v2952
          %vm2954 = vcmp.gt.f32.partialorder %v2947, 0.0
          %vm2955 = vcmp.gt.f32.partialorder %v2953, 0.0
          %vm2956 = vmor %vm2931, %vm2954
          %vm2957 = vmor %vm2932, %vm2955
          %v2958 = vadd.f32 %v2784, %v419
          %v2959 = vcvt.f32.s32.to.zero.pseudo %v2958
          %2960 = vset.pattern.permute.xlu0 0
          %2961 = vperm.xlu0 %2960, %v2959
          %v2962 = vpop.permute.xlu0 %2961
          %vm2963 = vcmp.eq.s32.totalorder %v2962, %v410
          %vm2964 = vcmp.eq.s32.totalorder %v2962, %v411
          %v2965 = vsel %vm2963, 1.0, 0.0
          %v2966 = vsel %vm2964, 1.0, 0.0
          %v2967 = vrot.slane %v2965, 4
          %v2968 = vmax.f32 %v2965, %v2967
          %v2969 = vrot.slane %v2968, 2
          %v2970 = vmax.f32 %v2968, %v2969
          %v2971 = vrot.slane %v2970, 1
          %v2972 = vmax.f32 %v2970, %v2971
          %v2973 = vrot.slane %v2966, 4
          %v2974 = vmax.f32 %v2966, %v2973
          %v2975 = vrot.slane %v2974, 2
          %v2976 = vmax.f32 %v2974, %v2975
          %v2977 = vrot.slane %v2976, 1
          %v2978 = vmax.f32 %v2976, %v2977
          %vm2979 = vcmp.gt.f32.partialorder %v2972, 0.0
          %vm2980 = vcmp.gt.f32.partialorder %v2978, 0.0
          %vm2981 = vmor %vm2956, %vm2979
          %vm2982 = vmor %vm2957, %vm2980
          %v2983 = vadd.f32 %v2784, %v420
          %v2984 = vcvt.f32.s32.to.zero.pseudo %v2983
          %2985 = vset.pattern.permute.xlu0 0
          %2986 = vperm.xlu0 %2985, %v2984
          %v2987 = vpop.permute.xlu0 %2986
          %vm2988 = vcmp.eq.s32.totalorder %v2987, %v410
          %vm2989 = vcmp.eq.s32.totalorder %v2987, %v411
          %v2990 = vsel %vm2988, 1.0, 0.0
          %v2991 = vsel %vm2989, 1.0, 0.0
          %v2992 = vrot.slane %v2990, 4
          %v2993 = vmax.f32 %v2990, %v2992
          %v2994 = vrot.slane %v2993, 2
          %v2995 = vmax.f32 %v2993, %v2994
          %v2996 = vrot.slane %v2995, 1
          %v2997 = vmax.f32 %v2995, %v2996
          %v2998 = vrot.slane %v2991, 4
          %v2999 = vmax.f32 %v2991, %v2998
          %v3000 = vrot.slane %v2999, 2
          %v3001 = vmax.f32 %v2999, %v3000
          %v3002 = vrot.slane %v3001, 1
          %v3003 = vmax.f32 %v3001, %v3002
          %vm3004 = vcmp.gt.f32.partialorder %v2997, 0.0
          %vm3005 = vcmp.gt.f32.partialorder %v3003, 0.0
          %vm3006 = vmor %vm2981, %vm3004
          %vm3007 = vmor %vm2982, %vm3005
          %v3008 = vadd.f32 %v2784, %v421
          %v3009 = vcvt.f32.s32.to.zero.pseudo %v3008
          %3010 = vset.pattern.permute.xlu0 0
          %3011 = vperm.xlu0 %3010, %v3009
          %v3012 = vpop.permute.xlu0 %3011
          %vm3013 = vcmp.eq.s32.totalorder %v3012, %v410
          %vm3014 = vcmp.eq.s32.totalorder %v3012, %v411
          %v3015 = vsel %vm3013, 1.0, 0.0
          %v3016 = vsel %vm3014, 1.0, 0.0
          %v3017 = vrot.slane %v3015, 4
          %v3018 = vmax.f32 %v3015, %v3017
          %v3019 = vrot.slane %v3018, 2
          %v3020 = vmax.f32 %v3018, %v3019
          %v3021 = vrot.slane %v3020, 1
          %v3022 = vmax.f32 %v3020, %v3021
          %v3023 = vrot.slane %v3016, 4
          %v3024 = vmax.f32 %v3016, %v3023
          %v3025 = vrot.slane %v3024, 2
          %v3026 = vmax.f32 %v3024, %v3025
          %v3027 = vrot.slane %v3026, 1
          %v3028 = vmax.f32 %v3026, %v3027
          %vm3029 = vcmp.gt.f32.partialorder %v3022, 0.0
          %vm3030 = vcmp.gt.f32.partialorder %v3028, 0.0
          %vm3031 = vmor %vm3006, %vm3029
          %vm3032 = vmor %vm3007, %vm3030
          %v3033 = vadd.f32 %v2784, %v422
          %v3034 = vcvt.f32.s32.to.zero.pseudo %v3033
          %3035 = vset.pattern.permute.xlu0 0
          %3036 = vperm.xlu0 %3035, %v3034
          %v3037 = vpop.permute.xlu0 %3036
          %vm3038 = vcmp.eq.s32.totalorder %v3037, %v410
          %vm3039 = vcmp.eq.s32.totalorder %v3037, %v411
          %v3040 = vsel %vm3038, 1.0, 0.0
          %v3041 = vsel %vm3039, 1.0, 0.0
          %v3042 = vrot.slane %v3040, 4
          %v3043 = vmax.f32 %v3040, %v3042
          %v3044 = vrot.slane %v3043, 2
          %v3045 = vmax.f32 %v3043, %v3044
          %v3046 = vrot.slane %v3045, 1
          %v3047 = vmax.f32 %v3045, %v3046
          %v3048 = vrot.slane %v3041, 4
          %v3049 = vmax.f32 %v3041, %v3048
          %v3050 = vrot.slane %v3049, 2
          %v3051 = vmax.f32 %v3049, %v3050
          %v3052 = vrot.slane %v3051, 1
          %v3053 = vmax.f32 %v3051, %v3052
          %vm3054 = vcmp.gt.f32.partialorder %v3047, 0.0
          %vm3055 = vcmp.gt.f32.partialorder %v3053, 0.0
          %vm3056 = vmor %vm3031, %vm3054
          %vm3057 = vmor %vm3032, %vm3055
          %v3058 = vadd.f32 %v2784, %v423
          %v3059 = vcvt.f32.s32.to.zero.pseudo %v3058
          %3060 = vset.pattern.permute.xlu0 0
          %3061 = vperm.xlu0 %3060, %v3059
          %v3062 = vpop.permute.xlu0 %3061
          %vm3063 = vcmp.eq.s32.totalorder %v3062, %v410
          %vm3064 = vcmp.eq.s32.totalorder %v3062, %v411
          %v3065 = vsel %vm3063, 1.0, 0.0
          %v3066 = vsel %vm3064, 1.0, 0.0
          %v3067 = vrot.slane %v3065, 4
          %v3068 = vmax.f32 %v3065, %v3067
          %v3069 = vrot.slane %v3068, 2
          %v3070 = vmax.f32 %v3068, %v3069
          %v3071 = vrot.slane %v3070, 1
          %v3072 = vmax.f32 %v3070, %v3071
          %v3073 = vrot.slane %v3066, 4
          %v3074 = vmax.f32 %v3066, %v3073
          %v3075 = vrot.slane %v3074, 2
          %v3076 = vmax.f32 %v3074, %v3075
          %v3077 = vrot.slane %v3076, 1
          %v3078 = vmax.f32 %v3076, %v3077
          %vm3079 = vcmp.gt.f32.partialorder %v3072, 0.0
          %vm3080 = vcmp.gt.f32.partialorder %v3078, 0.0
          %vm3081 = vmor %vm3056, %vm3079
          %vm3082 = vmor %vm3057, %vm3080
          %v3083 = vadd.f32 %v2784, %v424
          %v3084 = vcvt.f32.s32.to.zero.pseudo %v3083
          %3085 = vset.pattern.permute.xlu0 0
          %3086 = vperm.xlu0 %3085, %v3084
          %v3087 = vpop.permute.xlu0 %3086
          %vm3088 = vcmp.eq.s32.totalorder %v3087, %v410
          %vm3089 = vcmp.eq.s32.totalorder %v3087, %v411
          %v3090 = vsel %vm3088, 1.0, 0.0
          %v3091 = vsel %vm3089, 1.0, 0.0
          %v3092 = vrot.slane %v3090, 4
          %v3093 = vmax.f32 %v3090, %v3092
          %v3094 = vrot.slane %v3093, 2
          %v3095 = vmax.f32 %v3093, %v3094
          %v3096 = vrot.slane %v3095, 1
          %v3097 = vmax.f32 %v3095, %v3096
          %v3098 = vrot.slane %v3091, 4
          %v3099 = vmax.f32 %v3091, %v3098
          %v3100 = vrot.slane %v3099, 2
          %v3101 = vmax.f32 %v3099, %v3100
          %v3102 = vrot.slane %v3101, 1
          %v3103 = vmax.f32 %v3101, %v3102
          %vm3104 = vcmp.gt.f32.partialorder %v3097, 0.0
          %vm3105 = vcmp.gt.f32.partialorder %v3103, 0.0
          %vm3106 = vmor %vm3081, %vm3104
          %vm3107 = vmor %vm3082, %vm3105
          %v3108 = vadd.f32 %v2784, %v425
          %v3109 = vcvt.f32.s32.to.zero.pseudo %v3108
          %3110 = vset.pattern.permute.xlu0 0
          %3111 = vperm.xlu0 %3110, %v3109
          %v3112 = vpop.permute.xlu0 %3111
          %vm3113 = vcmp.eq.s32.totalorder %v3112, %v410
          %vm3114 = vcmp.eq.s32.totalorder %v3112, %v411
          %v3115 = vsel %vm3113, 1.0, 0.0
          %v3116 = vsel %vm3114, 1.0, 0.0
          %v3117 = vrot.slane %v3115, 4
          %v3118 = vmax.f32 %v3115, %v3117
          %v3119 = vrot.slane %v3118, 2
          %v3120 = vmax.f32 %v3118, %v3119
          %v3121 = vrot.slane %v3120, 1
          %v3122 = vmax.f32 %v3120, %v3121
          %v3123 = vrot.slane %v3116, 4
          %v3124 = vmax.f32 %v3116, %v3123
          %v3125 = vrot.slane %v3124, 2
          %v3126 = vmax.f32 %v3124, %v3125
          %v3127 = vrot.slane %v3126, 1
          %v3128 = vmax.f32 %v3126, %v3127
          %vm3129 = vcmp.gt.f32.partialorder %v3122, 0.0
          %vm3130 = vcmp.gt.f32.partialorder %v3128, 0.0
          %vm3131 = vmor %vm3106, %vm3129
          %vm3132 = vmor %vm3107, %vm3130
          %v3133 = vadd.f32 %v2784, %v426
          %v3134 = vcvt.f32.s32.to.zero.pseudo %v3133
          %3135 = vset.pattern.permute.xlu0 0
          %3136 = vperm.xlu0 %3135, %v3134
          %v3137 = vpop.permute.xlu0 %3136
          %vm3138 = vcmp.eq.s32.totalorder %v3137, %v410
          %vm3139 = vcmp.eq.s32.totalorder %v3137, %v411
          %v3140 = vsel %vm3138, 1.0, 0.0
          %v3141 = vsel %vm3139, 1.0, 0.0
          %v3142 = vrot.slane %v3140, 4
          %v3143 = vmax.f32 %v3140, %v3142
          %v3144 = vrot.slane %v3143, 2
          %v3145 = vmax.f32 %v3143, %v3144
          %v3146 = vrot.slane %v3145, 1
          %v3147 = vmax.f32 %v3145, %v3146
          %v3148 = vrot.slane %v3141, 4
          %v3149 = vmax.f32 %v3141, %v3148
          %v3150 = vrot.slane %v3149, 2
          %v3151 = vmax.f32 %v3149, %v3150
          %v3152 = vrot.slane %v3151, 1
          %v3153 = vmax.f32 %v3151, %v3152
          %vm3154 = vcmp.gt.f32.partialorder %v3147, 0.0
          %vm3155 = vcmp.gt.f32.partialorder %v3153, 0.0
          %vm3156 = vmor %vm3131, %vm3154
          %vm3157 = vmor %vm3132, %vm3155
          %v3158 = vld [vmem:[%s319] sm:$0x3]
          %v3160 = vperm.slane %v3158, 0
          %v3161 = vperm.slane %v3158, 1
          %v3164 = vsel %vm3156, 1.0, %v3160
          %v3165 = vsel %vm3157, 1.0, %v3161
          %v3168 = vrot.slane %v3165, 7
          %v3169 = vsel %vm397, %v3164, %v3168
          %3171 = vst.msk [vmem:[%s319] sm:$0x3] %vm403, %v3169
        $region72: #{tpu_custom_call.1} parent=43 // pred_fallthru
          _
        %p3172 = scmp.gt.s32.totalorder %s343, 7
        // Predicated region
        $region73: #{tpu_custom_call.1} parent=43 // pred_check
          %p3173 = pneg %p3172
        $region74: #{tpu_custom_call.1} parent=43 // pred_check_branch
          %3175 = sbr.rel (%p3173) target = $region76
        $region75: #{tpu_custom_call.1} parent=43 // pred_region
          %v3176 = vperm.slane %v427, 7
          %v3177 = vadd.f32 %v3176, %v412
          %v3178 = vcvt.f32.s32.to.zero.pseudo %v3177
          %3179 = vset.pattern.permute.xlu0 0
          %3180 = vperm.xlu0 %3179, %v3178
          %v3181 = vpop.permute.xlu0 %3180
          %vm3182 = vcmp.eq.s32.totalorder %v3181, %v410
          %vm3183 = vcmp.eq.s32.totalorder %v3181, %v411
          %v3184 = vsel %vm3182, 1.0, 0.0
          %v3185 = vsel %vm3183, 1.0, 0.0
          %v3186 = vrot.slane %v3184, 4
          %v3187 = vmax.f32 %v3184, %v3186
          %v3188 = vrot.slane %v3187, 2
          %v3189 = vmax.f32 %v3187, %v3188
          %v3190 = vrot.slane %v3189, 1
          %v3191 = vmax.f32 %v3189, %v3190
          %v3192 = vrot.slane %v3185, 4
          %v3193 = vmax.f32 %v3185, %v3192
          %v3194 = vrot.slane %v3193, 2
          %v3195 = vmax.f32 %v3193, %v3194
          %v3196 = vrot.slane %v3195, 1
          %v3197 = vmax.f32 %v3195, %v3196
          %vm3198 = vcmp.gt.f32.partialorder %v3191, 0.0
          %vm3199 = vcmp.gt.f32.partialorder %v3197, 0.0
          %v3200 = vadd.f32 %v3176, %v413
          %v3201 = vcvt.f32.s32.to.zero.pseudo %v3200
          %3202 = vset.pattern.permute.xlu0 0
          %3203 = vperm.xlu0 %3202, %v3201
          %v3204 = vpop.permute.xlu0 %3203
          %vm3205 = vcmp.eq.s32.totalorder %v3204, %v410
          %vm3206 = vcmp.eq.s32.totalorder %v3204, %v411
          %v3207 = vsel %vm3205, 1.0, 0.0
          %v3208 = vsel %vm3206, 1.0, 0.0
          %v3209 = vrot.slane %v3207, 4
          %v3210 = vmax.f32 %v3207, %v3209
          %v3211 = vrot.slane %v3210, 2
          %v3212 = vmax.f32 %v3210, %v3211
          %v3213 = vrot.slane %v3212, 1
          %v3214 = vmax.f32 %v3212, %v3213
          %v3215 = vrot.slane %v3208, 4
          %v3216 = vmax.f32 %v3208, %v3215
          %v3217 = vrot.slane %v3216, 2
          %v3218 = vmax.f32 %v3216, %v3217
          %v3219 = vrot.slane %v3218, 1
          %v3220 = vmax.f32 %v3218, %v3219
          %vm3221 = vcmp.gt.f32.partialorder %v3214, 0.0
          %vm3222 = vcmp.gt.f32.partialorder %v3220, 0.0
          %vm3223 = vmor %vm3198, %vm3221
          %vm3224 = vmor %vm3199, %vm3222
          %v3225 = vadd.f32 %v3176, %v414
          %v3226 = vcvt.f32.s32.to.zero.pseudo %v3225
          %3227 = vset.pattern.permute.xlu0 0
          %3228 = vperm.xlu0 %3227, %v3226
          %v3229 = vpop.permute.xlu0 %3228
          %vm3230 = vcmp.eq.s32.totalorder %v3229, %v410
          %vm3231 = vcmp.eq.s32.totalorder %v3229, %v411
          %v3232 = vsel %vm3230, 1.0, 0.0
          %v3233 = vsel %vm3231, 1.0, 0.0
          %v3234 = vrot.slane %v3232, 4
          %v3235 = vmax.f32 %v3232, %v3234
          %v3236 = vrot.slane %v3235, 2
          %v3237 = vmax.f32 %v3235, %v3236
          %v3238 = vrot.slane %v3237, 1
          %v3239 = vmax.f32 %v3237, %v3238
          %v3240 = vrot.slane %v3233, 4
          %v3241 = vmax.f32 %v3233, %v3240
          %v3242 = vrot.slane %v3241, 2
          %v3243 = vmax.f32 %v3241, %v3242
          %v3244 = vrot.slane %v3243, 1
          %v3245 = vmax.f32 %v3243, %v3244
          %vm3246 = vcmp.gt.f32.partialorder %v3239, 0.0
          %vm3247 = vcmp.gt.f32.partialorder %v3245, 0.0
          %vm3248 = vmor %vm3223, %vm3246
          %vm3249 = vmor %vm3224, %vm3247
          %v3250 = vadd.f32 %v3176, %v415
          %v3251 = vcvt.f32.s32.to.zero.pseudo %v3250
          %3252 = vset.pattern.permute.xlu0 0
          %3253 = vperm.xlu0 %3252, %v3251
          %v3254 = vpop.permute.xlu0 %3253
          %vm3255 = vcmp.eq.s32.totalorder %v3254, %v410
          %vm3256 = vcmp.eq.s32.totalorder %v3254, %v411
          %v3257 = vsel %vm3255, 1.0, 0.0
          %v3258 = vsel %vm3256, 1.0, 0.0
          %v3259 = vrot.slane %v3257, 4
          %v3260 = vmax.f32 %v3257, %v3259
          %v3261 = vrot.slane %v3260, 2
          %v3262 = vmax.f32 %v3260, %v3261
          %v3263 = vrot.slane %v3262, 1
          %v3264 = vmax.f32 %v3262, %v3263
          %v3265 = vrot.slane %v3258, 4
          %v3266 = vmax.f32 %v3258, %v3265
          %v3267 = vrot.slane %v3266, 2
          %v3268 = vmax.f32 %v3266, %v3267
          %v3269 = vrot.slane %v3268, 1
          %v3270 = vmax.f32 %v3268, %v3269
          %vm3271 = vcmp.gt.f32.partialorder %v3264, 0.0
          %vm3272 = vcmp.gt.f32.partialorder %v3270, 0.0
          %vm3273 = vmor %vm3248, %vm3271
          %vm3274 = vmor %vm3249, %vm3272
          %v3275 = vadd.f32 %v3176, %v416
          %v3276 = vcvt.f32.s32.to.zero.pseudo %v3275
          %3277 = vset.pattern.permute.xlu0 0
          %3278 = vperm.xlu0 %3277, %v3276
          %v3279 = vpop.permute.xlu0 %3278
          %vm3280 = vcmp.eq.s32.totalorder %v3279, %v410
          %vm3281 = vcmp.eq.s32.totalorder %v3279, %v411
          %v3282 = vsel %vm3280, 1.0, 0.0
          %v3283 = vsel %vm3281, 1.0, 0.0
          %v3284 = vrot.slane %v3282, 4
          %v3285 = vmax.f32 %v3282, %v3284
          %v3286 = vrot.slane %v3285, 2
          %v3287 = vmax.f32 %v3285, %v3286
          %v3288 = vrot.slane %v3287, 1
          %v3289 = vmax.f32 %v3287, %v3288
          %v3290 = vrot.slane %v3283, 4
          %v3291 = vmax.f32 %v3283, %v3290
          %v3292 = vrot.slane %v3291, 2
          %v3293 = vmax.f32 %v3291, %v3292
          %v3294 = vrot.slane %v3293, 1
          %v3295 = vmax.f32 %v3293, %v3294
          %vm3296 = vcmp.gt.f32.partialorder %v3289, 0.0
          %vm3297 = vcmp.gt.f32.partialorder %v3295, 0.0
          %vm3298 = vmor %vm3273, %vm3296
          %vm3299 = vmor %vm3274, %vm3297
          %v3300 = vadd.f32 %v3176, %v417
          %v3301 = vcvt.f32.s32.to.zero.pseudo %v3300
          %3302 = vset.pattern.permute.xlu0 0
          %3303 = vperm.xlu0 %3302, %v3301
          %v3304 = vpop.permute.xlu0 %3303
          %vm3305 = vcmp.eq.s32.totalorder %v3304, %v410
          %vm3306 = vcmp.eq.s32.totalorder %v3304, %v411
          %v3307 = vsel %vm3305, 1.0, 0.0
          %v3308 = vsel %vm3306, 1.0, 0.0
          %v3309 = vrot.slane %v3307, 4
          %v3310 = vmax.f32 %v3307, %v3309
          %v3311 = vrot.slane %v3310, 2
          %v3312 = vmax.f32 %v3310, %v3311
          %v3313 = vrot.slane %v3312, 1
          %v3314 = vmax.f32 %v3312, %v3313
          %v3315 = vrot.slane %v3308, 4
          %v3316 = vmax.f32 %v3308, %v3315
          %v3317 = vrot.slane %v3316, 2
          %v3318 = vmax.f32 %v3316, %v3317
          %v3319 = vrot.slane %v3318, 1
          %v3320 = vmax.f32 %v3318, %v3319
          %vm3321 = vcmp.gt.f32.partialorder %v3314, 0.0
          %vm3322 = vcmp.gt.f32.partialorder %v3320, 0.0
          %vm3323 = vmor %vm3298, %vm3321
          %vm3324 = vmor %vm3299, %vm3322
          %v3325 = vadd.f32 %v3176, %v418
          %v3326 = vcvt.f32.s32.to.zero.pseudo %v3325
          %3327 = vset.pattern.permute.xlu0 0
          %3328 = vperm.xlu0 %3327, %v3326
          %v3329 = vpop.permute.xlu0 %3328
          %vm3330 = vcmp.eq.s32.totalorder %v3329, %v410
          %vm3331 = vcmp.eq.s32.totalorder %v3329, %v411
          %v3332 = vsel %vm3330, 1.0, 0.0
          %v3333 = vsel %vm3331, 1.0, 0.0
          %v3334 = vrot.slane %v3332, 4
          %v3335 = vmax.f32 %v3332, %v3334
          %v3336 = vrot.slane %v3335, 2
          %v3337 = vmax.f32 %v3335, %v3336
          %v3338 = vrot.slane %v3337, 1
          %v3339 = vmax.f32 %v3337, %v3338
          %v3340 = vrot.slane %v3333, 4
          %v3341 = vmax.f32 %v3333, %v3340
          %v3342 = vrot.slane %v3341, 2
          %v3343 = vmax.f32 %v3341, %v3342
          %v3344 = vrot.slane %v3343, 1
          %v3345 = vmax.f32 %v3343, %v3344
          %vm3346 = vcmp.gt.f32.partialorder %v3339, 0.0
          %vm3347 = vcmp.gt.f32.partialorder %v3345, 0.0
          %vm3348 = vmor %vm3323, %vm3346
          %vm3349 = vmor %vm3324, %vm3347
          %v3350 = vadd.f32 %v3176, %v419
          %v3351 = vcvt.f32.s32.to.zero.pseudo %v3350
          %3352 = vset.pattern.permute.xlu0 0
          %3353 = vperm.xlu0 %3352, %v3351
          %v3354 = vpop.permute.xlu0 %3353
          %vm3355 = vcmp.eq.s32.totalorder %v3354, %v410
          %vm3356 = vcmp.eq.s32.totalorder %v3354, %v411
          %v3357 = vsel %vm3355, 1.0, 0.0
          %v3358 = vsel %vm3356, 1.0, 0.0
          %v3359 = vrot.slane %v3357, 4
          %v3360 = vmax.f32 %v3357, %v3359
          %v3361 = vrot.slane %v3360, 2
          %v3362 = vmax.f32 %v3360, %v3361
          %v3363 = vrot.slane %v3362, 1
          %v3364 = vmax.f32 %v3362, %v3363
          %v3365 = vrot.slane %v3358, 4
          %v3366 = vmax.f32 %v3358, %v3365
          %v3367 = vrot.slane %v3366, 2
          %v3368 = vmax.f32 %v3366, %v3367
          %v3369 = vrot.slane %v3368, 1
          %v3370 = vmax.f32 %v3368, %v3369
          %vm3371 = vcmp.gt.f32.partialorder %v3364, 0.0
          %vm3372 = vcmp.gt.f32.partialorder %v3370, 0.0
          %vm3373 = vmor %vm3348, %vm3371
          %vm3374 = vmor %vm3349, %vm3372
          %v3375 = vadd.f32 %v3176, %v420
          %v3376 = vcvt.f32.s32.to.zero.pseudo %v3375
          %3377 = vset.pattern.permute.xlu0 0
          %3378 = vperm.xlu0 %3377, %v3376
          %v3379 = vpop.permute.xlu0 %3378
          %vm3380 = vcmp.eq.s32.totalorder %v3379, %v410
          %vm3381 = vcmp.eq.s32.totalorder %v3379, %v411
          %v3382 = vsel %vm3380, 1.0, 0.0
          %v3383 = vsel %vm3381, 1.0, 0.0
          %v3384 = vrot.slane %v3382, 4
          %v3385 = vmax.f32 %v3382, %v3384
          %v3386 = vrot.slane %v3385, 2
          %v3387 = vmax.f32 %v3385, %v3386
          %v3388 = vrot.slane %v3387, 1
          %v3389 = vmax.f32 %v3387, %v3388
          %v3390 = vrot.slane %v3383, 4
          %v3391 = vmax.f32 %v3383, %v3390
          %v3392 = vrot.slane %v3391, 2
          %v3393 = vmax.f32 %v3391, %v3392
          %v3394 = vrot.slane %v3393, 1
          %v3395 = vmax.f32 %v3393, %v3394
          %vm3396 = vcmp.gt.f32.partialorder %v3389, 0.0
          %vm3397 = vcmp.gt.f32.partialorder %v3395, 0.0
          %vm3398 = vmor %vm3373, %vm3396
          %vm3399 = vmor %vm3374, %vm3397
          %v3400 = vadd.f32 %v3176, %v421
          %v3401 = vcvt.f32.s32.to.zero.pseudo %v3400
          %3402 = vset.pattern.permute.xlu0 0
          %3403 = vperm.xlu0 %3402, %v3401
          %v3404 = vpop.permute.xlu0 %3403
          %vm3405 = vcmp.eq.s32.totalorder %v3404, %v410
          %vm3406 = vcmp.eq.s32.totalorder %v3404, %v411
          %v3407 = vsel %vm3405, 1.0, 0.0
          %v3408 = vsel %vm3406, 1.0, 0.0
          %v3409 = vrot.slane %v3407, 4
          %v3410 = vmax.f32 %v3407, %v3409
          %v3411 = vrot.slane %v3410, 2
          %v3412 = vmax.f32 %v3410, %v3411
          %v3413 = vrot.slane %v3412, 1
          %v3414 = vmax.f32 %v3412, %v3413
          %v3415 = vrot.slane %v3408, 4
          %v3416 = vmax.f32 %v3408, %v3415
          %v3417 = vrot.slane %v3416, 2
          %v3418 = vmax.f32 %v3416, %v3417
          %v3419 = vrot.slane %v3418, 1
          %v3420 = vmax.f32 %v3418, %v3419
          %vm3421 = vcmp.gt.f32.partialorder %v3414, 0.0
          %vm3422 = vcmp.gt.f32.partialorder %v3420, 0.0
          %vm3423 = vmor %vm3398, %vm3421
          %vm3424 = vmor %vm3399, %vm3422
          %v3425 = vadd.f32 %v3176, %v422
          %v3426 = vcvt.f32.s32.to.zero.pseudo %v3425
          %3427 = vset.pattern.permute.xlu0 0
          %3428 = vperm.xlu0 %3427, %v3426
          %v3429 = vpop.permute.xlu0 %3428
          %vm3430 = vcmp.eq.s32.totalorder %v3429, %v410
          %vm3431 = vcmp.eq.s32.totalorder %v3429, %v411
          %v3432 = vsel %vm3430, 1.0, 0.0
          %v3433 = vsel %vm3431, 1.0, 0.0
          %v3434 = vrot.slane %v3432, 4
          %v3435 = vmax.f32 %v3432, %v3434
          %v3436 = vrot.slane %v3435, 2
          %v3437 = vmax.f32 %v3435, %v3436
          %v3438 = vrot.slane %v3437, 1
          %v3439 = vmax.f32 %v3437, %v3438
          %v3440 = vrot.slane %v3433, 4
          %v3441 = vmax.f32 %v3433, %v3440
          %v3442 = vrot.slane %v3441, 2
          %v3443 = vmax.f32 %v3441, %v3442
          %v3444 = vrot.slane %v3443, 1
          %v3445 = vmax.f32 %v3443, %v3444
          %vm3446 = vcmp.gt.f32.partialorder %v3439, 0.0
          %vm3447 = vcmp.gt.f32.partialorder %v3445, 0.0
          %vm3448 = vmor %vm3423, %vm3446
          %vm3449 = vmor %vm3424, %vm3447
          %v3450 = vadd.f32 %v3176, %v423
          %v3451 = vcvt.f32.s32.to.zero.pseudo %v3450
          %3452 = vset.pattern.permute.xlu0 0
          %3453 = vperm.xlu0 %3452, %v3451
          %v3454 = vpop.permute.xlu0 %3453
          %vm3455 = vcmp.eq.s32.totalorder %v3454, %v410
          %vm3456 = vcmp.eq.s32.totalorder %v3454, %v411
          %v3457 = vsel %vm3455, 1.0, 0.0
          %v3458 = vsel %vm3456, 1.0, 0.0
          %v3459 = vrot.slane %v3457, 4
          %v3460 = vmax.f32 %v3457, %v3459
          %v3461 = vrot.slane %v3460, 2
          %v3462 = vmax.f32 %v3460, %v3461
          %v3463 = vrot.slane %v3462, 1
          %v3464 = vmax.f32 %v3462, %v3463
          %v3465 = vrot.slane %v3458, 4
          %v3466 = vmax.f32 %v3458, %v3465
          %v3467 = vrot.slane %v3466, 2
          %v3468 = vmax.f32 %v3466, %v3467
          %v3469 = vrot.slane %v3468, 1
          %v3470 = vmax.f32 %v3468, %v3469
          %vm3471 = vcmp.gt.f32.partialorder %v3464, 0.0
          %vm3472 = vcmp.gt.f32.partialorder %v3470, 0.0
          %vm3473 = vmor %vm3448, %vm3471
          %vm3474 = vmor %vm3449, %vm3472
          %v3475 = vadd.f32 %v3176, %v424
          %v3476 = vcvt.f32.s32.to.zero.pseudo %v3475
          %3477 = vset.pattern.permute.xlu0 0
          %3478 = vperm.xlu0 %3477, %v3476
          %v3479 = vpop.permute.xlu0 %3478
          %vm3480 = vcmp.eq.s32.totalorder %v3479, %v410
          %vm3481 = vcmp.eq.s32.totalorder %v3479, %v411
          %v3482 = vsel %vm3480, 1.0, 0.0
          %v3483 = vsel %vm3481, 1.0, 0.0
          %v3484 = vrot.slane %v3482, 4
          %v3485 = vmax.f32 %v3482, %v3484
          %v3486 = vrot.slane %v3485, 2
          %v3487 = vmax.f32 %v3485, %v3486
          %v3488 = vrot.slane %v3487, 1
          %v3489 = vmax.f32 %v3487, %v3488
          %v3490 = vrot.slane %v3483, 4
          %v3491 = vmax.f32 %v3483, %v3490
          %v3492 = vrot.slane %v3491, 2
          %v3493 = vmax.f32 %v3491, %v3492
          %v3494 = vrot.slane %v3493, 1
          %v3495 = vmax.f32 %v3493, %v3494
          %vm3496 = vcmp.gt.f32.partialorder %v3489, 0.0
          %vm3497 = vcmp.gt.f32.partialorder %v3495, 0.0
          %vm3498 = vmor %vm3473, %vm3496
          %vm3499 = vmor %vm3474, %vm3497
          %v3500 = vadd.f32 %v3176, %v425
          %v3501 = vcvt.f32.s32.to.zero.pseudo %v3500
          %3502 = vset.pattern.permute.xlu0 0
          %3503 = vperm.xlu0 %3502, %v3501
          %v3504 = vpop.permute.xlu0 %3503
          %vm3505 = vcmp.eq.s32.totalorder %v3504, %v410
          %vm3506 = vcmp.eq.s32.totalorder %v3504, %v411
          %v3507 = vsel %vm3505, 1.0, 0.0
          %v3508 = vsel %vm3506, 1.0, 0.0
          %v3509 = vrot.slane %v3507, 4
          %v3510 = vmax.f32 %v3507, %v3509
          %v3511 = vrot.slane %v3510, 2
          %v3512 = vmax.f32 %v3510, %v3511
          %v3513 = vrot.slane %v3512, 1
          %v3514 = vmax.f32 %v3512, %v3513
          %v3515 = vrot.slane %v3508, 4
          %v3516 = vmax.f32 %v3508, %v3515
          %v3517 = vrot.slane %v3516, 2
          %v3518 = vmax.f32 %v3516, %v3517
          %v3519 = vrot.slane %v3518, 1
          %v3520 = vmax.f32 %v3518, %v3519
          %vm3521 = vcmp.gt.f32.partialorder %v3514, 0.0
          %vm3522 = vcmp.gt.f32.partialorder %v3520, 0.0
          %vm3523 = vmor %vm3498, %vm3521
          %vm3524 = vmor %vm3499, %vm3522
          %v3525 = vadd.f32 %v3176, %v426
          %v3526 = vcvt.f32.s32.to.zero.pseudo %v3525
          %3527 = vset.pattern.permute.xlu0 0
          %3528 = vperm.xlu0 %3527, %v3526
          %v3529 = vpop.permute.xlu0 %3528
          %vm3530 = vcmp.eq.s32.totalorder %v3529, %v410
          %vm3531 = vcmp.eq.s32.totalorder %v3529, %v411
          %v3532 = vsel %vm3530, 1.0, 0.0
          %v3533 = vsel %vm3531, 1.0, 0.0
          %v3534 = vrot.slane %v3532, 4
          %v3535 = vmax.f32 %v3532, %v3534
          %v3536 = vrot.slane %v3535, 2
          %v3537 = vmax.f32 %v3535, %v3536
          %v3538 = vrot.slane %v3537, 1
          %v3539 = vmax.f32 %v3537, %v3538
          %v3540 = vrot.slane %v3533, 4
          %v3541 = vmax.f32 %v3533, %v3540
          %v3542 = vrot.slane %v3541, 2
          %v3543 = vmax.f32 %v3541, %v3542
          %v3544 = vrot.slane %v3543, 1
          %v3545 = vmax.f32 %v3543, %v3544
          %vm3546 = vcmp.gt.f32.partialorder %v3539, 0.0
          %vm3547 = vcmp.gt.f32.partialorder %v3545, 0.0
          %vm3548 = vmor %vm3523, %vm3546
          %vm3549 = vmor %vm3524, %vm3547
          %v3550 = vld [vmem:[%s319] sm:$0x3]
          %v3552 = vperm.slane %v3550, 0
          %v3553 = vperm.slane %v3550, 1
          %v3556 = vsel %vm3548, 1.0, %v3552
          %v3557 = vsel %vm3549, 1.0, %v3553
          %v3560 = vrot.slane %v3557, 7
          %v3561 = vsel %vm397, %v3556, %v3560
          %3563 = vst.msk [vmem:[%s319] sm:$0x3] %vm403, %v3561
        $region76: #{tpu_custom_call.1} parent=43 // pred_fallthru
          _
        %s3564 = sand.u32 %s202, 1
        %s3565 = scalar_lea.sflag [#allocation5], %s3564
        %s3566 = sand.u32 %s202, 1
        %s3567 = smul.addr %s3566, 2
        %s3568 = scalar_lea.vmem [#allocation4], %s3567
        // Predicated region
        $region77: #{tpu_custom_call.1} parent=43 // pred_check
          %p3569 = pneg %p212
        $region78: #{tpu_custom_call.1} parent=43 // pred_check_branch
          %3571 = sbr.rel (%p3569) target = $region80
        $region79: #{tpu_custom_call.1} parent=43 // pred_region
          %s3572 = smul.u32 2, %s34
          %3574 = vsyncadd %s3565, 0
          %s3575 = smul.addr %s33, 2
          %s3576 = sadd.s32 %s3572, %s3575
          %s3577 = scalar_lea.hbm %s7, %s3576
          %s3579 = sshll.u32 %s3568, 4
          %s3580 = int_to_ptr.vmem [resolvable:$true] %s3579
          %s3581 = sshll.u32 %s3577, 4
          %s3582 = int_to_ptr.hbm [resolvable:$true] %s3581
          %3584 = dma.vmem_to_hbm [thread:$0]  %s3580, 32, %s3582, %s3565
        $region80: #{tpu_custom_call.1} parent=43 // pred_fallthru
          _
      $region44: #{tpu_custom_call.1} parent=5 // pred_fallthru
        _
      %p3585 = scmp.le.s32.totalorder 2, %s24
      // Predicated region
      $region81: #{tpu_custom_call.1} parent=5 // pred_check
        %p3586 = pneg %p3585
      $region82: #{tpu_custom_call.1} parent=5 // pred_check_branch
        %3588 = sbr.rel (%p3586) target = $region84
      $region83: #{tpu_custom_call.1} parent=5 // pred_region
        %s3589 = ssub.s32 %s24, 2
        // Predicated region
        $region85: #{tpu_custom_call.1} parent=83 // pred_check
          %p3590 = pneg %p218
        $region86: #{tpu_custom_call.1} parent=83 // pred_check_branch
          %3592 = sbr.rel (%p3590) target = $region88
        $region87: #{tpu_custom_call.1} parent=83 // pred_region
          %s3593 = sand.u32 %s203, 1
          %s3594 = scalar_lea.sflag [#allocation5], %s3593
          %s3595 = sand.u32 %s203, 1
          %s3596 = smul.addr %s3595, 2
          %s3597 = scalar_lea.vmem [#allocation4], %s3596
          %3599 = dma.done %s3594, 32
        $region88: #{tpu_custom_call.1} parent=83 // pred_fallthru
          _
      $region84: #{tpu_custom_call.1} parent=5 // pred_fallthru
        _
    $region6: #{tpu_custom_call.1} parent=1 // loop_footer
      %s28 = sadd.s32 1, %s24
    $region7: #{tpu_custom_call.1} parent=1 // loop_footer_branch
      %23 = sbr.rel target = $region3
    $region8: #{tpu_custom_call.1} parent=1 // loop_exit
      _
    %3600 = vsyncpa [#allocation5], 1
    %s3601 = scalar_lea.sflag [#allocation5], 1
    %3602 = vsyncpa %s3601, 1

</llo_original>
